<compile_context>
chip_gen: v7x
topology: tpu7x:2x2x1
jax: 0.10.0
libtpu: 0.0.40
codegen_flags: <defaults>
</compile_context>

<pallas_src>
import functools

import jax
import jax.numpy as jnp
from jax.experimental import pallas as pl
from jax.experimental.pallas import tpu as pltpu

LANES = 128  # pad all matmul output widths to this for lane-dense stores


# ----------------------------------------------------------------------------
# Pallas kernels
# ----------------------------------------------------------------------------
def _mm_bias_kernel(a_ref, b_ref, bias_ref, o_ref, *, relu):
    acc = jnp.dot(a_ref[...], b_ref[...], preferred_element_type=jnp.float32)
    acc = acc + bias_ref[...]
    if relu:
        acc = jnp.maximum(acc, 0.0)
    o_ref[...] = acc


def _mm4_maxpool_relu_kernel(a0_ref, a1_ref, a2_ref, a3_ref, b_ref, bias_ref, o_ref):
    # Fused conv + MaxPool2d(2) + ReLU: the four A matrices are the im2col
    # matrices of the four 2x2-pool offsets; max commutes with the shared bias.
    b = b_ref[...]
    d0 = jnp.dot(a0_ref[...], b, preferred_element_type=jnp.float32)
    d1 = jnp.dot(a1_ref[...], b, preferred_element_type=jnp.float32)
    d2 = jnp.dot(a2_ref[...], b, preferred_element_type=jnp.float32)
    d3 = jnp.dot(a3_ref[...], b, preferred_element_type=jnp.float32)
    acc = jnp.maximum(jnp.maximum(d0, d1), jnp.maximum(d2, d3))
    o_ref[...] = jnp.maximum(acc + bias_ref[...], 0.0)


def _pick_tile_m(m):
    """Tile M only when it is big enough to matter (v7x 2nd TC / VMEM safety)."""
    if m >= 512:
        for t in (512, 256, 128):
            if m % t == 0:
                return t
    return m


def matmul_bias(a, b, bias, relu=False):
    """a:(M,K) @ b:(K,128) + bias:(1,128), bf16 inputs, f32 accumulate."""
    m, k = a.shape
    _, n = b.shape
    tm = _pick_tile_m(m)
    return pl.pallas_call(
        functools.partial(_mm_bias_kernel, relu=relu),
        out_shape=jax.ShapeDtypeStruct((m, n), jnp.float32),
        grid=(m // tm,),
        in_specs=[
            pl.BlockSpec((tm, k), lambda i: (i, 0)),
            pl.BlockSpec((k, n), lambda i: (0, 0)),
            pl.BlockSpec((1, n), lambda i: (0, 0)),
        ],
        out_specs=pl.BlockSpec((tm, n), lambda i: (i, 0)),
        compiler_params=pltpu.CompilerParams(dimension_semantics=("parallel",)),
    )(a.astype(jnp.bfloat16), b.astype(jnp.bfloat16), bias)


def matmul4_maxpool_relu(a_list, b, bias):
    m, k = a_list[0].shape
    _, n = b.shape
    tm = _pick_tile_m(m)
    a_spec = pl.BlockSpec((tm, k), lambda i: (i, 0))
    return pl.pallas_call(
        _mm4_maxpool_relu_kernel,
        out_shape=jax.ShapeDtypeStruct((m, n), jnp.float32),
        grid=(m // tm,),
        in_specs=[a_spec] * 4
        + [
            pl.BlockSpec((k, n), lambda i: (0, 0)),
            pl.BlockSpec((1, n), lambda i: (0, 0)),
        ],
        out_specs=pl.BlockSpec((tm, n), lambda i: (i, 0)),
        compiler_params=pltpu.CompilerParams(dimension_semantics=("parallel",)),
    )(*(a.astype(jnp.bfloat16) for a in a_list), b.astype(jnp.bfloat16), bias)


# ----------------------------------------------------------------------------
# im2col (NHWC, contiguous channel-last slices) + weight packing
# ----------------------------------------------------------------------------
def _im2col(x, k, pad=0, stride=1, off=(0, 0), out_hw=None):
    """x:(N,H,W,C) -> (N*Ho*Wo, k*k*C); column order (dy, dx, c)."""
    n, h, w, c = x.shape
    xp = jnp.pad(x, ((0, 0), (pad, pad), (pad, pad), (0, 0)))
    if out_hw is None:
        ho = (h + 2 * pad - k) // stride + 1
        wo = (w + 2 * pad - k) // stride + 1
    else:
        ho, wo = out_hw
    oy, ox = off
    cols = []
    for dy in range(k):
        for dx in range(k):
            ys, xs = oy + dy, ox + dx
            cols.append(
                xp[:, ys: ys + stride * (ho - 1) + 1: stride,
                   xs: xs + stride * (wo - 1) + 1: stride, :]
            )
    a = jnp.concatenate(cols, axis=-1)          # (N, Ho, Wo, k*k*C)
    return a.reshape(n * ho * wo, k * k * c), ho, wo


def _prep_weight(w, pad_to=LANES):
    """PyTorch (Cout,Cin,kh,kw) -> matmul (kh*kw*Cin, pad_to), (dy,dx,c) rows."""
    cout, cin, kh, kw = w.shape
    b = w.transpose(2, 3, 1, 0).reshape(kh * kw * cin, cout)
    if cout < pad_to:
        b = jnp.pad(b, ((0, 0), (0, pad_to - cout)))
    return b


def _prep_bias(bias, pad_to=LANES):
    n = bias.shape[0]
    return jnp.pad(bias, (0, pad_to - n)).reshape(1, pad_to).astype(jnp.float32)


def conv2d_nhwc(x, wmat, bias, k, cout, pad=0, relu=False):
    n = x.shape[0]
    a, ho, wo = _im2col(x, k, pad=pad)
    out = matmul_bias(a, wmat, bias, relu=relu)         # (M, 128) lane-dense
    return out[:, :cout].reshape(n, ho, wo, cout)


def conv_pool_relu(x, wmat, bias, k, cout):
    """ReLU(MaxPool2d(2)(Conv2d(k, valid)(x))) fused into one kernel."""
    n, h, w, _ = x.shape
    ho, wo = (h - k + 1) // 2, (w - k + 1) // 2
    a_list = [
        _im2col(x, k, pad=0, stride=2, off=(dy, dx), out_hw=(ho, wo))[0]
        for dy in (0, 1) for dx in (0, 1)
    ]
    out = matmul4_maxpool_relu(a_list, wmat, bias)      # (N*ho*wo, 128)
    return out[:, :cout].reshape(n, ho, wo, cout)


# ----------------------------------------------------------------------------
# InceptionA
# ----------------------------------------------------------------------------
def _fuse_stage_a(p, cin):
    """Fuse pool-branch (avg3+1x1 == 3x3 conv w/9) and the three 1x1 convs
    (== 3x3 convs with a center-only tap) into one 3x3 weight of 72 outputs."""
    pool3 = jnp.broadcast_to(p["pool_w"] / 9.0, (24, cin, 3, 3))

    def center3(w1):
        co = w1.shape[0]
        z = jnp.zeros((co, cin, 3, 3), w1.dtype)
        return z.at[:, :, 1, 1].set(w1[:, :, 0, 0])

    w_a = jnp.concatenate(
        [pool3, center3(p["b1_w"]), center3(p["b5_1_w"]), center3(p["b3_1_w"])],
        axis=0)                                                   # (72, cin, 3, 3)
    b_a = jnp.concatenate([p["pool_b"], p["b1_b"], p["b5_1_b"], p["b3_1_b"]])
    return _prep_weight(w_a), _prep_bias(b_a)


def inception_a(x, p):
    n, h, w, cin = x.shape
    m = n * h * w

    # Stage A: one shared im2col(k=3,pad=1) + one matmul for all four heads.
    w_a, b_a = _fuse_stage_a(p, cin)
    a, _, _ = _im2col(x, 3, pad=1)
    out_a = matmul_bias(a, w_a, b_a)            # (M, 128)
    pool_out = out_a[:, 0:24]
    b1_out = out_a[:, 24:40]
    b5 = out_a[:, 40:56].reshape(n, h, w, 16)
    b3 = out_a[:, 56:72].reshape(n, h, w, 16)

    # Stage B/C: the remaining spatial convs of the 5x5 and 3x3 branches.
    b5_out = conv2d_nhwc(b5, _prep_weight(p["b5_2_w"]), _prep_bias(p["b5_2_b"]),
                         k=5, pad=2, cout=24).reshape(m, 24)
    b3_mid = conv2d_nhwc(b3, _prep_weight(p["b3_2_w"]), _prep_bias(p["b3_2_b"]),
                         k=3, pad=1, cout=24)
    b3_out = conv2d_nhwc(b3_mid, _prep_weight(p["b3_3_w"]), _prep_bias(p["b3_3_b"]),
                         k=3, pad=1, cout=24).reshape(m, 24)

    # PyTorch concat order: [pool, 1x1, 5x5, 3x3]  -> 88 channels (lane axis).
    out = jnp.concatenate([pool_out, b1_out, b5_out, b3_out], axis=-1)
    return out.reshape(n, h, w, 88)


# ----------------------------------------------------------------------------
# Model forward (input NCHW like PyTorch; internally NHWC)
# ----------------------------------------------------------------------------
def net_forward(x_nchw, params):
    x = jnp.transpose(x_nchw, (0, 2, 3, 1))                       # (N,28,28,1)
    x = conv_pool_relu(x, _prep_weight(params["conv1_w"]),
                       _prep_bias(params["conv1_b"]), k=5, cout=10)  # (N,12,12,10)
    x = inception_a(x, params["incep1"])                             # (N,12,12,88)
    x = conv_pool_relu(x, _prep_weight(params["conv2_w"]),
                       _prep_bias(params["conv2_b"]), k=5, cout=20)  # (N,4,4,20)
    x = inception_a(x, params["incep2"])                             # (N,4,4,88)

    n = x.shape[0]
    # Permute FC columns so NHWC flatten matches PyTorch's NCHW flatten.
    fc_w = params["fc_w"].reshape(10, 88, 4, 4).transpose(0, 2, 3, 1).reshape(10, 1408)
    wmat = jnp.pad(fc_w.T, ((0, 0), (0, LANES - 10)))             # (1408, 128)
    bias = _prep_bias(params["fc_b"])
    out = matmul_bias(x.reshape(n, 1408), wmat, bias)             # (N, 128)
    return out[:, :10]


# ----------------------------------------------------------------------------
# Deterministic parameter init (PyTorch-style uniform(-1/sqrt(fan_in), +))
# ----------------------------------------------------------------------------
def _init_conv(key, cout, cin, k):
    kw, kb = jax.random.split(key)
    bound = 1.0 / (cin * k * k) ** 0.5
    w = jax.random.uniform(kw, (cout, cin, k, k), jnp.float32, -bound, bound)
    b = jax.random.uniform(kb, (cout,), jnp.float32, -bound, bound)
    return w, b


def _init_inception(key, cin):
    ks = jax.random.split(key, 7)
    p = {}
    p["pool_w"], p["pool_b"] = _init_conv(ks[0], 24, cin, 1)
    p["b1_w"], p["b1_b"] = _init_conv(ks[1], 16, cin, 1)
    p["b5_1_w"], p["b5_1_b"] = _init_conv(ks[2], 16, cin, 1)
    p["b5_2_w"], p["b5_2_b"] = _init_conv(ks[3], 24, 16, 5)
    p["b3_1_w"], p["b3_1_b"] = _init_conv(ks[4], 16, cin, 1)
    p["b3_2_w"], p["b3_2_b"] = _init_conv(ks[5], 24, 16, 3)
    p["b3_3_w"], p["b3_3_b"] = _init_conv(ks[6], 24, 24, 3)
    return p


def init_params(key):
    k1, k2, k3, k4, k5 = jax.random.split(key, 5)
    params = {}
    params["conv1_w"], params["conv1_b"] = _init_conv(k1, 10, 1, 5)
    params["conv2_w"], params["conv2_b"] = _init_conv(k2, 20, 88, 5)
    params["incep1"] = _init_inception(k3, 10)
    params["incep2"] = _init_inception(k4, 20)
    kfw, kfb = jax.random.split(k5)
    bound = 1.0 / 1408 ** 0.5
    params["fc_w"] = jax.random.uniform(kfw, (10, 1408), jnp.float32, -bound, bound)
    params["fc_b"] = jax.random.uniform(kfb, (10,), jnp.float32, -bound, bound)
    return params


if __name__ == "__main__":
    key = jax.random.PRNGKey(0)
    kx, kp = jax.random.split(key)
    # 28x28 input is required so the flattened feature size is 88*4*4 = 1408.
    x = jax.random.normal(kx, (2, 1, 28, 28), jnp.float32)
    params = init_params(kp)

    logits = jax.jit(net_forward)(x, params)
    jax.block_until_ready(logits)
    assert logits.shape == (2, 10) and logits.dtype == jnp.float32
    print("KERNEL_OK")
</pallas_src>

<mosaic_0001>
module attributes {stable_mosaic.version = 11 : i64} {
  func.func @_mm4_maxpool_relu_kernel(%arg0: i32, %arg1: memref<288x25xbf16, #tpu.memory_space<vmem>>, %arg2: memref<288x25xbf16, #tpu.memory_space<vmem>>, %arg3: memref<288x25xbf16, #tpu.memory_space<vmem>>, %arg4: memref<288x25xbf16, #tpu.memory_space<vmem>>, %arg5: memref<25x128xbf16, #tpu.memory_space<vmem>>, %arg6: memref<1x128xf32, #tpu.memory_space<vmem>>, %arg7: memref<288x128xf32, #tpu.memory_space<vmem>>) attributes {dimension_semantics = [#tpu.dimension_semantics<parallel>], iteration_bounds = array<i64: 1>, scalar_prefetch = 0 : i64, scratch_operands = 0 : i64, tpu.core_type = #tpu.core_type<tc>, window_params = [{transform_indices = @transform_0, window_bounds = array<i64: 288, 25>}, {transform_indices = @transform_1, window_bounds = array<i64: 288, 25>}, {transform_indices = @transform_2, window_bounds = array<i64: 288, 25>}, {transform_indices = @transform_3, window_bounds = array<i64: 288, 25>}, {pipeline_mode = #tpu.pipeline_mode<synchronous>, transform_indices = @transform_4, window_bounds = array<i64: 25, 128>}, {pipeline_mode = #tpu.pipeline_mode<synchronous>, transform_indices = @transform_5, window_bounds = array<i64: 1, 128>}, {transform_indices = @transform_6, window_bounds = array<i64: 288, 128>}]} {
    %c0 = arith.constant 0 : index
    %c0_0 = arith.constant 0 : index
    %0 = vector.load %arg5[%c0, %c0_0] : memref<25x128xbf16, #tpu.memory_space<vmem>>, vector<25x128xbf16>
    %c0_1 = arith.constant 0 : index
    %c0_2 = arith.constant 0 : index
    %1 = vector.load %arg1[%c0_1, %c0_2] : memref<288x25xbf16, #tpu.memory_space<vmem>>, vector<288x25xbf16>
    %cst = arith.constant dense<0.000000e+00> : vector<288x128xf32>
    %2 = tpu.matmul %1, %0, %cst {dimension_numbers = #tpu.dot_dimension_numbers<[1], [0], [0], [1], [0, 0, 1, 1], [], []>} : vector<288x25xbf16>, vector<25x128xbf16>, vector<288x128xf32> -> vector<288x128xf32>
    %c0_3 = arith.constant 0 : index
    %c0_4 = arith.constant 0 : index
    %3 = vector.load %arg2[%c0_3, %c0_4] : memref<288x25xbf16, #tpu.memory_space<vmem>>, vector<288x25xbf16>
    %cst_5 = arith.constant dense<0.000000e+00> : vector<288x128xf32>
    %4 = tpu.matmul %3, %0, %cst_5 {dimension_numbers = #tpu.dot_dimension_numbers<[1], [0], [0], [1], [0, 0, 1, 1], [], []>} : vector<288x25xbf16>, vector<25x128xbf16>, vector<288x128xf32> -> vector<288x128xf32>
    %c0_6 = arith.constant 0 : index
    %c0_7 = arith.constant 0 : index
    %5 = vector.load %arg3[%c0_6, %c0_7] : memref<288x25xbf16, #tpu.memory_space<vmem>>, vector<288x25xbf16>
    %cst_8 = arith.constant dense<0.000000e+00> : vector<288x128xf32>
    %6 = tpu.matmul %5, %0, %cst_8 {dimension_numbers = #tpu.dot_dimension_numbers<[1], [0], [0], [1], [0, 0, 1, 1], [], []>} : vector<288x25xbf16>, vector<25x128xbf16>, vector<288x128xf32> -> vector<288x128xf32>
    %c0_9 = arith.constant 0 : index
    %c0_10 = arith.constant 0 : index
    %7 = vector.load %arg4[%c0_9, %c0_10] : memref<288x25xbf16, #tpu.memory_space<vmem>>, vector<288x25xbf16>
    %cst_11 = arith.constant dense<0.000000e+00> : vector<288x128xf32>
    %8 = tpu.matmul %7, %0, %cst_11 {dimension_numbers = #tpu.dot_dimension_numbers<[1], [0], [0], [1], [0, 0, 1, 1], [], []>} : vector<288x25xbf16>, vector<25x128xbf16>, vector<288x128xf32> -> vector<288x128xf32>
    %9 = arith.maximumf %2, %4 : vector<288x128xf32>
    %10 = arith.maximumf %6, %8 : vector<288x128xf32>
    %11 = arith.maximumf %9, %10 : vector<288x128xf32>
    %c0_12 = arith.constant 0 : index
    %c0_13 = arith.constant 0 : index
    %12 = vector.load %arg6[%c0_12, %c0_13] : memref<1x128xf32, #tpu.memory_space<vmem>>, vector<1x128xf32>
    %13 = vector.broadcast %12 : vector<1x128xf32> to vector<288x128xf32>
    %14 = arith.addf %11, %13 : vector<288x128xf32>
    %cst_14 = arith.constant 0.000000e+00 : f32
    %15 = vector.broadcast %cst_14 : f32 to vector<288x128xf32>
    %16 = arith.maximumf %14, %15 : vector<288x128xf32>
    %c0_15 = arith.constant 0 : index
    %c0_16 = arith.constant 0 : index
    %17 = vector.load %arg7[%c0_15, %c0_16] : memref<288x128xf32, #tpu.memory_space<vmem>>, vector<288x128xf32>
    tpu.vector_store %arg7[%c0_15, %c0_16], %16 {strides = array<i32>} : memref<288x128xf32, #tpu.memory_space<vmem>>, vector<288x128xf32>,
    return
  }
  func.func @transform_0(%arg0: i32) -> (i32, i32) {
    %c0_i32 = arith.constant 0 : i32
    %c0_i32_0 = arith.constant 0 : i32
    return %arg0, %c0_i32 : i32, i32
  }
  func.func @transform_1(%arg0: i32) -> (i32, i32) {
    %c0_i32 = arith.constant 0 : i32
    %c0_i32_0 = arith.constant 0 : i32
    return %arg0, %c0_i32 : i32, i32
  }
  func.func @transform_2(%arg0: i32) -> (i32, i32) {
    %c0_i32 = arith.constant 0 : i32
    %c0_i32_0 = arith.constant 0 : i32
    return %arg0, %c0_i32 : i32, i32
  }
  func.func @transform_3(%arg0: i32) -> (i32, i32) {
    %c0_i32 = arith.constant 0 : i32
    %c0_i32_0 = arith.constant 0 : i32
    return %arg0, %c0_i32 : i32, i32
  }
  func.func @transform_4(%arg0: i32) -> (i32, i32) {
    %c0_i32 = arith.constant 0 : i32
    %c0_i32_0 = arith.constant 0 : i32
    %c0_i32_1 = arith.constant 0 : i32
    return %c0_i32, %c0_i32_0 : i32, i32
  }
  func.func @transform_5(%arg0: i32) -> (i32, i32) {
    %c0_i32 = arith.constant 0 : i32
    %c0_i32_0 = arith.constant 0 : i32
    %c0_i32_1 = arith.constant 0 : i32
    return %c0_i32, %c0_i32_0 : i32, i32
  }
  func.func @transform_6(%arg0: i32) -> (i32, i32) {
    %c0_i32 = arith.constant 0 : i32
    %c0_i32_0 = arith.constant 0 : i32
    return %arg0, %c0_i32 : i32, i32
  }
}

module attributes {stable_mosaic.version = 11 : i64} {
  func.func @_mm_bias_kernel(%arg0: i32, %arg1: memref<288x90xbf16, #tpu.memory_space<vmem>>, %arg2: memref<90x128xbf16, #tpu.memory_space<vmem>>, %arg3: memref<1x128xf32, #tpu.memory_space<vmem>>, %arg4: memref<288x128xf32, #tpu.memory_space<vmem>>) attributes {dimension_semantics = [#tpu.dimension_semantics<parallel>], iteration_bounds = array<i64: 1>, scalar_prefetch = 0 : i64, scratch_operands = 0 : i64, tpu.core_type = #tpu.core_type<tc>, window_params = [{transform_indices = @transform_0, window_bounds = array<i64: 288, 90>}, {pipeline_mode = #tpu.pipeline_mode<synchronous>, transform_indices = @transform_1, window_bounds = array<i64: 90, 128>}, {pipeline_mode = #tpu.pipeline_mode<synchronous>, transform_indices = @transform_2, window_bounds = array<i64: 1, 128>}, {transform_indices = @transform_3, window_bounds = array<i64: 288, 128>}]} {
    %c0 = arith.constant 0 : index
    %c0_0 = arith.constant 0 : index
    %0 = vector.load %arg1[%c0, %c0_0] : memref<288x90xbf16, #tpu.memory_space<vmem>>, vector<288x90xbf16>
    %c0_1 = arith.constant 0 : index
    %c0_2 = arith.constant 0 : index
    %1 = vector.load %arg2[%c0_1, %c0_2] : memref<90x128xbf16, #tpu.memory_space<vmem>>, vector<90x128xbf16>
    %cst = arith.constant dense<0.000000e+00> : vector<288x128xf32>
    %2 = tpu.matmul %0, %1, %cst {dimension_numbers = #tpu.dot_dimension_numbers<[1], [0], [0], [1], [0, 0, 1, 1], [], []>} : vector<288x90xbf16>, vector<90x128xbf16>, vector<288x128xf32> -> vector<288x128xf32>
    %c0_3 = arith.constant 0 : index
    %c0_4 = arith.constant 0 : index
    %3 = vector.load %arg3[%c0_3, %c0_4] : memref<1x128xf32, #tpu.memory_space<vmem>>, vector<1x128xf32>
    %4 = vector.broadcast %3 : vector<1x128xf32> to vector<288x128xf32>
    %5 = arith.addf %2, %4 : vector<288x128xf32>
    %c0_5 = arith.constant 0 : index
    %c0_6 = arith.constant 0 : index
    %6 = vector.load %arg4[%c0_5, %c0_6] : memref<288x128xf32, #tpu.memory_space<vmem>>, vector<288x128xf32>
    tpu.vector_store %arg4[%c0_5, %c0_6], %5 {strides = array<i32>} : memref<288x128xf32, #tpu.memory_space<vmem>>, vector<288x128xf32>,
    return
  }
  func.func @transform_0(%arg0: i32) -> (i32, i32) {
    %c0_i32 = arith.constant 0 : i32
    %c0_i32_0 = arith.constant 0 : i32
    return %arg0, %c0_i32 : i32, i32
  }
  func.func @transform_1(%arg0: i32) -> (i32, i32) {
    %c0_i32 = arith.constant 0 : i32
    %c0_i32_0 = arith.constant 0 : i32
    %c0_i32_1 = arith.constant 0 : i32
    return %c0_i32, %c0_i32_0 : i32, i32
  }
  func.func @transform_2(%arg0: i32) -> (i32, i32) {
    %c0_i32 = arith.constant 0 : i32
    %c0_i32_0 = arith.constant 0 : i32
    %c0_i32_1 = arith.constant 0 : i32
    return %c0_i32, %c0_i32_0 : i32, i32
  }
  func.func @transform_3(%arg0: i32) -> (i32, i32) {
    %c0_i32 = arith.constant 0 : i32
    %c0_i32_0 = arith.constant 0 : i32
    return %arg0, %c0_i32 : i32, i32
  }
}

module attributes {stable_mosaic.version = 11 : i64} {
  func.func @_mm_bias_kernel(%arg0: i32, %arg1: memref<288x144xbf16, #tpu.memory_space<vmem>>, %arg2: memref<144x128xbf16, #tpu.memory_space<vmem>>, %arg3: memref<1x128xf32, #tpu.memory_space<vmem>>, %arg4: memref<288x128xf32, #tpu.memory_space<vmem>>) attributes {dimension_semantics = [#tpu.dimension_semantics<parallel>], iteration_bounds = array<i64: 1>, scalar_prefetch = 0 : i64, scratch_operands = 0 : i64, tpu.core_type = #tpu.core_type<tc>, window_params = [{transform_indices = @transform_0, window_bounds = array<i64: 288, 144>}, {pipeline_mode = #tpu.pipeline_mode<synchronous>, transform_indices = @transform_1, window_bounds = array<i64: 144, 128>}, {pipeline_mode = #tpu.pipeline_mode<synchronous>, transform_indices = @transform_2, window_bounds = array<i64: 1, 128>}, {transform_indices = @transform_3, window_bounds = array<i64: 288, 128>}]} {
    %c0 = arith.constant 0 : index
    %c0_0 = arith.constant 0 : index
    %0 = vector.load %arg1[%c0, %c0_0] : memref<288x144xbf16, #tpu.memory_space<vmem>>, vector<288x144xbf16>
    %c0_1 = arith.constant 0 : index
    %c0_2 = arith.constant 0 : index
    %1 = vector.load %arg2[%c0_1, %c0_2] : memref<144x128xbf16, #tpu.memory_space<vmem>>, vector<144x128xbf16>
    %cst = arith.constant dense<0.000000e+00> : vector<288x128xf32>
    %2 = tpu.matmul %0, %1, %cst {dimension_numbers = #tpu.dot_dimension_numbers<[1], [0], [0], [1], [0, 0, 1, 1], [], []>} : vector<288x144xbf16>, vector<144x128xbf16>, vector<288x128xf32> -> vector<288x128xf32>
    %c0_3 = arith.constant 0 : index
    %c0_4 = arith.constant 0 : index
    %3 = vector.load %arg3[%c0_3, %c0_4] : memref<1x128xf32, #tpu.memory_space<vmem>>, vector<1x128xf32>
    %4 = vector.broadcast %3 : vector<1x128xf32> to vector<288x128xf32>
    %5 = arith.addf %2, %4 : vector<288x128xf32>
    %c0_5 = arith.constant 0 : index
    %c0_6 = arith.constant 0 : index
    %6 = vector.load %arg4[%c0_5, %c0_6] : memref<288x128xf32, #tpu.memory_space<vmem>>, vector<288x128xf32>
    tpu.vector_store %arg4[%c0_5, %c0_6], %5 {strides = array<i32>} : memref<288x128xf32, #tpu.memory_space<vmem>>, vector<288x128xf32>,
    return
  }
  func.func @transform_0(%arg0: i32) -> (i32, i32) {
    %c0_i32 = arith.constant 0 : i32
    %c0_i32_0 = arith.constant 0 : i32
    return %arg0, %c0_i32 : i32, i32
  }
  func.func @transform_1(%arg0: i32) -> (i32, i32) {
    %c0_i32 = arith.constant 0 : i32
    %c0_i32_0 = arith.constant 0 : i32
    %c0_i32_1 = arith.constant 0 : i32
    return %c0_i32, %c0_i32_0 : i32, i32
  }
  func.func @transform_2(%arg0: i32) -> (i32, i32) {
    %c0_i32 = arith.constant 0 : i32
    %c0_i32_0 = arith.constant 0 : i32
    %c0_i32_1 = arith.constant 0 : i32
    return %c0_i32, %c0_i32_0 : i32, i32
  }
  func.func @transform_3(%arg0: i32) -> (i32, i32) {
    %c0_i32 = arith.constant 0 : i32
    %c0_i32_0 = arith.constant 0 : i32
    return %arg0, %c0_i32 : i32, i32
  }
}

module attributes {stable_mosaic.version = 11 : i64} {
  func.func @_mm_bias_kernel(%arg0: i32, %arg1: memref<288x216xbf16, #tpu.memory_space<vmem>>, %arg2: memref<216x128xbf16, #tpu.memory_space<vmem>>, %arg3: memref<1x128xf32, #tpu.memory_space<vmem>>, %arg4: memref<288x128xf32, #tpu.memory_space<vmem>>) attributes {dimension_semantics = [#tpu.dimension_semantics<parallel>], iteration_bounds = array<i64: 1>, scalar_prefetch = 0 : i64, scratch_operands = 0 : i64, tpu.core_type = #tpu.core_type<tc>, window_params = [{transform_indices = @transform_0, window_bounds = array<i64: 288, 216>}, {pipeline_mode = #tpu.pipeline_mode<synchronous>, transform_indices = @transform_1, window_bounds = array<i64: 216, 128>}, {pipeline_mode = #tpu.pipeline_mode<synchronous>, transform_indices = @transform_2, window_bounds = array<i64: 1, 128>}, {transform_indices = @transform_3, window_bounds = array<i64: 288, 128>}]} {
    %c0 = arith.constant 0 : index
    %c0_0 = arith.constant 0 : index
    %0 = vector.load %arg1[%c0, %c0_0] : memref<288x216xbf16, #tpu.memory_space<vmem>>, vector<288x216xbf16>
    %c0_1 = arith.constant 0 : index
    %c0_2 = arith.constant 0 : index
    %1 = vector.load %arg2[%c0_1, %c0_2] : memref<216x128xbf16, #tpu.memory_space<vmem>>, vector<216x128xbf16>
    %cst = arith.constant dense<0.000000e+00> : vector<288x128xf32>
    %2 = tpu.matmul %0, %1, %cst {dimension_numbers = #tpu.dot_dimension_numbers<[1], [0], [0], [1], [0, 0, 1, 1], [], []>} : vector<288x216xbf16>, vector<216x128xbf16>, vector<288x128xf32> -> vector<288x128xf32>
    %c0_3 = arith.constant 0 : index
    %c0_4 = arith.constant 0 : index
    %3 = vector.load %arg3[%c0_3, %c0_4] : memref<1x128xf32, #tpu.memory_space<vmem>>, vector<1x128xf32>
    %4 = vector.broadcast %3 : vector<1x128xf32> to vector<288x128xf32>
    %5 = arith.addf %2, %4 : vector<288x128xf32>
    %c0_5 = arith.constant 0 : index
    %c0_6 = arith.constant 0 : index
    %6 = vector.load %arg4[%c0_5, %c0_6] : memref<288x128xf32, #tpu.memory_space<vmem>>, vector<288x128xf32>
    tpu.vector_store %arg4[%c0_5, %c0_6], %5 {strides = array<i32>} : memref<288x128xf32, #tpu.memory_space<vmem>>, vector<288x128xf32>,
    return
  }
  func.func @transform_0(%arg0: i32) -> (i32, i32) {
    %c0_i32 = arith.constant 0 : i32
    %c0_i32_0 = arith.constant 0 : i32
    return %arg0, %c0_i32 : i32, i32
  }
  func.func @transform_1(%arg0: i32) -> (i32, i32) {
    %c0_i32 = arith.constant 0 : i32
    %c0_i32_0 = arith.constant 0 : i32
    %c0_i32_1 = arith.constant 0 : i32
    return %c0_i32, %c0_i32_0 : i32, i32
  }
  func.func @transform_2(%arg0: i32) -> (i32, i32) {
    %c0_i32 = arith.constant 0 : i32
    %c0_i32_0 = arith.constant 0 : i32
    %c0_i32_1 = arith.constant 0 : i32
    return %c0_i32, %c0_i32_0 : i32, i32
  }
  func.func @transform_3(%arg0: i32) -> (i32, i32) {
    %c0_i32 = arith.constant 0 : i32
    %c0_i32_0 = arith.constant 0 : i32
    return %arg0, %c0_i32 : i32, i32
  }
}

module attributes {stable_mosaic.version = 11 : i64} {
  func.func @_mm_bias_kernel(%arg0: i32, %arg1: memref<288x400xbf16, #tpu.memory_space<vmem>>, %arg2: memref<400x128xbf16, #tpu.memory_space<vmem>>, %arg3: memref<1x128xf32, #tpu.memory_space<vmem>>, %arg4: memref<288x128xf32, #tpu.memory_space<vmem>>) attributes {dimension_semantics = [#tpu.dimension_semantics<parallel>], iteration_bounds = array<i64: 1>, scalar_prefetch = 0 : i64, scratch_operands = 0 : i64, tpu.core_type = #tpu.core_type<tc>, window_params = [{transform_indices = @transform_0, window_bounds = array<i64: 288, 400>}, {pipeline_mode = #tpu.pipeline_mode<synchronous>, transform_indices = @transform_1, window_bounds = array<i64: 400, 128>}, {pipeline_mode = #tpu.pipeline_mode<synchronous>, transform_indices = @transform_2, window_bounds = array<i64: 1, 128>}, {transform_indices = @transform_3, window_bounds = array<i64: 288, 128>}]} {
    %c0 = arith.constant 0 : index
    %c0_0 = arith.constant 0 : index
    %0 = vector.load %arg1[%c0, %c0_0] : memref<288x400xbf16, #tpu.memory_space<vmem>>, vector<288x400xbf16>
    %c0_1 = arith.constant 0 : index
    %c0_2 = arith.constant 0 : index
    %1 = vector.load %arg2[%c0_1, %c0_2] : memref<400x128xbf16, #tpu.memory_space<vmem>>, vector<400x128xbf16>
    %cst = arith.constant dense<0.000000e+00> : vector<288x128xf32>
    %2 = tpu.matmul %0, %1, %cst {dimension_numbers = #tpu.dot_dimension_numbers<[1], [0], [0], [1], [0, 0, 1, 1], [], []>} : vector<288x400xbf16>, vector<400x128xbf16>, vector<288x128xf32> -> vector<288x128xf32>
    %c0_3 = arith.constant 0 : index
    %c0_4 = arith.constant 0 : index
    %3 = vector.load %arg3[%c0_3, %c0_4] : memref<1x128xf32, #tpu.memory_space<vmem>>, vector<1x128xf32>
    %4 = vector.broadcast %3 : vector<1x128xf32> to vector<288x128xf32>
    %5 = arith.addf %2, %4 : vector<288x128xf32>
    %c0_5 = arith.constant 0 : index
    %c0_6 = arith.constant 0 : index
    %6 = vector.load %arg4[%c0_5, %c0_6] : memref<288x128xf32, #tpu.memory_space<vmem>>, vector<288x128xf32>
    tpu.vector_store %arg4[%c0_5, %c0_6], %5 {strides = array<i32>} : memref<288x128xf32, #tpu.memory_space<vmem>>, vector<288x128xf32>,
    return
  }
  func.func @transform_0(%arg0: i32) -> (i32, i32) {
    %c0_i32 = arith.constant 0 : i32
    %c0_i32_0 = arith.constant 0 : i32
    return %arg0, %c0_i32 : i32, i32
  }
  func.func @transform_1(%arg0: i32) -> (i32, i32) {
    %c0_i32 = arith.constant 0 : i32
    %c0_i32_0 = arith.constant 0 : i32
    %c0_i32_1 = arith.constant 0 : i32
    return %c0_i32, %c0_i32_0 : i32, i32
  }
  func.func @transform_2(%arg0: i32) -> (i32, i32) {
    %c0_i32 = arith.constant 0 : i32
    %c0_i32_0 = arith.constant 0 : i32
    %c0_i32_1 = arith.constant 0 : i32
    return %c0_i32, %c0_i32_0 : i32, i32
  }
  func.func @transform_3(%arg0: i32) -> (i32, i32) {
    %c0_i32 = arith.constant 0 : i32
    %c0_i32_0 = arith.constant 0 : i32
    return %arg0, %c0_i32 : i32, i32
  }
}

module attributes {stable_mosaic.version = 11 : i64} {
  func.func @_mm4_maxpool_relu_kernel(%arg0: i32, %arg1: memref<32x2200xbf16, #tpu.memory_space<vmem>>, %arg2: memref<32x2200xbf16, #tpu.memory_space<vmem>>, %arg3: memref<32x2200xbf16, #tpu.memory_space<vmem>>, %arg4: memref<32x2200xbf16, #tpu.memory_space<vmem>>, %arg5: memref<2200x128xbf16, #tpu.memory_space<vmem>>, %arg6: memref<1x128xf32, #tpu.memory_space<vmem>>, %arg7: memref<32x128xf32, #tpu.memory_space<vmem>>) attributes {dimension_semantics = [#tpu.dimension_semantics<parallel>], iteration_bounds = array<i64: 1>, scalar_prefetch = 0 : i64, scratch_operands = 0 : i64, tpu.core_type = #tpu.core_type<tc>, window_params = [{transform_indices = @transform_0, window_bounds = array<i64: 32, 2200>}, {transform_indices = @transform_1, window_bounds = array<i64: 32, 2200>}, {transform_indices = @transform_2, window_bounds = array<i64: 32, 2200>}, {transform_indices = @transform_3, window_bounds = array<i64: 32, 2200>}, {pipeline_mode = #tpu.pipeline_mode<synchronous>, transform_indices = @transform_4, window_bounds = array<i64: 2200, 128>}, {pipeline_mode = #tpu.pipeline_mode<synchronous>, transform_indices = @transform_5, window_bounds = array<i64: 1, 128>}, {transform_indices = @transform_6, window_bounds = array<i64: 32, 128>}]} {
    %c0 = arith.constant 0 : index
    %c0_0 = arith.constant 0 : index
    %0 = vector.load %arg5[%c0, %c0_0] : memref<2200x128xbf16, #tpu.memory_space<vmem>>, vector<2200x128xbf16>
    %c0_1 = arith.constant 0 : index
    %c0_2 = arith.constant 0 : index
    %1 = vector.load %arg1[%c0_1, %c0_2] : memref<32x2200xbf16, #tpu.memory_space<vmem>>, vector<32x2200xbf16>
    %cst = arith.constant dense<0.000000e+00> : vector<32x128xf32>
    %2 = tpu.matmul %1, %0, %cst {dimension_numbers = #tpu.dot_dimension_numbers<[1], [0], [0], [1], [0, 0, 1, 1], [], []>} : vector<32x2200xbf16>, vector<2200x128xbf16>, vector<32x128xf32> -> vector<32x128xf32>
    %c0_3 = arith.constant 0 : index
    %c0_4 = arith.constant 0 : index
    %3 = vector.load %arg2[%c0_3, %c0_4] : memref<32x2200xbf16, #tpu.memory_space<vmem>>, vector<32x2200xbf16>
    %cst_5 = arith.constant dense<0.000000e+00> : vector<32x128xf32>
    %4 = tpu.matmul %3, %0, %cst_5 {dimension_numbers = #tpu.dot_dimension_numbers<[1], [0], [0], [1], [0, 0, 1, 1], [], []>} : vector<32x2200xbf16>, vector<2200x128xbf16>, vector<32x128xf32> -> vector<32x128xf32>
    %c0_6 = arith.constant 0 : index
    %c0_7 = arith.constant 0 : index
    %5 = vector.load %arg3[%c0_6, %c0_7] : memref<32x2200xbf16, #tpu.memory_space<vmem>>, vector<32x2200xbf16>
    %cst_8 = arith.constant dense<0.000000e+00> : vector<32x128xf32>
    %6 = tpu.matmul %5, %0, %cst_8 {dimension_numbers = #tpu.dot_dimension_numbers<[1], [0], [0], [1], [0, 0, 1, 1], [], []>} : vector<32x2200xbf16>, vector<2200x128xbf16>, vector<32x128xf32> -> vector<32x128xf32>
    %c0_9 = arith.constant 0 : index
    %c0_10 = arith.constant 0 : index
    %7 = vector.load %arg4[%c0_9, %c0_10] : memref<32x2200xbf16, #tpu.memory_space<vmem>>, vector<32x2200xbf16>
    %cst_11 = arith.constant dense<0.000000e+00> : vector<32x128xf32>
    %8 = tpu.matmul %7, %0, %cst_11 {dimension_numbers = #tpu.dot_dimension_numbers<[1], [0], [0], [1], [0, 0, 1, 1], [], []>} : vector<32x2200xbf16>, vector<2200x128xbf16>, vector<32x128xf32> -> vector<32x128xf32>
    %9 = arith.maximumf %2, %4 : vector<32x128xf32>
    %10 = arith.maximumf %6, %8 : vector<32x128xf32>
    %11 = arith.maximumf %9, %10 : vector<32x128xf32>
    %c0_12 = arith.constant 0 : index
    %c0_13 = arith.constant 0 : index
    %12 = vector.load %arg6[%c0_12, %c0_13] : memref<1x128xf32, #tpu.memory_space<vmem>>, vector<1x128xf32>
    %13 = vector.broadcast %12 : vector<1x128xf32> to vector<32x128xf32>
    %14 = arith.addf %11, %13 : vector<32x128xf32>
    %cst_14 = arith.constant 0.000000e+00 : f32
    %15 = vector.broadcast %cst_14 : f32 to vector<32x128xf32>
    %16 = arith.maximumf %14, %15 : vector<32x128xf32>
    %c0_15 = arith.constant 0 : index
    %c0_16 = arith.constant 0 : index
    %17 = vector.load %arg7[%c0_15, %c0_16] : memref<32x128xf32, #tpu.memory_space<vmem>>, vector<32x128xf32>
    tpu.vector_store %arg7[%c0_15, %c0_16], %16 {strides = array<i32>} : memref<32x128xf32, #tpu.memory_space<vmem>>, vector<32x128xf32>,
    return
  }
  func.func @transform_0(%arg0: i32) -> (i32, i32) {
    %c0_i32 = arith.constant 0 : i32
    %c0_i32_0 = arith.constant 0 : i32
    return %arg0, %c0_i32 : i32, i32
  }
  func.func @transform_1(%arg0: i32) -> (i32, i32) {
    %c0_i32 = arith.constant 0 : i32
    %c0_i32_0 = arith.constant 0 : i32
    return %arg0, %c0_i32 : i32, i32
  }
  func.func @transform_2(%arg0: i32) -> (i32, i32) {
    %c0_i32 = arith.constant 0 : i32
    %c0_i32_0 = arith.constant 0 : i32
    return %arg0, %c0_i32 : i32, i32
  }
  func.func @transform_3(%arg0: i32) -> (i32, i32) {
    %c0_i32 = arith.constant 0 : i32
    %c0_i32_0 = arith.constant 0 : i32
    return %arg0, %c0_i32 : i32, i32
  }
  func.func @transform_4(%arg0: i32) -> (i32, i32) {
    %c0_i32 = arith.constant 0 : i32
    %c0_i32_0 = arith.constant 0 : i32
    %c0_i32_1 = arith.constant 0 : i32
    return %c0_i32, %c0_i32_0 : i32, i32
  }
  func.func @transform_5(%arg0: i32) -> (i32, i32) {
    %c0_i32 = arith.constant 0 : i32
    %c0_i32_0 = arith.constant 0 : i32
    %c0_i32_1 = arith.constant 0 : i32
    return %c0_i32, %c0_i32_0 : i32, i32
  }
  func.func @transform_6(%arg0: i32) -> (i32, i32) {
    %c0_i32 = arith.constant 0 : i32
    %c0_i32_0 = arith.constant 0 : i32
    return %arg0, %c0_i32 : i32, i32
  }
}

module attributes {stable_mosaic.version = 11 : i64} {
  func.func @_mm_bias_kernel(%arg0: i32, %arg1: memref<32x180xbf16, #tpu.memory_space<vmem>>, %arg2: memref<180x128xbf16, #tpu.memory_space<vmem>>, %arg3: memref<1x128xf32, #tpu.memory_space<vmem>>, %arg4: memref<32x128xf32, #tpu.memory_space<vmem>>) attributes {dimension_semantics = [#tpu.dimension_semantics<parallel>], iteration_bounds = array<i64: 1>, scalar_prefetch = 0 : i64, scratch_operands = 0 : i64, tpu.core_type = #tpu.core_type<tc>, window_params = [{transform_indices = @transform_0, window_bounds = array<i64: 32, 180>}, {pipeline_mode = #tpu.pipeline_mode<synchronous>, transform_indices = @transform_1, window_bounds = array<i64: 180, 128>}, {pipeline_mode = #tpu.pipeline_mode<synchronous>, transform_indices = @transform_2, window_bounds = array<i64: 1, 128>}, {transform_indices = @transform_3, window_bounds = array<i64: 32, 128>}]} {
    %c0 = arith.constant 0 : index
    %c0_0 = arith.constant 0 : index
    %0 = vector.load %arg1[%c0, %c0_0] : memref<32x180xbf16, #tpu.memory_space<vmem>>, vector<32x180xbf16>
    %c0_1 = arith.constant 0 : index
    %c0_2 = arith.constant 0 : index
    %1 = vector.load %arg2[%c0_1, %c0_2] : memref<180x128xbf16, #tpu.memory_space<vmem>>, vector<180x128xbf16>
    %cst = arith.constant dense<0.000000e+00> : vector<32x128xf32>
    %2 = tpu.matmul %0, %1, %cst {dimension_numbers = #tpu.dot_dimension_numbers<[1], [0], [0], [1], [0, 0, 1, 1], [], []>} : vector<32x180xbf16>, vector<180x128xbf16>, vector<32x128xf32> -> vector<32x128xf32>
    %c0_3 = arith.constant 0 : index
    %c0_4 = arith.constant 0 : index
    %3 = vector.load %arg3[%c0_3, %c0_4] : memref<1x128xf32, #tpu.memory_space<vmem>>, vector<1x128xf32>
    %4 = vector.broadcast %3 : vector<1x128xf32> to vector<32x128xf32>
    %5 = arith.addf %2, %4 : vector<32x128xf32>
    %c0_5 = arith.constant 0 : index
    %c0_6 = arith.constant 0 : index
    %6 = vector.load %arg4[%c0_5, %c0_6] : memref<32x128xf32, #tpu.memory_space<vmem>>, vector<32x128xf32>
    tpu.vector_store %arg4[%c0_5, %c0_6], %5 {strides = array<i32>} : memref<32x128xf32, #tpu.memory_space<vmem>>, vector<32x128xf32>,
    return
  }
  func.func @transform_0(%arg0: i32) -> (i32, i32) {
    %c0_i32 = arith.constant 0 : i32
    %c0_i32_0 = arith.constant 0 : i32
    return %arg0, %c0_i32 : i32, i32
  }
  func.func @transform_1(%arg0: i32) -> (i32, i32) {
    %c0_i32 = arith.constant 0 : i32
    %c0_i32_0 = arith.constant 0 : i32
    %c0_i32_1 = arith.constant 0 : i32
    return %c0_i32, %c0_i32_0 : i32, i32
  }
  func.func @transform_2(%arg0: i32) -> (i32, i32) {
    %c0_i32 = arith.constant 0 : i32
    %c0_i32_0 = arith.constant 0 : i32
    %c0_i32_1 = arith.constant 0 : i32
    return %c0_i32, %c0_i32_0 : i32, i32
  }
  func.func @transform_3(%arg0: i32) -> (i32, i32) {
    %c0_i32 = arith.constant 0 : i32
    %c0_i32_0 = arith.constant 0 : i32
    return %arg0, %c0_i32 : i32, i32
  }
}

module attributes {stable_mosaic.version = 11 : i64} {
  func.func @_mm_bias_kernel(%arg0: i32, %arg1: memref<32x144xbf16, #tpu.memory_space<vmem>>, %arg2: memref<144x128xbf16, #tpu.memory_space<vmem>>, %arg3: memref<1x128xf32, #tpu.memory_space<vmem>>, %arg4: memref<32x128xf32, #tpu.memory_space<vmem>>) attributes {dimension_semantics = [#tpu.dimension_semantics<parallel>], iteration_bounds = array<i64: 1>, scalar_prefetch = 0 : i64, scratch_operands = 0 : i64, tpu.core_type = #tpu.core_type<tc>, window_params = [{transform_indices = @transform_0, window_bounds = array<i64: 32, 144>}, {pipeline_mode = #tpu.pipeline_mode<synchronous>, transform_indices = @transform_1, window_bounds = array<i64: 144, 128>}, {pipeline_mode = #tpu.pipeline_mode<synchronous>, transform_indices = @transform_2, window_bounds = array<i64: 1, 128>}, {transform_indices = @transform_3, window_bounds = array<i64: 32, 128>}]} {
    %c0 = arith.constant 0 : index
    %c0_0 = arith.constant 0 : index
    %0 = vector.load %arg1[%c0, %c0_0] : memref<32x144xbf16, #tpu.memory_space<vmem>>, vector<32x144xbf16>
    %c0_1 = arith.constant 0 : index
    %c0_2 = arith.constant 0 : index
    %1 = vector.load %arg2[%c0_1, %c0_2] : memref<144x128xbf16, #tpu.memory_space<vmem>>, vector<144x128xbf16>
    %cst = arith.constant dense<0.000000e+00> : vector<32x128xf32>
    %2 = tpu.matmul %0, %1, %cst {dimension_numbers = #tpu.dot_dimension_numbers<[1], [0], [0], [1], [0, 0, 1, 1], [], []>} : vector<32x144xbf16>, vector<144x128xbf16>, vector<32x128xf32> -> vector<32x128xf32>
    %c0_3 = arith.constant 0 : index
    %c0_4 = arith.constant 0 : index
    %3 = vector.load %arg3[%c0_3, %c0_4] : memref<1x128xf32, #tpu.memory_space<vmem>>, vector<1x128xf32>
    %4 = vector.broadcast %3 : vector<1x128xf32> to vector<32x128xf32>
    %5 = arith.addf %2, %4 : vector<32x128xf32>
    %c0_5 = arith.constant 0 : index
    %c0_6 = arith.constant 0 : index
    %6 = vector.load %arg4[%c0_5, %c0_6] : memref<32x128xf32, #tpu.memory_space<vmem>>, vector<32x128xf32>
    tpu.vector_store %arg4[%c0_5, %c0_6], %5 {strides = array<i32>} : memref<32x128xf32, #tpu.memory_space<vmem>>, vector<32x128xf32>,
    return
  }
  func.func @transform_0(%arg0: i32) -> (i32, i32) {
    %c0_i32 = arith.constant 0 : i32
    %c0_i32_0 = arith.constant 0 : i32
    return %arg0, %c0_i32 : i32, i32
  }
  func.func @transform_1(%arg0: i32) -> (i32, i32) {
    %c0_i32 = arith.constant 0 : i32
    %c0_i32_0 = arith.constant 0 : i32
    %c0_i32_1 = arith.constant 0 : i32
    return %c0_i32, %c0_i32_0 : i32, i32
  }
  func.func @transform_2(%arg0: i32) -> (i32, i32) {
    %c0_i32 = arith.constant 0 : i32
    %c0_i32_0 = arith.constant 0 : i32
    %c0_i32_1 = arith.constant 0 : i32
    return %c0_i32, %c0_i32_0 : i32, i32
  }
  func.func @transform_3(%arg0: i32) -> (i32, i32) {
    %c0_i32 = arith.constant 0 : i32
    %c0_i32_0 = arith.constant 0 : i32
    return %arg0, %c0_i32 : i32, i32
  }
}

module attributes {stable_mosaic.version = 11 : i64} {
  func.func @_mm_bias_kernel(%arg0: i32, %arg1: memref<32x216xbf16, #tpu.memory_space<vmem>>, %arg2: memref<216x128xbf16, #tpu.memory_space<vmem>>, %arg3: memref<1x128xf32, #tpu.memory_space<vmem>>, %arg4: memref<32x128xf32, #tpu.memory_space<vmem>>) attributes {dimension_semantics = [#tpu.dimension_semantics<parallel>], iteration_bounds = array<i64: 1>, scalar_prefetch = 0 : i64, scratch_operands = 0 : i64, tpu.core_type = #tpu.core_type<tc>, window_params = [{transform_indices = @transform_0, window_bounds = array<i64: 32, 216>}, {pipeline_mode = #tpu.pipeline_mode<synchronous>, transform_indices = @transform_1, window_bounds = array<i64: 216, 128>}, {pipeline_mode = #tpu.pipeline_mode<synchronous>, transform_indices = @transform_2, window_bounds = array<i64: 1, 128>}, {transform_indices = @transform_3, window_bounds = array<i64: 32, 128>}]} {
    %c0 = arith.constant 0 : index
    %c0_0 = arith.constant 0 : index
    %0 = vector.load %arg1[%c0, %c0_0] : memref<32x216xbf16, #tpu.memory_space<vmem>>, vector<32x216xbf16>
    %c0_1 = arith.constant 0 : index
    %c0_2 = arith.constant 0 : index
    %1 = vector.load %arg2[%c0_1, %c0_2] : memref<216x128xbf16, #tpu.memory_space<vmem>>, vector<216x128xbf16>
    %cst = arith.constant dense<0.000000e+00> : vector<32x128xf32>
    %2 = tpu.matmul %0, %1, %cst {dimension_numbers = #tpu.dot_dimension_numbers<[1], [0], [0], [1], [0, 0, 1, 1], [], []>} : vector<32x216xbf16>, vector<216x128xbf16>, vector<32x128xf32> -> vector<32x128xf32>
    %c0_3 = arith.constant 0 : index
    %c0_4 = arith.constant 0 : index
    %3 = vector.load %arg3[%c0_3, %c0_4] : memref<1x128xf32, #tpu.memory_space<vmem>>, vector<1x128xf32>
    %4 = vector.broadcast %3 : vector<1x128xf32> to vector<32x128xf32>
    %5 = arith.addf %2, %4 : vector<32x128xf32>
    %c0_5 = arith.constant 0 : index
    %c0_6 = arith.constant 0 : index
    %6 = vector.load %arg4[%c0_5, %c0_6] : memref<32x128xf32, #tpu.memory_space<vmem>>, vector<32x128xf32>
    tpu.vector_store %arg4[%c0_5, %c0_6], %5 {strides = array<i32>} : memref<32x128xf32, #tpu.memory_space<vmem>>, vector<32x128xf32>,
    return
  }
  func.func @transform_0(%arg0: i32) -> (i32, i32) {
    %c0_i32 = arith.constant 0 : i32
    %c0_i32_0 = arith.constant 0 : i32
    return %arg0, %c0_i32 : i32, i32
  }
  func.func @transform_1(%arg0: i32) -> (i32, i32) {
    %c0_i32 = arith.constant 0 : i32
    %c0_i32_0 = arith.constant 0 : i32
    %c0_i32_1 = arith.constant 0 : i32
    return %c0_i32, %c0_i32_0 : i32, i32
  }
  func.func @transform_2(%arg0: i32) -> (i32, i32) {
    %c0_i32 = arith.constant 0 : i32
    %c0_i32_0 = arith.constant 0 : i32
    %c0_i32_1 = arith.constant 0 : i32
    return %c0_i32, %c0_i32_0 : i32, i32
  }
  func.func @transform_3(%arg0: i32) -> (i32, i32) {
    %c0_i32 = arith.constant 0 : i32
    %c0_i32_0 = arith.constant 0 : i32
    return %arg0, %c0_i32 : i32, i32
  }
}

module attributes {stable_mosaic.version = 11 : i64} {
  func.func @_mm_bias_kernel(%arg0: i32, %arg1: memref<32x400xbf16, #tpu.memory_space<vmem>>, %arg2: memref<400x128xbf16, #tpu.memory_space<vmem>>, %arg3: memref<1x128xf32, #tpu.memory_space<vmem>>, %arg4: memref<32x128xf32, #tpu.memory_space<vmem>>) attributes {dimension_semantics = [#tpu.dimension_semantics<parallel>], iteration_bounds = array<i64: 1>, scalar_prefetch = 0 : i64, scratch_operands = 0 : i64, tpu.core_type = #tpu.core_type<tc>, window_params = [{transform_indices = @transform_0, window_bounds = array<i64: 32, 400>}, {pipeline_mode = #tpu.pipeline_mode<synchronous>, transform_indices = @transform_1, window_bounds = array<i64: 400, 128>}, {pipeline_mode = #tpu.pipeline_mode<synchronous>, transform_indices = @transform_2, window_bounds = array<i64: 1, 128>}, {transform_indices = @transform_3, window_bounds = array<i64: 32, 128>}]} {
    %c0 = arith.constant 0 : index
    %c0_0 = arith.constant 0 : index
    %0 = vector.load %arg1[%c0, %c0_0] : memref<32x400xbf16, #tpu.memory_space<vmem>>, vector<32x400xbf16>
    %c0_1 = arith.constant 0 : index
    %c0_2 = arith.constant 0 : index
    %1 = vector.load %arg2[%c0_1, %c0_2] : memref<400x128xbf16, #tpu.memory_space<vmem>>, vector<400x128xbf16>
    %cst = arith.constant dense<0.000000e+00> : vector<32x128xf32>
    %2 = tpu.matmul %0, %1, %cst {dimension_numbers = #tpu.dot_dimension_numbers<[1], [0], [0], [1], [0, 0, 1, 1], [], []>} : vector<32x400xbf16>, vector<400x128xbf16>, vector<32x128xf32> -> vector<32x128xf32>
    %c0_3 = arith.constant 0 : index
    %c0_4 = arith.constant 0 : index
    %3 = vector.load %arg3[%c0_3, %c0_4] : memref<1x128xf32, #tpu.memory_space<vmem>>, vector<1x128xf32>
    %4 = vector.broadcast %3 : vector<1x128xf32> to vector<32x128xf32>
    %5 = arith.addf %2, %4 : vector<32x128xf32>
    %c0_5 = arith.constant 0 : index
    %c0_6 = arith.constant 0 : index
    %6 = vector.load %arg4[%c0_5, %c0_6] : memref<32x128xf32, #tpu.memory_space<vmem>>, vector<32x128xf32>
    tpu.vector_store %arg4[%c0_5, %c0_6], %5 {strides = array<i32>} : memref<32x128xf32, #tpu.memory_space<vmem>>, vector<32x128xf32>,
    return
  }
  func.func @transform_0(%arg0: i32) -> (i32, i32) {
    %c0_i32 = arith.constant 0 : i32
    %c0_i32_0 = arith.constant 0 : i32
    return %arg0, %c0_i32 : i32, i32
  }
  func.func @transform_1(%arg0: i32) -> (i32, i32) {
    %c0_i32 = arith.constant 0 : i32
    %c0_i32_0 = arith.constant 0 : i32
    %c0_i32_1 = arith.constant 0 : i32
    return %c0_i32, %c0_i32_0 : i32, i32
  }
  func.func @transform_2(%arg0: i32) -> (i32, i32) {
    %c0_i32 = arith.constant 0 : i32
    %c0_i32_0 = arith.constant 0 : i32
    %c0_i32_1 = arith.constant 0 : i32
    return %c0_i32, %c0_i32_0 : i32, i32
  }
  func.func @transform_3(%arg0: i32) -> (i32, i32) {
    %c0_i32 = arith.constant 0 : i32
    %c0_i32_0 = arith.constant 0 : i32
    return %arg0, %c0_i32 : i32, i32
  }
}

module attributes {stable_mosaic.version = 11 : i64} {
  func.func @_mm_bias_kernel(%arg0: i32, %arg1: memref<2x1408xbf16, #tpu.memory_space<vmem>>, %arg2: memref<1408x128xbf16, #tpu.memory_space<vmem>>, %arg3: memref<1x128xf32, #tpu.memory_space<vmem>>, %arg4: memref<2x128xf32, #tpu.memory_space<vmem>>) attributes {dimension_semantics = [#tpu.dimension_semantics<parallel>], iteration_bounds = array<i64: 1>, scalar_prefetch = 0 : i64, scratch_operands = 0 : i64, tpu.core_type = #tpu.core_type<tc>, window_params = [{transform_indices = @transform_0, window_bounds = array<i64: 2, 1408>}, {pipeline_mode = #tpu.pipeline_mode<synchronous>, transform_indices = @transform_1, window_bounds = array<i64: 1408, 128>}, {pipeline_mode = #tpu.pipeline_mode<synchronous>, transform_indices = @transform_2, window_bounds = array<i64: 1, 128>}, {transform_indices = @transform_3, window_bounds = array<i64: 2, 128>}]} {
    %c0 = arith.constant 0 : index
    %c0_0 = arith.constant 0 : index
    %0 = vector.load %arg1[%c0, %c0_0] : memref<2x1408xbf16, #tpu.memory_space<vmem>>, vector<2x1408xbf16>
    %c0_1 = arith.constant 0 : index
    %c0_2 = arith.constant 0 : index
    %1 = vector.load %arg2[%c0_1, %c0_2] : memref<1408x128xbf16, #tpu.memory_space<vmem>>, vector<1408x128xbf16>
    %cst = arith.constant dense<0.000000e+00> : vector<2x128xf32>
    %2 = tpu.matmul %0, %1, %cst {dimension_numbers = #tpu.dot_dimension_numbers<[1], [0], [0], [1], [0, 0, 1, 1], [], []>} : vector<2x1408xbf16>, vector<1408x128xbf16>, vector<2x128xf32> -> vector<2x128xf32>
    %c0_3 = arith.constant 0 : index
    %c0_4 = arith.constant 0 : index
    %3 = vector.load %arg3[%c0_3, %c0_4] : memref<1x128xf32, #tpu.memory_space<vmem>>, vector<1x128xf32>
    %4 = vector.broadcast %3 : vector<1x128xf32> to vector<2x128xf32>
    %5 = arith.addf %2, %4 : vector<2x128xf32>
    %c0_5 = arith.constant 0 : index
    %c0_6 = arith.constant 0 : index
    %6 = vector.load %arg4[%c0_5, %c0_6] : memref<2x128xf32, #tpu.memory_space<vmem>>, vector<2x128xf32>
    tpu.vector_store %arg4[%c0_5, %c0_6], %5 {strides = array<i32>} : memref<2x128xf32, #tpu.memory_space<vmem>>, vector<2x128xf32>,
    return
  }
  func.func @transform_0(%arg0: i32) -> (i32, i32) {
    %c0_i32 = arith.constant 0 : i32
    %c0_i32_0 = arith.constant 0 : i32
    return %arg0, %c0_i32 : i32, i32
  }
  func.func @transform_1(%arg0: i32) -> (i32, i32) {
    %c0_i32 = arith.constant 0 : i32
    %c0_i32_0 = arith.constant 0 : i32
    %c0_i32_1 = arith.constant 0 : i32
    return %c0_i32, %c0_i32_0 : i32, i32
  }
  func.func @transform_2(%arg0: i32) -> (i32, i32) {
    %c0_i32 = arith.constant 0 : i32
    %c0_i32_0 = arith.constant 0 : i32
    %c0_i32_1 = arith.constant 0 : i32
    return %c0_i32, %c0_i32_0 : i32, i32
  }
  func.func @transform_3(%arg0: i32) -> (i32, i32) {
    %c0_i32 = arith.constant 0 : i32
    %c0_i32_0 = arith.constant 0 : i32
    return %arg0, %c0_i32 : i32, i32
  }
}

</mosaic_0001>

<llo_original>
// kernel: net_forward.11
$region0: #{net_forward.11}
  #allocation0 [shape = 'u32[]', space=smem, size = 0x4, offset = 0x4, fixed_abs, tag = 'smem constant byte address 0x4 - core index']
  #allocation1 [shape = 'u32[144,128]{1,0:T(1,128)}', space=vmem, size = 0x12000, scoped, tag = 'internal scratch']
  %s0 = inlined_call_operand.vmem [shape: bf16[288,25], index: 0, kind: input, shape index: {}]
  %s1 = inlined_call_operand.vmem [shape: bf16[288,25], index: 1, kind: input, shape index: {}]
  %s2 = inlined_call_operand.vmem [shape: bf16[288,25], index: 2, kind: input, shape index: {}]
  %s3 = inlined_call_operand.vmem [shape: bf16[288,25], index: 3, kind: input, shape index: {}]
  %s4 = inlined_call_operand.vmem [shape: bf16[25,128], index: 4, kind: input, shape index: {}]
  %s5 = inlined_call_operand.vmem [shape: f32[1,128], index: 5, kind: input, shape index: {}]
  %s6 = inlined_call_operand.vmem [shape: f32[288,128], index: 6, kind: output, shape index: {}]
  %s7 = sld [smem:[#allocation0]]
  $region34: #{net_forward.11} parent=0
    _
  %s9 = ssub.s32 1, %s7
  %s10 = scalar_select 0, %s9, %s7
  // Predicated region
  $region2: #{net_forward.11} parent=0 // pred_check
    _
  $region3: #{net_forward.11} parent=0 // pred_check_branch
    %12 = sbr.rel (0) target = $region5
  $region4: #{net_forward.11} parent=0 // pred_region
    _
  $region5: #{net_forward.11} parent=0 // pred_fallthru
    _
  // Predicated region
  $region6: #{net_forward.11} parent=0 // pred_check
    _
  $region7: #{net_forward.11} parent=0 // pred_check_branch
    %14 = sbr.rel (0) target = $region9
  $region8: #{net_forward.11} parent=0 // pred_region
    _
  $region9: #{net_forward.11} parent=0 // pred_fallthru
    _
  // Predicated region
  $region10: #{net_forward.11} parent=0 // pred_check
    _
  $region11: #{net_forward.11} parent=0 // pred_check_branch
    %16 = sbr.rel (0) target = $region13
  $region12: #{net_forward.11} parent=0 // pred_region
    _
  $region13: #{net_forward.11} parent=0 // pred_fallthru
    _
  // Predicated region
  $region14: #{net_forward.11} parent=0 // pred_check
    _
  $region15: #{net_forward.11} parent=0 // pred_check_branch
    %18 = sbr.rel (0) target = $region17
  $region16: #{net_forward.11} parent=0 // pred_region
    _
  $region17: #{net_forward.11} parent=0 // pred_fallthru
    _
  // Predicated region
  $region18: #{net_forward.11} parent=0 // pred_check
    _
  $region19: #{net_forward.11} parent=0 // pred_check_branch
    %20 = sbr.rel (0) target = $region21
  $region20: #{net_forward.11} parent=0 // pred_region
    _
  $region21: #{net_forward.11} parent=0 // pred_fallthru
    _
  // Predicated region
  $region22: #{net_forward.11} parent=0 // pred_check
    _
  $region23: #{net_forward.11} parent=0 // pred_check_branch
    %22 = sbr.rel (0) target = $region25
  $region24: #{net_forward.11} parent=0 // pred_region
    _
  $region25: #{net_forward.11} parent=0 // pred_fallthru
    _
  %v24 = vld [vmem:[%s4] sm:$0xf]
  %v25 = vld [vmem:[%s4 + $0x4] sm:$0xf]
  %v26 = vld [vmem:[%s4 + $0x8] sm:$0xf]
  %v27 = vld [vmem:[%s4 + $0xc] sm:$0x1]
  %v28 = vld [vmem:[%s0] sm:$0xf]
  %v29 = vld [vmem:[%s0 + $0x4] sm:$0xf]
  %v30 = vld [vmem:[%s0 + $0x8] sm:$0xf]
  %v31 = vld [vmem:[%s0 + $0xc] sm:$0xf]
  %v32 = vld [vmem:[%s0 + $0x10] sm:$0xf]
  %v33 = vld [vmem:[%s0 + $0x14] sm:$0xf]
  %v34 = vld [vmem:[%s0 + $0x18] sm:$0xf]
  %v35 = vld [vmem:[%s0 + $0x1c] sm:$0xf]
  %v36 = vld [vmem:[%s0 + $0x20] sm:$0xf]
  %v37 = vld [vmem:[%s0 + $0x24] sm:$0xf]
  %v38 = vld [vmem:[%s0 + $0x28] sm:$0xf]
  %v39 = vld [vmem:[%s0 + $0x2c] sm:$0xf]
  %v40 = vld [vmem:[%s0 + $0x30] sm:$0xf]
  %v41 = vld [vmem:[%s0 + $0x34] sm:$0xf]
  %v42 = vld [vmem:[%s0 + $0x38] sm:$0xf]
  %v43 = vld [vmem:[%s0 + $0x3c] sm:$0xf]
  %v44 = vld [vmem:[%s0 + $0x40] sm:$0xf]
  %v45 = vld [vmem:[%s0 + $0x44] sm:$0xf]
  %v46 = vld [vmem:[%s0 + $0x48] sm:$0xf]
  %v47 = vld [vmem:[%s0 + $0x4c] sm:$0xf]
  %v48 = vld [vmem:[%s0 + $0x50] sm:$0xf]
  %v49 = vld [vmem:[%s0 + $0x54] sm:$0xf]
  %v50 = vld [vmem:[%s0 + $0x58] sm:$0xf]
  %v51 = vld [vmem:[%s0 + $0x5c] sm:$0xf]
  %v52 = vld [vmem:[%s0 + $0x60] sm:$0xf]
  %v53 = vld [vmem:[%s0 + $0x64] sm:$0xf]
  %v54 = vld [vmem:[%s0 + $0x68] sm:$0xf]
  %v55 = vld [vmem:[%s0 + $0x6c] sm:$0xf]
  %v56 = vld [vmem:[%s0 + $0x70] sm:$0xf]
  %v57 = vld [vmem:[%s0 + $0x74] sm:$0xf]
  %v58 = vld [vmem:[%s0 + $0x78] sm:$0xf]
  %v59 = vld [vmem:[%s0 + $0x7c] sm:$0xf]
  %v60 = vld [vmem:[%s0 + $0x80] sm:$0xf]
  %v61 = vld [vmem:[%s0 + $0x84] sm:$0xf]
  %v62 = vld [vmem:[%s0 + $0x88] sm:$0xf]
  %v63 = vld [vmem:[%s0 + $0x8c] sm:$0xf]
  %v100 = vunpack.c.l.b16 %v28
  %v101 = vunpack.c.l.b16 %v29
  %v102 = vunpack.c.l.b16 %v30
  %v103 = vunpack.c.l.b16 %v31
  %v104 = vunpack.c.l.b16 %v32
  %v105 = vunpack.c.l.b16 %v33
  %v106 = vunpack.c.l.b16 %v34
  %v107 = vunpack.c.l.b16 %v35
  %v108 = vunpack.c.l.b16 %v36
  %v109 = vunpack.c.l.b16 %v37
  %v110 = vunpack.c.l.b16 %v38
  %v111 = vunpack.c.l.b16 %v39
  %v112 = vunpack.c.l.b16 %v40
  %v113 = vunpack.c.l.b16 %v41
  %v114 = vunpack.c.l.b16 %v42
  %v115 = vunpack.c.l.b16 %v43
  %v116 = vunpack.c.l.b16 %v44
  %v117 = vunpack.c.l.b16 %v45
  %v118 = vunpack.c.l.b16 %v46
  %v119 = vunpack.c.l.b16 %v47
  %v120 = vunpack.c.l.b16 %v48
  %v121 = vunpack.c.l.b16 %v49
  %v122 = vunpack.c.l.b16 %v50
  %v123 = vunpack.c.l.b16 %v51
  %v124 = vunpack.c.l.b16 %v52
  %v125 = vunpack.c.l.b16 %v53
  %v126 = vunpack.c.l.b16 %v54
  %v127 = vunpack.c.l.b16 %v55
  %v128 = vunpack.c.l.b16 %v56
  %v129 = vunpack.c.l.b16 %v57
  %v130 = vunpack.c.l.b16 %v58
  %v131 = vunpack.c.l.b16 %v59
  %v132 = vunpack.c.l.b16 %v60
  %v133 = vunpack.c.l.b16 %v61
  %v134 = vunpack.c.l.b16 %v62
  %v135 = vunpack.c.l.b16 %v63
  %v136 = vpack.c.b16 %v101, %v100
  %v137 = vpack.c.b16 %v103, %v102
  %v138 = vpack.c.b16 %v105, %v104
  %v139 = vpack.c.b16 %v107, %v106
  %v140 = vpack.c.b16 %v109, %v108
  %v141 = vpack.c.b16 %v111, %v110
  %v142 = vpack.c.b16 %v113, %v112
  %v143 = vpack.c.b16 %v115, %v114
  %v144 = vpack.c.b16 %v117, %v116
  %v145 = vpack.c.b16 %v119, %v118
  %v146 = vpack.c.b16 %v121, %v120
  %v147 = vpack.c.b16 %v123, %v122
  %v148 = vpack.c.b16 %v125, %v124
  %v149 = vpack.c.b16 %v127, %v126
  %v150 = vpack.c.b16 %v129, %v128
  %v151 = vpack.c.b16 %v131, %v130
  %v152 = vpack.c.b16 %v133, %v132
  %v153 = vpack.c.b16 %v135, %v134
  %v158 = vunpack.c.l.b16 %v24
  %v159 = vunpack.c.l.b16 %v25
  %v160 = vunpack.c.l.b16 %v26
  %v161 = vunpack.c.l.b16 %v27
  %v162 = vpack.c.b16 %v159, %v158
  %v163 = vpack.c.b16 %v161, %v160
  %vm165 = vcmask 203776
  %v167 = vsel %vm165, %v136, 0
  %v170 = vsel %vm165, %v137, 0
  %v173 = vsel %vm165, %v138, 0
  %v176 = vsel %vm165, %v139, 0
  %v179 = vsel %vm165, %v140, 0
  %v182 = vsel %vm165, %v141, 0
  %v185 = vsel %vm165, %v142, 0
  %v188 = vsel %vm165, %v143, 0
  %v191 = vsel %vm165, %v144, 0
  %v194 = vsel %vm165, %v145, 0
  %v197 = vsel %vm165, %v146, 0
  %v200 = vsel %vm165, %v147, 0
  %v203 = vsel %vm165, %v148, 0
  %v206 = vsel %vm165, %v149, 0
  %v209 = vsel %vm165, %v150, 0
  %v212 = vsel %vm165, %v151, 0
  %v215 = vsel %vm165, %v152, 0
  %v218 = vsel %vm165, %v153, 0
  %vm220 = vcmask 1043456
  %vm221 = vcmask 1044480
  %v222 = vsel %vm220, 4294967295, 65535
  %v223 = vsel %vm221, %v222, 0
  %v225 = vand.u32 %v163, %v223
  %227 = vmatprep.subr.bf16.mxu0 0
  %228 = vmatpush1.bf16.msra.mxu0 %v162
  %229 = vmatprep.subr.bf16.mxu0 0
  %230 = vmatpush1.bf16.msra.mxu0 %v225
  %231 = vmatprep.subr.bf16.mxu0 0
  %232 = vmatpush1.bf16.msra.mxu0 0
  %233 = vmatprep.subr.bf16.mxu0 0
  %234 = vmatpush1.bf16.msra.mxu0 0
  %235 = vmatprep.subr.bf16.mxu0 0
  %236 = vmatpush1.bf16.msra.mxu0 0
  %237 = vmatprep.subr.bf16.mxu0 0
  %238 = vmatpush1.bf16.msra.mxu0 0
  %239 = vmatprep.subr.bf16.mxu0 0
  %240 = vmatpush1.bf16.msra.mxu0 0
  %241 = vmatprep.subr.bf16.mxu0 0
  %242 = vmatpush1.bf16.msra.mxu0 0
  %243 = vmatprep.subr.bf16.mxu0 0
  %244 = vmatpush1.bf16.msra.mxu0 0
  %245 = vmatprep.subr.bf16.mxu0 0
  %246 = vmatpush1.bf16.msra.mxu0 0
  %247 = vmatprep.subr.bf16.mxu0 0
  %248 = vmatpush1.bf16.msra.mxu0 0
  %249 = vmatprep.subr.bf16.mxu0 0
  %250 = vmatpush1.bf16.msra.mxu0 0
  %251 = vmatprep.subr.bf16.mxu0 0
  %252 = vmatpush1.bf16.msra.mxu0 0
  %253 = vmatprep.subr.bf16.mxu0 0
  %254 = vmatpush1.bf16.msra.mxu0 0
  %255 = vmatprep.subr.bf16.mxu0 0
  %256 = vmatpush1.bf16.msra.mxu0 0
  %257 = vmatprep.subr.bf16.mxu0 0
  %258 = vmatpush1.bf16.msra.mxu0 0
  %259 = vmatprep.mubr.bf16.mxu0 0
  %260 = vmatmul.mubr.bf16.gmra.mrb[0].mxu0 %v167
  %v261 = vpop.f32.mrb[0].mxu0
  %v262 = vadd.f32 0.0, %v261
  %v263 = vpop.f32.mrb[0].mxu0
  %v264 = vpop.f32.mrb[0].mxu0
  %v265 = vadd.f32 0.0, %v264
  %v266 = vpop.f32.mrb[0].mxu0
  %267 = vmatprep.mubr.bf16.mxu0 0
  %268 = vmatmul.mubr.bf16.gmra.mrb[0].mxu0 %v170
  %v269 = vpop.f32.mrb[0].mxu0
  %v270 = vadd.f32 0.0, %v269
  %v271 = vpop.f32.mrb[0].mxu0
  %v272 = vpop.f32.mrb[0].mxu0
  %v273 = vadd.f32 0.0, %v272
  %v274 = vpop.f32.mrb[0].mxu0
  %275 = vmatprep.mubr.bf16.mxu0 0
  %276 = vmatmul.mubr.bf16.gmra.mrb[0].mxu0 %v173
  %v277 = vpop.f32.mrb[0].mxu0
  %v278 = vadd.f32 0.0, %v277
  %v279 = vpop.f32.mrb[0].mxu0
  %v280 = vpop.f32.mrb[0].mxu0
  %v281 = vadd.f32 0.0, %v280
  %v282 = vpop.f32.mrb[0].mxu0
  %283 = vmatprep.mubr.bf16.mxu0 0
  %284 = vmatmul.mubr.bf16.gmra.mrb[0].mxu0 %v176
  %v285 = vpop.f32.mrb[0].mxu0
  %v286 = vadd.f32 0.0, %v285
  %v287 = vpop.f32.mrb[0].mxu0
  %v288 = vpop.f32.mrb[0].mxu0
  %v289 = vadd.f32 0.0, %v288
  %v290 = vpop.f32.mrb[0].mxu0
  %291 = vmatprep.mubr.bf16.mxu0 0
  %292 = vmatmul.mubr.bf16.gmra.mrb[0].mxu0 %v179
  %v293 = vpop.f32.mrb[0].mxu0
  %v294 = vadd.f32 0.0, %v293
  %v295 = vpop.f32.mrb[0].mxu0
  %v296 = vpop.f32.mrb[0].mxu0
  %v297 = vadd.f32 0.0, %v296
  %v298 = vpop.f32.mrb[0].mxu0
  %299 = vmatprep.mubr.bf16.mxu0 0
  %300 = vmatmul.mubr.bf16.gmra.mrb[0].mxu0 %v182
  %v301 = vpop.f32.mrb[0].mxu0
  %v302 = vadd.f32 0.0, %v301
  %v303 = vpop.f32.mrb[0].mxu0
  %v304 = vpop.f32.mrb[0].mxu0
  %v305 = vadd.f32 0.0, %v304
  %v306 = vpop.f32.mrb[0].mxu0
  %307 = vmatprep.mubr.bf16.mxu0 0
  %308 = vmatmul.mubr.bf16.gmra.mrb[0].mxu0 %v185
  %v309 = vpop.f32.mrb[0].mxu0
  %v310 = vadd.f32 0.0, %v309
  %v311 = vpop.f32.mrb[0].mxu0
  %v312 = vpop.f32.mrb[0].mxu0
  %v313 = vadd.f32 0.0, %v312
  %v314 = vpop.f32.mrb[0].mxu0
  %315 = vmatprep.mubr.bf16.mxu0 0
  %316 = vmatmul.mubr.bf16.gmra.mrb[0].mxu0 %v188
  %v317 = vpop.f32.mrb[0].mxu0
  %v318 = vadd.f32 0.0, %v317
  %v319 = vpop.f32.mrb[0].mxu0
  %v320 = vpop.f32.mrb[0].mxu0
  %v321 = vadd.f32 0.0, %v320
  %v322 = vpop.f32.mrb[0].mxu0
  %323 = vmatprep.mubr.bf16.mxu0 0
  %324 = vmatmul.mubr.bf16.gmra.mrb[0].mxu0 %v191
  %v325 = vpop.f32.mrb[0].mxu0
  %v326 = vadd.f32 0.0, %v325
  %v327 = vpop.f32.mrb[0].mxu0
  %v328 = vpop.f32.mrb[0].mxu0
  %v329 = vadd.f32 0.0, %v328
  %v330 = vpop.f32.mrb[0].mxu0
  %331 = vmatprep.mubr.bf16.mxu0 0
  %332 = vmatmul.mubr.bf16.gmra.mrb[0].mxu0 %v194
  %v333 = vpop.f32.mrb[0].mxu0
  %v334 = vadd.f32 0.0, %v333
  %v335 = vpop.f32.mrb[0].mxu0
  %v336 = vpop.f32.mrb[0].mxu0
  %v337 = vadd.f32 0.0, %v336
  %v338 = vpop.f32.mrb[0].mxu0
  %339 = vmatprep.mubr.bf16.mxu0 0
  %340 = vmatmul.mubr.bf16.gmra.mrb[0].mxu0 %v197
  %v341 = vpop.f32.mrb[0].mxu0
  %v342 = vadd.f32 0.0, %v341
  %v343 = vpop.f32.mrb[0].mxu0
  %v344 = vpop.f32.mrb[0].mxu0
  %v345 = vadd.f32 0.0, %v344
  %v346 = vpop.f32.mrb[0].mxu0
  %347 = vmatprep.mubr.bf16.mxu0 0
  %348 = vmatmul.mubr.bf16.gmra.mrb[0].mxu0 %v200
  %v349 = vpop.f32.mrb[0].mxu0
  %v350 = vadd.f32 0.0, %v349
  %v351 = vpop.f32.mrb[0].mxu0
  %v352 = vpop.f32.mrb[0].mxu0
  %v353 = vadd.f32 0.0, %v352
  %v354 = vpop.f32.mrb[0].mxu0
  %355 = vmatprep.mubr.bf16.mxu0 0
  %356 = vmatmul.mubr.bf16.gmra.mrb[0].mxu0 %v203
  %v357 = vpop.f32.mrb[0].mxu0
  %v358 = vadd.f32 0.0, %v357
  %v359 = vpop.f32.mrb[0].mxu0
  %v360 = vpop.f32.mrb[0].mxu0
  %v361 = vadd.f32 0.0, %v360
  %v362 = vpop.f32.mrb[0].mxu0
  %363 = vmatprep.mubr.bf16.mxu0 0
  %364 = vmatmul.mubr.bf16.gmra.mrb[0].mxu0 %v206
  %v365 = vpop.f32.mrb[0].mxu0
  %v366 = vadd.f32 0.0, %v365
  %v367 = vpop.f32.mrb[0].mxu0
  %v368 = vpop.f32.mrb[0].mxu0
  %v369 = vadd.f32 0.0, %v368
  %v370 = vpop.f32.mrb[0].mxu0
  %371 = vmatprep.mubr.bf16.mxu0 0
  %372 = vmatmul.mubr.bf16.gmra.mrb[0].mxu0 %v209
  %v373 = vpop.f32.mrb[0].mxu0
  %v374 = vadd.f32 0.0, %v373
  %v375 = vpop.f32.mrb[0].mxu0
  %v376 = vpop.f32.mrb[0].mxu0
  %v377 = vadd.f32 0.0, %v376
  %v378 = vpop.f32.mrb[0].mxu0
  %379 = vmatprep.mubr.bf16.mxu0 0
  %380 = vmatmul.mubr.bf16.gmra.mrb[0].mxu0 %v212
  %v381 = vpop.f32.mrb[0].mxu0
  %v382 = vadd.f32 0.0, %v381
  %v383 = vpop.f32.mrb[0].mxu0
  %v384 = vpop.f32.mrb[0].mxu0
  %v385 = vadd.f32 0.0, %v384
  %v386 = vpop.f32.mrb[0].mxu0
  %387 = vmatprep.mubr.bf16.mxu0 0
  %388 = vmatmul.mubr.bf16.gmra.mrb[0].mxu0 %v215
  %v389 = vpop.f32.mrb[0].mxu0
  %v390 = vadd.f32 0.0, %v389
  %v391 = vpop.f32.mrb[0].mxu0
  %v392 = vpop.f32.mrb[0].mxu0
  %v393 = vadd.f32 0.0, %v392
  %v394 = vpop.f32.mrb[0].mxu0
  %395 = vmatprep.mubr.bf16.mxu0 0
  %396 = vmatmul.mubr.bf16.gmra.mrb[0].mxu0 %v218
  %v397 = vpop.f32.mrb[0].mxu0
  %v398 = vadd.f32 0.0, %v397
  %v399 = vpop.f32.mrb[0].mxu0
  %v400 = vpop.f32.mrb[0].mxu0
  %v401 = vadd.f32 0.0, %v400
  %v402 = vpop.f32.mrb[0].mxu0
  %403 = vdwg.mxu0
  %v404 = vld [vmem:[%s1] sm:$0xf]
  %v405 = vld [vmem:[%s1 + $0x4] sm:$0xf]
  %v406 = vld [vmem:[%s1 + $0x8] sm:$0xf]
  %v407 = vld [vmem:[%s1 + $0xc] sm:$0xf]
  %v408 = vld [vmem:[%s1 + $0x10] sm:$0xf]
  %v409 = vld [vmem:[%s1 + $0x14] sm:$0xf]
  %v410 = vld [vmem:[%s1 + $0x18] sm:$0xf]
  %v411 = vld [vmem:[%s1 + $0x1c] sm:$0xf]
  %v412 = vld [vmem:[%s1 + $0x20] sm:$0xf]
  %v413 = vld [vmem:[%s1 + $0x24] sm:$0xf]
  %v414 = vld [vmem:[%s1 + $0x28] sm:$0xf]
  %v415 = vld [vmem:[%s1 + $0x2c] sm:$0xf]
  %v416 = vld [vmem:[%s1 + $0x30] sm:$0xf]
  %v417 = vld [vmem:[%s1 + $0x34] sm:$0xf]
  %v418 = vld [vmem:[%s1 + $0x38] sm:$0xf]
  %v419 = vld [vmem:[%s1 + $0x3c] sm:$0xf]
  %v420 = vld [vmem:[%s1 + $0x40] sm:$0xf]
  %v421 = vld [vmem:[%s1 + $0x44] sm:$0xf]
  %v422 = vld [vmem:[%s1 + $0x48] sm:$0xf]
  %v423 = vld [vmem:[%s1 + $0x4c] sm:$0xf]
  %v424 = vld [vmem:[%s1 + $0x50] sm:$0xf]
  %v425 = vld [vmem:[%s1 + $0x54] sm:$0xf]
  %v426 = vld [vmem:[%s1 + $0x58] sm:$0xf]
  %v427 = vld [vmem:[%s1 + $0x5c] sm:$0xf]
  %v428 = vld [vmem:[%s1 + $0x60] sm:$0xf]
  %v429 = vld [vmem:[%s1 + $0x64] sm:$0xf]
  %v430 = vld [vmem:[%s1 + $0x68] sm:$0xf]
  %v431 = vld [vmem:[%s1 + $0x6c] sm:$0xf]
  %v432 = vld [vmem:[%s1 + $0x70] sm:$0xf]
  %v433 = vld [vmem:[%s1 + $0x74] sm:$0xf]
  %v434 = vld [vmem:[%s1 + $0x78] sm:$0xf]
  %v435 = vld [vmem:[%s1 + $0x7c] sm:$0xf]
  %v436 = vld [vmem:[%s1 + $0x80] sm:$0xf]
  %v437 = vld [vmem:[%s1 + $0x84] sm:$0xf]
  %v438 = vld [vmem:[%s1 + $0x88] sm:$0xf]
  %v439 = vld [vmem:[%s1 + $0x8c] sm:$0xf]
  %v476 = vunpack.c.l.b16 %v404
  %v477 = vunpack.c.l.b16 %v405
  %v478 = vunpack.c.l.b16 %v406
  %v479 = vunpack.c.l.b16 %v407
  %v480 = vunpack.c.l.b16 %v408
  %v481 = vunpack.c.l.b16 %v409
  %v482 = vunpack.c.l.b16 %v410
  %v483 = vunpack.c.l.b16 %v411
  %v484 = vunpack.c.l.b16 %v412
  %v485 = vunpack.c.l.b16 %v413
  %v486 = vunpack.c.l.b16 %v414
  %v487 = vunpack.c.l.b16 %v415
  %v488 = vunpack.c.l.b16 %v416
  %v489 = vunpack.c.l.b16 %v417
  %v490 = vunpack.c.l.b16 %v418
  %v491 = vunpack.c.l.b16 %v419
  %v492 = vunpack.c.l.b16 %v420
  %v493 = vunpack.c.l.b16 %v421
  %v494 = vunpack.c.l.b16 %v422
  %v495 = vunpack.c.l.b16 %v423
  %v496 = vunpack.c.l.b16 %v424
  %v497 = vunpack.c.l.b16 %v425
  %v498 = vunpack.c.l.b16 %v426
  %v499 = vunpack.c.l.b16 %v427
  %v500 = vunpack.c.l.b16 %v428
  %v501 = vunpack.c.l.b16 %v429
  %v502 = vunpack.c.l.b16 %v430
  %v503 = vunpack.c.l.b16 %v431
  %v504 = vunpack.c.l.b16 %v432
  %v505 = vunpack.c.l.b16 %v433
  %v506 = vunpack.c.l.b16 %v434
  %v507 = vunpack.c.l.b16 %v435
  %v508 = vunpack.c.l.b16 %v436
  %v509 = vunpack.c.l.b16 %v437
  %v510 = vunpack.c.l.b16 %v438
  %v511 = vunpack.c.l.b16 %v439
  %v512 = vpack.c.b16 %v477, %v476
  %v513 = vpack.c.b16 %v479, %v478
  %v514 = vpack.c.b16 %v481, %v480
  %v515 = vpack.c.b16 %v483, %v482
  %v516 = vpack.c.b16 %v485, %v484
  %v517 = vpack.c.b16 %v487, %v486
  %v518 = vpack.c.b16 %v489, %v488
  %v519 = vpack.c.b16 %v491, %v490
  %v520 = vpack.c.b16 %v493, %v492
  %v521 = vpack.c.b16 %v495, %v494
  %v522 = vpack.c.b16 %v497, %v496
  %v523 = vpack.c.b16 %v499, %v498
  %v524 = vpack.c.b16 %v501, %v500
  %v525 = vpack.c.b16 %v503, %v502
  %v526 = vpack.c.b16 %v505, %v504
  %v527 = vpack.c.b16 %v507, %v506
  %v528 = vpack.c.b16 %v509, %v508
  %v529 = vpack.c.b16 %v511, %v510
  %v531 = vsel %vm165, %v512, 0
  %v534 = vsel %vm165, %v513, 0
  %v537 = vsel %vm165, %v514, 0
  %v540 = vsel %vm165, %v515, 0
  %v543 = vsel %vm165, %v516, 0
  %v546 = vsel %vm165, %v517, 0
  %v549 = vsel %vm165, %v518, 0
  %v552 = vsel %vm165, %v519, 0
  %v555 = vsel %vm165, %v520, 0
  %v558 = vsel %vm165, %v521, 0
  %v561 = vsel %vm165, %v522, 0
  %v564 = vsel %vm165, %v523, 0
  %v567 = vsel %vm165, %v524, 0
  %v570 = vsel %vm165, %v525, 0
  %v573 = vsel %vm165, %v526, 0
  %v576 = vsel %vm165, %v527, 0
  %v579 = vsel %vm165, %v528, 0
  %v582 = vsel %vm165, %v529, 0
  %584 = vmatprep.subr.bf16.mxu0 0
  %585 = vmatpush1.bf16.msra.mxu0 %v162
  %586 = vmatprep.subr.bf16.mxu0 0
  %587 = vmatpush1.bf16.msra.mxu0 %v225
  %588 = vmatprep.subr.bf16.mxu0 0
  %589 = vmatpush1.bf16.msra.mxu0 0
  %590 = vmatprep.subr.bf16.mxu0 0
  %591 = vmatpush1.bf16.msra.mxu0 0
  %592 = vmatprep.subr.bf16.mxu0 0
  %593 = vmatpush1.bf16.msra.mxu0 0
  %594 = vmatprep.subr.bf16.mxu0 0
  %595 = vmatpush1.bf16.msra.mxu0 0
  %596 = vmatprep.subr.bf16.mxu0 0
  %597 = vmatpush1.bf16.msra.mxu0 0
  %598 = vmatprep.subr.bf16.mxu0 0
  %599 = vmatpush1.bf16.msra.mxu0 0
  %600 = vmatprep.subr.bf16.mxu0 0
  %601 = vmatpush1.bf16.msra.mxu0 0
  %602 = vmatprep.subr.bf16.mxu0 0
  %603 = vmatpush1.bf16.msra.mxu0 0
  %604 = vmatprep.subr.bf16.mxu0 0
  %605 = vmatpush1.bf16.msra.mxu0 0
  %606 = vmatprep.subr.bf16.mxu0 0
  %607 = vmatpush1.bf16.msra.mxu0 0
  %608 = vmatprep.subr.bf16.mxu0 0
  %609 = vmatpush1.bf16.msra.mxu0 0
  %610 = vmatprep.subr.bf16.mxu0 0
  %611 = vmatpush1.bf16.msra.mxu0 0
  %612 = vmatprep.subr.bf16.mxu0 0
  %613 = vmatpush1.bf16.msra.mxu0 0
  %614 = vmatprep.subr.bf16.mxu0 0
  %615 = vmatpush1.bf16.msra.mxu0 0
  %616 = vmatprep.mubr.bf16.mxu0 0
  %617 = vmatmul.mubr.bf16.gmra.mrb[0].mxu0 %v531
  %v618 = vpop.f32.mrb[0].mxu0
  %v619 = vadd.f32 0.0, %v618
  %v620 = vpop.f32.mrb[0].mxu0
  %v621 = vpop.f32.mrb[0].mxu0
  %v622 = vadd.f32 0.0, %v621
  %v623 = vpop.f32.mrb[0].mxu0
  %624 = vmatprep.mubr.bf16.mxu0 0
  %625 = vmatmul.mubr.bf16.gmra.mrb[0].mxu0 %v534
  %v626 = vpop.f32.mrb[0].mxu0
  %v627 = vadd.f32 0.0, %v626
  %v628 = vpop.f32.mrb[0].mxu0
  %v629 = vpop.f32.mrb[0].mxu0
  %v630 = vadd.f32 0.0, %v629
  %v631 = vpop.f32.mrb[0].mxu0
  %632 = vmatprep.mubr.bf16.mxu0 0
  %633 = vmatmul.mubr.bf16.gmra.mrb[0].mxu0 %v537
  %v634 = vpop.f32.mrb[0].mxu0
  %v635 = vadd.f32 0.0, %v634
  %v636 = vpop.f32.mrb[0].mxu0
  %v637 = vpop.f32.mrb[0].mxu0
  %v638 = vadd.f32 0.0, %v637
  %v639 = vpop.f32.mrb[0].mxu0
  %640 = vmatprep.mubr.bf16.mxu0 0
  %641 = vmatmul.mubr.bf16.gmra.mrb[0].mxu0 %v540
  %v642 = vpop.f32.mrb[0].mxu0
  %v643 = vadd.f32 0.0, %v642
  %v644 = vpop.f32.mrb[0].mxu0
  %v645 = vpop.f32.mrb[0].mxu0
  %v646 = vadd.f32 0.0, %v645
  %v647 = vpop.f32.mrb[0].mxu0
  %648 = vmatprep.mubr.bf16.mxu0 0
  %649 = vmatmul.mubr.bf16.gmra.mrb[0].mxu0 %v543
  %v650 = vpop.f32.mrb[0].mxu0
  %v651 = vadd.f32 0.0, %v650
  %v652 = vpop.f32.mrb[0].mxu0
  %v653 = vpop.f32.mrb[0].mxu0
  %v654 = vadd.f32 0.0, %v653
  %v655 = vpop.f32.mrb[0].mxu0
  %656 = vmatprep.mubr.bf16.mxu0 0
  %657 = vmatmul.mubr.bf16.gmra.mrb[0].mxu0 %v546
  %v658 = vpop.f32.mrb[0].mxu0
  %v659 = vadd.f32 0.0, %v658
  %v660 = vpop.f32.mrb[0].mxu0
  %v661 = vpop.f32.mrb[0].mxu0
  %v662 = vadd.f32 0.0, %v661
  %v663 = vpop.f32.mrb[0].mxu0
  %664 = vmatprep.mubr.bf16.mxu0 0
  %665 = vmatmul.mubr.bf16.gmra.mrb[0].mxu0 %v549
  %v666 = vpop.f32.mrb[0].mxu0
  %v667 = vadd.f32 0.0, %v666
  %v668 = vpop.f32.mrb[0].mxu0
  %v669 = vpop.f32.mrb[0].mxu0
  %v670 = vadd.f32 0.0, %v669
  %v671 = vpop.f32.mrb[0].mxu0
  %672 = vmatprep.mubr.bf16.mxu0 0
  %673 = vmatmul.mubr.bf16.gmra.mrb[0].mxu0 %v552
  %v674 = vpop.f32.mrb[0].mxu0
  %v675 = vadd.f32 0.0, %v674
  %v676 = vpop.f32.mrb[0].mxu0
  %v677 = vpop.f32.mrb[0].mxu0
  %v678 = vadd.f32 0.0, %v677
  %v679 = vpop.f32.mrb[0].mxu0
  %680 = vmatprep.mubr.bf16.mxu0 0
  %681 = vmatmul.mubr.bf16.gmra.mrb[0].mxu0 %v555
  %v682 = vpop.f32.mrb[0].mxu0
  %v683 = vadd.f32 0.0, %v682
  %v684 = vpop.f32.mrb[0].mxu0
  %v685 = vpop.f32.mrb[0].mxu0
  %v686 = vadd.f32 0.0, %v685
  %v687 = vpop.f32.mrb[0].mxu0
  %688 = vmatprep.mubr.bf16.mxu0 0
  %689 = vmatmul.mubr.bf16.gmra.mrb[0].mxu0 %v558
  %v690 = vpop.f32.mrb[0].mxu0
  %v691 = vadd.f32 0.0, %v690
  %v692 = vpop.f32.mrb[0].mxu0
  %v693 = vpop.f32.mrb[0].mxu0
  %v694 = vadd.f32 0.0, %v693
  %v695 = vpop.f32.mrb[0].mxu0
  %696 = vmatprep.mubr.bf16.mxu0 0
  %697 = vmatmul.mubr.bf16.gmra.mrb[0].mxu0 %v561
  %v698 = vpop.f32.mrb[0].mxu0
  %v699 = vadd.f32 0.0, %v698
  %v700 = vpop.f32.mrb[0].mxu0
  %v701 = vpop.f32.mrb[0].mxu0
  %v702 = vadd.f32 0.0, %v701
  %v703 = vpop.f32.mrb[0].mxu0
  %704 = vmatprep.mubr.bf16.mxu0 0
  %705 = vmatmul.mubr.bf16.gmra.mrb[0].mxu0 %v564
  %v706 = vpop.f32.mrb[0].mxu0
  %v707 = vadd.f32 0.0, %v706
  %v708 = vpop.f32.mrb[0].mxu0
  %v709 = vpop.f32.mrb[0].mxu0
  %v710 = vadd.f32 0.0, %v709
  %v711 = vpop.f32.mrb[0].mxu0
  %712 = vmatprep.mubr.bf16.mxu0 0
  %713 = vmatmul.mubr.bf16.gmra.mrb[0].mxu0 %v567
  %v714 = vpop.f32.mrb[0].mxu0
  %v715 = vadd.f32 0.0, %v714
  %v716 = vpop.f32.mrb[0].mxu0
  %v717 = vpop.f32.mrb[0].mxu0
  %v718 = vadd.f32 0.0, %v717
  %v719 = vpop.f32.mrb[0].mxu0
  %720 = vmatprep.mubr.bf16.mxu0 0
  %721 = vmatmul.mubr.bf16.gmra.mrb[0].mxu0 %v570
  %v722 = vpop.f32.mrb[0].mxu0
  %v723 = vadd.f32 0.0, %v722
  %v724 = vpop.f32.mrb[0].mxu0
  %v725 = vpop.f32.mrb[0].mxu0
  %v726 = vadd.f32 0.0, %v725
  %v727 = vpop.f32.mrb[0].mxu0
  %728 = vmatprep.mubr.bf16.mxu0 0
  %729 = vmatmul.mubr.bf16.gmra.mrb[0].mxu0 %v573
  %v730 = vpop.f32.mrb[0].mxu0
  %v731 = vadd.f32 0.0, %v730
  %v732 = vpop.f32.mrb[0].mxu0
  %v733 = vpop.f32.mrb[0].mxu0
  %v734 = vadd.f32 0.0, %v733
  %v735 = vpop.f32.mrb[0].mxu0
  %736 = vmatprep.mubr.bf16.mxu0 0
  %737 = vmatmul.mubr.bf16.gmra.mrb[0].mxu0 %v576
  %v738 = vpop.f32.mrb[0].mxu0
  %v739 = vadd.f32 0.0, %v738
  %v740 = vpop.f32.mrb[0].mxu0
  %v741 = vpop.f32.mrb[0].mxu0
  %v742 = vadd.f32 0.0, %v741
  %v743 = vpop.f32.mrb[0].mxu0
  %744 = vmatprep.mubr.bf16.mxu0 0
  %745 = vmatmul.mubr.bf16.gmra.mrb[0].mxu0 %v579
  %v746 = vpop.f32.mrb[0].mxu0
  %v747 = vadd.f32 0.0, %v746
  %v748 = vpop.f32.mrb[0].mxu0
  %v749 = vpop.f32.mrb[0].mxu0
  %v750 = vadd.f32 0.0, %v749
  %v751 = vpop.f32.mrb[0].mxu0
  %752 = vmatprep.mubr.bf16.mxu0 0
  %753 = vmatmul.mubr.bf16.gmra.mrb[0].mxu0 %v582
  %v754 = vpop.f32.mrb[0].mxu0
  %v755 = vadd.f32 0.0, %v754
  %v756 = vpop.f32.mrb[0].mxu0
  %v757 = vpop.f32.mrb[0].mxu0
  %v758 = vadd.f32 0.0, %v757
  %v759 = vpop.f32.mrb[0].mxu0
  %760 = vdwg.mxu0
  %v761 = vld [vmem:[%s2] sm:$0xf]
  %v762 = vld [vmem:[%s2 + $0x4] sm:$0xf]
  %v763 = vld [vmem:[%s2 + $0x8] sm:$0xf]
  %v764 = vld [vmem:[%s2 + $0xc] sm:$0xf]
  %v765 = vld [vmem:[%s2 + $0x10] sm:$0xf]
  %v766 = vld [vmem:[%s2 + $0x14] sm:$0xf]
  %v767 = vld [vmem:[%s2 + $0x18] sm:$0xf]
  %v768 = vld [vmem:[%s2 + $0x1c] sm:$0xf]
  %v769 = vld [vmem:[%s2 + $0x20] sm:$0xf]
  %v770 = vld [vmem:[%s2 + $0x24] sm:$0xf]
  %v771 = vld [vmem:[%s2 + $0x28] sm:$0xf]
  %v772 = vld [vmem:[%s2 + $0x2c] sm:$0xf]
  %v773 = vld [vmem:[%s2 + $0x30] sm:$0xf]
  %v774 = vld [vmem:[%s2 + $0x34] sm:$0xf]
  %v775 = vld [vmem:[%s2 + $0x38] sm:$0xf]
  %v776 = vld [vmem:[%s2 + $0x3c] sm:$0xf]
  %v777 = vld [vmem:[%s2 + $0x40] sm:$0xf]
  %v778 = vld [vmem:[%s2 + $0x44] sm:$0xf]
  %v779 = vld [vmem:[%s2 + $0x48] sm:$0xf]
  %v780 = vld [vmem:[%s2 + $0x4c] sm:$0xf]
  %v781 = vld [vmem:[%s2 + $0x50] sm:$0xf]
  %v782 = vld [vmem:[%s2 + $0x54] sm:$0xf]
  %v783 = vld [vmem:[%s2 + $0x58] sm:$0xf]
  %v784 = vld [vmem:[%s2 + $0x5c] sm:$0xf]
  %v785 = vld [vmem:[%s2 + $0x60] sm:$0xf]
  %v786 = vld [vmem:[%s2 + $0x64] sm:$0xf]
  %v787 = vld [vmem:[%s2 + $0x68] sm:$0xf]
  %v788 = vld [vmem:[%s2 + $0x6c] sm:$0xf]
  %v789 = vld [vmem:[%s2 + $0x70] sm:$0xf]
  %v790 = vld [vmem:[%s2 + $0x74] sm:$0xf]
  %v791 = vld [vmem:[%s2 + $0x78] sm:$0xf]
  %v792 = vld [vmem:[%s2 + $0x7c] sm:$0xf]
  %v793 = vld [vmem:[%s2 + $0x80] sm:$0xf]
  %v794 = vld [vmem:[%s2 + $0x84] sm:$0xf]
  %v795 = vld [vmem:[%s2 + $0x88] sm:$0xf]
  %v796 = vld [vmem:[%s2 + $0x8c] sm:$0xf]
  %v833 = vunpack.c.l.b16 %v761
  %v834 = vunpack.c.l.b16 %v762
  %v835 = vunpack.c.l.b16 %v763
  %v836 = vunpack.c.l.b16 %v764
  %v837 = vunpack.c.l.b16 %v765
  %v838 = vunpack.c.l.b16 %v766
  %v839 = vunpack.c.l.b16 %v767
  %v840 = vunpack.c.l.b16 %v768
  %v841 = vunpack.c.l.b16 %v769
  %v842 = vunpack.c.l.b16 %v770
  %v843 = vunpack.c.l.b16 %v771
  %v844 = vunpack.c.l.b16 %v772
  %v845 = vunpack.c.l.b16 %v773
  %v846 = vunpack.c.l.b16 %v774
  %v847 = vunpack.c.l.b16 %v775
  %v848 = vunpack.c.l.b16 %v776
  %v849 = vunpack.c.l.b16 %v777
  %v850 = vunpack.c.l.b16 %v778
  %v851 = vunpack.c.l.b16 %v779
  %v852 = vunpack.c.l.b16 %v780
  %v853 = vunpack.c.l.b16 %v781
  %v854 = vunpack.c.l.b16 %v782
  %v855 = vunpack.c.l.b16 %v783
  %v856 = vunpack.c.l.b16 %v784
  %v857 = vunpack.c.l.b16 %v785
  %v858 = vunpack.c.l.b16 %v786
  %v859 = vunpack.c.l.b16 %v787
  %v860 = vunpack.c.l.b16 %v788
  %v861 = vunpack.c.l.b16 %v789
  %v862 = vunpack.c.l.b16 %v790
  %v863 = vunpack.c.l.b16 %v791
  %v864 = vunpack.c.l.b16 %v792
  %v865 = vunpack.c.l.b16 %v793
  %v866 = vunpack.c.l.b16 %v794
  %v867 = vunpack.c.l.b16 %v795
  %v868 = vunpack.c.l.b16 %v796
  %v869 = vpack.c.b16 %v834, %v833
  %v870 = vpack.c.b16 %v836, %v835
  %v871 = vpack.c.b16 %v838, %v837
  %v872 = vpack.c.b16 %v840, %v839
  %v873 = vpack.c.b16 %v842, %v841
  %v874 = vpack.c.b16 %v844, %v843
  %v875 = vpack.c.b16 %v846, %v845
  %v876 = vpack.c.b16 %v848, %v847
  %v877 = vpack.c.b16 %v850, %v849
  %v878 = vpack.c.b16 %v852, %v851
  %v879 = vpack.c.b16 %v854, %v853
  %v880 = vpack.c.b16 %v856, %v855
  %v881 = vpack.c.b16 %v858, %v857
  %v882 = vpack.c.b16 %v860, %v859
  %v883 = vpack.c.b16 %v862, %v861
  %v884 = vpack.c.b16 %v864, %v863
  %v885 = vpack.c.b16 %v866, %v865
  %v886 = vpack.c.b16 %v868, %v867
  %v888 = vsel %vm165, %v869, 0
  %v891 = vsel %vm165, %v870, 0
  %v894 = vsel %vm165, %v871, 0
  %v897 = vsel %vm165, %v872, 0
  %v900 = vsel %vm165, %v873, 0
  %v903 = vsel %vm165, %v874, 0
  %v906 = vsel %vm165, %v875, 0
  %v909 = vsel %vm165, %v876, 0
  %v912 = vsel %vm165, %v877, 0
  %v915 = vsel %vm165, %v878, 0
  %v918 = vsel %vm165, %v879, 0
  %v921 = vsel %vm165, %v880, 0
  %v924 = vsel %vm165, %v881, 0
  %v927 = vsel %vm165, %v882, 0
  %v930 = vsel %vm165, %v883, 0
  %v933 = vsel %vm165, %v884, 0
  %v936 = vsel %vm165, %v885, 0
  %v939 = vsel %vm165, %v886, 0
  %941 = vmatprep.subr.bf16.mxu0 0
  %942 = vmatpush1.bf16.msra.mxu0 %v162
  %943 = vmatprep.subr.bf16.mxu0 0
  %944 = vmatpush1.bf16.msra.mxu0 %v225
  %945 = vmatprep.subr.bf16.mxu0 0
  %946 = vmatpush1.bf16.msra.mxu0 0
  %947 = vmatprep.subr.bf16.mxu0 0
  %948 = vmatpush1.bf16.msra.mxu0 0
  %949 = vmatprep.subr.bf16.mxu0 0
  %950 = vmatpush1.bf16.msra.mxu0 0
  %951 = vmatprep.subr.bf16.mxu0 0
  %952 = vmatpush1.bf16.msra.mxu0 0
  %953 = vmatprep.subr.bf16.mxu0 0
  %954 = vmatpush1.bf16.msra.mxu0 0
  %955 = vmatprep.subr.bf16.mxu0 0
  %956 = vmatpush1.bf16.msra.mxu0 0
  %957 = vmatprep.subr.bf16.mxu0 0
  %958 = vmatpush1.bf16.msra.mxu0 0
  %959 = vmatprep.subr.bf16.mxu0 0
  %960 = vmatpush1.bf16.msra.mxu0 0
  %961 = vmatprep.subr.bf16.mxu0 0
  %962 = vmatpush1.bf16.msra.mxu0 0
  %963 = vmatprep.subr.bf16.mxu0 0
  %964 = vmatpush1.bf16.msra.mxu0 0
  %965 = vmatprep.subr.bf16.mxu0 0
  %966 = vmatpush1.bf16.msra.mxu0 0
  %967 = vmatprep.subr.bf16.mxu0 0
  %968 = vmatpush1.bf16.msra.mxu0 0
  %969 = vmatprep.subr.bf16.mxu0 0
  %970 = vmatpush1.bf16.msra.mxu0 0
  %971 = vmatprep.subr.bf16.mxu0 0
  %972 = vmatpush1.bf16.msra.mxu0 0
  %973 = vmatprep.mubr.bf16.mxu0 0
  %974 = vmatmul.mubr.bf16.gmra.mrb[0].mxu0 %v888
  %v975 = vpop.f32.mrb[0].mxu0
  %v976 = vadd.f32 0.0, %v975
  %v977 = vpop.f32.mrb[0].mxu0
  %v978 = vpop.f32.mrb[0].mxu0
  %v979 = vadd.f32 0.0, %v978
  %v980 = vpop.f32.mrb[0].mxu0
  %981 = vmatprep.mubr.bf16.mxu0 0
  %982 = vmatmul.mubr.bf16.gmra.mrb[0].mxu0 %v891
  %v983 = vpop.f32.mrb[0].mxu0
  %v984 = vadd.f32 0.0, %v983
  %v985 = vpop.f32.mrb[0].mxu0
  %v986 = vpop.f32.mrb[0].mxu0
  %v987 = vadd.f32 0.0, %v986
  %v988 = vpop.f32.mrb[0].mxu0
  %989 = vmatprep.mubr.bf16.mxu0 0
  %990 = vmatmul.mubr.bf16.gmra.mrb[0].mxu0 %v894
  %v991 = vpop.f32.mrb[0].mxu0
  %v992 = vadd.f32 0.0, %v991
  %v993 = vpop.f32.mrb[0].mxu0
  %v994 = vpop.f32.mrb[0].mxu0
  %v995 = vadd.f32 0.0, %v994
  %v996 = vpop.f32.mrb[0].mxu0
  %997 = vmatprep.mubr.bf16.mxu0 0
  %998 = vmatmul.mubr.bf16.gmra.mrb[0].mxu0 %v897
  %v999 = vpop.f32.mrb[0].mxu0
  %v1000 = vadd.f32 0.0, %v999
  %v1001 = vpop.f32.mrb[0].mxu0
  %v1002 = vpop.f32.mrb[0].mxu0
  %v1003 = vadd.f32 0.0, %v1002
  %v1004 = vpop.f32.mrb[0].mxu0
  %1005 = vmatprep.mubr.bf16.mxu0 0
  %1006 = vmatmul.mubr.bf16.gmra.mrb[0].mxu0 %v900
  %v1007 = vpop.f32.mrb[0].mxu0
  %v1008 = vadd.f32 0.0, %v1007
  %v1009 = vpop.f32.mrb[0].mxu0
  %v1010 = vpop.f32.mrb[0].mxu0
  %v1011 = vadd.f32 0.0, %v1010
  %v1012 = vpop.f32.mrb[0].mxu0
  %1013 = vmatprep.mubr.bf16.mxu0 0
  %1014 = vmatmul.mubr.bf16.gmra.mrb[0].mxu0 %v903
  %v1015 = vpop.f32.mrb[0].mxu0
  %v1016 = vadd.f32 0.0, %v1015
  %v1017 = vpop.f32.mrb[0].mxu0
  %v1018 = vpop.f32.mrb[0].mxu0
  %v1019 = vadd.f32 0.0, %v1018
  %v1020 = vpop.f32.mrb[0].mxu0
  %1021 = vmatprep.mubr.bf16.mxu0 0
  %1022 = vmatmul.mubr.bf16.gmra.mrb[0].mxu0 %v906
  %v1023 = vpop.f32.mrb[0].mxu0
  %v1024 = vadd.f32 0.0, %v1023
  %v1025 = vpop.f32.mrb[0].mxu0
  %v1026 = vpop.f32.mrb[0].mxu0
  %v1027 = vadd.f32 0.0, %v1026
  %v1028 = vpop.f32.mrb[0].mxu0
  %1029 = vmatprep.mubr.bf16.mxu0 0
  %1030 = vmatmul.mubr.bf16.gmra.mrb[0].mxu0 %v909
  %v1031 = vpop.f32.mrb[0].mxu0
  %v1032 = vadd.f32 0.0, %v1031
  %v1033 = vpop.f32.mrb[0].mxu0
  %v1034 = vpop.f32.mrb[0].mxu0
  %v1035 = vadd.f32 0.0, %v1034
  %v1036 = vpop.f32.mrb[0].mxu0
  %1037 = vmatprep.mubr.bf16.mxu0 0
  %1038 = vmatmul.mubr.bf16.gmra.mrb[0].mxu0 %v912
  %v1039 = vpop.f32.mrb[0].mxu0
  %v1040 = vadd.f32 0.0, %v1039
  %v1041 = vpop.f32.mrb[0].mxu0
  %v1042 = vpop.f32.mrb[0].mxu0
  %v1043 = vadd.f32 0.0, %v1042
  %v1044 = vpop.f32.mrb[0].mxu0
  %1045 = vmatprep.mubr.bf16.mxu0 0
  %1046 = vmatmul.mubr.bf16.gmra.mrb[0].mxu0 %v915
  %v1047 = vpop.f32.mrb[0].mxu0
  %v1048 = vadd.f32 0.0, %v1047
  %v1049 = vpop.f32.mrb[0].mxu0
  %v1050 = vpop.f32.mrb[0].mxu0
  %v1051 = vadd.f32 0.0, %v1050
  %v1052 = vpop.f32.mrb[0].mxu0
  %1053 = vmatprep.mubr.bf16.mxu0 0
  %1054 = vmatmul.mubr.bf16.gmra.mrb[0].mxu0 %v918
  %v1055 = vpop.f32.mrb[0].mxu0
  %v1056 = vadd.f32 0.0, %v1055
  %v1057 = vpop.f32.mrb[0].mxu0
  %v1058 = vpop.f32.mrb[0].mxu0
  %v1059 = vadd.f32 0.0, %v1058
  %v1060 = vpop.f32.mrb[0].mxu0
  %1061 = vmatprep.mubr.bf16.mxu0 0
  %1062 = vmatmul.mubr.bf16.gmra.mrb[0].mxu0 %v921
  %v1063 = vpop.f32.mrb[0].mxu0
  %v1064 = vadd.f32 0.0, %v1063
  %v1065 = vpop.f32.mrb[0].mxu0
  %v1066 = vpop.f32.mrb[0].mxu0
  %v1067 = vadd.f32 0.0, %v1066
  %v1068 = vpop.f32.mrb[0].mxu0
  %1069 = vmatprep.mubr.bf16.mxu0 0
  %1070 = vmatmul.mubr.bf16.gmra.mrb[0].mxu0 %v924
  %v1071 = vpop.f32.mrb[0].mxu0
  %v1072 = vadd.f32 0.0, %v1071
  %v1073 = vpop.f32.mrb[0].mxu0
  %v1074 = vpop.f32.mrb[0].mxu0
  %v1075 = vadd.f32 0.0, %v1074
  %v1076 = vpop.f32.mrb[0].mxu0
  %1077 = vmatprep.mubr.bf16.mxu0 0
  %1078 = vmatmul.mubr.bf16.gmra.mrb[0].mxu0 %v927
  %v1079 = vpop.f32.mrb[0].mxu0
  %v1080 = vadd.f32 0.0, %v1079
  %v1081 = vpop.f32.mrb[0].mxu0
  %v1082 = vpop.f32.mrb[0].mxu0
  %v1083 = vadd.f32 0.0, %v1082
  %v1084 = vpop.f32.mrb[0].mxu0
  %1085 = vmatprep.mubr.bf16.mxu0 0
  %1086 = vmatmul.mubr.bf16.gmra.mrb[0].mxu0 %v930
  %v1087 = vpop.f32.mrb[0].mxu0
  %v1088 = vadd.f32 0.0, %v1087
  %v1089 = vpop.f32.mrb[0].mxu0
  %v1090 = vpop.f32.mrb[0].mxu0
  %v1091 = vadd.f32 0.0, %v1090
  %v1092 = vpop.f32.mrb[0].mxu0
  %1093 = vmatprep.mubr.bf16.mxu0 0
  %1094 = vmatmul.mubr.bf16.gmra.mrb[0].mxu0 %v933
  %v1095 = vpop.f32.mrb[0].mxu0
  %v1096 = vadd.f32 0.0, %v1095
  %v1097 = vpop.f32.mrb[0].mxu0
  %v1098 = vpop.f32.mrb[0].mxu0
  %v1099 = vadd.f32 0.0, %v1098
  %v1100 = vpop.f32.mrb[0].mxu0
  %1101 = vmatprep.mubr.bf16.mxu0 0
  %1102 = vmatmul.mubr.bf16.gmra.mrb[0].mxu0 %v936
  %v1103 = vpop.f32.mrb[0].mxu0
  %v1104 = vadd.f32 0.0, %v1103
  %v1105 = vpop.f32.mrb[0].mxu0
  %v1106 = vpop.f32.mrb[0].mxu0
  %v1107 = vadd.f32 0.0, %v1106
  %v1108 = vpop.f32.mrb[0].mxu0
  %1109 = vmatprep.mubr.bf16.mxu0 0
  %1110 = vmatmul.mubr.bf16.gmra.mrb[0].mxu0 %v939
  %v1111 = vpop.f32.mrb[0].mxu0
  %v1112 = vadd.f32 0.0, %v1111
  %v1113 = vpop.f32.mrb[0].mxu0
  %v1114 = vpop.f32.mrb[0].mxu0
  %v1115 = vadd.f32 0.0, %v1114
  %v1116 = vpop.f32.mrb[0].mxu0
  %1117 = vdwg.mxu0
  %v1118 = vld [vmem:[%s3] sm:$0xf]
  %v1119 = vld [vmem:[%s3 + $0x4] sm:$0xf]
  %v1120 = vld [vmem:[%s3 + $0x8] sm:$0xf]
  %v1121 = vld [vmem:[%s3 + $0xc] sm:$0xf]
  %v1122 = vld [vmem:[%s3 + $0x10] sm:$0xf]
  %v1123 = vld [vmem:[%s3 + $0x14] sm:$0xf]
  %v1124 = vld [vmem:[%s3 + $0x18] sm:$0xf]
  %v1125 = vld [vmem:[%s3 + $0x1c] sm:$0xf]
  %v1126 = vld [vmem:[%s3 + $0x20] sm:$0xf]
  %v1127 = vld [vmem:[%s3 + $0x24] sm:$0xf]
  %v1128 = vld [vmem:[%s3 + $0x28] sm:$0xf]
  %v1129 = vld [vmem:[%s3 + $0x2c] sm:$0xf]
  %v1130 = vld [vmem:[%s3 + $0x30] sm:$0xf]
  %v1131 = vld [vmem:[%s3 + $0x34] sm:$0xf]
  %v1132 = vld [vmem:[%s3 + $0x38] sm:$0xf]
  %v1133 = vld [vmem:[%s3 + $0x3c] sm:$0xf]
  %v1134 = vld [vmem:[%s3 + $0x40] sm:$0xf]
  %v1135 = vld [vmem:[%s3 + $0x44] sm:$0xf]
  %v1136 = vld [vmem:[%s3 + $0x48] sm:$0xf]
  %v1137 = vld [vmem:[%s3 + $0x4c] sm:$0xf]
  %v1138 = vld [vmem:[%s3 + $0x50] sm:$0xf]
  %v1139 = vld [vmem:[%s3 + $0x54] sm:$0xf]
  %v1140 = vld [vmem:[%s3 + $0x58] sm:$0xf]
  %v1141 = vld [vmem:[%s3 + $0x5c] sm:$0xf]
  %v1142 = vld [vmem:[%s3 + $0x60] sm:$0xf]
  %v1143 = vld [vmem:[%s3 + $0x64] sm:$0xf]
  %v1144 = vld [vmem:[%s3 + $0x68] sm:$0xf]
  %v1145 = vld [vmem:[%s3 + $0x6c] sm:$0xf]
  %v1146 = vld [vmem:[%s3 + $0x70] sm:$0xf]
  %v1147 = vld [vmem:[%s3 + $0x74] sm:$0xf]
  %v1148 = vld [vmem:[%s3 + $0x78] sm:$0xf]
  %v1149 = vld [vmem:[%s3 + $0x7c] sm:$0xf]
  %v1150 = vld [vmem:[%s3 + $0x80] sm:$0xf]
  %v1151 = vld [vmem:[%s3 + $0x84] sm:$0xf]
  %v1152 = vld [vmem:[%s3 + $0x88] sm:$0xf]
  %v1153 = vld [vmem:[%s3 + $0x8c] sm:$0xf]
  %v1190 = vunpack.c.l.b16 %v1118
  %v1191 = vunpack.c.l.b16 %v1119
  %v1192 = vunpack.c.l.b16 %v1120
  %v1193 = vunpack.c.l.b16 %v1121
  %v1194 = vunpack.c.l.b16 %v1122
  %v1195 = vunpack.c.l.b16 %v1123
  %v1196 = vunpack.c.l.b16 %v1124
  %v1197 = vunpack.c.l.b16 %v1125
  %v1198 = vunpack.c.l.b16 %v1126
  %v1199 = vunpack.c.l.b16 %v1127
  %v1200 = vunpack.c.l.b16 %v1128
  %v1201 = vunpack.c.l.b16 %v1129
  %v1202 = vunpack.c.l.b16 %v1130
  %v1203 = vunpack.c.l.b16 %v1131
  %v1204 = vunpack.c.l.b16 %v1132
  %v1205 = vunpack.c.l.b16 %v1133
  %v1206 = vunpack.c.l.b16 %v1134
  %v1207 = vunpack.c.l.b16 %v1135
  %v1208 = vunpack.c.l.b16 %v1136
  %v1209 = vunpack.c.l.b16 %v1137
  %v1210 = vunpack.c.l.b16 %v1138
  %v1211 = vunpack.c.l.b16 %v1139
  %v1212 = vunpack.c.l.b16 %v1140
  %v1213 = vunpack.c.l.b16 %v1141
  %v1214 = vunpack.c.l.b16 %v1142
  %v1215 = vunpack.c.l.b16 %v1143
  %v1216 = vunpack.c.l.b16 %v1144
  %v1217 = vunpack.c.l.b16 %v1145
  %v1218 = vunpack.c.l.b16 %v1146
  %v1219 = vunpack.c.l.b16 %v1147
  %v1220 = vunpack.c.l.b16 %v1148
  %v1221 = vunpack.c.l.b16 %v1149
  %v1222 = vunpack.c.l.b16 %v1150
  %v1223 = vunpack.c.l.b16 %v1151
  %v1224 = vunpack.c.l.b16 %v1152
  %v1225 = vunpack.c.l.b16 %v1153
  %v1226 = vpack.c.b16 %v1191, %v1190
  %v1227 = vpack.c.b16 %v1193, %v1192
  %v1228 = vpack.c.b16 %v1195, %v1194
  %v1229 = vpack.c.b16 %v1197, %v1196
  %v1230 = vpack.c.b16 %v1199, %v1198
  %v1231 = vpack.c.b16 %v1201, %v1200
  %v1232 = vpack.c.b16 %v1203, %v1202
  %v1233 = vpack.c.b16 %v1205, %v1204
  %v1234 = vpack.c.b16 %v1207, %v1206
  %v1235 = vpack.c.b16 %v1209, %v1208
  %v1236 = vpack.c.b16 %v1211, %v1210
  %v1237 = vpack.c.b16 %v1213, %v1212
  %v1238 = vpack.c.b16 %v1215, %v1214
  %v1239 = vpack.c.b16 %v1217, %v1216
  %v1240 = vpack.c.b16 %v1219, %v1218
  %v1241 = vpack.c.b16 %v1221, %v1220
  %v1242 = vpack.c.b16 %v1223, %v1222
  %v1243 = vpack.c.b16 %v1225, %v1224
  %v1245 = vsel %vm165, %v1226, 0
  %v1248 = vsel %vm165, %v1227, 0
  %v1251 = vsel %vm165, %v1228, 0
  %v1254 = vsel %vm165, %v1229, 0
  %v1257 = vsel %vm165, %v1230, 0
  %v1260 = vsel %vm165, %v1231, 0
  %v1263 = vsel %vm165, %v1232, 0
  %v1266 = vsel %vm165, %v1233, 0
  %v1269 = vsel %vm165, %v1234, 0
  %v1272 = vsel %vm165, %v1235, 0
  %v1275 = vsel %vm165, %v1236, 0
  %v1278 = vsel %vm165, %v1237, 0
  %v1281 = vsel %vm165, %v1238, 0
  %v1284 = vsel %vm165, %v1239, 0
  %v1287 = vsel %vm165, %v1240, 0
  %v1290 = vsel %vm165, %v1241, 0
  %v1293 = vsel %vm165, %v1242, 0
  %v1296 = vsel %vm165, %v1243, 0
  %1298 = vmatprep.subr.bf16.mxu0 0
  %1299 = vmatpush1.bf16.msra.mxu0 %v162
  %1300 = vmatprep.subr.bf16.mxu0 0
  %1301 = vmatpush1.bf16.msra.mxu0 %v225
  %1302 = vmatprep.subr.bf16.mxu0 0
  %1303 = vmatpush1.bf16.msra.mxu0 0
  %1304 = vmatprep.subr.bf16.mxu0 0
  %1305 = vmatpush1.bf16.msra.mxu0 0
  %1306 = vmatprep.subr.bf16.mxu0 0
  %1307 = vmatpush1.bf16.msra.mxu0 0
  %1308 = vmatprep.subr.bf16.mxu0 0
  %1309 = vmatpush1.bf16.msra.mxu0 0
  %1310 = vmatprep.subr.bf16.mxu0 0
  %1311 = vmatpush1.bf16.msra.mxu0 0
  %1312 = vmatprep.subr.bf16.mxu0 0
  %1313 = vmatpush1.bf16.msra.mxu0 0
  %1314 = vmatprep.subr.bf16.mxu0 0
  %1315 = vmatpush1.bf16.msra.mxu0 0
  %1316 = vmatprep.subr.bf16.mxu0 0
  %1317 = vmatpush1.bf16.msra.mxu0 0
  %1318 = vmatprep.subr.bf16.mxu0 0
  %1319 = vmatpush1.bf16.msra.mxu0 0
  %1320 = vmatprep.subr.bf16.mxu0 0
  %1321 = vmatpush1.bf16.msra.mxu0 0
  %1322 = vmatprep.subr.bf16.mxu0 0
  %1323 = vmatpush1.bf16.msra.mxu0 0
  %1324 = vmatprep.subr.bf16.mxu0 0
  %1325 = vmatpush1.bf16.msra.mxu0 0
  %1326 = vmatprep.subr.bf16.mxu0 0
  %1327 = vmatpush1.bf16.msra.mxu0 0
  %1328 = vmatprep.subr.bf16.mxu0 0
  %1329 = vmatpush1.bf16.msra.mxu0 0
  %1330 = vmatprep.mubr.bf16.mxu0 0
  %1331 = vmatmul.mubr.bf16.gmra.mrb[0].mxu0 %v1245
  %v1332 = vpop.f32.mrb[0].mxu0
  %v1333 = vadd.f32 0.0, %v1332
  %v1334 = vpop.f32.mrb[0].mxu0
  %v1335 = vpop.f32.mrb[0].mxu0
  %v1336 = vadd.f32 0.0, %v1335
  %v1337 = vpop.f32.mrb[0].mxu0
  %1338 = vmatprep.mubr.bf16.mxu0 0
  %1339 = vmatmul.mubr.bf16.gmra.mrb[0].mxu0 %v1248
  %v1340 = vpop.f32.mrb[0].mxu0
  %v1341 = vadd.f32 0.0, %v1340
  %v1342 = vpop.f32.mrb[0].mxu0
  %v1343 = vpop.f32.mrb[0].mxu0
  %v1344 = vadd.f32 0.0, %v1343
  %v1345 = vpop.f32.mrb[0].mxu0
  %1346 = vmatprep.mubr.bf16.mxu0 0
  %1347 = vmatmul.mubr.bf16.gmra.mrb[0].mxu0 %v1251
  %v1348 = vpop.f32.mrb[0].mxu0
  %v1349 = vadd.f32 0.0, %v1348
  %v1350 = vpop.f32.mrb[0].mxu0
  %v1351 = vpop.f32.mrb[0].mxu0
  %v1352 = vadd.f32 0.0, %v1351
  %v1353 = vpop.f32.mrb[0].mxu0
  %1354 = vmatprep.mubr.bf16.mxu0 0
  %1355 = vmatmul.mubr.bf16.gmra.mrb[0].mxu0 %v1254
  %v1356 = vpop.f32.mrb[0].mxu0
  %v1357 = vadd.f32 0.0, %v1356
  %v1358 = vpop.f32.mrb[0].mxu0
  %v1359 = vpop.f32.mrb[0].mxu0
  %v1360 = vadd.f32 0.0, %v1359
  %v1361 = vpop.f32.mrb[0].mxu0
  %1362 = vmatprep.mubr.bf16.mxu0 0
  %1363 = vmatmul.mubr.bf16.gmra.mrb[0].mxu0 %v1257
  %v1364 = vpop.f32.mrb[0].mxu0
  %v1365 = vadd.f32 0.0, %v1364
  %v1366 = vpop.f32.mrb[0].mxu0
  %v1367 = vpop.f32.mrb[0].mxu0
  %v1368 = vadd.f32 0.0, %v1367
  %v1369 = vpop.f32.mrb[0].mxu0
  %1370 = vmatprep.mubr.bf16.mxu0 0
  %1371 = vmatmul.mubr.bf16.gmra.mrb[0].mxu0 %v1260
  %v1372 = vpop.f32.mrb[0].mxu0
  %v1373 = vadd.f32 0.0, %v1372
  %v1374 = vpop.f32.mrb[0].mxu0
  %v1375 = vpop.f32.mrb[0].mxu0
  %v1376 = vadd.f32 0.0, %v1375
  %v1377 = vpop.f32.mrb[0].mxu0
  %1378 = vmatprep.mubr.bf16.mxu0 0
  %1379 = vmatmul.mubr.bf16.gmra.mrb[0].mxu0 %v1263
  %v1380 = vpop.f32.mrb[0].mxu0
  %v1381 = vadd.f32 0.0, %v1380
  %v1382 = vpop.f32.mrb[0].mxu0
  %v1383 = vpop.f32.mrb[0].mxu0
  %v1384 = vadd.f32 0.0, %v1383
  %v1385 = vpop.f32.mrb[0].mxu0
  %1386 = vmatprep.mubr.bf16.mxu0 0
  %1387 = vmatmul.mubr.bf16.gmra.mrb[0].mxu0 %v1266
  %v1388 = vpop.f32.mrb[0].mxu0
  %v1389 = vadd.f32 0.0, %v1388
  %v1390 = vpop.f32.mrb[0].mxu0
  %v1391 = vpop.f32.mrb[0].mxu0
  %v1392 = vadd.f32 0.0, %v1391
  %v1393 = vpop.f32.mrb[0].mxu0
  %1394 = vmatprep.mubr.bf16.mxu0 0
  %1395 = vmatmul.mubr.bf16.gmra.mrb[0].mxu0 %v1269
  %v1396 = vpop.f32.mrb[0].mxu0
  %v1397 = vadd.f32 0.0, %v1396
  %v1398 = vpop.f32.mrb[0].mxu0
  %v1399 = vpop.f32.mrb[0].mxu0
  %v1400 = vadd.f32 0.0, %v1399
  %v1401 = vpop.f32.mrb[0].mxu0
  %1402 = vmatprep.mubr.bf16.mxu0 0
  %1403 = vmatmul.mubr.bf16.gmra.mrb[0].mxu0 %v1272
  %v1404 = vpop.f32.mrb[0].mxu0
  %v1405 = vadd.f32 0.0, %v1404
  %v1406 = vpop.f32.mrb[0].mxu0
  %v1407 = vpop.f32.mrb[0].mxu0
  %v1408 = vadd.f32 0.0, %v1407
  %v1409 = vpop.f32.mrb[0].mxu0
  %1410 = vmatprep.mubr.bf16.mxu0 0
  %1411 = vmatmul.mubr.bf16.gmra.mrb[0].mxu0 %v1275
  %v1412 = vpop.f32.mrb[0].mxu0
  %v1413 = vadd.f32 0.0, %v1412
  %v1414 = vpop.f32.mrb[0].mxu0
  %v1415 = vpop.f32.mrb[0].mxu0
  %v1416 = vadd.f32 0.0, %v1415
  %v1417 = vpop.f32.mrb[0].mxu0
  %1418 = vmatprep.mubr.bf16.mxu0 0
  %1419 = vmatmul.mubr.bf16.gmra.mrb[0].mxu0 %v1278
  %v1420 = vpop.f32.mrb[0].mxu0
  %v1421 = vadd.f32 0.0, %v1420
  %v1422 = vpop.f32.mrb[0].mxu0
  %v1423 = vpop.f32.mrb[0].mxu0
  %v1424 = vadd.f32 0.0, %v1423
  %v1425 = vpop.f32.mrb[0].mxu0
  %1426 = vmatprep.mubr.bf16.mxu0 0
  %1427 = vmatmul.mubr.bf16.gmra.mrb[0].mxu0 %v1281
  %v1428 = vpop.f32.mrb[0].mxu0
  %v1429 = vadd.f32 0.0, %v1428
  %v1430 = vpop.f32.mrb[0].mxu0
  %v1431 = vpop.f32.mrb[0].mxu0
  %v1432 = vadd.f32 0.0, %v1431
  %v1433 = vpop.f32.mrb[0].mxu0
  %1434 = vmatprep.mubr.bf16.mxu0 0
  %1435 = vmatmul.mubr.bf16.gmra.mrb[0].mxu0 %v1284
  %v1436 = vpop.f32.mrb[0].mxu0
  %v1437 = vadd.f32 0.0, %v1436
  %v1438 = vpop.f32.mrb[0].mxu0
  %v1439 = vpop.f32.mrb[0].mxu0
  %v1440 = vadd.f32 0.0, %v1439
  %v1441 = vpop.f32.mrb[0].mxu0
  %1442 = vmatprep.mubr.bf16.mxu0 0
  %1443 = vmatmul.mubr.bf16.gmra.mrb[0].mxu0 %v1287
  %v1444 = vpop.f32.mrb[0].mxu0
  %v1445 = vadd.f32 0.0, %v1444
  %v1446 = vpop.f32.mrb[0].mxu0
  %v1447 = vpop.f32.mrb[0].mxu0
  %v1448 = vadd.f32 0.0, %v1447
  %v1449 = vpop.f32.mrb[0].mxu0
  %1450 = vmatprep.mubr.bf16.mxu0 0
  %1451 = vmatmul.mubr.bf16.gmra.mrb[0].mxu0 %v1290
  %v1452 = vpop.f32.mrb[0].mxu0
  %v1453 = vadd.f32 0.0, %v1452
  %v1454 = vpop.f32.mrb[0].mxu0
  %v1455 = vpop.f32.mrb[0].mxu0
  %v1456 = vadd.f32 0.0, %v1455
  %v1457 = vpop.f32.mrb[0].mxu0
  %1458 = vmatprep.mubr.bf16.mxu0 0
  %1459 = vmatmul.mubr.bf16.gmra.mrb[0].mxu0 %v1293
  %v1460 = vpop.f32.mrb[0].mxu0
  %v1461 = vadd.f32 0.0, %v1460
  %v1462 = vpop.f32.mrb[0].mxu0
  %v1463 = vpop.f32.mrb[0].mxu0
  %v1464 = vadd.f32 0.0, %v1463
  %v1465 = vpop.f32.mrb[0].mxu0
  %1466 = vmatprep.mubr.bf16.mxu0 0
  %1467 = vmatmul.mubr.bf16.gmra.mrb[0].mxu0 %v1296
  %v1468 = vpop.f32.mrb[0].mxu0
  %v1469 = vadd.f32 0.0, %v1468
  %v1470 = vpop.f32.mrb[0].mxu0
  %v1471 = vpop.f32.mrb[0].mxu0
  %v1472 = vadd.f32 0.0, %v1471
  %v1473 = vpop.f32.mrb[0].mxu0
  %1474 = vdwg.mxu0
  %v1475 = vmax.f32 %v262, %v619
  %v1476 = vmax.f32 %v265, %v622
  %v1477 = vmax.f32 %v270, %v627
  %v1478 = vmax.f32 %v273, %v630
  %v1479 = vmax.f32 %v278, %v635
  %v1480 = vmax.f32 %v281, %v638
  %v1481 = vmax.f32 %v286, %v643
  %v1482 = vmax.f32 %v289, %v646
  %v1483 = vmax.f32 %v294, %v651
  %v1484 = vmax.f32 %v297, %v654
  %v1485 = vmax.f32 %v302, %v659
  %v1486 = vmax.f32 %v305, %v662
  %v1487 = vmax.f32 %v310, %v667
  %v1488 = vmax.f32 %v313, %v670
  %v1489 = vmax.f32 %v318, %v675
  %v1490 = vmax.f32 %v321, %v678
  %v1491 = vmax.f32 %v326, %v683
  %v1492 = vmax.f32 %v329, %v686
  %v1493 = vmax.f32 %v334, %v691
  %v1494 = vmax.f32 %v337, %v694
  %v1495 = vmax.f32 %v342, %v699
  %v1496 = vmax.f32 %v345, %v702
  %v1497 = vmax.f32 %v350, %v707
  %v1498 = vmax.f32 %v353, %v710
  %v1499 = vmax.f32 %v358, %v715
  %v1500 = vmax.f32 %v361, %v718
  %v1501 = vmax.f32 %v366, %v723
  %v1502 = vmax.f32 %v369, %v726
  %v1503 = vmax.f32 %v374, %v731
  %v1504 = vmax.f32 %v377, %v734
  %v1505 = vmax.f32 %v382, %v739
  %v1506 = vmax.f32 %v385, %v742
  %v1507 = vmax.f32 %v390, %v747
  %v1508 = vmax.f32 %v393, %v750
  %v1509 = vmax.f32 %v398, %v755
  %v1510 = vmax.f32 %v401, %v758
  %v1511 = vmax.f32 %v976, %v1333
  %v1512 = vmax.f32 %v979, %v1336
  %v1513 = vmax.f32 %v984, %v1341
  %v1514 = vmax.f32 %v987, %v1344
  %v1515 = vmax.f32 %v992, %v1349
  %v1516 = vmax.f32 %v995, %v1352
  %v1517 = vmax.f32 %v1000, %v1357
  %v1518 = vmax.f32 %v1003, %v1360
  %v1519 = vmax.f32 %v1008, %v1365
  %v1520 = vmax.f32 %v1011, %v1368
  %v1521 = vmax.f32 %v1016, %v1373
  %v1522 = vmax.f32 %v1019, %v1376
  %v1523 = vmax.f32 %v1024, %v1381
  %v1524 = vmax.f32 %v1027, %v1384
  %v1525 = vmax.f32 %v1032, %v1389
  %v1526 = vmax.f32 %v1035, %v1392
  %v1527 = vmax.f32 %v1040, %v1397
  %v1528 = vmax.f32 %v1043, %v1400
  %v1529 = vmax.f32 %v1048, %v1405
  %v1530 = vmax.f32 %v1051, %v1408
  %v1531 = vmax.f32 %v1056, %v1413
  %v1532 = vmax.f32 %v1059, %v1416
  %v1533 = vmax.f32 %v1064, %v1421
  %v1534 = vmax.f32 %v1067, %v1424
  %v1535 = vmax.f32 %v1072, %v1429
  %v1536 = vmax.f32 %v1075, %v1432
  %v1537 = vmax.f32 %v1080, %v1437
  %v1538 = vmax.f32 %v1083, %v1440
  %v1539 = vmax.f32 %v1088, %v1445
  %v1540 = vmax.f32 %v1091, %v1448
  %v1541 = vmax.f32 %v1096, %v1453
  %v1542 = vmax.f32 %v1099, %v1456
  %v1543 = vmax.f32 %v1104, %v1461
  %v1544 = vmax.f32 %v1107, %v1464
  %v1545 = vmax.f32 %v1112, %v1469
  %v1546 = vmax.f32 %v1115, %v1472
  %v1547 = vmax.f32 %v1475, %v1511
  %v1548 = vmax.f32 %v1476, %v1512
  %v1549 = vmax.f32 %v1477, %v1513
  %v1550 = vmax.f32 %v1478, %v1514
  %v1551 = vmax.f32 %v1479, %v1515
  %v1552 = vmax.f32 %v1480, %v1516
  %v1553 = vmax.f32 %v1481, %v1517
  %v1554 = vmax.f32 %v1482, %v1518
  %v1555 = vmax.f32 %v1483, %v1519
  %v1556 = vmax.f32 %v1484, %v1520
  %v1557 = vmax.f32 %v1485, %v1521
  %v1558 = vmax.f32 %v1486, %v1522
  %v1559 = vmax.f32 %v1487, %v1523
  %v1560 = vmax.f32 %v1488, %v1524
  %v1561 = vmax.f32 %v1489, %v1525
  %v1562 = vmax.f32 %v1490, %v1526
  %v1563 = vmax.f32 %v1491, %v1527
  %v1564 = vmax.f32 %v1492, %v1528
  %v1565 = vmax.f32 %v1493, %v1529
  %v1566 = vmax.f32 %v1494, %v1530
  %v1567 = vmax.f32 %v1495, %v1531
  %v1568 = vmax.f32 %v1496, %v1532
  %v1569 = vmax.f32 %v1497, %v1533
  %v1570 = vmax.f32 %v1498, %v1534
  %v1571 = vmax.f32 %v1499, %v1535
  %v1572 = vmax.f32 %v1500, %v1536
  %v1573 = vmax.f32 %v1501, %v1537
  %v1574 = vmax.f32 %v1502, %v1538
  %v1575 = vmax.f32 %v1503, %v1539
  %v1576 = vmax.f32 %v1504, %v1540
  %v1577 = vmax.f32 %v1505, %v1541
  %v1578 = vmax.f32 %v1506, %v1542
  %v1579 = vmax.f32 %v1507, %v1543
  %v1580 = vmax.f32 %v1508, %v1544
  %v1581 = vmax.f32 %v1509, %v1545
  %v1582 = vmax.f32 %v1510, %v1546
  %v1583 = vld [vmem:[%s5] sm:$0x1]
  %v1585 = vlaneseq
  %v1586 = vshrl.u32 %v1585, 7
  %v1587 = vsub.s32 0, %v1586
  %v1588 = vrot.slane %v1583, %v1587
  %v1590 = vadd.f32 %v1547, %v1588
  %v1591 = vadd.f32 %v1548, %v1588
  %v1592 = vadd.f32 %v1549, %v1588
  %v1593 = vadd.f32 %v1550, %v1588
  %v1594 = vadd.f32 %v1551, %v1588
  %v1595 = vadd.f32 %v1552, %v1588
  %v1596 = vadd.f32 %v1553, %v1588
  %v1597 = vadd.f32 %v1554, %v1588
  %v1598 = vadd.f32 %v1555, %v1588
  %v1599 = vadd.f32 %v1556, %v1588
  %v1600 = vadd.f32 %v1557, %v1588
  %v1601 = vadd.f32 %v1558, %v1588
  %v1602 = vadd.f32 %v1559, %v1588
  %v1603 = vadd.f32 %v1560, %v1588
  %v1604 = vadd.f32 %v1561, %v1588
  %v1605 = vadd.f32 %v1562, %v1588
  %v1606 = vadd.f32 %v1563, %v1588
  %v1607 = vadd.f32 %v1564, %v1588
  %v1608 = vadd.f32 %v1565, %v1588
  %v1609 = vadd.f32 %v1566, %v1588
  %v1610 = vadd.f32 %v1567, %v1588
  %v1611 = vadd.f32 %v1568, %v1588
  %v1612 = vadd.f32 %v1569, %v1588
  %v1613 = vadd.f32 %v1570, %v1588
  %v1614 = vadd.f32 %v1571, %v1588
  %v1615 = vadd.f32 %v1572, %v1588
  %v1616 = vadd.f32 %v1573, %v1588
  %v1617 = vadd.f32 %v1574, %v1588
  %v1618 = vadd.f32 %v1575, %v1588
  %v1619 = vadd.f32 %v1576, %v1588
  %v1620 = vadd.f32 %v1577, %v1588
  %v1621 = vadd.f32 %v1578, %v1588
  %v1622 = vadd.f32 %v1579, %v1588
  %v1623 = vadd.f32 %v1580, %v1588
  %v1624 = vadd.f32 %v1581, %v1588
  %v1625 = vadd.f32 %v1582, %v1588
  %v1626 = vmax.f32 %v1590, 0.0
  %v1627 = vmax.f32 %v1591, 0.0
  %v1628 = vmax.f32 %v1592, 0.0
  %v1629 = vmax.f32 %v1593, 0.0
  %v1630 = vmax.f32 %v1594, 0.0
  %v1631 = vmax.f32 %v1595, 0.0
  %v1632 = vmax.f32 %v1596, 0.0
  %v1633 = vmax.f32 %v1597, 0.0
  %v1634 = vmax.f32 %v1598, 0.0
  %v1635 = vmax.f32 %v1599, 0.0
  %v1636 = vmax.f32 %v1600, 0.0
  %v1637 = vmax.f32 %v1601, 0.0
  %v1638 = vmax.f32 %v1602, 0.0
  %v1639 = vmax.f32 %v1603, 0.0
  %v1640 = vmax.f32 %v1604, 0.0
  %v1641 = vmax.f32 %v1605, 0.0
  %v1642 = vmax.f32 %v1606, 0.0
  %v1643 = vmax.f32 %v1607, 0.0
  %v1644 = vmax.f32 %v1608, 0.0
  %v1645 = vmax.f32 %v1609, 0.0
  %v1646 = vmax.f32 %v1610, 0.0
  %v1647 = vmax.f32 %v1611, 0.0
  %v1648 = vmax.f32 %v1612, 0.0
  %v1649 = vmax.f32 %v1613, 0.0
  %v1650 = vmax.f32 %v1614, 0.0
  %v1651 = vmax.f32 %v1615, 0.0
  %v1652 = vmax.f32 %v1616, 0.0
  %v1653 = vmax.f32 %v1617, 0.0
  %v1654 = vmax.f32 %v1618, 0.0
  %v1655 = vmax.f32 %v1619, 0.0
  %v1656 = vmax.f32 %v1620, 0.0
  %v1657 = vmax.f32 %v1621, 0.0
  %v1658 = vmax.f32 %v1622, 0.0
  %v1659 = vmax.f32 %v1623, 0.0
  %v1660 = vmax.f32 %v1624, 0.0
  %v1661 = vmax.f32 %v1625, 0.0
  %1662 = vst [vmem:[%s6] sm:$0xff] %v1626
  %1663 = vst [vmem:[%s6 + $0x8] sm:$0xff] %v1627
  %1664 = vst [vmem:[%s6 + $0x10] sm:$0xff] %v1628
  %1665 = vst [vmem:[%s6 + $0x18] sm:$0xff] %v1629
  %1666 = vst [vmem:[%s6 + $0x20] sm:$0xff] %v1630
  %1667 = vst [vmem:[%s6 + $0x28] sm:$0xff] %v1631
  %1668 = vst [vmem:[%s6 + $0x30] sm:$0xff] %v1632
  %1669 = vst [vmem:[%s6 + $0x38] sm:$0xff] %v1633
  %1670 = vst [vmem:[%s6 + $0x40] sm:$0xff] %v1634
  %1671 = vst [vmem:[%s6 + $0x48] sm:$0xff] %v1635
  %1672 = vst [vmem:[%s6 + $0x50] sm:$0xff] %v1636
  %1673 = vst [vmem:[%s6 + $0x58] sm:$0xff] %v1637
  %1674 = vst [vmem:[%s6 + $0x60] sm:$0xff] %v1638
  %1675 = vst [vmem:[%s6 + $0x68] sm:$0xff] %v1639
  %1676 = vst [vmem:[%s6 + $0x70] sm:$0xff] %v1640
  %1677 = vst [vmem:[%s6 + $0x78] sm:$0xff] %v1641
  %1678 = vst [vmem:[%s6 + $0x80] sm:$0xff] %v1642
  %1679 = vst [vmem:[%s6 + $0x88] sm:$0xff] %v1643
  %1680 = vst [vmem:[%s6 + $0x90] sm:$0xff] %v1644
  %1681 = vst [vmem:[%s6 + $0x98] sm:$0xff] %v1645
  %1682 = vst [vmem:[%s6 + $0xa0] sm:$0xff] %v1646
  %1683 = vst [vmem:[%s6 + $0xa8] sm:$0xff] %v1647
  %1684 = vst [vmem:[%s6 + $0xb0] sm:$0xff] %v1648
  %1685 = vst [vmem:[%s6 + $0xb8] sm:$0xff] %v1649
  %1686 = vst [vmem:[%s6 + $0xc0] sm:$0xff] %v1650
  %1687 = vst [vmem:[%s6 + $0xc8] sm:$0xff] %v1651
  %1688 = vst [vmem:[%s6 + $0xd0] sm:$0xff] %v1652
  %1689 = vst [vmem:[%s6 + $0xd8] sm:$0xff] %v1653
  %1690 = vst [vmem:[%s6 + $0xe0] sm:$0xff] %v1654
  %1691 = vst [vmem:[%s6 + $0xe8] sm:$0xff] %v1655
  %1692 = vst [vmem:[%s6 + $0xf0] sm:$0xff] %v1656
  %1693 = vst [vmem:[%s6 + $0xf8] sm:$0xff] %v1657
  %1694 = vst [vmem:[%s6 + $0x100] sm:$0xff] %v1658
  %1695 = vst [vmem:[%s6 + $0x108] sm:$0xff] %v1659
  %1696 = vst [vmem:[%s6 + $0x110] sm:$0xff] %v1660
  %1697 = vst [vmem:[%s6 + $0x118] sm:$0xff] %v1661
  // Predicated region
  $region26: #{net_forward.11} parent=0 // pred_check
    _
  $region27: #{net_forward.11} parent=0 // pred_check_branch
    %1699 = sbr.rel (0) target = $region29
  $region28: #{net_forward.11} parent=0 // pred_region
    _
  $region29: #{net_forward.11} parent=0 // pred_fallthru
    _
  // Predicated region
  $region30: #{net_forward.11} parent=0 // pred_check
    _
  $region31: #{net_forward.11} parent=0 // pred_check_branch
    %1701 = sbr.rel (0) target = $region33
  $region32: #{net_forward.11} parent=0 // pred_region
    _
  $region33: #{net_forward.11} parent=0 // pred_fallthru
    _

// kernel: net_forward.12
$region0: #{net_forward.12}
  #allocation0 [shape = 'u32[]', space=smem, size = 0x4, offset = 0x4, fixed_abs, tag = 'smem constant byte address 0x4 - core index']
  #allocation1 [shape = 'u32[144,128]{1,0:T(1,128)}', space=vmem, size = 0x12000, scoped, tag = 'internal scratch']
  %s0 = inlined_call_operand.vmem [shape: bf16[288,90], index: 0, kind: input, shape index: {}]
  %s1 = inlined_call_operand.vmem [shape: bf16[90,128], index: 1, kind: input, shape index: {}]
  %s2 = inlined_call_operand.vmem [shape: f32[1,128], index: 2, kind: input, shape index: {}]
  %s3 = inlined_call_operand.vmem [shape: f32[288,128], index: 3, kind: output, shape index: {}]
  %s4 = sld [smem:[#allocation0]]
  $region22: #{net_forward.12} parent=0
    _
  %s6 = ssub.s32 1, %s4
  %s7 = scalar_select 0, %s6, %s4
  // Predicated region
  $region2: #{net_forward.12} parent=0 // pred_check
    _
  $region3: #{net_forward.12} parent=0 // pred_check_branch
    %9 = sbr.rel (0) target = $region5
  $region4: #{net_forward.12} parent=0 // pred_region
    _
  $region5: #{net_forward.12} parent=0 // pred_fallthru
    _
  // Predicated region
  $region6: #{net_forward.12} parent=0 // pred_check
    _
  $region7: #{net_forward.12} parent=0 // pred_check_branch
    %11 = sbr.rel (0) target = $region9
  $region8: #{net_forward.12} parent=0 // pred_region
    _
  $region9: #{net_forward.12} parent=0 // pred_fallthru
    _
  // Predicated region
  $region10: #{net_forward.12} parent=0 // pred_check
    _
  $region11: #{net_forward.12} parent=0 // pred_check_branch
    %13 = sbr.rel (0) target = $region13
  $region12: #{net_forward.12} parent=0 // pred_region
    _
  $region13: #{net_forward.12} parent=0 // pred_fallthru
    _
  %v15 = vld [vmem:[%s0] sm:$0xf]
  %v16 = vld [vmem:[%s0 + $0x4] sm:$0xf]
  %v17 = vld [vmem:[%s0 + $0x8] sm:$0xf]
  %v18 = vld [vmem:[%s0 + $0xc] sm:$0xf]
  %v19 = vld [vmem:[%s0 + $0x10] sm:$0xf]
  %v20 = vld [vmem:[%s0 + $0x14] sm:$0xf]
  %v21 = vld [vmem:[%s0 + $0x18] sm:$0xf]
  %v22 = vld [vmem:[%s0 + $0x1c] sm:$0xf]
  %v23 = vld [vmem:[%s0 + $0x20] sm:$0xf]
  %v24 = vld [vmem:[%s0 + $0x24] sm:$0xf]
  %v25 = vld [vmem:[%s0 + $0x28] sm:$0xf]
  %v26 = vld [vmem:[%s0 + $0x2c] sm:$0xf]
  %v27 = vld [vmem:[%s0 + $0x30] sm:$0xf]
  %v28 = vld [vmem:[%s0 + $0x34] sm:$0xf]
  %v29 = vld [vmem:[%s0 + $0x38] sm:$0xf]
  %v30 = vld [vmem:[%s0 + $0x3c] sm:$0xf]
  %v31 = vld [vmem:[%s0 + $0x40] sm:$0xf]
  %v32 = vld [vmem:[%s0 + $0x44] sm:$0xf]
  %v33 = vld [vmem:[%s0 + $0x48] sm:$0xf]
  %v34 = vld [vmem:[%s0 + $0x4c] sm:$0xf]
  %v35 = vld [vmem:[%s0 + $0x50] sm:$0xf]
  %v36 = vld [vmem:[%s0 + $0x54] sm:$0xf]
  %v37 = vld [vmem:[%s0 + $0x58] sm:$0xf]
  %v38 = vld [vmem:[%s0 + $0x5c] sm:$0xf]
  %v39 = vld [vmem:[%s0 + $0x60] sm:$0xf]
  %v40 = vld [vmem:[%s0 + $0x64] sm:$0xf]
  %v41 = vld [vmem:[%s0 + $0x68] sm:$0xf]
  %v42 = vld [vmem:[%s0 + $0x6c] sm:$0xf]
  %v43 = vld [vmem:[%s0 + $0x70] sm:$0xf]
  %v44 = vld [vmem:[%s0 + $0x74] sm:$0xf]
  %v45 = vld [vmem:[%s0 + $0x78] sm:$0xf]
  %v46 = vld [vmem:[%s0 + $0x7c] sm:$0xf]
  %v47 = vld [vmem:[%s0 + $0x80] sm:$0xf]
  %v48 = vld [vmem:[%s0 + $0x84] sm:$0xf]
  %v49 = vld [vmem:[%s0 + $0x88] sm:$0xf]
  %v50 = vld [vmem:[%s0 + $0x8c] sm:$0xf]
  %v51 = vld [vmem:[%s1] sm:$0xf]
  %v52 = vld [vmem:[%s1 + $0x4] sm:$0xf]
  %v53 = vld [vmem:[%s1 + $0x8] sm:$0xf]
  %v54 = vld [vmem:[%s1 + $0xc] sm:$0xf]
  %v55 = vld [vmem:[%s1 + $0x10] sm:$0xf]
  %v56 = vld [vmem:[%s1 + $0x14] sm:$0xf]
  %v57 = vld [vmem:[%s1 + $0x18] sm:$0xf]
  %v58 = vld [vmem:[%s1 + $0x1c] sm:$0xf]
  %v59 = vld [vmem:[%s1 + $0x20] sm:$0xf]
  %v60 = vld [vmem:[%s1 + $0x24] sm:$0xf]
  %v61 = vld [vmem:[%s1 + $0x28] sm:$0xf]
  %v62 = vld [vmem:[%s1 + $0x2c] sm:$0x1]
  %v63 = vld [vmem:[%s2] sm:$0x1]
  %v65 = vlaneseq
  %v66 = vshrl.u32 %v65, 7
  %v67 = vsub.s32 0, %v66
  %v68 = vrot.slane %v63, %v67
  %v106 = vunpack.c.l.b16 %v15
  %v107 = vunpack.c.l.b16 %v16
  %v108 = vunpack.c.l.b16 %v17
  %v109 = vunpack.c.l.b16 %v18
  %v110 = vunpack.c.l.b16 %v19
  %v111 = vunpack.c.l.b16 %v20
  %v112 = vunpack.c.l.b16 %v21
  %v113 = vunpack.c.l.b16 %v22
  %v114 = vunpack.c.l.b16 %v23
  %v115 = vunpack.c.l.b16 %v24
  %v116 = vunpack.c.l.b16 %v25
  %v117 = vunpack.c.l.b16 %v26
  %v118 = vunpack.c.l.b16 %v27
  %v119 = vunpack.c.l.b16 %v28
  %v120 = vunpack.c.l.b16 %v29
  %v121 = vunpack.c.l.b16 %v30
  %v122 = vunpack.c.l.b16 %v31
  %v123 = vunpack.c.l.b16 %v32
  %v124 = vunpack.c.l.b16 %v33
  %v125 = vunpack.c.l.b16 %v34
  %v126 = vunpack.c.l.b16 %v35
  %v127 = vunpack.c.l.b16 %v36
  %v128 = vunpack.c.l.b16 %v37
  %v129 = vunpack.c.l.b16 %v38
  %v130 = vunpack.c.l.b16 %v39
  %v131 = vunpack.c.l.b16 %v40
  %v132 = vunpack.c.l.b16 %v41
  %v133 = vunpack.c.l.b16 %v42
  %v134 = vunpack.c.l.b16 %v43
  %v135 = vunpack.c.l.b16 %v44
  %v136 = vunpack.c.l.b16 %v45
  %v137 = vunpack.c.l.b16 %v46
  %v138 = vunpack.c.l.b16 %v47
  %v139 = vunpack.c.l.b16 %v48
  %v140 = vunpack.c.l.b16 %v49
  %v141 = vunpack.c.l.b16 %v50
  %v142 = vpack.c.b16 %v107, %v106
  %v143 = vpack.c.b16 %v109, %v108
  %v144 = vpack.c.b16 %v111, %v110
  %v145 = vpack.c.b16 %v113, %v112
  %v146 = vpack.c.b16 %v115, %v114
  %v147 = vpack.c.b16 %v117, %v116
  %v148 = vpack.c.b16 %v119, %v118
  %v149 = vpack.c.b16 %v121, %v120
  %v150 = vpack.c.b16 %v123, %v122
  %v151 = vpack.c.b16 %v125, %v124
  %v152 = vpack.c.b16 %v127, %v126
  %v153 = vpack.c.b16 %v129, %v128
  %v154 = vpack.c.b16 %v131, %v130
  %v155 = vpack.c.b16 %v133, %v132
  %v156 = vpack.c.b16 %v135, %v134
  %v157 = vpack.c.b16 %v137, %v136
  %v158 = vpack.c.b16 %v139, %v138
  %v159 = vpack.c.b16 %v141, %v140
  %v172 = vunpack.c.l.b16 %v51
  %v173 = vunpack.c.l.b16 %v52
  %v174 = vunpack.c.l.b16 %v53
  %v175 = vunpack.c.l.b16 %v54
  %v176 = vunpack.c.l.b16 %v55
  %v177 = vunpack.c.l.b16 %v56
  %v178 = vunpack.c.l.b16 %v57
  %v179 = vunpack.c.l.b16 %v58
  %v180 = vunpack.c.l.b16 %v59
  %v181 = vunpack.c.l.b16 %v60
  %v182 = vunpack.c.l.b16 %v61
  %v183 = vunpack.c.l.b16 %v62
  %v184 = vpack.c.b16 %v173, %v172
  %v185 = vpack.c.b16 %v175, %v174
  %v186 = vpack.c.b16 %v177, %v176
  %v187 = vpack.c.b16 %v179, %v178
  %v188 = vpack.c.b16 %v181, %v180
  %v189 = vpack.c.b16 %v183, %v182
  %vm195 = vcmask 736256
  %v197 = vsel %vm195, %v142, 0
  %v200 = vsel %vm195, %v143, 0
  %v203 = vsel %vm195, %v144, 0
  %v206 = vsel %vm195, %v145, 0
  %v209 = vsel %vm195, %v146, 0
  %v212 = vsel %vm195, %v147, 0
  %v215 = vsel %vm195, %v148, 0
  %v218 = vsel %vm195, %v149, 0
  %v221 = vsel %vm195, %v150, 0
  %v224 = vsel %vm195, %v151, 0
  %v227 = vsel %vm195, %v152, 0
  %v230 = vsel %vm195, %v153, 0
  %v233 = vsel %vm195, %v154, 0
  %v236 = vsel %vm195, %v155, 0
  %v239 = vsel %vm195, %v156, 0
  %v242 = vsel %vm195, %v157, 0
  %v245 = vsel %vm195, %v158, 0
  %v248 = vsel %vm195, %v159, 0
  %vm250 = vcmask 1044480
  %v252 = vsel %vm250, %v189, 0
  %254 = vmatprep.subr.bf16.mxu0 0
  %255 = vmatpush1.bf16.msra.mxu0 %v184
  %256 = vmatprep.subr.bf16.mxu0 0
  %257 = vmatpush1.bf16.msra.mxu0 %v185
  %258 = vmatprep.subr.bf16.mxu0 0
  %259 = vmatpush1.bf16.msra.mxu0 %v186
  %260 = vmatprep.subr.bf16.mxu0 0
  %261 = vmatpush1.bf16.msra.mxu0 %v187
  %262 = vmatprep.subr.bf16.mxu0 0
  %263 = vmatpush1.bf16.msra.mxu0 %v188
  %264 = vmatprep.subr.bf16.mxu0 0
  %265 = vmatpush1.bf16.msra.mxu0 %v252
  %266 = vmatprep.subr.bf16.mxu0 0
  %267 = vmatpush1.bf16.msra.mxu0 0
  %268 = vmatprep.subr.bf16.mxu0 0
  %269 = vmatpush1.bf16.msra.mxu0 0
  %270 = vmatprep.subr.bf16.mxu0 0
  %271 = vmatpush1.bf16.msra.mxu0 0
  %272 = vmatprep.subr.bf16.mxu0 0
  %273 = vmatpush1.bf16.msra.mxu0 0
  %274 = vmatprep.subr.bf16.mxu0 0
  %275 = vmatpush1.bf16.msra.mxu0 0
  %276 = vmatprep.subr.bf16.mxu0 0
  %277 = vmatpush1.bf16.msra.mxu0 0
  %278 = vmatprep.subr.bf16.mxu0 0
  %279 = vmatpush1.bf16.msra.mxu0 0
  %280 = vmatprep.subr.bf16.mxu0 0
  %281 = vmatpush1.bf16.msra.mxu0 0
  %282 = vmatprep.subr.bf16.mxu0 0
  %283 = vmatpush1.bf16.msra.mxu0 0
  %284 = vmatprep.subr.bf16.mxu0 0
  %285 = vmatpush1.bf16.msra.mxu0 0
  %286 = vmatprep.mubr.bf16.mxu0 0
  %287 = vmatmul.mubr.bf16.gmra.mrb[0].mxu0 %v197
  %v288 = vpop.f32.mrb[0].mxu0
  %v289 = vadd.f32 %v68, %v288
  %v290 = vpop.f32.mrb[0].mxu0
  %v291 = vpop.f32.mrb[0].mxu0
  %v292 = vadd.f32 %v68, %v291
  %v293 = vpop.f32.mrb[0].mxu0
  %294 = vmatprep.mubr.bf16.mxu0 0
  %295 = vmatmul.mubr.bf16.gmra.mrb[0].mxu0 %v200
  %v296 = vpop.f32.mrb[0].mxu0
  %v297 = vadd.f32 %v68, %v296
  %v298 = vpop.f32.mrb[0].mxu0
  %v299 = vpop.f32.mrb[0].mxu0
  %v300 = vadd.f32 %v68, %v299
  %v301 = vpop.f32.mrb[0].mxu0
  %302 = vmatprep.mubr.bf16.mxu0 0
  %303 = vmatmul.mubr.bf16.gmra.mrb[0].mxu0 %v203
  %v304 = vpop.f32.mrb[0].mxu0
  %v305 = vadd.f32 %v68, %v304
  %v306 = vpop.f32.mrb[0].mxu0
  %v307 = vpop.f32.mrb[0].mxu0
  %v308 = vadd.f32 %v68, %v307
  %v309 = vpop.f32.mrb[0].mxu0
  %310 = vmatprep.mubr.bf16.mxu0 0
  %311 = vmatmul.mubr.bf16.gmra.mrb[0].mxu0 %v206
  %v312 = vpop.f32.mrb[0].mxu0
  %v313 = vadd.f32 %v68, %v312
  %v314 = vpop.f32.mrb[0].mxu0
  %v315 = vpop.f32.mrb[0].mxu0
  %v316 = vadd.f32 %v68, %v315
  %v317 = vpop.f32.mrb[0].mxu0
  %318 = vmatprep.mubr.bf16.mxu0 0
  %319 = vmatmul.mubr.bf16.gmra.mrb[0].mxu0 %v209
  %v320 = vpop.f32.mrb[0].mxu0
  %v321 = vadd.f32 %v68, %v320
  %v322 = vpop.f32.mrb[0].mxu0
  %v323 = vpop.f32.mrb[0].mxu0
  %v324 = vadd.f32 %v68, %v323
  %v325 = vpop.f32.mrb[0].mxu0
  %326 = vmatprep.mubr.bf16.mxu0 0
  %327 = vmatmul.mubr.bf16.gmra.mrb[0].mxu0 %v212
  %v328 = vpop.f32.mrb[0].mxu0
  %v329 = vadd.f32 %v68, %v328
  %v330 = vpop.f32.mrb[0].mxu0
  %v331 = vpop.f32.mrb[0].mxu0
  %v332 = vadd.f32 %v68, %v331
  %v333 = vpop.f32.mrb[0].mxu0
  %334 = vmatprep.mubr.bf16.mxu0 0
  %335 = vmatmul.mubr.bf16.gmra.mrb[0].mxu0 %v215
  %v336 = vpop.f32.mrb[0].mxu0
  %v337 = vadd.f32 %v68, %v336
  %v338 = vpop.f32.mrb[0].mxu0
  %v339 = vpop.f32.mrb[0].mxu0
  %v340 = vadd.f32 %v68, %v339
  %v341 = vpop.f32.mrb[0].mxu0
  %342 = vmatprep.mubr.bf16.mxu0 0
  %343 = vmatmul.mubr.bf16.gmra.mrb[0].mxu0 %v218
  %v344 = vpop.f32.mrb[0].mxu0
  %v345 = vadd.f32 %v68, %v344
  %v346 = vpop.f32.mrb[0].mxu0
  %v347 = vpop.f32.mrb[0].mxu0
  %v348 = vadd.f32 %v68, %v347
  %v349 = vpop.f32.mrb[0].mxu0
  %350 = vmatprep.mubr.bf16.mxu0 0
  %351 = vmatmul.mubr.bf16.gmra.mrb[0].mxu0 %v221
  %v352 = vpop.f32.mrb[0].mxu0
  %v353 = vadd.f32 %v68, %v352
  %v354 = vpop.f32.mrb[0].mxu0
  %v355 = vpop.f32.mrb[0].mxu0
  %v356 = vadd.f32 %v68, %v355
  %v357 = vpop.f32.mrb[0].mxu0
  %358 = vmatprep.mubr.bf16.mxu0 0
  %359 = vmatmul.mubr.bf16.gmra.mrb[0].mxu0 %v224
  %v360 = vpop.f32.mrb[0].mxu0
  %v361 = vadd.f32 %v68, %v360
  %v362 = vpop.f32.mrb[0].mxu0
  %v363 = vpop.f32.mrb[0].mxu0
  %v364 = vadd.f32 %v68, %v363
  %v365 = vpop.f32.mrb[0].mxu0
  %366 = vmatprep.mubr.bf16.mxu0 0
  %367 = vmatmul.mubr.bf16.gmra.mrb[0].mxu0 %v227
  %v368 = vpop.f32.mrb[0].mxu0
  %v369 = vadd.f32 %v68, %v368
  %v370 = vpop.f32.mrb[0].mxu0
  %v371 = vpop.f32.mrb[0].mxu0
  %v372 = vadd.f32 %v68, %v371
  %v373 = vpop.f32.mrb[0].mxu0
  %374 = vmatprep.mubr.bf16.mxu0 0
  %375 = vmatmul.mubr.bf16.gmra.mrb[0].mxu0 %v230
  %v376 = vpop.f32.mrb[0].mxu0
  %v377 = vadd.f32 %v68, %v376
  %v378 = vpop.f32.mrb[0].mxu0
  %v379 = vpop.f32.mrb[0].mxu0
  %v380 = vadd.f32 %v68, %v379
  %v381 = vpop.f32.mrb[0].mxu0
  %382 = vmatprep.mubr.bf16.mxu0 0
  %383 = vmatmul.mubr.bf16.gmra.mrb[0].mxu0 %v233
  %v384 = vpop.f32.mrb[0].mxu0
  %v385 = vadd.f32 %v68, %v384
  %v386 = vpop.f32.mrb[0].mxu0
  %v387 = vpop.f32.mrb[0].mxu0
  %v388 = vadd.f32 %v68, %v387
  %v389 = vpop.f32.mrb[0].mxu0
  %390 = vmatprep.mubr.bf16.mxu0 0
  %391 = vmatmul.mubr.bf16.gmra.mrb[0].mxu0 %v236
  %v392 = vpop.f32.mrb[0].mxu0
  %v393 = vadd.f32 %v68, %v392
  %v394 = vpop.f32.mrb[0].mxu0
  %v395 = vpop.f32.mrb[0].mxu0
  %v396 = vadd.f32 %v68, %v395
  %v397 = vpop.f32.mrb[0].mxu0
  %398 = vmatprep.mubr.bf16.mxu0 0
  %399 = vmatmul.mubr.bf16.gmra.mrb[0].mxu0 %v239
  %v400 = vpop.f32.mrb[0].mxu0
  %v401 = vadd.f32 %v68, %v400
  %v402 = vpop.f32.mrb[0].mxu0
  %v403 = vpop.f32.mrb[0].mxu0
  %v404 = vadd.f32 %v68, %v403
  %v405 = vpop.f32.mrb[0].mxu0
  %406 = vmatprep.mubr.bf16.mxu0 0
  %407 = vmatmul.mubr.bf16.gmra.mrb[0].mxu0 %v242
  %v408 = vpop.f32.mrb[0].mxu0
  %v409 = vadd.f32 %v68, %v408
  %v410 = vpop.f32.mrb[0].mxu0
  %v411 = vpop.f32.mrb[0].mxu0
  %v412 = vadd.f32 %v68, %v411
  %v413 = vpop.f32.mrb[0].mxu0
  %414 = vmatprep.mubr.bf16.mxu0 0
  %415 = vmatmul.mubr.bf16.gmra.mrb[0].mxu0 %v245
  %v416 = vpop.f32.mrb[0].mxu0
  %v417 = vadd.f32 %v68, %v416
  %v418 = vpop.f32.mrb[0].mxu0
  %v419 = vpop.f32.mrb[0].mxu0
  %v420 = vadd.f32 %v68, %v419
  %v421 = vpop.f32.mrb[0].mxu0
  %422 = vmatprep.mubr.bf16.mxu0 0
  %423 = vmatmul.mubr.bf16.gmra.mrb[0].mxu0 %v248
  %v424 = vpop.f32.mrb[0].mxu0
  %v425 = vadd.f32 %v68, %v424
  %v426 = vpop.f32.mrb[0].mxu0
  %v427 = vpop.f32.mrb[0].mxu0
  %v428 = vadd.f32 %v68, %v427
  %v429 = vpop.f32.mrb[0].mxu0
  %430 = vdwg.mxu0
  %431 = vst [vmem:[%s3] sm:$0xff] %v289
  %432 = vst [vmem:[%s3 + $0x8] sm:$0xff] %v292
  %433 = vst [vmem:[%s3 + $0x10] sm:$0xff] %v297
  %434 = vst [vmem:[%s3 + $0x18] sm:$0xff] %v300
  %435 = vst [vmem:[%s3 + $0x20] sm:$0xff] %v305
  %436 = vst [vmem:[%s3 + $0x28] sm:$0xff] %v308
  %437 = vst [vmem:[%s3 + $0x30] sm:$0xff] %v313
  %438 = vst [vmem:[%s3 + $0x38] sm:$0xff] %v316
  %439 = vst [vmem:[%s3 + $0x40] sm:$0xff] %v321
  %440 = vst [vmem:[%s3 + $0x48] sm:$0xff] %v324
  %441 = vst [vmem:[%s3 + $0x50] sm:$0xff] %v329
  %442 = vst [vmem:[%s3 + $0x58] sm:$0xff] %v332
  %443 = vst [vmem:[%s3 + $0x60] sm:$0xff] %v337
  %444 = vst [vmem:[%s3 + $0x68] sm:$0xff] %v340
  %445 = vst [vmem:[%s3 + $0x70] sm:$0xff] %v345
  %446 = vst [vmem:[%s3 + $0x78] sm:$0xff] %v348
  %447 = vst [vmem:[%s3 + $0x80] sm:$0xff] %v353
  %448 = vst [vmem:[%s3 + $0x88] sm:$0xff] %v356
  %449 = vst [vmem:[%s3 + $0x90] sm:$0xff] %v361
  %450 = vst [vmem:[%s3 + $0x98] sm:$0xff] %v364
  %451 = vst [vmem:[%s3 + $0xa0] sm:$0xff] %v369
  %452 = vst [vmem:[%s3 + $0xa8] sm:$0xff] %v372
  %453 = vst [vmem:[%s3 + $0xb0] sm:$0xff] %v377
  %454 = vst [vmem:[%s3 + $0xb8] sm:$0xff] %v380
  %455 = vst [vmem:[%s3 + $0xc0] sm:$0xff] %v385
  %456 = vst [vmem:[%s3 + $0xc8] sm:$0xff] %v388
  %457 = vst [vmem:[%s3 + $0xd0] sm:$0xff] %v393
  %458 = vst [vmem:[%s3 + $0xd8] sm:$0xff] %v396
  %459 = vst [vmem:[%s3 + $0xe0] sm:$0xff] %v401
  %460 = vst [vmem:[%s3 + $0xe8] sm:$0xff] %v404
  %461 = vst [vmem:[%s3 + $0xf0] sm:$0xff] %v409
  %462 = vst [vmem:[%s3 + $0xf8] sm:$0xff] %v412
  %463 = vst [vmem:[%s3 + $0x100] sm:$0xff] %v417
  %464 = vst [vmem:[%s3 + $0x108] sm:$0xff] %v420
  %465 = vst [vmem:[%s3 + $0x110] sm:$0xff] %v425
  %466 = vst [vmem:[%s3 + $0x118] sm:$0xff] %v428
  // Predicated region
  $region14: #{net_forward.12} parent=0 // pred_check
    _
  $region15: #{net_forward.12} parent=0 // pred_check_branch
    %468 = sbr.rel (0) target = $region17
  $region16: #{net_forward.12} parent=0 // pred_region
    _
  $region17: #{net_forward.12} parent=0 // pred_fallthru
    _
  // Predicated region
  $region18: #{net_forward.12} parent=0 // pred_check
    _
  $region19: #{net_forward.12} parent=0 // pred_check_branch
    %470 = sbr.rel (0) target = $region21
  $region20: #{net_forward.12} parent=0 // pred_region
    _
  $region21: #{net_forward.12} parent=0 // pred_fallthru
    _

// kernel: net_forward.14
$region0: #{net_forward.14}
  #allocation0 [shape = 'u32[]', space=smem, size = 0x4, offset = 0x4, fixed_abs, tag = 'smem constant byte address 0x4 - core index']
  #allocation1 [shape = 'u32[144,128]{1,0:T(1,128)}', space=vmem, size = 0x12000, scoped, tag = 'internal scratch']
  %s0 = inlined_call_operand.vmem [shape: bf16[288,144], index: 0, kind: input, shape index: {}]
  %s1 = inlined_call_operand.vmem [shape: bf16[144,128], index: 1, kind: input, shape index: {}]
  %s2 = inlined_call_operand.vmem [shape: f32[1,128], index: 2, kind: input, shape index: {}]
  %s3 = inlined_call_operand.vmem [shape: f32[288,128], index: 3, kind: output, shape index: {}]
  %s4 = sld [smem:[#allocation0]]
  $region22: #{net_forward.14} parent=0
    _
  %s6 = ssub.s32 1, %s4
  %s7 = scalar_select 0, %s6, %s4
  // Predicated region
  $region2: #{net_forward.14} parent=0 // pred_check
    _
  $region3: #{net_forward.14} parent=0 // pred_check_branch
    %9 = sbr.rel (0) target = $region5
  $region4: #{net_forward.14} parent=0 // pred_region
    _
  $region5: #{net_forward.14} parent=0 // pred_fallthru
    _
  // Predicated region
  $region6: #{net_forward.14} parent=0 // pred_check
    _
  $region7: #{net_forward.14} parent=0 // pred_check_branch
    %11 = sbr.rel (0) target = $region9
  $region8: #{net_forward.14} parent=0 // pred_region
    _
  $region9: #{net_forward.14} parent=0 // pred_fallthru
    _
  // Predicated region
  $region10: #{net_forward.14} parent=0 // pred_check
    _
  $region11: #{net_forward.14} parent=0 // pred_check_branch
    %13 = sbr.rel (0) target = $region13
  $region12: #{net_forward.14} parent=0 // pred_region
    _
  $region13: #{net_forward.14} parent=0 // pred_fallthru
    _
  %v15 = vld [vmem:[%s0] sm:$0xff]
  %v16 = vld [vmem:[%s0 + $0x8] sm:$0xff]
  %v17 = vld [vmem:[%s0 + $0x10] sm:$0xff]
  %v18 = vld [vmem:[%s0 + $0x18] sm:$0xff]
  %v19 = vld [vmem:[%s0 + $0x20] sm:$0xff]
  %v20 = vld [vmem:[%s0 + $0x28] sm:$0xff]
  %v21 = vld [vmem:[%s0 + $0x30] sm:$0xff]
  %v22 = vld [vmem:[%s0 + $0x38] sm:$0xff]
  %v23 = vld [vmem:[%s0 + $0x40] sm:$0xff]
  %v24 = vld [vmem:[%s0 + $0x48] sm:$0xff]
  %v25 = vld [vmem:[%s0 + $0x50] sm:$0xff]
  %v26 = vld [vmem:[%s0 + $0x58] sm:$0xff]
  %v27 = vld [vmem:[%s0 + $0x60] sm:$0xff]
  %v28 = vld [vmem:[%s0 + $0x68] sm:$0xff]
  %v29 = vld [vmem:[%s0 + $0x70] sm:$0xff]
  %v30 = vld [vmem:[%s0 + $0x78] sm:$0xff]
  %v31 = vld [vmem:[%s0 + $0x80] sm:$0xff]
  %v32 = vld [vmem:[%s0 + $0x88] sm:$0xff]
  %v33 = vld [vmem:[%s0 + $0x90] sm:$0xff]
  %v34 = vld [vmem:[%s0 + $0x98] sm:$0xff]
  %v35 = vld [vmem:[%s0 + $0xa0] sm:$0xff]
  %v36 = vld [vmem:[%s0 + $0xa8] sm:$0xff]
  %v37 = vld [vmem:[%s0 + $0xb0] sm:$0xff]
  %v38 = vld [vmem:[%s0 + $0xb8] sm:$0xff]
  %v39 = vld [vmem:[%s0 + $0xc0] sm:$0xff]
  %v40 = vld [vmem:[%s0 + $0xc8] sm:$0xff]
  %v41 = vld [vmem:[%s0 + $0xd0] sm:$0xff]
  %v42 = vld [vmem:[%s0 + $0xd8] sm:$0xff]
  %v43 = vld [vmem:[%s0 + $0xe0] sm:$0xff]
  %v44 = vld [vmem:[%s0 + $0xe8] sm:$0xff]
  %v45 = vld [vmem:[%s0 + $0xf0] sm:$0xff]
  %v46 = vld [vmem:[%s0 + $0xf8] sm:$0xff]
  %v47 = vld [vmem:[%s0 + $0x100] sm:$0xff]
  %v48 = vld [vmem:[%s0 + $0x108] sm:$0xff]
  %v49 = vld [vmem:[%s0 + $0x110] sm:$0xff]
  %v50 = vld [vmem:[%s0 + $0x118] sm:$0xff]
  %v51 = vld [vmem:[%s1] sm:$0xf]
  %v52 = vld [vmem:[%s1 + $0x4] sm:$0xf]
  %v53 = vld [vmem:[%s1 + $0x8] sm:$0xf]
  %v54 = vld [vmem:[%s1 + $0xc] sm:$0xf]
  %v55 = vld [vmem:[%s1 + $0x10] sm:$0xf]
  %v56 = vld [vmem:[%s1 + $0x14] sm:$0xf]
  %v57 = vld [vmem:[%s1 + $0x18] sm:$0xf]
  %v58 = vld [vmem:[%s1 + $0x1c] sm:$0xf]
  %v59 = vld [vmem:[%s1 + $0x20] sm:$0xf]
  %v60 = vld [vmem:[%s1 + $0x24] sm:$0xf]
  %v61 = vld [vmem:[%s1 + $0x28] sm:$0xf]
  %v62 = vld [vmem:[%s1 + $0x2c] sm:$0xf]
  %v63 = vld [vmem:[%s1 + $0x30] sm:$0xf]
  %v64 = vld [vmem:[%s1 + $0x34] sm:$0xf]
  %v65 = vld [vmem:[%s1 + $0x38] sm:$0xf]
  %v66 = vld [vmem:[%s1 + $0x3c] sm:$0xf]
  %v67 = vld [vmem:[%s1 + $0x40] sm:$0xf]
  %v68 = vld [vmem:[%s1 + $0x44] sm:$0xf]
  %v69 = vld [vmem:[%s2] sm:$0x1]
  %v71 = vlaneseq
  %v72 = vshrl.u32 %v71, 7
  %v73 = vsub.s32 0, %v72
  %v74 = vrot.slane %v69, %v73
  %v112 = vunpack.c.l.b16 %v15
  %v113 = vunpack.c.h.b16 %v15
  %v114 = vunpack.c.l.b16 %v16
  %v115 = vunpack.c.h.b16 %v16
  %v116 = vunpack.c.l.b16 %v17
  %v117 = vunpack.c.h.b16 %v17
  %v118 = vunpack.c.l.b16 %v18
  %v119 = vunpack.c.h.b16 %v18
  %v120 = vunpack.c.l.b16 %v19
  %v121 = vunpack.c.h.b16 %v19
  %v122 = vunpack.c.l.b16 %v20
  %v123 = vunpack.c.h.b16 %v20
  %v124 = vunpack.c.l.b16 %v21
  %v125 = vunpack.c.h.b16 %v21
  %v126 = vunpack.c.l.b16 %v22
  %v127 = vunpack.c.h.b16 %v22
  %v128 = vunpack.c.l.b16 %v23
  %v129 = vunpack.c.h.b16 %v23
  %v130 = vunpack.c.l.b16 %v24
  %v131 = vunpack.c.h.b16 %v24
  %v132 = vunpack.c.l.b16 %v25
  %v133 = vunpack.c.h.b16 %v25
  %v134 = vunpack.c.l.b16 %v26
  %v135 = vunpack.c.h.b16 %v26
  %v136 = vunpack.c.l.b16 %v27
  %v137 = vunpack.c.h.b16 %v27
  %v138 = vunpack.c.l.b16 %v28
  %v139 = vunpack.c.h.b16 %v28
  %v140 = vunpack.c.l.b16 %v29
  %v141 = vunpack.c.h.b16 %v29
  %v142 = vunpack.c.l.b16 %v30
  %v143 = vunpack.c.h.b16 %v30
  %v144 = vunpack.c.l.b16 %v31
  %v145 = vunpack.c.h.b16 %v31
  %v146 = vunpack.c.l.b16 %v32
  %v147 = vunpack.c.h.b16 %v32
  %v148 = vunpack.c.l.b16 %v33
  %v149 = vunpack.c.h.b16 %v33
  %v150 = vunpack.c.l.b16 %v34
  %v151 = vunpack.c.h.b16 %v34
  %v152 = vunpack.c.l.b16 %v35
  %v153 = vunpack.c.h.b16 %v35
  %v154 = vunpack.c.l.b16 %v36
  %v155 = vunpack.c.h.b16 %v36
  %v156 = vunpack.c.l.b16 %v37
  %v157 = vunpack.c.h.b16 %v37
  %v158 = vunpack.c.l.b16 %v38
  %v159 = vunpack.c.h.b16 %v38
  %v160 = vunpack.c.l.b16 %v39
  %v161 = vunpack.c.h.b16 %v39
  %v162 = vunpack.c.l.b16 %v40
  %v163 = vunpack.c.h.b16 %v40
  %v164 = vunpack.c.l.b16 %v41
  %v165 = vunpack.c.h.b16 %v41
  %v166 = vunpack.c.l.b16 %v42
  %v167 = vunpack.c.h.b16 %v42
  %v168 = vunpack.c.l.b16 %v43
  %v169 = vunpack.c.h.b16 %v43
  %v170 = vunpack.c.l.b16 %v44
  %v171 = vunpack.c.h.b16 %v44
  %v172 = vunpack.c.l.b16 %v45
  %v173 = vunpack.c.h.b16 %v45
  %v174 = vunpack.c.l.b16 %v46
  %v175 = vunpack.c.h.b16 %v46
  %v176 = vunpack.c.l.b16 %v47
  %v177 = vunpack.c.h.b16 %v47
  %v178 = vunpack.c.l.b16 %v48
  %v179 = vunpack.c.h.b16 %v48
  %v180 = vunpack.c.l.b16 %v49
  %v181 = vunpack.c.h.b16 %v49
  %v182 = vunpack.c.l.b16 %v50
  %v183 = vunpack.c.h.b16 %v50
  %v184 = vpack.c.b16 %v114, %v112
  %v185 = vpack.c.b16 %v115, %v113
  %v186 = vpack.c.b16 %v118, %v116
  %v187 = vpack.c.b16 %v119, %v117
  %v188 = vpack.c.b16 %v122, %v120
  %v189 = vpack.c.b16 %v123, %v121
  %v190 = vpack.c.b16 %v126, %v124
  %v191 = vpack.c.b16 %v127, %v125
  %v192 = vpack.c.b16 %v130, %v128
  %v193 = vpack.c.b16 %v131, %v129
  %v194 = vpack.c.b16 %v134, %v132
  %v195 = vpack.c.b16 %v135, %v133
  %v196 = vpack.c.b16 %v138, %v136
  %v197 = vpack.c.b16 %v139, %v137
  %v198 = vpack.c.b16 %v142, %v140
  %v199 = vpack.c.b16 %v143, %v141
  %v200 = vpack.c.b16 %v146, %v144
  %v201 = vpack.c.b16 %v147, %v145
  %v202 = vpack.c.b16 %v150, %v148
  %v203 = vpack.c.b16 %v151, %v149
  %v204 = vpack.c.b16 %v154, %v152
  %v205 = vpack.c.b16 %v155, %v153
  %v206 = vpack.c.b16 %v158, %v156
  %v207 = vpack.c.b16 %v159, %v157
  %v208 = vpack.c.b16 %v162, %v160
  %v209 = vpack.c.b16 %v163, %v161
  %v210 = vpack.c.b16 %v166, %v164
  %v211 = vpack.c.b16 %v167, %v165
  %v212 = vpack.c.b16 %v170, %v168
  %v213 = vpack.c.b16 %v171, %v169
  %v214 = vpack.c.b16 %v174, %v172
  %v215 = vpack.c.b16 %v175, %v173
  %v216 = vpack.c.b16 %v178, %v176
  %v217 = vpack.c.b16 %v179, %v177
  %v218 = vpack.c.b16 %v182, %v180
  %v219 = vpack.c.b16 %v183, %v181
  %v256 = vunpack.c.l.b16 %v51
  %v257 = vunpack.c.l.b16 %v52
  %v258 = vunpack.c.l.b16 %v53
  %v259 = vunpack.c.l.b16 %v54
  %v260 = vunpack.c.l.b16 %v55
  %v261 = vunpack.c.l.b16 %v56
  %v262 = vunpack.c.l.b16 %v57
  %v263 = vunpack.c.l.b16 %v58
  %v264 = vunpack.c.l.b16 %v59
  %v265 = vunpack.c.l.b16 %v60
  %v266 = vunpack.c.l.b16 %v61
  %v267 = vunpack.c.l.b16 %v62
  %v268 = vunpack.c.l.b16 %v63
  %v269 = vunpack.c.l.b16 %v64
  %v270 = vunpack.c.l.b16 %v65
  %v271 = vunpack.c.l.b16 %v66
  %v272 = vunpack.c.l.b16 %v67
  %v273 = vunpack.c.l.b16 %v68
  %v274 = vpack.c.b16 %v257, %v256
  %v275 = vpack.c.b16 %v259, %v258
  %v276 = vpack.c.b16 %v261, %v260
  %v277 = vpack.c.b16 %v263, %v262
  %v278 = vpack.c.b16 %v265, %v264
  %v279 = vpack.c.b16 %v267, %v266
  %v280 = vpack.c.b16 %v269, %v268
  %v281 = vpack.c.b16 %v271, %v270
  %v282 = vpack.c.b16 %v273, %v272
  %vm292 = vcmask 130048
  %v294 = vsel %vm292, %v185, 0
  %v297 = vsel %vm292, %v187, 0
  %v300 = vsel %vm292, %v189, 0
  %v303 = vsel %vm292, %v191, 0
  %v306 = vsel %vm292, %v193, 0
  %v309 = vsel %vm292, %v195, 0
  %v312 = vsel %vm292, %v197, 0
  %v315 = vsel %vm292, %v199, 0
  %v318 = vsel %vm292, %v201, 0
  %v321 = vsel %vm292, %v203, 0
  %v324 = vsel %vm292, %v205, 0
  %v327 = vsel %vm292, %v207, 0
  %v330 = vsel %vm292, %v209, 0
  %v333 = vsel %vm292, %v211, 0
  %v336 = vsel %vm292, %v213, 0
  %v339 = vsel %vm292, %v215, 0
  %v342 = vsel %vm292, %v217, 0
  %v345 = vsel %vm292, %v219, 0
  %347 = vmatprep.subr.bf16.mxu0 0
  %348 = vmatpush1.bf16.msra.mxu0 %v274
  %349 = vmatprep.subr.bf16.mxu0 0
  %350 = vmatpush1.bf16.msra.mxu0 %v275
  %351 = vmatprep.subr.bf16.mxu0 0
  %352 = vmatpush1.bf16.msra.mxu0 %v276
  %353 = vmatprep.subr.bf16.mxu0 0
  %354 = vmatpush1.bf16.msra.mxu0 %v277
  %355 = vmatprep.subr.bf16.mxu0 0
  %356 = vmatpush1.bf16.msra.mxu0 %v278
  %357 = vmatprep.subr.bf16.mxu0 0
  %358 = vmatpush1.bf16.msra.mxu0 %v279
  %359 = vmatprep.subr.bf16.mxu0 0
  %360 = vmatpush1.bf16.msra.mxu0 %v280
  %361 = vmatprep.subr.bf16.mxu0 0
  %362 = vmatpush1.bf16.msra.mxu0 %v281
  %363 = vmatprep.subr.bf16.mxu0 0
  %364 = vmatpush1.bf16.msra.mxu0 %v282
  %365 = vmatprep.subr.bf16.mxu0 0
  %366 = vmatpush1.bf16.msra.mxu0 0
  %367 = vmatprep.subr.bf16.mxu0 0
  %368 = vmatpush1.bf16.msra.mxu0 0
  %369 = vmatprep.subr.bf16.mxu0 0
  %370 = vmatpush1.bf16.msra.mxu0 0
  %371 = vmatprep.subr.bf16.mxu0 0
  %372 = vmatpush1.bf16.msra.mxu0 0
  %373 = vmatprep.subr.bf16.mxu0 0
  %374 = vmatpush1.bf16.msra.mxu0 0
  %375 = vmatprep.subr.bf16.mxu0 0
  %376 = vmatpush1.bf16.msra.mxu0 0
  %377 = vmatprep.subr.bf16.mxu0 0
  %378 = vmatpush1.bf16.msra.mxu0 0
  %379 = vmatprep.mubr.bf16.mxu0 %v294
  %380 = vmatmul.mubr.bf16.gmra.mrb[0].mxu0 %v184
  %v381 = vpop.f32.mrb[0].mxu0
  %v382 = vadd.f32 %v74, %v381
  %v383 = vpop.f32.mrb[0].mxu0
  %v384 = vpop.f32.mrb[0].mxu0
  %v385 = vadd.f32 %v74, %v384
  %v386 = vpop.f32.mrb[0].mxu0
  %387 = vmatprep.mubr.bf16.mxu0 %v297
  %388 = vmatmul.mubr.bf16.gmra.mrb[0].mxu0 %v186
  %v389 = vpop.f32.mrb[0].mxu0
  %v390 = vadd.f32 %v74, %v389
  %v391 = vpop.f32.mrb[0].mxu0
  %v392 = vpop.f32.mrb[0].mxu0
  %v393 = vadd.f32 %v74, %v392
  %v394 = vpop.f32.mrb[0].mxu0
  %395 = vmatprep.mubr.bf16.mxu0 %v300
  %396 = vmatmul.mubr.bf16.gmra.mrb[0].mxu0 %v188
  %v397 = vpop.f32.mrb[0].mxu0
  %v398 = vadd.f32 %v74, %v397
  %v399 = vpop.f32.mrb[0].mxu0
  %v400 = vpop.f32.mrb[0].mxu0
  %v401 = vadd.f32 %v74, %v400
  %v402 = vpop.f32.mrb[0].mxu0
  %403 = vmatprep.mubr.bf16.mxu0 %v303
  %404 = vmatmul.mubr.bf16.gmra.mrb[0].mxu0 %v190
  %v405 = vpop.f32.mrb[0].mxu0
  %v406 = vadd.f32 %v74, %v405
  %v407 = vpop.f32.mrb[0].mxu0
  %v408 = vpop.f32.mrb[0].mxu0
  %v409 = vadd.f32 %v74, %v408
  %v410 = vpop.f32.mrb[0].mxu0
  %411 = vmatprep.mubr.bf16.mxu0 %v306
  %412 = vmatmul.mubr.bf16.gmra.mrb[0].mxu0 %v192
  %v413 = vpop.f32.mrb[0].mxu0
  %v414 = vadd.f32 %v74, %v413
  %v415 = vpop.f32.mrb[0].mxu0
  %v416 = vpop.f32.mrb[0].mxu0
  %v417 = vadd.f32 %v74, %v416
  %v418 = vpop.f32.mrb[0].mxu0
  %419 = vmatprep.mubr.bf16.mxu0 %v309
  %420 = vmatmul.mubr.bf16.gmra.mrb[0].mxu0 %v194
  %v421 = vpop.f32.mrb[0].mxu0
  %v422 = vadd.f32 %v74, %v421
  %v423 = vpop.f32.mrb[0].mxu0
  %v424 = vpop.f32.mrb[0].mxu0
  %v425 = vadd.f32 %v74, %v424
  %v426 = vpop.f32.mrb[0].mxu0
  %427 = vmatprep.mubr.bf16.mxu0 %v312
  %428 = vmatmul.mubr.bf16.gmra.mrb[0].mxu0 %v196
  %v429 = vpop.f32.mrb[0].mxu0
  %v430 = vadd.f32 %v74, %v429
  %v431 = vpop.f32.mrb[0].mxu0
  %v432 = vpop.f32.mrb[0].mxu0
  %v433 = vadd.f32 %v74, %v432
  %v434 = vpop.f32.mrb[0].mxu0
  %435 = vmatprep.mubr.bf16.mxu0 %v315
  %436 = vmatmul.mubr.bf16.gmra.mrb[0].mxu0 %v198
  %v437 = vpop.f32.mrb[0].mxu0
  %v438 = vadd.f32 %v74, %v437
  %v439 = vpop.f32.mrb[0].mxu0
  %v440 = vpop.f32.mrb[0].mxu0
  %v441 = vadd.f32 %v74, %v440
  %v442 = vpop.f32.mrb[0].mxu0
  %443 = vmatprep.mubr.bf16.mxu0 %v318
  %444 = vmatmul.mubr.bf16.gmra.mrb[0].mxu0 %v200
  %v445 = vpop.f32.mrb[0].mxu0
  %v446 = vadd.f32 %v74, %v445
  %v447 = vpop.f32.mrb[0].mxu0
  %v448 = vpop.f32.mrb[0].mxu0
  %v449 = vadd.f32 %v74, %v448
  %v450 = vpop.f32.mrb[0].mxu0
  %451 = vmatprep.mubr.bf16.mxu0 %v321
  %452 = vmatmul.mubr.bf16.gmra.mrb[0].mxu0 %v202
  %v453 = vpop.f32.mrb[0].mxu0
  %v454 = vadd.f32 %v74, %v453
  %v455 = vpop.f32.mrb[0].mxu0
  %v456 = vpop.f32.mrb[0].mxu0
  %v457 = vadd.f32 %v74, %v456
  %v458 = vpop.f32.mrb[0].mxu0
  %459 = vmatprep.mubr.bf16.mxu0 %v324
  %460 = vmatmul.mubr.bf16.gmra.mrb[0].mxu0 %v204
  %v461 = vpop.f32.mrb[0].mxu0
  %v462 = vadd.f32 %v74, %v461
  %v463 = vpop.f32.mrb[0].mxu0
  %v464 = vpop.f32.mrb[0].mxu0
  %v465 = vadd.f32 %v74, %v464
  %v466 = vpop.f32.mrb[0].mxu0
  %467 = vmatprep.mubr.bf16.mxu0 %v327
  %468 = vmatmul.mubr.bf16.gmra.mrb[0].mxu0 %v206
  %v469 = vpop.f32.mrb[0].mxu0
  %v470 = vadd.f32 %v74, %v469
  %v471 = vpop.f32.mrb[0].mxu0
  %v472 = vpop.f32.mrb[0].mxu0
  %v473 = vadd.f32 %v74, %v472
  %v474 = vpop.f32.mrb[0].mxu0
  %475 = vmatprep.mubr.bf16.mxu0 %v330
  %476 = vmatmul.mubr.bf16.gmra.mrb[0].mxu0 %v208
  %v477 = vpop.f32.mrb[0].mxu0
  %v478 = vadd.f32 %v74, %v477
  %v479 = vpop.f32.mrb[0].mxu0
  %v480 = vpop.f32.mrb[0].mxu0
  %v481 = vadd.f32 %v74, %v480
  %v482 = vpop.f32.mrb[0].mxu0
  %483 = vmatprep.mubr.bf16.mxu0 %v333
  %484 = vmatmul.mubr.bf16.gmra.mrb[0].mxu0 %v210
  %v485 = vpop.f32.mrb[0].mxu0
  %v486 = vadd.f32 %v74, %v485
  %v487 = vpop.f32.mrb[0].mxu0
  %v488 = vpop.f32.mrb[0].mxu0
  %v489 = vadd.f32 %v74, %v488
  %v490 = vpop.f32.mrb[0].mxu0
  %491 = vmatprep.mubr.bf16.mxu0 %v336
  %492 = vmatmul.mubr.bf16.gmra.mrb[0].mxu0 %v212
  %v493 = vpop.f32.mrb[0].mxu0
  %v494 = vadd.f32 %v74, %v493
  %v495 = vpop.f32.mrb[0].mxu0
  %v496 = vpop.f32.mrb[0].mxu0
  %v497 = vadd.f32 %v74, %v496
  %v498 = vpop.f32.mrb[0].mxu0
  %499 = vmatprep.mubr.bf16.mxu0 %v339
  %500 = vmatmul.mubr.bf16.gmra.mrb[0].mxu0 %v214
  %v501 = vpop.f32.mrb[0].mxu0
  %v502 = vadd.f32 %v74, %v501
  %v503 = vpop.f32.mrb[0].mxu0
  %v504 = vpop.f32.mrb[0].mxu0
  %v505 = vadd.f32 %v74, %v504
  %v506 = vpop.f32.mrb[0].mxu0
  %507 = vmatprep.mubr.bf16.mxu0 %v342
  %508 = vmatmul.mubr.bf16.gmra.mrb[0].mxu0 %v216
  %v509 = vpop.f32.mrb[0].mxu0
  %v510 = vadd.f32 %v74, %v509
  %v511 = vpop.f32.mrb[0].mxu0
  %v512 = vpop.f32.mrb[0].mxu0
  %v513 = vadd.f32 %v74, %v512
  %v514 = vpop.f32.mrb[0].mxu0
  %515 = vmatprep.mubr.bf16.mxu0 %v345
  %516 = vmatmul.mubr.bf16.gmra.mrb[0].mxu0 %v218
  %v517 = vpop.f32.mrb[0].mxu0
  %v518 = vadd.f32 %v74, %v517
  %v519 = vpop.f32.mrb[0].mxu0
  %v520 = vpop.f32.mrb[0].mxu0
  %v521 = vadd.f32 %v74, %v520
  %v522 = vpop.f32.mrb[0].mxu0
  %523 = vdwg.mxu0
  %524 = vst [vmem:[%s3] sm:$0xff] %v382
  %525 = vst [vmem:[%s3 + $0x8] sm:$0xff] %v385
  %526 = vst [vmem:[%s3 + $0x10] sm:$0xff] %v390
  %527 = vst [vmem:[%s3 + $0x18] sm:$0xff] %v393
  %528 = vst [vmem:[%s3 + $0x20] sm:$0xff] %v398
  %529 = vst [vmem:[%s3 + $0x28] sm:$0xff] %v401
  %530 = vst [vmem:[%s3 + $0x30] sm:$0xff] %v406
  %531 = vst [vmem:[%s3 + $0x38] sm:$0xff] %v409
  %532 = vst [vmem:[%s3 + $0x40] sm:$0xff] %v414
  %533 = vst [vmem:[%s3 + $0x48] sm:$0xff] %v417
  %534 = vst [vmem:[%s3 + $0x50] sm:$0xff] %v422
  %535 = vst [vmem:[%s3 + $0x58] sm:$0xff] %v425
  %536 = vst [vmem:[%s3 + $0x60] sm:$0xff] %v430
  %537 = vst [vmem:[%s3 + $0x68] sm:$0xff] %v433
  %538 = vst [vmem:[%s3 + $0x70] sm:$0xff] %v438
  %539 = vst [vmem:[%s3 + $0x78] sm:$0xff] %v441
  %540 = vst [vmem:[%s3 + $0x80] sm:$0xff] %v446
  %541 = vst [vmem:[%s3 + $0x88] sm:$0xff] %v449
  %542 = vst [vmem:[%s3 + $0x90] sm:$0xff] %v454
  %543 = vst [vmem:[%s3 + $0x98] sm:$0xff] %v457
  %544 = vst [vmem:[%s3 + $0xa0] sm:$0xff] %v462
  %545 = vst [vmem:[%s3 + $0xa8] sm:$0xff] %v465
  %546 = vst [vmem:[%s3 + $0xb0] sm:$0xff] %v470
  %547 = vst [vmem:[%s3 + $0xb8] sm:$0xff] %v473
  %548 = vst [vmem:[%s3 + $0xc0] sm:$0xff] %v478
  %549 = vst [vmem:[%s3 + $0xc8] sm:$0xff] %v481
  %550 = vst [vmem:[%s3 + $0xd0] sm:$0xff] %v486
  %551 = vst [vmem:[%s3 + $0xd8] sm:$0xff] %v489
  %552 = vst [vmem:[%s3 + $0xe0] sm:$0xff] %v494
  %553 = vst [vmem:[%s3 + $0xe8] sm:$0xff] %v497
  %554 = vst [vmem:[%s3 + $0xf0] sm:$0xff] %v502
  %555 = vst [vmem:[%s3 + $0xf8] sm:$0xff] %v505
  %556 = vst [vmem:[%s3 + $0x100] sm:$0xff] %v510
  %557 = vst [vmem:[%s3 + $0x108] sm:$0xff] %v513
  %558 = vst [vmem:[%s3 + $0x110] sm:$0xff] %v518
  %559 = vst [vmem:[%s3 + $0x118] sm:$0xff] %v521
  // Predicated region
  $region14: #{net_forward.14} parent=0 // pred_check
    _
  $region15: #{net_forward.14} parent=0 // pred_check_branch
    %561 = sbr.rel (0) target = $region17
  $region16: #{net_forward.14} parent=0 // pred_region
    _
  $region17: #{net_forward.14} parent=0 // pred_fallthru
    _
  // Predicated region
  $region18: #{net_forward.14} parent=0 // pred_check
    _
  $region19: #{net_forward.14} parent=0 // pred_check_branch
    %563 = sbr.rel (0) target = $region21
  $region20: #{net_forward.14} parent=0 // pred_region
    _
  $region21: #{net_forward.14} parent=0 // pred_fallthru
    _

// kernel: net_forward.15
$region0: #{net_forward.15}
  #allocation0 [shape = 'u32[]', space=smem, size = 0x4, offset = 0x4, fixed_abs, tag = 'smem constant byte address 0x4 - core index']
  #allocation1 [shape = 'u32[144,128]{1,0:T(1,128)}', space=vmem, size = 0x12000, scoped, tag = 'internal scratch']
  %s0 = inlined_call_operand.vmem [shape: bf16[288,216], index: 0, kind: input, shape index: {}]
  %s1 = inlined_call_operand.vmem [shape: bf16[216,128], index: 1, kind: input, shape index: {}]
  %s2 = inlined_call_operand.vmem [shape: f32[1,128], index: 2, kind: input, shape index: {}]
  %s3 = inlined_call_operand.vmem [shape: f32[288,128], index: 3, kind: output, shape index: {}]
  %s4 = sld [smem:[#allocation0]]
  $region22: #{net_forward.15} parent=0
    _
  %s6 = ssub.s32 1, %s4
  %s7 = scalar_select 0, %s6, %s4
  // Predicated region
  $region2: #{net_forward.15} parent=0 // pred_check
    _
  $region3: #{net_forward.15} parent=0 // pred_check_branch
    %9 = sbr.rel (0) target = $region5
  $region4: #{net_forward.15} parent=0 // pred_region
    _
  $region5: #{net_forward.15} parent=0 // pred_fallthru
    _
  // Predicated region
  $region6: #{net_forward.15} parent=0 // pred_check
    _
  $region7: #{net_forward.15} parent=0 // pred_check_branch
    %11 = sbr.rel (0) target = $region9
  $region8: #{net_forward.15} parent=0 // pred_region
    _
  $region9: #{net_forward.15} parent=0 // pred_fallthru
    _
  // Predicated region
  $region10: #{net_forward.15} parent=0 // pred_check
    _
  $region11: #{net_forward.15} parent=0 // pred_check_branch
    %13 = sbr.rel (0) target = $region13
  $region12: #{net_forward.15} parent=0 // pred_region
    _
  $region13: #{net_forward.15} parent=0 // pred_fallthru
    _
  %v15 = vld [vmem:[%s0] sm:$0xff]
  %v16 = vld [vmem:[%s0 + $0x8] sm:$0xff]
  %v17 = vld [vmem:[%s0 + $0x10] sm:$0xff]
  %v18 = vld [vmem:[%s0 + $0x18] sm:$0xff]
  %v19 = vld [vmem:[%s0 + $0x20] sm:$0xff]
  %v20 = vld [vmem:[%s0 + $0x28] sm:$0xff]
  %v21 = vld [vmem:[%s0 + $0x30] sm:$0xff]
  %v22 = vld [vmem:[%s0 + $0x38] sm:$0xff]
  %v23 = vld [vmem:[%s0 + $0x40] sm:$0xff]
  %v24 = vld [vmem:[%s0 + $0x48] sm:$0xff]
  %v25 = vld [vmem:[%s0 + $0x50] sm:$0xff]
  %v26 = vld [vmem:[%s0 + $0x58] sm:$0xff]
  %v27 = vld [vmem:[%s0 + $0x60] sm:$0xff]
  %v28 = vld [vmem:[%s0 + $0x68] sm:$0xff]
  %v29 = vld [vmem:[%s0 + $0x70] sm:$0xff]
  %v30 = vld [vmem:[%s0 + $0x78] sm:$0xff]
  %v31 = vld [vmem:[%s0 + $0x80] sm:$0xff]
  %v32 = vld [vmem:[%s0 + $0x88] sm:$0xff]
  %v33 = vld [vmem:[%s0 + $0x90] sm:$0xff]
  %v34 = vld [vmem:[%s0 + $0x98] sm:$0xff]
  %v35 = vld [vmem:[%s0 + $0xa0] sm:$0xff]
  %v36 = vld [vmem:[%s0 + $0xa8] sm:$0xff]
  %v37 = vld [vmem:[%s0 + $0xb0] sm:$0xff]
  %v38 = vld [vmem:[%s0 + $0xb8] sm:$0xff]
  %v39 = vld [vmem:[%s0 + $0xc0] sm:$0xff]
  %v40 = vld [vmem:[%s0 + $0xc8] sm:$0xff]
  %v41 = vld [vmem:[%s0 + $0xd0] sm:$0xff]
  %v42 = vld [vmem:[%s0 + $0xd8] sm:$0xff]
  %v43 = vld [vmem:[%s0 + $0xe0] sm:$0xff]
  %v44 = vld [vmem:[%s0 + $0xe8] sm:$0xff]
  %v45 = vld [vmem:[%s0 + $0xf0] sm:$0xff]
  %v46 = vld [vmem:[%s0 + $0xf8] sm:$0xff]
  %v47 = vld [vmem:[%s0 + $0x100] sm:$0xff]
  %v48 = vld [vmem:[%s0 + $0x108] sm:$0xff]
  %v49 = vld [vmem:[%s0 + $0x110] sm:$0xff]
  %v50 = vld [vmem:[%s0 + $0x118] sm:$0xff]
  %v51 = vld [vmem:[%s1] sm:$0xf]
  %v52 = vld [vmem:[%s1 + $0x4] sm:$0xf]
  %v53 = vld [vmem:[%s1 + $0x8] sm:$0xf]
  %v54 = vld [vmem:[%s1 + $0xc] sm:$0xf]
  %v55 = vld [vmem:[%s1 + $0x10] sm:$0xf]
  %v56 = vld [vmem:[%s1 + $0x14] sm:$0xf]
  %v57 = vld [vmem:[%s1 + $0x18] sm:$0xf]
  %v58 = vld [vmem:[%s1 + $0x1c] sm:$0xf]
  %v59 = vld [vmem:[%s1 + $0x20] sm:$0xf]
  %v60 = vld [vmem:[%s1 + $0x24] sm:$0xf]
  %v61 = vld [vmem:[%s1 + $0x28] sm:$0xf]
  %v62 = vld [vmem:[%s1 + $0x2c] sm:$0xf]
  %v63 = vld [vmem:[%s1 + $0x30] sm:$0xf]
  %v64 = vld [vmem:[%s1 + $0x34] sm:$0xf]
  %v65 = vld [vmem:[%s1 + $0x38] sm:$0xf]
  %v66 = vld [vmem:[%s1 + $0x3c] sm:$0xf]
  %v67 = vld [vmem:[%s1 + $0x40] sm:$0xf]
  %v68 = vld [vmem:[%s1 + $0x44] sm:$0xf]
  %v69 = vld [vmem:[%s1 + $0x48] sm:$0xf]
  %v70 = vld [vmem:[%s1 + $0x4c] sm:$0xf]
  %v71 = vld [vmem:[%s1 + $0x50] sm:$0xf]
  %v72 = vld [vmem:[%s1 + $0x54] sm:$0xf]
  %v73 = vld [vmem:[%s1 + $0x58] sm:$0xf]
  %v74 = vld [vmem:[%s1 + $0x5c] sm:$0xf]
  %v75 = vld [vmem:[%s1 + $0x60] sm:$0xf]
  %v76 = vld [vmem:[%s1 + $0x64] sm:$0xf]
  %v77 = vld [vmem:[%s1 + $0x68] sm:$0xf]
  %v78 = vld [vmem:[%s2] sm:$0x1]
  %v80 = vlaneseq
  %v81 = vshrl.u32 %v80, 7
  %v82 = vsub.s32 0, %v81
  %v83 = vrot.slane %v78, %v82
  %v121 = vunpack.c.l.b16 %v15
  %v122 = vunpack.c.h.b16 %v15
  %v123 = vunpack.c.l.b16 %v16
  %v124 = vunpack.c.h.b16 %v16
  %v125 = vunpack.c.l.b16 %v17
  %v126 = vunpack.c.h.b16 %v17
  %v127 = vunpack.c.l.b16 %v18
  %v128 = vunpack.c.h.b16 %v18
  %v129 = vunpack.c.l.b16 %v19
  %v130 = vunpack.c.h.b16 %v19
  %v131 = vunpack.c.l.b16 %v20
  %v132 = vunpack.c.h.b16 %v20
  %v133 = vunpack.c.l.b16 %v21
  %v134 = vunpack.c.h.b16 %v21
  %v135 = vunpack.c.l.b16 %v22
  %v136 = vunpack.c.h.b16 %v22
  %v137 = vunpack.c.l.b16 %v23
  %v138 = vunpack.c.h.b16 %v23
  %v139 = vunpack.c.l.b16 %v24
  %v140 = vunpack.c.h.b16 %v24
  %v141 = vunpack.c.l.b16 %v25
  %v142 = vunpack.c.h.b16 %v25
  %v143 = vunpack.c.l.b16 %v26
  %v144 = vunpack.c.h.b16 %v26
  %v145 = vunpack.c.l.b16 %v27
  %v146 = vunpack.c.h.b16 %v27
  %v147 = vunpack.c.l.b16 %v28
  %v148 = vunpack.c.h.b16 %v28
  %v149 = vunpack.c.l.b16 %v29
  %v150 = vunpack.c.h.b16 %v29
  %v151 = vunpack.c.l.b16 %v30
  %v152 = vunpack.c.h.b16 %v30
  %v153 = vunpack.c.l.b16 %v31
  %v154 = vunpack.c.h.b16 %v31
  %v155 = vunpack.c.l.b16 %v32
  %v156 = vunpack.c.h.b16 %v32
  %v157 = vunpack.c.l.b16 %v33
  %v158 = vunpack.c.h.b16 %v33
  %v159 = vunpack.c.l.b16 %v34
  %v160 = vunpack.c.h.b16 %v34
  %v161 = vunpack.c.l.b16 %v35
  %v162 = vunpack.c.h.b16 %v35
  %v163 = vunpack.c.l.b16 %v36
  %v164 = vunpack.c.h.b16 %v36
  %v165 = vunpack.c.l.b16 %v37
  %v166 = vunpack.c.h.b16 %v37
  %v167 = vunpack.c.l.b16 %v38
  %v168 = vunpack.c.h.b16 %v38
  %v169 = vunpack.c.l.b16 %v39
  %v170 = vunpack.c.h.b16 %v39
  %v171 = vunpack.c.l.b16 %v40
  %v172 = vunpack.c.h.b16 %v40
  %v173 = vunpack.c.l.b16 %v41
  %v174 = vunpack.c.h.b16 %v41
  %v175 = vunpack.c.l.b16 %v42
  %v176 = vunpack.c.h.b16 %v42
  %v177 = vunpack.c.l.b16 %v43
  %v178 = vunpack.c.h.b16 %v43
  %v179 = vunpack.c.l.b16 %v44
  %v180 = vunpack.c.h.b16 %v44
  %v181 = vunpack.c.l.b16 %v45
  %v182 = vunpack.c.h.b16 %v45
  %v183 = vunpack.c.l.b16 %v46
  %v184 = vunpack.c.h.b16 %v46
  %v185 = vunpack.c.l.b16 %v47
  %v186 = vunpack.c.h.b16 %v47
  %v187 = vunpack.c.l.b16 %v48
  %v188 = vunpack.c.h.b16 %v48
  %v189 = vunpack.c.l.b16 %v49
  %v190 = vunpack.c.h.b16 %v49
  %v191 = vunpack.c.l.b16 %v50
  %v192 = vunpack.c.h.b16 %v50
  %v193 = vpack.c.b16 %v123, %v121
  %v194 = vpack.c.b16 %v124, %v122
  %v195 = vpack.c.b16 %v127, %v125
  %v196 = vpack.c.b16 %v128, %v126
  %v197 = vpack.c.b16 %v131, %v129
  %v198 = vpack.c.b16 %v132, %v130
  %v199 = vpack.c.b16 %v135, %v133
  %v200 = vpack.c.b16 %v136, %v134
  %v201 = vpack.c.b16 %v139, %v137
  %v202 = vpack.c.b16 %v140, %v138
  %v203 = vpack.c.b16 %v143, %v141
  %v204 = vpack.c.b16 %v144, %v142
  %v205 = vpack.c.b16 %v147, %v145
  %v206 = vpack.c.b16 %v148, %v146
  %v207 = vpack.c.b16 %v151, %v149
  %v208 = vpack.c.b16 %v152, %v150
  %v209 = vpack.c.b16 %v155, %v153
  %v210 = vpack.c.b16 %v156, %v154
  %v211 = vpack.c.b16 %v159, %v157
  %v212 = vpack.c.b16 %v160, %v158
  %v213 = vpack.c.b16 %v163, %v161
  %v214 = vpack.c.b16 %v164, %v162
  %v215 = vpack.c.b16 %v167, %v165
  %v216 = vpack.c.b16 %v168, %v166
  %v217 = vpack.c.b16 %v171, %v169
  %v218 = vpack.c.b16 %v172, %v170
  %v219 = vpack.c.b16 %v175, %v173
  %v220 = vpack.c.b16 %v176, %v174
  %v221 = vpack.c.b16 %v179, %v177
  %v222 = vpack.c.b16 %v180, %v178
  %v223 = vpack.c.b16 %v183, %v181
  %v224 = vpack.c.b16 %v184, %v182
  %v225 = vpack.c.b16 %v187, %v185
  %v226 = vpack.c.b16 %v188, %v186
  %v227 = vpack.c.b16 %v191, %v189
  %v228 = vpack.c.b16 %v192, %v190
  %v274 = vunpack.c.l.b16 %v51
  %v275 = vunpack.c.l.b16 %v52
  %v276 = vunpack.c.l.b16 %v53
  %v277 = vunpack.c.l.b16 %v54
  %v278 = vunpack.c.l.b16 %v55
  %v279 = vunpack.c.l.b16 %v56
  %v280 = vunpack.c.l.b16 %v57
  %v281 = vunpack.c.l.b16 %v58
  %v282 = vunpack.c.l.b16 %v59
  %v283 = vunpack.c.l.b16 %v60
  %v284 = vunpack.c.l.b16 %v61
  %v285 = vunpack.c.l.b16 %v62
  %v286 = vunpack.c.l.b16 %v63
  %v287 = vunpack.c.l.b16 %v64
  %v288 = vunpack.c.l.b16 %v65
  %v289 = vunpack.c.l.b16 %v66
  %v290 = vunpack.c.l.b16 %v67
  %v291 = vunpack.c.l.b16 %v68
  %v292 = vunpack.c.l.b16 %v69
  %v293 = vunpack.c.l.b16 %v70
  %v294 = vunpack.c.l.b16 %v71
  %v295 = vunpack.c.l.b16 %v72
  %v296 = vunpack.c.l.b16 %v73
  %v297 = vunpack.c.l.b16 %v74
  %v298 = vunpack.c.l.b16 %v75
  %v299 = vunpack.c.l.b16 %v76
  %v300 = vunpack.c.l.b16 %v77
  %v301 = vpack.c.b16 %v275, %v274
  %v302 = vpack.c.b16 %v277, %v276
  %v303 = vpack.c.b16 %v279, %v278
  %v304 = vpack.c.b16 %v281, %v280
  %v305 = vpack.c.b16 %v283, %v282
  %v306 = vpack.c.b16 %v285, %v284
  %v307 = vpack.c.b16 %v287, %v286
  %v308 = vpack.c.b16 %v289, %v288
  %v309 = vpack.c.b16 %v291, %v290
  %v310 = vpack.c.b16 %v293, %v292
  %v311 = vpack.c.b16 %v295, %v294
  %v312 = vpack.c.b16 %v297, %v296
  %v313 = vpack.c.b16 %v299, %v298
  %v314 = vpack.c.b16 %v300, %v300
  %vm328 = vcmask 719872
  %v330 = vsel %vm328, %v194, 0
  %v333 = vsel %vm328, %v196, 0
  %v336 = vsel %vm328, %v198, 0
  %v339 = vsel %vm328, %v200, 0
  %v342 = vsel %vm328, %v202, 0
  %v345 = vsel %vm328, %v204, 0
  %v348 = vsel %vm328, %v206, 0
  %v351 = vsel %vm328, %v208, 0
  %v354 = vsel %vm328, %v210, 0
  %v357 = vsel %vm328, %v212, 0
  %v360 = vsel %vm328, %v214, 0
  %v363 = vsel %vm328, %v216, 0
  %v366 = vsel %vm328, %v218, 0
  %v369 = vsel %vm328, %v220, 0
  %v372 = vsel %vm328, %v222, 0
  %v375 = vsel %vm328, %v224, 0
  %v378 = vsel %vm328, %v226, 0
  %v381 = vsel %vm328, %v228, 0
  %vm383 = vcmask 1043456
  %v385 = vsel %vm383, %v314, 0
  %387 = vmatprep.subr.bf16.mxu0 0
  %388 = vmatpush1.bf16.msra.mxu0 %v301
  %389 = vmatprep.subr.bf16.mxu0 0
  %390 = vmatpush1.bf16.msra.mxu0 %v302
  %391 = vmatprep.subr.bf16.mxu0 0
  %392 = vmatpush1.bf16.msra.mxu0 %v303
  %393 = vmatprep.subr.bf16.mxu0 0
  %394 = vmatpush1.bf16.msra.mxu0 %v304
  %395 = vmatprep.subr.bf16.mxu0 0
  %396 = vmatpush1.bf16.msra.mxu0 %v305
  %397 = vmatprep.subr.bf16.mxu0 0
  %398 = vmatpush1.bf16.msra.mxu0 %v306
  %399 = vmatprep.subr.bf16.mxu0 0
  %400 = vmatpush1.bf16.msra.mxu0 %v307
  %401 = vmatprep.subr.bf16.mxu0 0
  %402 = vmatpush1.bf16.msra.mxu0 %v308
  %403 = vmatprep.subr.bf16.mxu0 0
  %404 = vmatpush1.bf16.msra.mxu0 %v309
  %405 = vmatprep.subr.bf16.mxu0 0
  %406 = vmatpush1.bf16.msra.mxu0 %v310
  %407 = vmatprep.subr.bf16.mxu0 0
  %408 = vmatpush1.bf16.msra.mxu0 %v311
  %409 = vmatprep.subr.bf16.mxu0 0
  %410 = vmatpush1.bf16.msra.mxu0 %v312
  %411 = vmatprep.subr.bf16.mxu0 0
  %412 = vmatpush1.bf16.msra.mxu0 %v313
  %413 = vmatprep.subr.bf16.mxu0 0
  %414 = vmatpush1.bf16.msra.mxu0 %v385
  %415 = vmatprep.subr.bf16.mxu0 0
  %416 = vmatpush1.bf16.msra.mxu0 0
  %417 = vmatprep.subr.bf16.mxu0 0
  %418 = vmatpush1.bf16.msra.mxu0 0
  %419 = vmatprep.mubr.bf16.mxu0 %v330
  %420 = vmatmul.mubr.bf16.gmra.mrb[0].mxu0 %v193
  %v421 = vpop.f32.mrb[0].mxu0
  %v422 = vadd.f32 %v83, %v421
  %v423 = vpop.f32.mrb[0].mxu0
  %v424 = vpop.f32.mrb[0].mxu0
  %v425 = vadd.f32 %v83, %v424
  %v426 = vpop.f32.mrb[0].mxu0
  %427 = vmatprep.mubr.bf16.mxu0 %v333
  %428 = vmatmul.mubr.bf16.gmra.mrb[0].mxu0 %v195
  %v429 = vpop.f32.mrb[0].mxu0
  %v430 = vadd.f32 %v83, %v429
  %v431 = vpop.f32.mrb[0].mxu0
  %v432 = vpop.f32.mrb[0].mxu0
  %v433 = vadd.f32 %v83, %v432
  %v434 = vpop.f32.mrb[0].mxu0
  %435 = vmatprep.mubr.bf16.mxu0 %v336
  %436 = vmatmul.mubr.bf16.gmra.mrb[0].mxu0 %v197
  %v437 = vpop.f32.mrb[0].mxu0
  %v438 = vadd.f32 %v83, %v437
  %v439 = vpop.f32.mrb[0].mxu0
  %v440 = vpop.f32.mrb[0].mxu0
  %v441 = vadd.f32 %v83, %v440
  %v442 = vpop.f32.mrb[0].mxu0
  %443 = vmatprep.mubr.bf16.mxu0 %v339
  %444 = vmatmul.mubr.bf16.gmra.mrb[0].mxu0 %v199
  %v445 = vpop.f32.mrb[0].mxu0
  %v446 = vadd.f32 %v83, %v445
  %v447 = vpop.f32.mrb[0].mxu0
  %v448 = vpop.f32.mrb[0].mxu0
  %v449 = vadd.f32 %v83, %v448
  %v450 = vpop.f32.mrb[0].mxu0
  %451 = vmatprep.mubr.bf16.mxu0 %v342
  %452 = vmatmul.mubr.bf16.gmra.mrb[0].mxu0 %v201
  %v453 = vpop.f32.mrb[0].mxu0
  %v454 = vadd.f32 %v83, %v453
  %v455 = vpop.f32.mrb[0].mxu0
  %v456 = vpop.f32.mrb[0].mxu0
  %v457 = vadd.f32 %v83, %v456
  %v458 = vpop.f32.mrb[0].mxu0
  %459 = vmatprep.mubr.bf16.mxu0 %v345
  %460 = vmatmul.mubr.bf16.gmra.mrb[0].mxu0 %v203
  %v461 = vpop.f32.mrb[0].mxu0
  %v462 = vadd.f32 %v83, %v461
  %v463 = vpop.f32.mrb[0].mxu0
  %v464 = vpop.f32.mrb[0].mxu0
  %v465 = vadd.f32 %v83, %v464
  %v466 = vpop.f32.mrb[0].mxu0
  %467 = vmatprep.mubr.bf16.mxu0 %v348
  %468 = vmatmul.mubr.bf16.gmra.mrb[0].mxu0 %v205
  %v469 = vpop.f32.mrb[0].mxu0
  %v470 = vadd.f32 %v83, %v469
  %v471 = vpop.f32.mrb[0].mxu0
  %v472 = vpop.f32.mrb[0].mxu0
  %v473 = vadd.f32 %v83, %v472
  %v474 = vpop.f32.mrb[0].mxu0
  %475 = vmatprep.mubr.bf16.mxu0 %v351
  %476 = vmatmul.mubr.bf16.gmra.mrb[0].mxu0 %v207
  %v477 = vpop.f32.mrb[0].mxu0
  %v478 = vadd.f32 %v83, %v477
  %v479 = vpop.f32.mrb[0].mxu0
  %v480 = vpop.f32.mrb[0].mxu0
  %v481 = vadd.f32 %v83, %v480
  %v482 = vpop.f32.mrb[0].mxu0
  %483 = vmatprep.mubr.bf16.mxu0 %v354
  %484 = vmatmul.mubr.bf16.gmra.mrb[0].mxu0 %v209
  %v485 = vpop.f32.mrb[0].mxu0
  %v486 = vadd.f32 %v83, %v485
  %v487 = vpop.f32.mrb[0].mxu0
  %v488 = vpop.f32.mrb[0].mxu0
  %v489 = vadd.f32 %v83, %v488
  %v490 = vpop.f32.mrb[0].mxu0
  %491 = vmatprep.mubr.bf16.mxu0 %v357
  %492 = vmatmul.mubr.bf16.gmra.mrb[0].mxu0 %v211
  %v493 = vpop.f32.mrb[0].mxu0
  %v494 = vadd.f32 %v83, %v493
  %v495 = vpop.f32.mrb[0].mxu0
  %v496 = vpop.f32.mrb[0].mxu0
  %v497 = vadd.f32 %v83, %v496
  %v498 = vpop.f32.mrb[0].mxu0
  %499 = vmatprep.mubr.bf16.mxu0 %v360
  %500 = vmatmul.mubr.bf16.gmra.mrb[0].mxu0 %v213
  %v501 = vpop.f32.mrb[0].mxu0
  %v502 = vadd.f32 %v83, %v501
  %v503 = vpop.f32.mrb[0].mxu0
  %v504 = vpop.f32.mrb[0].mxu0
  %v505 = vadd.f32 %v83, %v504
  %v506 = vpop.f32.mrb[0].mxu0
  %507 = vmatprep.mubr.bf16.mxu0 %v363
  %508 = vmatmul.mubr.bf16.gmra.mrb[0].mxu0 %v215
  %v509 = vpop.f32.mrb[0].mxu0
  %v510 = vadd.f32 %v83, %v509
  %v511 = vpop.f32.mrb[0].mxu0
  %v512 = vpop.f32.mrb[0].mxu0
  %v513 = vadd.f32 %v83, %v512
  %v514 = vpop.f32.mrb[0].mxu0
  %515 = vmatprep.mubr.bf16.mxu0 %v366
  %516 = vmatmul.mubr.bf16.gmra.mrb[0].mxu0 %v217
  %v517 = vpop.f32.mrb[0].mxu0
  %v518 = vadd.f32 %v83, %v517
  %v519 = vpop.f32.mrb[0].mxu0
  %v520 = vpop.f32.mrb[0].mxu0
  %v521 = vadd.f32 %v83, %v520
  %v522 = vpop.f32.mrb[0].mxu0
  %523 = vmatprep.mubr.bf16.mxu0 %v369
  %524 = vmatmul.mubr.bf16.gmra.mrb[0].mxu0 %v219
  %v525 = vpop.f32.mrb[0].mxu0
  %v526 = vadd.f32 %v83, %v525
  %v527 = vpop.f32.mrb[0].mxu0
  %v528 = vpop.f32.mrb[0].mxu0
  %v529 = vadd.f32 %v83, %v528
  %v530 = vpop.f32.mrb[0].mxu0
  %531 = vmatprep.mubr.bf16.mxu0 %v372
  %532 = vmatmul.mubr.bf16.gmra.mrb[0].mxu0 %v221
  %v533 = vpop.f32.mrb[0].mxu0
  %v534 = vadd.f32 %v83, %v533
  %v535 = vpop.f32.mrb[0].mxu0
  %v536 = vpop.f32.mrb[0].mxu0
  %v537 = vadd.f32 %v83, %v536
  %v538 = vpop.f32.mrb[0].mxu0
  %539 = vmatprep.mubr.bf16.mxu0 %v375
  %540 = vmatmul.mubr.bf16.gmra.mrb[0].mxu0 %v223
  %v541 = vpop.f32.mrb[0].mxu0
  %v542 = vadd.f32 %v83, %v541
  %v543 = vpop.f32.mrb[0].mxu0
  %v544 = vpop.f32.mrb[0].mxu0
  %v545 = vadd.f32 %v83, %v544
  %v546 = vpop.f32.mrb[0].mxu0
  %547 = vmatprep.mubr.bf16.mxu0 %v378
  %548 = vmatmul.mubr.bf16.gmra.mrb[0].mxu0 %v225
  %v549 = vpop.f32.mrb[0].mxu0
  %v550 = vadd.f32 %v83, %v549
  %v551 = vpop.f32.mrb[0].mxu0
  %v552 = vpop.f32.mrb[0].mxu0
  %v553 = vadd.f32 %v83, %v552
  %v554 = vpop.f32.mrb[0].mxu0
  %555 = vmatprep.mubr.bf16.mxu0 %v381
  %556 = vmatmul.mubr.bf16.gmra.mrb[0].mxu0 %v227
  %v557 = vpop.f32.mrb[0].mxu0
  %v558 = vadd.f32 %v83, %v557
  %v559 = vpop.f32.mrb[0].mxu0
  %v560 = vpop.f32.mrb[0].mxu0
  %v561 = vadd.f32 %v83, %v560
  %v562 = vpop.f32.mrb[0].mxu0
  %563 = vdwg.mxu0
  %564 = vst [vmem:[%s3] sm:$0xff] %v422
  %565 = vst [vmem:[%s3 + $0x8] sm:$0xff] %v425
  %566 = vst [vmem:[%s3 + $0x10] sm:$0xff] %v430
  %567 = vst [vmem:[%s3 + $0x18] sm:$0xff] %v433
  %568 = vst [vmem:[%s3 + $0x20] sm:$0xff] %v438
  %569 = vst [vmem:[%s3 + $0x28] sm:$0xff] %v441
  %570 = vst [vmem:[%s3 + $0x30] sm:$0xff] %v446
  %571 = vst [vmem:[%s3 + $0x38] sm:$0xff] %v449
  %572 = vst [vmem:[%s3 + $0x40] sm:$0xff] %v454
  %573 = vst [vmem:[%s3 + $0x48] sm:$0xff] %v457
  %574 = vst [vmem:[%s3 + $0x50] sm:$0xff] %v462
  %575 = vst [vmem:[%s3 + $0x58] sm:$0xff] %v465
  %576 = vst [vmem:[%s3 + $0x60] sm:$0xff] %v470
  %577 = vst [vmem:[%s3 + $0x68] sm:$0xff] %v473
  %578 = vst [vmem:[%s3 + $0x70] sm:$0xff] %v478
  %579 = vst [vmem:[%s3 + $0x78] sm:$0xff] %v481
  %580 = vst [vmem:[%s3 + $0x80] sm:$0xff] %v486
  %581 = vst [vmem:[%s3 + $0x88] sm:$0xff] %v489
  %582 = vst [vmem:[%s3 + $0x90] sm:$0xff] %v494
  %583 = vst [vmem:[%s3 + $0x98] sm:$0xff] %v497
  %584 = vst [vmem:[%s3 + $0xa0] sm:$0xff] %v502
  %585 = vst [vmem:[%s3 + $0xa8] sm:$0xff] %v505
  %586 = vst [vmem:[%s3 + $0xb0] sm:$0xff] %v510
  %587 = vst [vmem:[%s3 + $0xb8] sm:$0xff] %v513
  %588 = vst [vmem:[%s3 + $0xc0] sm:$0xff] %v518
  %589 = vst [vmem:[%s3 + $0xc8] sm:$0xff] %v521
  %590 = vst [vmem:[%s3 + $0xd0] sm:$0xff] %v526
  %591 = vst [vmem:[%s3 + $0xd8] sm:$0xff] %v529
  %592 = vst [vmem:[%s3 + $0xe0] sm:$0xff] %v534
  %593 = vst [vmem:[%s3 + $0xe8] sm:$0xff] %v537
  %594 = vst [vmem:[%s3 + $0xf0] sm:$0xff] %v542
  %595 = vst [vmem:[%s3 + $0xf8] sm:$0xff] %v545
  %596 = vst [vmem:[%s3 + $0x100] sm:$0xff] %v550
  %597 = vst [vmem:[%s3 + $0x108] sm:$0xff] %v553
  %598 = vst [vmem:[%s3 + $0x110] sm:$0xff] %v558
  %599 = vst [vmem:[%s3 + $0x118] sm:$0xff] %v561
  // Predicated region
  $region14: #{net_forward.15} parent=0 // pred_check
    _
  $region15: #{net_forward.15} parent=0 // pred_check_branch
    %601 = sbr.rel (0) target = $region17
  $region16: #{net_forward.15} parent=0 // pred_region
    _
  $region17: #{net_forward.15} parent=0 // pred_fallthru
    _
  // Predicated region
  $region18: #{net_forward.15} parent=0 // pred_check
    _
  $region19: #{net_forward.15} parent=0 // pred_check_branch
    %603 = sbr.rel (0) target = $region21
  $region20: #{net_forward.15} parent=0 // pred_region
    _
  $region21: #{net_forward.15} parent=0 // pred_fallthru
    _

// kernel: net_forward.13
$region0: #{net_forward.13}
  #allocation0 [shape = 'u32[]', space=smem, size = 0x4, offset = 0x4, fixed_abs, tag = 'smem constant byte address 0x4 - core index']
  #allocation1 [shape = 'u32[144,128]{1,0:T(1,128)}', space=vmem, size = 0x12000, scoped, tag = 'internal scratch']
  %s0 = inlined_call_operand.vmem [shape: bf16[288,400], index: 0, kind: input, shape index: {}]
  %s1 = inlined_call_operand.vmem [shape: bf16[400,128], index: 1, kind: input, shape index: {}]
  %s2 = inlined_call_operand.vmem [shape: f32[1,128], index: 2, kind: input, shape index: {}]
  %s3 = inlined_call_operand.vmem [shape: f32[288,128], index: 3, kind: output, shape index: {}]
  %s4 = sld [smem:[#allocation0]]
  $region22: #{net_forward.13} parent=0
    _
  %s6 = ssub.s32 1, %s4
  %s7 = scalar_select 0, %s6, %s4
  // Predicated region
  $region2: #{net_forward.13} parent=0 // pred_check
    _
  $region3: #{net_forward.13} parent=0 // pred_check_branch
    %9 = sbr.rel (0) target = $region5
  $region4: #{net_forward.13} parent=0 // pred_region
    _
  $region5: #{net_forward.13} parent=0 // pred_fallthru
    _
  // Predicated region
  $region6: #{net_forward.13} parent=0 // pred_check
    _
  $region7: #{net_forward.13} parent=0 // pred_check_branch
    %11 = sbr.rel (0) target = $region9
  $region8: #{net_forward.13} parent=0 // pred_region
    _
  $region9: #{net_forward.13} parent=0 // pred_fallthru
    _
  // Predicated region
  $region10: #{net_forward.13} parent=0 // pred_check
    _
  $region11: #{net_forward.13} parent=0 // pred_check_branch
    %13 = sbr.rel (0) target = $region13
  $region12: #{net_forward.13} parent=0 // pred_region
    _
  $region13: #{net_forward.13} parent=0 // pred_fallthru
    _
  %v15 = vld [vmem:[%s0] sm:$0xff]
  %v16 = vld [vmem:[%s0 + $0x8] sm:$0xff]
  %v17 = vld [vmem:[%s0 + $0x10] sm:$0xff]
  %v18 = vld [vmem:[%s0 + $0x18] sm:$0xff]
  %v19 = vld [vmem:[%s0 + $0x20] sm:$0xff]
  %v20 = vld [vmem:[%s0 + $0x28] sm:$0xff]
  %v21 = vld [vmem:[%s0 + $0x30] sm:$0xff]
  %v22 = vld [vmem:[%s0 + $0x38] sm:$0xff]
  %v23 = vld [vmem:[%s0 + $0x40] sm:$0xff]
  %v24 = vld [vmem:[%s0 + $0x48] sm:$0xff]
  %v25 = vld [vmem:[%s0 + $0x50] sm:$0xff]
  %v26 = vld [vmem:[%s0 + $0x58] sm:$0xff]
  %v27 = vld [vmem:[%s0 + $0x60] sm:$0xff]
  %v28 = vld [vmem:[%s0 + $0x68] sm:$0xff]
  %v29 = vld [vmem:[%s0 + $0x70] sm:$0xff]
  %v30 = vld [vmem:[%s0 + $0x78] sm:$0xff]
  %v31 = vld [vmem:[%s0 + $0x80] sm:$0xff]
  %v32 = vld [vmem:[%s0 + $0x88] sm:$0xff]
  %v33 = vld [vmem:[%s0 + $0x90] sm:$0xff]
  %v34 = vld [vmem:[%s0 + $0x98] sm:$0xff]
  %v35 = vld [vmem:[%s0 + $0xa0] sm:$0xff]
  %v36 = vld [vmem:[%s0 + $0xa8] sm:$0xff]
  %v37 = vld [vmem:[%s0 + $0xb0] sm:$0xff]
  %v38 = vld [vmem:[%s0 + $0xb8] sm:$0xff]
  %v39 = vld [vmem:[%s0 + $0xc0] sm:$0xff]
  %v40 = vld [vmem:[%s0 + $0xc8] sm:$0xff]
  %v41 = vld [vmem:[%s0 + $0xd0] sm:$0xff]
  %v42 = vld [vmem:[%s0 + $0xd8] sm:$0xff]
  %v43 = vld [vmem:[%s0 + $0xe0] sm:$0xff]
  %v44 = vld [vmem:[%s0 + $0xe8] sm:$0xff]
  %v45 = vld [vmem:[%s0 + $0xf0] sm:$0xff]
  %v46 = vld [vmem:[%s0 + $0xf8] sm:$0xff]
  %v47 = vld [vmem:[%s0 + $0x100] sm:$0xff]
  %v48 = vld [vmem:[%s0 + $0x108] sm:$0xff]
  %v49 = vld [vmem:[%s0 + $0x110] sm:$0xff]
  %v50 = vld [vmem:[%s0 + $0x118] sm:$0xff]
  %v51 = vld [vmem:[%s0 + $0x120] sm:$0xff]
  %v52 = vld [vmem:[%s0 + $0x128] sm:$0xff]
  %v53 = vld [vmem:[%s0 + $0x130] sm:$0xff]
  %v54 = vld [vmem:[%s0 + $0x138] sm:$0xff]
  %v55 = vld [vmem:[%s0 + $0x140] sm:$0xff]
  %v56 = vld [vmem:[%s0 + $0x148] sm:$0xff]
  %v57 = vld [vmem:[%s0 + $0x150] sm:$0xff]
  %v58 = vld [vmem:[%s0 + $0x158] sm:$0xff]
  %v59 = vld [vmem:[%s0 + $0x160] sm:$0xff]
  %v60 = vld [vmem:[%s0 + $0x168] sm:$0xff]
  %v61 = vld [vmem:[%s0 + $0x170] sm:$0xff]
  %v62 = vld [vmem:[%s0 + $0x178] sm:$0xff]
  %v63 = vld [vmem:[%s0 + $0x180] sm:$0xff]
  %v64 = vld [vmem:[%s0 + $0x188] sm:$0xff]
  %v65 = vld [vmem:[%s0 + $0x190] sm:$0xff]
  %v66 = vld [vmem:[%s0 + $0x198] sm:$0xff]
  %v67 = vld [vmem:[%s0 + $0x1a0] sm:$0xff]
  %v68 = vld [vmem:[%s0 + $0x1a8] sm:$0xff]
  %v69 = vld [vmem:[%s0 + $0x1b0] sm:$0xff]
  %v70 = vld [vmem:[%s0 + $0x1b8] sm:$0xff]
  %v71 = vld [vmem:[%s0 + $0x1c0] sm:$0xff]
  %v72 = vld [vmem:[%s0 + $0x1c8] sm:$0xff]
  %v73 = vld [vmem:[%s0 + $0x1d0] sm:$0xff]
  %v74 = vld [vmem:[%s0 + $0x1d8] sm:$0xff]
  %v75 = vld [vmem:[%s0 + $0x1e0] sm:$0xff]
  %v76 = vld [vmem:[%s0 + $0x1e8] sm:$0xff]
  %v77 = vld [vmem:[%s0 + $0x1f0] sm:$0xff]
  %v78 = vld [vmem:[%s0 + $0x1f8] sm:$0xff]
  %v79 = vld [vmem:[%s0 + $0x200] sm:$0xff]
  %v80 = vld [vmem:[%s0 + $0x208] sm:$0xff]
  %v81 = vld [vmem:[%s0 + $0x210] sm:$0xff]
  %v82 = vld [vmem:[%s0 + $0x218] sm:$0xff]
  %v83 = vld [vmem:[%s0 + $0x220] sm:$0xff]
  %v84 = vld [vmem:[%s0 + $0x228] sm:$0xff]
  %v85 = vld [vmem:[%s0 + $0x230] sm:$0xff]
  %v86 = vld [vmem:[%s0 + $0x238] sm:$0xff]
  %v87 = vld [vmem:[%s1] sm:$0xf]
  %v88 = vld [vmem:[%s1 + $0x4] sm:$0xf]
  %v89 = vld [vmem:[%s1 + $0x8] sm:$0xf]
  %v90 = vld [vmem:[%s1 + $0xc] sm:$0xf]
  %v91 = vld [vmem:[%s1 + $0x10] sm:$0xf]
  %v92 = vld [vmem:[%s1 + $0x14] sm:$0xf]
  %v93 = vld [vmem:[%s1 + $0x18] sm:$0xf]
  %v94 = vld [vmem:[%s1 + $0x1c] sm:$0xf]
  %v95 = vld [vmem:[%s1 + $0x20] sm:$0xf]
  %v96 = vld [vmem:[%s1 + $0x24] sm:$0xf]
  %v97 = vld [vmem:[%s1 + $0x28] sm:$0xf]
  %v98 = vld [vmem:[%s1 + $0x2c] sm:$0xf]
  %v99 = vld [vmem:[%s1 + $0x30] sm:$0xf]
  %v100 = vld [vmem:[%s1 + $0x34] sm:$0xf]
  %v101 = vld [vmem:[%s1 + $0x38] sm:$0xf]
  %v102 = vld [vmem:[%s1 + $0x3c] sm:$0xf]
  %v103 = vld [vmem:[%s1 + $0x40] sm:$0xf]
  %v104 = vld [vmem:[%s1 + $0x44] sm:$0xf]
  %v105 = vld [vmem:[%s1 + $0x48] sm:$0xf]
  %v106 = vld [vmem:[%s1 + $0x4c] sm:$0xf]
  %v107 = vld [vmem:[%s1 + $0x50] sm:$0xf]
  %v108 = vld [vmem:[%s1 + $0x54] sm:$0xf]
  %v109 = vld [vmem:[%s1 + $0x58] sm:$0xf]
  %v110 = vld [vmem:[%s1 + $0x5c] sm:$0xf]
  %v111 = vld [vmem:[%s1 + $0x60] sm:$0xf]
  %v112 = vld [vmem:[%s1 + $0x64] sm:$0xf]
  %v113 = vld [vmem:[%s1 + $0x68] sm:$0xf]
  %v114 = vld [vmem:[%s1 + $0x6c] sm:$0xf]
  %v115 = vld [vmem:[%s1 + $0x70] sm:$0xf]
  %v116 = vld [vmem:[%s1 + $0x74] sm:$0xf]
  %v117 = vld [vmem:[%s1 + $0x78] sm:$0xf]
  %v118 = vld [vmem:[%s1 + $0x7c] sm:$0xf]
  %v119 = vld [vmem:[%s1 + $0x80] sm:$0xf]
  %v120 = vld [vmem:[%s1 + $0x84] sm:$0xf]
  %v121 = vld [vmem:[%s1 + $0x88] sm:$0xf]
  %v122 = vld [vmem:[%s1 + $0x8c] sm:$0xf]
  %v123 = vld [vmem:[%s1 + $0x90] sm:$0xf]
  %v124 = vld [vmem:[%s1 + $0x94] sm:$0xf]
  %v125 = vld [vmem:[%s1 + $0x98] sm:$0xf]
  %v126 = vld [vmem:[%s1 + $0x9c] sm:$0xf]
  %v127 = vld [vmem:[%s1 + $0xa0] sm:$0xf]
  %v128 = vld [vmem:[%s1 + $0xa4] sm:$0xf]
  %v129 = vld [vmem:[%s1 + $0xa8] sm:$0xf]
  %v130 = vld [vmem:[%s1 + $0xac] sm:$0xf]
  %v131 = vld [vmem:[%s1 + $0xb0] sm:$0xf]
  %v132 = vld [vmem:[%s1 + $0xb4] sm:$0xf]
  %v133 = vld [vmem:[%s1 + $0xb8] sm:$0xf]
  %v134 = vld [vmem:[%s1 + $0xbc] sm:$0xf]
  %v135 = vld [vmem:[%s1 + $0xc0] sm:$0xf]
  %v136 = vld [vmem:[%s1 + $0xc4] sm:$0xf]
  %v137 = vld [vmem:[%s2] sm:$0x1]
  %v139 = vlaneseq
  %v140 = vshrl.u32 %v139, 7
  %v141 = vsub.s32 0, %v140
  %v142 = vrot.slane %v137, %v141
  %v216 = vunpack.c.l.b16 %v15
  %v217 = vunpack.c.h.b16 %v15
  %v218 = vunpack.c.l.b16 %v16
  %v219 = vunpack.c.h.b16 %v16
  %v220 = vunpack.c.l.b16 %v17
  %v221 = vunpack.c.h.b16 %v17
  %v222 = vunpack.c.l.b16 %v18
  %v223 = vunpack.c.h.b16 %v18
  %v224 = vunpack.c.l.b16 %v19
  %v225 = vunpack.c.h.b16 %v19
  %v226 = vunpack.c.l.b16 %v20
  %v227 = vunpack.c.h.b16 %v20
  %v228 = vunpack.c.l.b16 %v21
  %v229 = vunpack.c.h.b16 %v21
  %v230 = vunpack.c.l.b16 %v22
  %v231 = vunpack.c.h.b16 %v22
  %v232 = vunpack.c.l.b16 %v23
  %v233 = vunpack.c.h.b16 %v23
  %v234 = vunpack.c.l.b16 %v24
  %v235 = vunpack.c.h.b16 %v24
  %v236 = vunpack.c.l.b16 %v25
  %v237 = vunpack.c.h.b16 %v25
  %v238 = vunpack.c.l.b16 %v26
  %v239 = vunpack.c.h.b16 %v26
  %v240 = vunpack.c.l.b16 %v27
  %v241 = vunpack.c.h.b16 %v27
  %v242 = vunpack.c.l.b16 %v28
  %v243 = vunpack.c.h.b16 %v28
  %v244 = vunpack.c.l.b16 %v29
  %v245 = vunpack.c.h.b16 %v29
  %v246 = vunpack.c.l.b16 %v30
  %v247 = vunpack.c.h.b16 %v30
  %v248 = vunpack.c.l.b16 %v31
  %v249 = vunpack.c.h.b16 %v31
  %v250 = vunpack.c.l.b16 %v32
  %v251 = vunpack.c.h.b16 %v32
  %v252 = vunpack.c.l.b16 %v33
  %v253 = vunpack.c.h.b16 %v33
  %v254 = vunpack.c.l.b16 %v34
  %v255 = vunpack.c.h.b16 %v34
  %v256 = vunpack.c.l.b16 %v35
  %v257 = vunpack.c.h.b16 %v35
  %v258 = vunpack.c.l.b16 %v36
  %v259 = vunpack.c.h.b16 %v36
  %v260 = vunpack.c.l.b16 %v37
  %v261 = vunpack.c.h.b16 %v37
  %v262 = vunpack.c.l.b16 %v38
  %v263 = vunpack.c.h.b16 %v38
  %v264 = vunpack.c.l.b16 %v39
  %v265 = vunpack.c.h.b16 %v39
  %v266 = vunpack.c.l.b16 %v40
  %v267 = vunpack.c.h.b16 %v40
  %v268 = vunpack.c.l.b16 %v41
  %v269 = vunpack.c.h.b16 %v41
  %v270 = vunpack.c.l.b16 %v42
  %v271 = vunpack.c.h.b16 %v42
  %v272 = vunpack.c.l.b16 %v43
  %v273 = vunpack.c.h.b16 %v43
  %v274 = vunpack.c.l.b16 %v44
  %v275 = vunpack.c.h.b16 %v44
  %v276 = vunpack.c.l.b16 %v45
  %v277 = vunpack.c.h.b16 %v45
  %v278 = vunpack.c.l.b16 %v46
  %v279 = vunpack.c.h.b16 %v46
  %v280 = vunpack.c.l.b16 %v47
  %v281 = vunpack.c.h.b16 %v47
  %v282 = vunpack.c.l.b16 %v48
  %v283 = vunpack.c.h.b16 %v48
  %v284 = vunpack.c.l.b16 %v49
  %v285 = vunpack.c.h.b16 %v49
  %v286 = vunpack.c.l.b16 %v50
  %v287 = vunpack.c.h.b16 %v50
  %v288 = vunpack.c.l.b16 %v51
  %v289 = vunpack.c.h.b16 %v51
  %v290 = vunpack.c.l.b16 %v52
  %v291 = vunpack.c.h.b16 %v52
  %v292 = vunpack.c.l.b16 %v53
  %v293 = vunpack.c.h.b16 %v53
  %v294 = vunpack.c.l.b16 %v54
  %v295 = vunpack.c.h.b16 %v54
  %v296 = vunpack.c.l.b16 %v55
  %v297 = vunpack.c.h.b16 %v55
  %v298 = vunpack.c.l.b16 %v56
  %v299 = vunpack.c.h.b16 %v56
  %v300 = vunpack.c.l.b16 %v57
  %v301 = vunpack.c.h.b16 %v57
  %v302 = vunpack.c.l.b16 %v58
  %v303 = vunpack.c.h.b16 %v58
  %v304 = vunpack.c.l.b16 %v59
  %v305 = vunpack.c.h.b16 %v59
  %v306 = vunpack.c.l.b16 %v60
  %v307 = vunpack.c.h.b16 %v60
  %v308 = vunpack.c.l.b16 %v61
  %v309 = vunpack.c.h.b16 %v61
  %v310 = vunpack.c.l.b16 %v62
  %v311 = vunpack.c.h.b16 %v62
  %v312 = vunpack.c.l.b16 %v63
  %v313 = vunpack.c.h.b16 %v63
  %v314 = vunpack.c.l.b16 %v64
  %v315 = vunpack.c.h.b16 %v64
  %v316 = vunpack.c.l.b16 %v65
  %v317 = vunpack.c.h.b16 %v65
  %v318 = vunpack.c.l.b16 %v66
  %v319 = vunpack.c.h.b16 %v66
  %v320 = vunpack.c.l.b16 %v67
  %v321 = vunpack.c.h.b16 %v67
  %v322 = vunpack.c.l.b16 %v68
  %v323 = vunpack.c.h.b16 %v68
  %v324 = vunpack.c.l.b16 %v69
  %v325 = vunpack.c.h.b16 %v69
  %v326 = vunpack.c.l.b16 %v70
  %v327 = vunpack.c.h.b16 %v70
  %v328 = vunpack.c.l.b16 %v71
  %v329 = vunpack.c.h.b16 %v71
  %v330 = vunpack.c.l.b16 %v72
  %v331 = vunpack.c.h.b16 %v72
  %v332 = vunpack.c.l.b16 %v73
  %v333 = vunpack.c.h.b16 %v73
  %v334 = vunpack.c.l.b16 %v74
  %v335 = vunpack.c.h.b16 %v74
  %v336 = vunpack.c.l.b16 %v75
  %v337 = vunpack.c.h.b16 %v75
  %v338 = vunpack.c.l.b16 %v76
  %v339 = vunpack.c.h.b16 %v76
  %v340 = vunpack.c.l.b16 %v77
  %v341 = vunpack.c.h.b16 %v77
  %v342 = vunpack.c.l.b16 %v78
  %v343 = vunpack.c.h.b16 %v78
  %v344 = vunpack.c.l.b16 %v79
  %v345 = vunpack.c.h.b16 %v79
  %v346 = vunpack.c.l.b16 %v80
  %v347 = vunpack.c.h.b16 %v80
  %v348 = vunpack.c.l.b16 %v81
  %v349 = vunpack.c.h.b16 %v81
  %v350 = vunpack.c.l.b16 %v82
  %v351 = vunpack.c.h.b16 %v82
  %v352 = vunpack.c.l.b16 %v83
  %v353 = vunpack.c.h.b16 %v83
  %v354 = vunpack.c.l.b16 %v84
  %v355 = vunpack.c.h.b16 %v84
  %v356 = vunpack.c.l.b16 %v85
  %v357 = vunpack.c.h.b16 %v85
  %v358 = vunpack.c.l.b16 %v86
  %v359 = vunpack.c.h.b16 %v86
  %v360 = vpack.c.b16 %v220, %v216
  %v361 = vpack.c.b16 %v221, %v217
  %v362 = vpack.c.b16 %v222, %v218
  %v363 = vpack.c.b16 %v223, %v219
  %v364 = vpack.c.b16 %v228, %v224
  %v365 = vpack.c.b16 %v229, %v225
  %v366 = vpack.c.b16 %v230, %v226
  %v367 = vpack.c.b16 %v231, %v227
  %v368 = vpack.c.b16 %v236, %v232
  %v369 = vpack.c.b16 %v237, %v233
  %v370 = vpack.c.b16 %v238, %v234
  %v371 = vpack.c.b16 %v239, %v235
  %v372 = vpack.c.b16 %v244, %v240
  %v373 = vpack.c.b16 %v245, %v241
  %v374 = vpack.c.b16 %v246, %v242
  %v375 = vpack.c.b16 %v247, %v243
  %v376 = vpack.c.b16 %v252, %v248
  %v377 = vpack.c.b16 %v253, %v249
  %v378 = vpack.c.b16 %v254, %v250
  %v379 = vpack.c.b16 %v255, %v251
  %v380 = vpack.c.b16 %v260, %v256
  %v381 = vpack.c.b16 %v261, %v257
  %v382 = vpack.c.b16 %v262, %v258
  %v383 = vpack.c.b16 %v263, %v259
  %v384 = vpack.c.b16 %v268, %v264
  %v385 = vpack.c.b16 %v269, %v265
  %v386 = vpack.c.b16 %v270, %v266
  %v387 = vpack.c.b16 %v271, %v267
  %v388 = vpack.c.b16 %v276, %v272
  %v389 = vpack.c.b16 %v277, %v273
  %v390 = vpack.c.b16 %v278, %v274
  %v391 = vpack.c.b16 %v279, %v275
  %v392 = vpack.c.b16 %v284, %v280
  %v393 = vpack.c.b16 %v285, %v281
  %v394 = vpack.c.b16 %v286, %v282
  %v395 = vpack.c.b16 %v287, %v283
  %v396 = vpack.c.b16 %v292, %v288
  %v397 = vpack.c.b16 %v293, %v289
  %v398 = vpack.c.b16 %v294, %v290
  %v399 = vpack.c.b16 %v295, %v291
  %v400 = vpack.c.b16 %v300, %v296
  %v401 = vpack.c.b16 %v301, %v297
  %v402 = vpack.c.b16 %v302, %v298
  %v403 = vpack.c.b16 %v303, %v299
  %v404 = vpack.c.b16 %v308, %v304
  %v405 = vpack.c.b16 %v309, %v305
  %v406 = vpack.c.b16 %v310, %v306
  %v407 = vpack.c.b16 %v311, %v307
  %v408 = vpack.c.b16 %v316, %v312
  %v409 = vpack.c.b16 %v317, %v313
  %v410 = vpack.c.b16 %v318, %v314
  %v411 = vpack.c.b16 %v319, %v315
  %v412 = vpack.c.b16 %v324, %v320
  %v413 = vpack.c.b16 %v325, %v321
  %v414 = vpack.c.b16 %v326, %v322
  %v415 = vpack.c.b16 %v327, %v323
  %v416 = vpack.c.b16 %v332, %v328
  %v417 = vpack.c.b16 %v333, %v329
  %v418 = vpack.c.b16 %v334, %v330
  %v419 = vpack.c.b16 %v335, %v331
  %v420 = vpack.c.b16 %v340, %v336
  %v421 = vpack.c.b16 %v341, %v337
  %v422 = vpack.c.b16 %v342, %v338
  %v423 = vpack.c.b16 %v343, %v339
  %v424 = vpack.c.b16 %v348, %v344
  %v425 = vpack.c.b16 %v349, %v345
  %v426 = vpack.c.b16 %v350, %v346
  %v427 = vpack.c.b16 %v351, %v347
  %v428 = vpack.c.b16 %v356, %v352
  %v429 = vpack.c.b16 %v357, %v353
  %v430 = vpack.c.b16 %v358, %v354
  %v431 = vpack.c.b16 %v359, %v355
  %v536 = vunpack.c.l.b16 %v87
  %v537 = vunpack.c.l.b16 %v88
  %v538 = vunpack.c.l.b16 %v89
  %v539 = vunpack.c.l.b16 %v90
  %v540 = vunpack.c.l.b16 %v91
  %v541 = vunpack.c.l.b16 %v92
  %v542 = vunpack.c.l.b16 %v93
  %v543 = vunpack.c.l.b16 %v94
  %v544 = vunpack.c.l.b16 %v95
  %v545 = vunpack.c.l.b16 %v96
  %v546 = vunpack.c.l.b16 %v97
  %v547 = vunpack.c.l.b16 %v98
  %v548 = vunpack.c.l.b16 %v99
  %v549 = vunpack.c.l.b16 %v100
  %v550 = vunpack.c.l.b16 %v101
  %v551 = vunpack.c.l.b16 %v102
  %v552 = vunpack.c.l.b16 %v103
  %v553 = vunpack.c.l.b16 %v104
  %v554 = vunpack.c.l.b16 %v105
  %v555 = vunpack.c.l.b16 %v106
  %v556 = vunpack.c.l.b16 %v107
  %v557 = vunpack.c.l.b16 %v108
  %v558 = vunpack.c.l.b16 %v109
  %v559 = vunpack.c.l.b16 %v110
  %v560 = vunpack.c.l.b16 %v111
  %v561 = vunpack.c.l.b16 %v112
  %v562 = vunpack.c.l.b16 %v113
  %v563 = vunpack.c.l.b16 %v114
  %v564 = vunpack.c.l.b16 %v115
  %v565 = vunpack.c.l.b16 %v116
  %v566 = vunpack.c.l.b16 %v117
  %v567 = vunpack.c.l.b16 %v118
  %v568 = vunpack.c.l.b16 %v119
  %v569 = vunpack.c.l.b16 %v120
  %v570 = vunpack.c.l.b16 %v121
  %v571 = vunpack.c.l.b16 %v122
  %v572 = vunpack.c.l.b16 %v123
  %v573 = vunpack.c.l.b16 %v124
  %v574 = vunpack.c.l.b16 %v125
  %v575 = vunpack.c.l.b16 %v126
  %v576 = vunpack.c.l.b16 %v127
  %v577 = vunpack.c.l.b16 %v128
  %v578 = vunpack.c.l.b16 %v129
  %v579 = vunpack.c.l.b16 %v130
  %v580 = vunpack.c.l.b16 %v131
  %v581 = vunpack.c.l.b16 %v132
  %v582 = vunpack.c.l.b16 %v133
  %v583 = vunpack.c.l.b16 %v134
  %v584 = vunpack.c.l.b16 %v135
  %v585 = vunpack.c.l.b16 %v136
  %v586 = vpack.c.b16 %v537, %v536
  %v587 = vpack.c.b16 %v539, %v538
  %v588 = vpack.c.b16 %v541, %v540
  %v589 = vpack.c.b16 %v543, %v542
  %v590 = vpack.c.b16 %v545, %v544
  %v591 = vpack.c.b16 %v547, %v546
  %v592 = vpack.c.b16 %v549, %v548
  %v593 = vpack.c.b16 %v551, %v550
  %v594 = vpack.c.b16 %v553, %v552
  %v595 = vpack.c.b16 %v555, %v554
  %v596 = vpack.c.b16 %v557, %v556
  %v597 = vpack.c.b16 %v559, %v558
  %v598 = vpack.c.b16 %v561, %v560
  %v599 = vpack.c.b16 %v563, %v562
  %v600 = vpack.c.b16 %v565, %v564
  %v601 = vpack.c.b16 %v567, %v566
  %v602 = vpack.c.b16 %v569, %v568
  %v603 = vpack.c.b16 %v571, %v570
  %v604 = vpack.c.b16 %v573, %v572
  %v605 = vpack.c.b16 %v575, %v574
  %v606 = vpack.c.b16 %v577, %v576
  %v607 = vpack.c.b16 %v579, %v578
  %v608 = vpack.c.b16 %v581, %v580
  %v609 = vpack.c.b16 %v583, %v582
  %v610 = vpack.c.b16 %v585, %v584
  %vm636 = vcmask 130048
  %v638 = vsel %vm636, %v363, 0
  %v641 = vsel %vm636, %v367, 0
  %v644 = vsel %vm636, %v371, 0
  %v647 = vsel %vm636, %v375, 0
  %v650 = vsel %vm636, %v379, 0
  %v653 = vsel %vm636, %v383, 0
  %v656 = vsel %vm636, %v387, 0
  %v659 = vsel %vm636, %v391, 0
  %v662 = vsel %vm636, %v395, 0
  %v665 = vsel %vm636, %v399, 0
  %v668 = vsel %vm636, %v403, 0
  %v671 = vsel %vm636, %v407, 0
  %v674 = vsel %vm636, %v411, 0
  %v677 = vsel %vm636, %v415, 0
  %v680 = vsel %vm636, %v419, 0
  %v683 = vsel %vm636, %v423, 0
  %v686 = vsel %vm636, %v427, 0
  %v689 = vsel %vm636, %v431, 0
  %691 = vmatprep.subr.bf16.mxu0 0
  %692 = vmatpush1.bf16.msra.mxu0 %v586
  %693 = vmatprep.subr.bf16.mxu0 0
  %694 = vmatpush1.bf16.msra.mxu0 %v587
  %695 = vmatprep.subr.bf16.mxu0 0
  %696 = vmatpush1.bf16.msra.mxu0 %v588
  %697 = vmatprep.subr.bf16.mxu0 0
  %698 = vmatpush1.bf16.msra.mxu0 %v589
  %699 = vmatprep.subr.bf16.mxu0 0
  %700 = vmatpush1.bf16.msra.mxu0 %v590
  %701 = vmatprep.subr.bf16.mxu0 0
  %702 = vmatpush1.bf16.msra.mxu0 %v591
  %703 = vmatprep.subr.bf16.mxu0 0
  %704 = vmatpush1.bf16.msra.mxu0 %v592
  %705 = vmatprep.subr.bf16.mxu0 0
  %706 = vmatpush1.bf16.msra.mxu0 %v593
  %707 = vmatprep.subr.bf16.mxu0 0
  %708 = vmatpush1.bf16.msra.mxu0 %v594
  %709 = vmatprep.subr.bf16.mxu0 0
  %710 = vmatpush1.bf16.msra.mxu0 %v595
  %711 = vmatprep.subr.bf16.mxu0 0
  %712 = vmatpush1.bf16.msra.mxu0 %v596
  %713 = vmatprep.subr.bf16.mxu0 0
  %714 = vmatpush1.bf16.msra.mxu0 %v597
  %715 = vmatprep.subr.bf16.mxu0 0
  %716 = vmatpush1.bf16.msra.mxu0 %v598
  %717 = vmatprep.subr.bf16.mxu0 0
  %718 = vmatpush1.bf16.msra.mxu0 %v599
  %719 = vmatprep.subr.bf16.mxu0 0
  %720 = vmatpush1.bf16.msra.mxu0 %v600
  %721 = vmatprep.subr.bf16.mxu0 0
  %722 = vmatpush1.bf16.msra.mxu0 %v601
  %723 = vmatprep.mubr.bf16.mxu0 %v361
  %724 = vmatmul.mubr.bf16.gmra.mrb[0].mxu0 %v360
  %v725 = vpop.f32.mrb[0].mxu0
  %v726 = vadd.f32 %v142, %v725
  %v727 = vpop.f32.mrb[0].mxu0
  %v728 = vpop.f32.mrb[0].mxu0
  %v729 = vadd.f32 %v142, %v728
  %v730 = vpop.f32.mrb[0].mxu0
  %731 = vmatprep.mubr.bf16.mxu0 %v365
  %732 = vmatmul.mubr.bf16.gmra.mrb[0].mxu0 %v364
  %v733 = vpop.f32.mrb[0].mxu0
  %v734 = vadd.f32 %v142, %v733
  %v735 = vpop.f32.mrb[0].mxu0
  %v736 = vpop.f32.mrb[0].mxu0
  %v737 = vadd.f32 %v142, %v736
  %v738 = vpop.f32.mrb[0].mxu0
  %739 = vmatprep.mubr.bf16.mxu0 %v369
  %740 = vmatmul.mubr.bf16.gmra.mrb[0].mxu0 %v368
  %v741 = vpop.f32.mrb[0].mxu0
  %v742 = vadd.f32 %v142, %v741
  %v743 = vpop.f32.mrb[0].mxu0
  %v744 = vpop.f32.mrb[0].mxu0
  %v745 = vadd.f32 %v142, %v744
  %v746 = vpop.f32.mrb[0].mxu0
  %747 = vmatprep.mubr.bf16.mxu0 %v373
  %748 = vmatmul.mubr.bf16.gmra.mrb[0].mxu0 %v372
  %v749 = vpop.f32.mrb[0].mxu0
  %v750 = vadd.f32 %v142, %v749
  %v751 = vpop.f32.mrb[0].mxu0
  %v752 = vpop.f32.mrb[0].mxu0
  %v753 = vadd.f32 %v142, %v752
  %v754 = vpop.f32.mrb[0].mxu0
  %755 = vmatprep.mubr.bf16.mxu0 %v377
  %756 = vmatmul.mubr.bf16.gmra.mrb[0].mxu0 %v376
  %v757 = vpop.f32.mrb[0].mxu0
  %v758 = vadd.f32 %v142, %v757
  %v759 = vpop.f32.mrb[0].mxu0
  %v760 = vpop.f32.mrb[0].mxu0
  %v761 = vadd.f32 %v142, %v760
  %v762 = vpop.f32.mrb[0].mxu0
  %763 = vmatprep.mubr.bf16.mxu0 %v381
  %764 = vmatmul.mubr.bf16.gmra.mrb[0].mxu0 %v380
  %v765 = vpop.f32.mrb[0].mxu0
  %v766 = vadd.f32 %v142, %v765
  %v767 = vpop.f32.mrb[0].mxu0
  %v768 = vpop.f32.mrb[0].mxu0
  %v769 = vadd.f32 %v142, %v768
  %v770 = vpop.f32.mrb[0].mxu0
  %771 = vmatprep.mubr.bf16.mxu0 %v385
  %772 = vmatmul.mubr.bf16.gmra.mrb[0].mxu0 %v384
  %v773 = vpop.f32.mrb[0].mxu0
  %v774 = vadd.f32 %v142, %v773
  %v775 = vpop.f32.mrb[0].mxu0
  %v776 = vpop.f32.mrb[0].mxu0
  %v777 = vadd.f32 %v142, %v776
  %v778 = vpop.f32.mrb[0].mxu0
  %779 = vmatprep.mubr.bf16.mxu0 %v389
  %780 = vmatmul.mubr.bf16.gmra.mrb[0].mxu0 %v388
  %v781 = vpop.f32.mrb[0].mxu0
  %v782 = vadd.f32 %v142, %v781
  %v783 = vpop.f32.mrb[0].mxu0
  %v784 = vpop.f32.mrb[0].mxu0
  %v785 = vadd.f32 %v142, %v784
  %v786 = vpop.f32.mrb[0].mxu0
  %787 = vmatprep.mubr.bf16.mxu0 %v393
  %788 = vmatmul.mubr.bf16.gmra.mrb[0].mxu0 %v392
  %v789 = vpop.f32.mrb[0].mxu0
  %v790 = vadd.f32 %v142, %v789
  %v791 = vpop.f32.mrb[0].mxu0
  %v792 = vpop.f32.mrb[0].mxu0
  %v793 = vadd.f32 %v142, %v792
  %v794 = vpop.f32.mrb[0].mxu0
  %795 = vmatprep.mubr.bf16.mxu0 %v397
  %796 = vmatmul.mubr.bf16.gmra.mrb[0].mxu0 %v396
  %v797 = vpop.f32.mrb[0].mxu0
  %v798 = vadd.f32 %v142, %v797
  %v799 = vpop.f32.mrb[0].mxu0
  %v800 = vpop.f32.mrb[0].mxu0
  %v801 = vadd.f32 %v142, %v800
  %v802 = vpop.f32.mrb[0].mxu0
  %803 = vmatprep.mubr.bf16.mxu0 %v401
  %804 = vmatmul.mubr.bf16.gmra.mrb[0].mxu0 %v400
  %v805 = vpop.f32.mrb[0].mxu0
  %v806 = vadd.f32 %v142, %v805
  %v807 = vpop.f32.mrb[0].mxu0
  %v808 = vpop.f32.mrb[0].mxu0
  %v809 = vadd.f32 %v142, %v808
  %v810 = vpop.f32.mrb[0].mxu0
  %811 = vmatprep.mubr.bf16.mxu0 %v405
  %812 = vmatmul.mubr.bf16.gmra.mrb[0].mxu0 %v404
  %v813 = vpop.f32.mrb[0].mxu0
  %v814 = vadd.f32 %v142, %v813
  %v815 = vpop.f32.mrb[0].mxu0
  %v816 = vpop.f32.mrb[0].mxu0
  %v817 = vadd.f32 %v142, %v816
  %v818 = vpop.f32.mrb[0].mxu0
  %819 = vmatprep.mubr.bf16.mxu0 %v409
  %820 = vmatmul.mubr.bf16.gmra.mrb[0].mxu0 %v408
  %v821 = vpop.f32.mrb[0].mxu0
  %v822 = vadd.f32 %v142, %v821
  %v823 = vpop.f32.mrb[0].mxu0
  %v824 = vpop.f32.mrb[0].mxu0
  %v825 = vadd.f32 %v142, %v824
  %v826 = vpop.f32.mrb[0].mxu0
  %827 = vmatprep.mubr.bf16.mxu0 %v413
  %828 = vmatmul.mubr.bf16.gmra.mrb[0].mxu0 %v412
  %v829 = vpop.f32.mrb[0].mxu0
  %v830 = vadd.f32 %v142, %v829
  %v831 = vpop.f32.mrb[0].mxu0
  %v832 = vpop.f32.mrb[0].mxu0
  %v833 = vadd.f32 %v142, %v832
  %v834 = vpop.f32.mrb[0].mxu0
  %835 = vmatprep.mubr.bf16.mxu0 %v417
  %836 = vmatmul.mubr.bf16.gmra.mrb[0].mxu0 %v416
  %v837 = vpop.f32.mrb[0].mxu0
  %v838 = vadd.f32 %v142, %v837
  %v839 = vpop.f32.mrb[0].mxu0
  %v840 = vpop.f32.mrb[0].mxu0
  %v841 = vadd.f32 %v142, %v840
  %v842 = vpop.f32.mrb[0].mxu0
  %843 = vmatprep.mubr.bf16.mxu0 %v421
  %844 = vmatmul.mubr.bf16.gmra.mrb[0].mxu0 %v420
  %v845 = vpop.f32.mrb[0].mxu0
  %v846 = vadd.f32 %v142, %v845
  %v847 = vpop.f32.mrb[0].mxu0
  %v848 = vpop.f32.mrb[0].mxu0
  %v849 = vadd.f32 %v142, %v848
  %v850 = vpop.f32.mrb[0].mxu0
  %851 = vmatprep.mubr.bf16.mxu0 %v425
  %852 = vmatmul.mubr.bf16.gmra.mrb[0].mxu0 %v424
  %v853 = vpop.f32.mrb[0].mxu0
  %v854 = vadd.f32 %v142, %v853
  %v855 = vpop.f32.mrb[0].mxu0
  %v856 = vpop.f32.mrb[0].mxu0
  %v857 = vadd.f32 %v142, %v856
  %v858 = vpop.f32.mrb[0].mxu0
  %859 = vmatprep.mubr.bf16.mxu0 %v429
  %860 = vmatmul.mubr.bf16.gmra.mrb[0].mxu0 %v428
  %v861 = vpop.f32.mrb[0].mxu0
  %v862 = vadd.f32 %v142, %v861
  %v863 = vpop.f32.mrb[0].mxu0
  %v864 = vpop.f32.mrb[0].mxu0
  %v865 = vadd.f32 %v142, %v864
  %v866 = vpop.f32.mrb[0].mxu0
  %867 = vdwg.mxu0
  %868 = vmatprep.subr.bf16.mxu0 0
  %869 = vmatpush1.bf16.msra.mxu0 %v602
  %870 = vmatprep.subr.bf16.mxu0 0
  %871 = vmatpush1.bf16.msra.mxu0 %v603
  %872 = vmatprep.subr.bf16.mxu0 0
  %873 = vmatpush1.bf16.msra.mxu0 %v604
  %874 = vmatprep.subr.bf16.mxu0 0
  %875 = vmatpush1.bf16.msra.mxu0 %v605
  %876 = vmatprep.subr.bf16.mxu0 0
  %877 = vmatpush1.bf16.msra.mxu0 %v606
  %878 = vmatprep.subr.bf16.mxu0 0
  %879 = vmatpush1.bf16.msra.mxu0 %v607
  %880 = vmatprep.subr.bf16.mxu0 0
  %881 = vmatpush1.bf16.msra.mxu0 %v608
  %882 = vmatprep.subr.bf16.mxu0 0
  %883 = vmatpush1.bf16.msra.mxu0 %v609
  %884 = vmatprep.subr.bf16.mxu0 0
  %885 = vmatpush1.bf16.msra.mxu0 %v610
  %886 = vmatprep.subr.bf16.mxu0 0
  %887 = vmatpush1.bf16.msra.mxu0 0
  %888 = vmatprep.subr.bf16.mxu0 0
  %889 = vmatpush1.bf16.msra.mxu0 0
  %890 = vmatprep.subr.bf16.mxu0 0
  %891 = vmatpush1.bf16.msra.mxu0 0
  %892 = vmatprep.subr.bf16.mxu0 0
  %893 = vmatpush1.bf16.msra.mxu0 0
  %894 = vmatprep.subr.bf16.mxu0 0
  %895 = vmatpush1.bf16.msra.mxu0 0
  %896 = vmatprep.subr.bf16.mxu0 0
  %897 = vmatpush1.bf16.msra.mxu0 0
  %898 = vmatprep.subr.bf16.mxu0 0
  %899 = vmatpush1.bf16.msra.mxu0 0
  %900 = vmatprep.mubr.bf16.mxu0 %v638
  %901 = vmatmul.mubr.bf16.gmra.mrb[0].mxu0 %v362
  %v902 = vpop.f32.mrb[0].mxu0
  %v903 = vadd.f32 %v726, %v902
  %v904 = vpop.f32.mrb[0].mxu0
  %v905 = vpop.f32.mrb[0].mxu0
  %v906 = vadd.f32 %v729, %v905
  %v907 = vpop.f32.mrb[0].mxu0
  %908 = vmatprep.mubr.bf16.mxu0 %v641
  %909 = vmatmul.mubr.bf16.gmra.mrb[0].mxu0 %v366
  %v910 = vpop.f32.mrb[0].mxu0
  %v911 = vadd.f32 %v734, %v910
  %v912 = vpop.f32.mrb[0].mxu0
  %v913 = vpop.f32.mrb[0].mxu0
  %v914 = vadd.f32 %v737, %v913
  %v915 = vpop.f32.mrb[0].mxu0
  %916 = vmatprep.mubr.bf16.mxu0 %v644
  %917 = vmatmul.mubr.bf16.gmra.mrb[0].mxu0 %v370
  %v918 = vpop.f32.mrb[0].mxu0
  %v919 = vadd.f32 %v742, %v918
  %v920 = vpop.f32.mrb[0].mxu0
  %v921 = vpop.f32.mrb[0].mxu0
  %v922 = vadd.f32 %v745, %v921
  %v923 = vpop.f32.mrb[0].mxu0
  %924 = vmatprep.mubr.bf16.mxu0 %v647
  %925 = vmatmul.mubr.bf16.gmra.mrb[0].mxu0 %v374
  %v926 = vpop.f32.mrb[0].mxu0
  %v927 = vadd.f32 %v750, %v926
  %v928 = vpop.f32.mrb[0].mxu0
  %v929 = vpop.f32.mrb[0].mxu0
  %v930 = vadd.f32 %v753, %v929
  %v931 = vpop.f32.mrb[0].mxu0
  %932 = vmatprep.mubr.bf16.mxu0 %v650
  %933 = vmatmul.mubr.bf16.gmra.mrb[0].mxu0 %v378
  %v934 = vpop.f32.mrb[0].mxu0
  %v935 = vadd.f32 %v758, %v934
  %v936 = vpop.f32.mrb[0].mxu0
  %v937 = vpop.f32.mrb[0].mxu0
  %v938 = vadd.f32 %v761, %v937
  %v939 = vpop.f32.mrb[0].mxu0
  %940 = vmatprep.mubr.bf16.mxu0 %v653
  %941 = vmatmul.mubr.bf16.gmra.mrb[0].mxu0 %v382
  %v942 = vpop.f32.mrb[0].mxu0
  %v943 = vadd.f32 %v766, %v942
  %v944 = vpop.f32.mrb[0].mxu0
  %v945 = vpop.f32.mrb[0].mxu0
  %v946 = vadd.f32 %v769, %v945
  %v947 = vpop.f32.mrb[0].mxu0
  %948 = vmatprep.mubr.bf16.mxu0 %v656
  %949 = vmatmul.mubr.bf16.gmra.mrb[0].mxu0 %v386
  %v950 = vpop.f32.mrb[0].mxu0
  %v951 = vadd.f32 %v774, %v950
  %v952 = vpop.f32.mrb[0].mxu0
  %v953 = vpop.f32.mrb[0].mxu0
  %v954 = vadd.f32 %v777, %v953
  %v955 = vpop.f32.mrb[0].mxu0
  %956 = vmatprep.mubr.bf16.mxu0 %v659
  %957 = vmatmul.mubr.bf16.gmra.mrb[0].mxu0 %v390
  %v958 = vpop.f32.mrb[0].mxu0
  %v959 = vadd.f32 %v782, %v958
  %v960 = vpop.f32.mrb[0].mxu0
  %v961 = vpop.f32.mrb[0].mxu0
  %v962 = vadd.f32 %v785, %v961
  %v963 = vpop.f32.mrb[0].mxu0
  %964 = vmatprep.mubr.bf16.mxu0 %v662
  %965 = vmatmul.mubr.bf16.gmra.mrb[0].mxu0 %v394
  %v966 = vpop.f32.mrb[0].mxu0
  %v967 = vadd.f32 %v790, %v966
  %v968 = vpop.f32.mrb[0].mxu0
  %v969 = vpop.f32.mrb[0].mxu0
  %v970 = vadd.f32 %v793, %v969
  %v971 = vpop.f32.mrb[0].mxu0
  %972 = vmatprep.mubr.bf16.mxu0 %v665
  %973 = vmatmul.mubr.bf16.gmra.mrb[0].mxu0 %v398
  %v974 = vpop.f32.mrb[0].mxu0
  %v975 = vadd.f32 %v798, %v974
  %v976 = vpop.f32.mrb[0].mxu0
  %v977 = vpop.f32.mrb[0].mxu0
  %v978 = vadd.f32 %v801, %v977
  %v979 = vpop.f32.mrb[0].mxu0
  %980 = vmatprep.mubr.bf16.mxu0 %v668
  %981 = vmatmul.mubr.bf16.gmra.mrb[0].mxu0 %v402
  %v982 = vpop.f32.mrb[0].mxu0
  %v983 = vadd.f32 %v806, %v982
  %v984 = vpop.f32.mrb[0].mxu0
  %v985 = vpop.f32.mrb[0].mxu0
  %v986 = vadd.f32 %v809, %v985
  %v987 = vpop.f32.mrb[0].mxu0
  %988 = vmatprep.mubr.bf16.mxu0 %v671
  %989 = vmatmul.mubr.bf16.gmra.mrb[0].mxu0 %v406
  %v990 = vpop.f32.mrb[0].mxu0
  %v991 = vadd.f32 %v814, %v990
  %v992 = vpop.f32.mrb[0].mxu0
  %v993 = vpop.f32.mrb[0].mxu0
  %v994 = vadd.f32 %v817, %v993
  %v995 = vpop.f32.mrb[0].mxu0
  %996 = vmatprep.mubr.bf16.mxu0 %v674
  %997 = vmatmul.mubr.bf16.gmra.mrb[0].mxu0 %v410
  %v998 = vpop.f32.mrb[0].mxu0
  %v999 = vadd.f32 %v822, %v998
  %v1000 = vpop.f32.mrb[0].mxu0
  %v1001 = vpop.f32.mrb[0].mxu0
  %v1002 = vadd.f32 %v825, %v1001
  %v1003 = vpop.f32.mrb[0].mxu0
  %1004 = vmatprep.mubr.bf16.mxu0 %v677
  %1005 = vmatmul.mubr.bf16.gmra.mrb[0].mxu0 %v414
  %v1006 = vpop.f32.mrb[0].mxu0
  %v1007 = vadd.f32 %v830, %v1006
  %v1008 = vpop.f32.mrb[0].mxu0
  %v1009 = vpop.f32.mrb[0].mxu0
  %v1010 = vadd.f32 %v833, %v1009
  %v1011 = vpop.f32.mrb[0].mxu0
  %1012 = vmatprep.mubr.bf16.mxu0 %v680
  %1013 = vmatmul.mubr.bf16.gmra.mrb[0].mxu0 %v418
  %v1014 = vpop.f32.mrb[0].mxu0
  %v1015 = vadd.f32 %v838, %v1014
  %v1016 = vpop.f32.mrb[0].mxu0
  %v1017 = vpop.f32.mrb[0].mxu0
  %v1018 = vadd.f32 %v841, %v1017
  %v1019 = vpop.f32.mrb[0].mxu0
  %1020 = vmatprep.mubr.bf16.mxu0 %v683
  %1021 = vmatmul.mubr.bf16.gmra.mrb[0].mxu0 %v422
  %v1022 = vpop.f32.mrb[0].mxu0
  %v1023 = vadd.f32 %v846, %v1022
  %v1024 = vpop.f32.mrb[0].mxu0
  %v1025 = vpop.f32.mrb[0].mxu0
  %v1026 = vadd.f32 %v849, %v1025
  %v1027 = vpop.f32.mrb[0].mxu0
  %1028 = vmatprep.mubr.bf16.mxu0 %v686
  %1029 = vmatmul.mubr.bf16.gmra.mrb[0].mxu0 %v426
  %v1030 = vpop.f32.mrb[0].mxu0
  %v1031 = vadd.f32 %v854, %v1030
  %v1032 = vpop.f32.mrb[0].mxu0
  %v1033 = vpop.f32.mrb[0].mxu0
  %v1034 = vadd.f32 %v857, %v1033
  %v1035 = vpop.f32.mrb[0].mxu0
  %1036 = vmatprep.mubr.bf16.mxu0 %v689
  %1037 = vmatmul.mubr.bf16.gmra.mrb[0].mxu0 %v430
  %v1038 = vpop.f32.mrb[0].mxu0
  %v1039 = vadd.f32 %v862, %v1038
  %v1040 = vpop.f32.mrb[0].mxu0
  %v1041 = vpop.f32.mrb[0].mxu0
  %v1042 = vadd.f32 %v865, %v1041
  %v1043 = vpop.f32.mrb[0].mxu0
  %1044 = vdwg.mxu0
  %1045 = vst [vmem:[%s3] sm:$0xff] %v903
  %1046 = vst [vmem:[%s3 + $0x8] sm:$0xff] %v906
  %1047 = vst [vmem:[%s3 + $0x10] sm:$0xff] %v911
  %1048 = vst [vmem:[%s3 + $0x18] sm:$0xff] %v914
  %1049 = vst [vmem:[%s3 + $0x20] sm:$0xff] %v919
  %1050 = vst [vmem:[%s3 + $0x28] sm:$0xff] %v922
  %1051 = vst [vmem:[%s3 + $0x30] sm:$0xff] %v927
  %1052 = vst [vmem:[%s3 + $0x38] sm:$0xff] %v930
  %1053 = vst [vmem:[%s3 + $0x40] sm:$0xff] %v935
  %1054 = vst [vmem:[%s3 + $0x48] sm:$0xff] %v938
  %1055 = vst [vmem:[%s3 + $0x50] sm:$0xff] %v943
  %1056 = vst [vmem:[%s3 + $0x58] sm:$0xff] %v946
  %1057 = vst [vmem:[%s3 + $0x60] sm:$0xff] %v951
  %1058 = vst [vmem:[%s3 + $0x68] sm:$0xff] %v954
  %1059 = vst [vmem:[%s3 + $0x70] sm:$0xff] %v959
  %1060 = vst [vmem:[%s3 + $0x78] sm:$0xff] %v962
  %1061 = vst [vmem:[%s3 + $0x80] sm:$0xff] %v967
  %1062 = vst [vmem:[%s3 + $0x88] sm:$0xff] %v970
  %1063 = vst [vmem:[%s3 + $0x90] sm:$0xff] %v975
  %1064 = vst [vmem:[%s3 + $0x98] sm:$0xff] %v978
  %1065 = vst [vmem:[%s3 + $0xa0] sm:$0xff] %v983
  %1066 = vst [vmem:[%s3 + $0xa8] sm:$0xff] %v986
  %1067 = vst [vmem:[%s3 + $0xb0] sm:$0xff] %v991
  %1068 = vst [vmem:[%s3 + $0xb8] sm:$0xff] %v994
  %1069 = vst [vmem:[%s3 + $0xc0] sm:$0xff] %v999
  %1070 = vst [vmem:[%s3 + $0xc8] sm:$0xff] %v1002
  %1071 = vst [vmem:[%s3 + $0xd0] sm:$0xff] %v1007
  %1072 = vst [vmem:[%s3 + $0xd8] sm:$0xff] %v1010
  %1073 = vst [vmem:[%s3 + $0xe0] sm:$0xff] %v1015
  %1074 = vst [vmem:[%s3 + $0xe8] sm:$0xff] %v1018
  %1075 = vst [vmem:[%s3 + $0xf0] sm:$0xff] %v1023
  %1076 = vst [vmem:[%s3 + $0xf8] sm:$0xff] %v1026
  %1077 = vst [vmem:[%s3 + $0x100] sm:$0xff] %v1031
  %1078 = vst [vmem:[%s3 + $0x108] sm:$0xff] %v1034
  %1079 = vst [vmem:[%s3 + $0x110] sm:$0xff] %v1039
  %1080 = vst [vmem:[%s3 + $0x118] sm:$0xff] %v1042
  // Predicated region
  $region14: #{net_forward.13} parent=0 // pred_check
    _
  $region15: #{net_forward.13} parent=0 // pred_check_branch
    %1082 = sbr.rel (0) target = $region17
  $region16: #{net_forward.13} parent=0 // pred_region
    _
  $region17: #{net_forward.13} parent=0 // pred_fallthru
    _
  // Predicated region
  $region18: #{net_forward.13} parent=0 // pred_check
    _
  $region19: #{net_forward.13} parent=0 // pred_check_branch
    %1084 = sbr.rel (0) target = $region21
  $region20: #{net_forward.13} parent=0 // pred_region
    _
  $region21: #{net_forward.13} parent=0 // pred_fallthru
    _

// kernel: net_forward.17
$region0: #{net_forward.17}
  #allocation0 [shape = 'u32[]', space=smem, size = 0x4, offset = 0x4, fixed_abs, tag = 'smem constant byte address 0x4 - core index']
  #allocation1 [shape = 'u32[144,128]{1,0:T(1,128)}', space=vmem, size = 0x12000, scoped, tag = 'internal scratch']
  %s0 = inlined_call_operand.vmem [shape: bf16[32,180], index: 0, kind: input, shape index: {}]
  %s1 = inlined_call_operand.vmem [shape: bf16[180,128], index: 1, kind: input, shape index: {}]
  %s2 = inlined_call_operand.vmem [shape: f32[1,128], index: 2, kind: input, shape index: {}]
  %s3 = inlined_call_operand.vmem [shape: f32[32,128], index: 3, kind: output, shape index: {}]
  %s4 = sld [smem:[#allocation0]]
  $region22: #{net_forward.17} parent=0
    _
  %s6 = ssub.s32 1, %s4
  %s7 = scalar_select 0, %s6, %s4
  // Predicated region
  $region2: #{net_forward.17} parent=0 // pred_check
    _
  $region3: #{net_forward.17} parent=0 // pred_check_branch
    %9 = sbr.rel (0) target = $region5
  $region4: #{net_forward.17} parent=0 // pred_region
    _
  $region5: #{net_forward.17} parent=0 // pred_fallthru
    _
  // Predicated region
  $region6: #{net_forward.17} parent=0 // pred_check
    _
  $region7: #{net_forward.17} parent=0 // pred_check_branch
    %11 = sbr.rel (0) target = $region9
  $region8: #{net_forward.17} parent=0 // pred_region
    _
  $region9: #{net_forward.17} parent=0 // pred_fallthru
    _
  // Predicated region
  $region10: #{net_forward.17} parent=0 // pred_check
    _
  $region11: #{net_forward.17} parent=0 // pred_check_branch
    %13 = sbr.rel (0) target = $region13
  $region12: #{net_forward.17} parent=0 // pred_region
    _
  $region13: #{net_forward.17} parent=0 // pred_fallthru
    _
  %v15 = vld [vmem:[%s0] sm:$0xff]
  %v16 = vld [vmem:[%s0 + $0x8] sm:$0xff]
  %v17 = vld [vmem:[%s0 + $0x10] sm:$0xff]
  %v18 = vld [vmem:[%s0 + $0x18] sm:$0xff]
  %v19 = vld [vmem:[%s1] sm:$0xf]
  %v20 = vld [vmem:[%s1 + $0x4] sm:$0xf]
  %v21 = vld [vmem:[%s1 + $0x8] sm:$0xf]
  %v22 = vld [vmem:[%s1 + $0xc] sm:$0xf]
  %v23 = vld [vmem:[%s1 + $0x10] sm:$0xf]
  %v24 = vld [vmem:[%s1 + $0x14] sm:$0xf]
  %v25 = vld [vmem:[%s1 + $0x18] sm:$0xf]
  %v26 = vld [vmem:[%s1 + $0x1c] sm:$0xf]
  %v27 = vld [vmem:[%s1 + $0x20] sm:$0xf]
  %v28 = vld [vmem:[%s1 + $0x24] sm:$0xf]
  %v29 = vld [vmem:[%s1 + $0x28] sm:$0xf]
  %v30 = vld [vmem:[%s1 + $0x2c] sm:$0xf]
  %v31 = vld [vmem:[%s1 + $0x30] sm:$0xf]
  %v32 = vld [vmem:[%s1 + $0x34] sm:$0xf]
  %v33 = vld [vmem:[%s1 + $0x38] sm:$0xf]
  %v34 = vld [vmem:[%s1 + $0x3c] sm:$0xf]
  %v35 = vld [vmem:[%s1 + $0x40] sm:$0xf]
  %v36 = vld [vmem:[%s1 + $0x44] sm:$0xf]
  %v37 = vld [vmem:[%s1 + $0x48] sm:$0xf]
  %v38 = vld [vmem:[%s1 + $0x4c] sm:$0xf]
  %v39 = vld [vmem:[%s1 + $0x50] sm:$0xf]
  %v40 = vld [vmem:[%s1 + $0x54] sm:$0xf]
  %v41 = vld [vmem:[%s1 + $0x58] sm:$0x3]
  %v42 = vld [vmem:[%s2] sm:$0x1]
  %v44 = vlaneseq
  %v45 = vshrl.u32 %v44, 7
  %v46 = vsub.s32 0, %v45
  %v47 = vrot.slane %v42, %v46
  %v53 = vunpack.c.l.b16 %v15
  %v54 = vunpack.c.h.b16 %v15
  %v55 = vunpack.c.l.b16 %v16
  %v56 = vunpack.c.h.b16 %v16
  %v57 = vunpack.c.l.b16 %v17
  %v58 = vunpack.c.h.b16 %v17
  %v59 = vunpack.c.l.b16 %v18
  %v60 = vunpack.c.h.b16 %v18
  %v61 = vpack.c.b16 %v55, %v53
  %v62 = vpack.c.b16 %v56, %v54
  %v63 = vpack.c.b16 %v59, %v57
  %v64 = vpack.c.b16 %v60, %v58
  %v90 = vunpack.c.l.b16 %v19
  %v91 = vunpack.c.l.b16 %v20
  %v92 = vunpack.c.l.b16 %v21
  %v93 = vunpack.c.l.b16 %v22
  %v94 = vunpack.c.l.b16 %v23
  %v95 = vunpack.c.l.b16 %v24
  %v96 = vunpack.c.l.b16 %v25
  %v97 = vunpack.c.l.b16 %v26
  %v98 = vunpack.c.l.b16 %v27
  %v99 = vunpack.c.l.b16 %v28
  %v100 = vunpack.c.l.b16 %v29
  %v101 = vunpack.c.l.b16 %v30
  %v102 = vunpack.c.l.b16 %v31
  %v103 = vunpack.c.l.b16 %v32
  %v104 = vunpack.c.l.b16 %v33
  %v105 = vunpack.c.l.b16 %v34
  %v106 = vunpack.c.l.b16 %v35
  %v107 = vunpack.c.l.b16 %v36
  %v108 = vunpack.c.l.b16 %v37
  %v109 = vunpack.c.l.b16 %v38
  %v110 = vunpack.c.l.b16 %v39
  %v111 = vunpack.c.l.b16 %v40
  %v112 = vunpack.c.l.b16 %v41
  %v113 = vpack.c.b16 %v91, %v90
  %v114 = vpack.c.b16 %v93, %v92
  %v115 = vpack.c.b16 %v95, %v94
  %v116 = vpack.c.b16 %v97, %v96
  %v117 = vpack.c.b16 %v99, %v98
  %v118 = vpack.c.b16 %v101, %v100
  %v119 = vpack.c.b16 %v103, %v102
  %v120 = vpack.c.b16 %v105, %v104
  %v121 = vpack.c.b16 %v107, %v106
  %v122 = vpack.c.b16 %v109, %v108
  %v123 = vpack.c.b16 %v111, %v110
  %v124 = vpack.c.b16 %v112, %v112
  %vm136 = vcmask 424960
  %v138 = vsel %vm136, %v62, 0
  %v141 = vsel %vm136, %v64, 0
  %vm143 = vcmask 1041408
  %v145 = vsel %vm143, %v124, 0
  %147 = vmatprep.subr.bf16.mxu0 0
  %148 = vmatpush1.bf16.msra.mxu0 %v113
  %149 = vmatprep.subr.bf16.mxu0 0
  %150 = vmatpush1.bf16.msra.mxu0 %v114
  %151 = vmatprep.subr.bf16.mxu0 0
  %152 = vmatpush1.bf16.msra.mxu0 %v115
  %153 = vmatprep.subr.bf16.mxu0 0
  %154 = vmatpush1.bf16.msra.mxu0 %v116
  %155 = vmatprep.subr.bf16.mxu0 0
  %156 = vmatpush1.bf16.msra.mxu0 %v117
  %157 = vmatprep.subr.bf16.mxu0 0
  %158 = vmatpush1.bf16.msra.mxu0 %v118
  %159 = vmatprep.subr.bf16.mxu0 0
  %160 = vmatpush1.bf16.msra.mxu0 %v119
  %161 = vmatprep.subr.bf16.mxu0 0
  %162 = vmatpush1.bf16.msra.mxu0 %v120
  %163 = vmatprep.subr.bf16.mxu0 0
  %164 = vmatpush1.bf16.msra.mxu0 %v121
  %165 = vmatprep.subr.bf16.mxu0 0
  %166 = vmatpush1.bf16.msra.mxu0 %v122
  %167 = vmatprep.subr.bf16.mxu0 0
  %168 = vmatpush1.bf16.msra.mxu0 %v123
  %169 = vmatprep.subr.bf16.mxu0 0
  %170 = vmatpush1.bf16.msra.mxu0 %v145
  %171 = vmatprep.subr.bf16.mxu0 0
  %172 = vmatpush1.bf16.msra.mxu0 0
  %173 = vmatprep.subr.bf16.mxu0 0
  %174 = vmatpush1.bf16.msra.mxu0 0
  %175 = vmatprep.subr.bf16.mxu0 0
  %176 = vmatpush1.bf16.msra.mxu0 0
  %177 = vmatprep.subr.bf16.mxu0 0
  %178 = vmatpush1.bf16.msra.mxu0 0
  %179 = vmatprep.mubr.bf16.mxu0 %v138
  %180 = vmatmul.mubr.bf16.gmra.mrb[0].mxu0 %v61
  %v181 = vpop.f32.mrb[0].mxu0
  %v182 = vadd.f32 %v47, %v181
  %v183 = vpop.f32.mrb[0].mxu0
  %v184 = vpop.f32.mrb[0].mxu0
  %v185 = vadd.f32 %v47, %v184
  %v186 = vpop.f32.mrb[0].mxu0
  %187 = vmatprep.mubr.bf16.mxu0 %v141
  %188 = vmatmul.mubr.bf16.gmra.mrb[0].mxu0 %v63
  %v189 = vpop.f32.mrb[0].mxu0
  %v190 = vadd.f32 %v47, %v189
  %v191 = vpop.f32.mrb[0].mxu0
  %v192 = vpop.f32.mrb[0].mxu0
  %v193 = vadd.f32 %v47, %v192
  %v194 = vpop.f32.mrb[0].mxu0
  %195 = vdwg.mxu0
  %196 = vst [vmem:[%s3] sm:$0xff] %v182
  %197 = vst [vmem:[%s3 + $0x8] sm:$0xff] %v185
  %198 = vst [vmem:[%s3 + $0x10] sm:$0xff] %v190
  %199 = vst [vmem:[%s3 + $0x18] sm:$0xff] %v193
  // Predicated region
  $region14: #{net_forward.17} parent=0 // pred_check
    _
  $region15: #{net_forward.17} parent=0 // pred_check_branch
    %201 = sbr.rel (0) target = $region17
  $region16: #{net_forward.17} parent=0 // pred_region
    _
  $region17: #{net_forward.17} parent=0 // pred_fallthru
    _
  // Predicated region
  $region18: #{net_forward.17} parent=0 // pred_check
    _
  $region19: #{net_forward.17} parent=0 // pred_check_branch
    %203 = sbr.rel (0) target = $region21
  $region20: #{net_forward.17} parent=0 // pred_region
    _
  $region21: #{net_forward.17} parent=0 // pred_fallthru
    _

// kernel: net_forward.19
$region0: #{net_forward.19}
  #allocation0 [shape = 'u32[]', space=smem, size = 0x4, offset = 0x4, fixed_abs, tag = 'smem constant byte address 0x4 - core index']
  #allocation1 [shape = 'u32[144,128]{1,0:T(1,128)}', space=vmem, size = 0x12000, scoped, tag = 'internal scratch']
  %s0 = inlined_call_operand.vmem [shape: bf16[32,144], index: 0, kind: input, shape index: {}]
  %s1 = inlined_call_operand.vmem [shape: bf16[144,128], index: 1, kind: input, shape index: {}]
  %s2 = inlined_call_operand.vmem [shape: f32[1,128], index: 2, kind: input, shape index: {}]
  %s3 = inlined_call_operand.vmem [shape: f32[32,128], index: 3, kind: output, shape index: {}]
  %s4 = sld [smem:[#allocation0]]
  $region22: #{net_forward.19} parent=0
    _
  %s6 = ssub.s32 1, %s4
  %s7 = scalar_select 0, %s6, %s4
  // Predicated region
  $region2: #{net_forward.19} parent=0 // pred_check
    _
  $region3: #{net_forward.19} parent=0 // pred_check_branch
    %9 = sbr.rel (0) target = $region5
  $region4: #{net_forward.19} parent=0 // pred_region
    _
  $region5: #{net_forward.19} parent=0 // pred_fallthru
    _
  // Predicated region
  $region6: #{net_forward.19} parent=0 // pred_check
    _
  $region7: #{net_forward.19} parent=0 // pred_check_branch
    %11 = sbr.rel (0) target = $region9
  $region8: #{net_forward.19} parent=0 // pred_region
    _
  $region9: #{net_forward.19} parent=0 // pred_fallthru
    _
  // Predicated region
  $region10: #{net_forward.19} parent=0 // pred_check
    _
  $region11: #{net_forward.19} parent=0 // pred_check_branch
    %13 = sbr.rel (0) target = $region13
  $region12: #{net_forward.19} parent=0 // pred_region
    _
  $region13: #{net_forward.19} parent=0 // pred_fallthru
    _
  %v15 = vld [vmem:[%s0] sm:$0xff]
  %v16 = vld [vmem:[%s0 + $0x8] sm:$0xff]
  %v17 = vld [vmem:[%s0 + $0x10] sm:$0xff]
  %v18 = vld [vmem:[%s0 + $0x18] sm:$0xff]
  %v19 = vld [vmem:[%s1] sm:$0xf]
  %v20 = vld [vmem:[%s1 + $0x4] sm:$0xf]
  %v21 = vld [vmem:[%s1 + $0x8] sm:$0xf]
  %v22 = vld [vmem:[%s1 + $0xc] sm:$0xf]
  %v23 = vld [vmem:[%s1 + $0x10] sm:$0xf]
  %v24 = vld [vmem:[%s1 + $0x14] sm:$0xf]
  %v25 = vld [vmem:[%s1 + $0x18] sm:$0xf]
  %v26 = vld [vmem:[%s1 + $0x1c] sm:$0xf]
  %v27 = vld [vmem:[%s1 + $0x20] sm:$0xf]
  %v28 = vld [vmem:[%s1 + $0x24] sm:$0xf]
  %v29 = vld [vmem:[%s1 + $0x28] sm:$0xf]
  %v30 = vld [vmem:[%s1 + $0x2c] sm:$0xf]
  %v31 = vld [vmem:[%s1 + $0x30] sm:$0xf]
  %v32 = vld [vmem:[%s1 + $0x34] sm:$0xf]
  %v33 = vld [vmem:[%s1 + $0x38] sm:$0xf]
  %v34 = vld [vmem:[%s1 + $0x3c] sm:$0xf]
  %v35 = vld [vmem:[%s1 + $0x40] sm:$0xf]
  %v36 = vld [vmem:[%s1 + $0x44] sm:$0xf]
  %v37 = vld [vmem:[%s2] sm:$0x1]
  %v39 = vlaneseq
  %v40 = vshrl.u32 %v39, 7
  %v41 = vsub.s32 0, %v40
  %v42 = vrot.slane %v37, %v41
  %v48 = vunpack.c.l.b16 %v15
  %v49 = vunpack.c.h.b16 %v15
  %v50 = vunpack.c.l.b16 %v16
  %v51 = vunpack.c.h.b16 %v16
  %v52 = vunpack.c.l.b16 %v17
  %v53 = vunpack.c.h.b16 %v17
  %v54 = vunpack.c.l.b16 %v18
  %v55 = vunpack.c.h.b16 %v18
  %v56 = vpack.c.b16 %v50, %v48
  %v57 = vpack.c.b16 %v51, %v49
  %v58 = vpack.c.b16 %v54, %v52
  %v59 = vpack.c.b16 %v55, %v53
  %v80 = vunpack.c.l.b16 %v19
  %v81 = vunpack.c.l.b16 %v20
  %v82 = vunpack.c.l.b16 %v21
  %v83 = vunpack.c.l.b16 %v22
  %v84 = vunpack.c.l.b16 %v23
  %v85 = vunpack.c.l.b16 %v24
  %v86 = vunpack.c.l.b16 %v25
  %v87 = vunpack.c.l.b16 %v26
  %v88 = vunpack.c.l.b16 %v27
  %v89 = vunpack.c.l.b16 %v28
  %v90 = vunpack.c.l.b16 %v29
  %v91 = vunpack.c.l.b16 %v30
  %v92 = vunpack.c.l.b16 %v31
  %v93 = vunpack.c.l.b16 %v32
  %v94 = vunpack.c.l.b16 %v33
  %v95 = vunpack.c.l.b16 %v34
  %v96 = vunpack.c.l.b16 %v35
  %v97 = vunpack.c.l.b16 %v36
  %v98 = vpack.c.b16 %v81, %v80
  %v99 = vpack.c.b16 %v83, %v82
  %v100 = vpack.c.b16 %v85, %v84
  %v101 = vpack.c.b16 %v87, %v86
  %v102 = vpack.c.b16 %v89, %v88
  %v103 = vpack.c.b16 %v91, %v90
  %v104 = vpack.c.b16 %v93, %v92
  %v105 = vpack.c.b16 %v95, %v94
  %v106 = vpack.c.b16 %v97, %v96
  %vm116 = vcmask 130048
  %v118 = vsel %vm116, %v57, 0
  %v121 = vsel %vm116, %v59, 0
  %123 = vmatprep.subr.bf16.mxu0 0
  %124 = vmatpush1.bf16.msra.mxu0 %v98
  %125 = vmatprep.subr.bf16.mxu0 0
  %126 = vmatpush1.bf16.msra.mxu0 %v99
  %127 = vmatprep.subr.bf16.mxu0 0
  %128 = vmatpush1.bf16.msra.mxu0 %v100
  %129 = vmatprep.subr.bf16.mxu0 0
  %130 = vmatpush1.bf16.msra.mxu0 %v101
  %131 = vmatprep.subr.bf16.mxu0 0
  %132 = vmatpush1.bf16.msra.mxu0 %v102
  %133 = vmatprep.subr.bf16.mxu0 0
  %134 = vmatpush1.bf16.msra.mxu0 %v103
  %135 = vmatprep.subr.bf16.mxu0 0
  %136 = vmatpush1.bf16.msra.mxu0 %v104
  %137 = vmatprep.subr.bf16.mxu0 0
  %138 = vmatpush1.bf16.msra.mxu0 %v105
  %139 = vmatprep.subr.bf16.mxu0 0
  %140 = vmatpush1.bf16.msra.mxu0 %v106
  %141 = vmatprep.subr.bf16.mxu0 0
  %142 = vmatpush1.bf16.msra.mxu0 0
  %143 = vmatprep.subr.bf16.mxu0 0
  %144 = vmatpush1.bf16.msra.mxu0 0
  %145 = vmatprep.subr.bf16.mxu0 0
  %146 = vmatpush1.bf16.msra.mxu0 0
  %147 = vmatprep.subr.bf16.mxu0 0
  %148 = vmatpush1.bf16.msra.mxu0 0
  %149 = vmatprep.subr.bf16.mxu0 0
  %150 = vmatpush1.bf16.msra.mxu0 0
  %151 = vmatprep.subr.bf16.mxu0 0
  %152 = vmatpush1.bf16.msra.mxu0 0
  %153 = vmatprep.subr.bf16.mxu0 0
  %154 = vmatpush1.bf16.msra.mxu0 0
  %155 = vmatprep.mubr.bf16.mxu0 %v118
  %156 = vmatmul.mubr.bf16.gmra.mrb[0].mxu0 %v56
  %v157 = vpop.f32.mrb[0].mxu0
  %v158 = vadd.f32 %v42, %v157
  %v159 = vpop.f32.mrb[0].mxu0
  %v160 = vpop.f32.mrb[0].mxu0
  %v161 = vadd.f32 %v42, %v160
  %v162 = vpop.f32.mrb[0].mxu0
  %163 = vmatprep.mubr.bf16.mxu0 %v121
  %164 = vmatmul.mubr.bf16.gmra.mrb[0].mxu0 %v58
  %v165 = vpop.f32.mrb[0].mxu0
  %v166 = vadd.f32 %v42, %v165
  %v167 = vpop.f32.mrb[0].mxu0
  %v168 = vpop.f32.mrb[0].mxu0
  %v169 = vadd.f32 %v42, %v168
  %v170 = vpop.f32.mrb[0].mxu0
  %171 = vdwg.mxu0
  %172 = vst [vmem:[%s3] sm:$0xff] %v158
  %173 = vst [vmem:[%s3 + $0x8] sm:$0xff] %v161
  %174 = vst [vmem:[%s3 + $0x10] sm:$0xff] %v166
  %175 = vst [vmem:[%s3 + $0x18] sm:$0xff] %v169
  // Predicated region
  $region14: #{net_forward.19} parent=0 // pred_check
    _
  $region15: #{net_forward.19} parent=0 // pred_check_branch
    %177 = sbr.rel (0) target = $region17
  $region16: #{net_forward.19} parent=0 // pred_region
    _
  $region17: #{net_forward.19} parent=0 // pred_fallthru
    _
  // Predicated region
  $region18: #{net_forward.19} parent=0 // pred_check
    _
  $region19: #{net_forward.19} parent=0 // pred_check_branch
    %179 = sbr.rel (0) target = $region21
  $region20: #{net_forward.19} parent=0 // pred_region
    _
  $region21: #{net_forward.19} parent=0 // pred_fallthru
    _

// kernel: net_forward.20
$region0: #{net_forward.20}
  #allocation0 [shape = 'u32[]', space=smem, size = 0x4, offset = 0x4, fixed_abs, tag = 'smem constant byte address 0x4 - core index']
  #allocation1 [shape = 'u32[144,128]{1,0:T(1,128)}', space=vmem, size = 0x12000, scoped, tag = 'internal scratch']
  %s0 = inlined_call_operand.vmem [shape: bf16[32,216], index: 0, kind: input, shape index: {}]
  %s1 = inlined_call_operand.vmem [shape: bf16[216,128], index: 1, kind: input, shape index: {}]
  %s2 = inlined_call_operand.vmem [shape: f32[1,128], index: 2, kind: input, shape index: {}]
  %s3 = inlined_call_operand.vmem [shape: f32[32,128], index: 3, kind: output, shape index: {}]
  %s4 = sld [smem:[#allocation0]]
  $region22: #{net_forward.20} parent=0
    _
  %s6 = ssub.s32 1, %s4
  %s7 = scalar_select 0, %s6, %s4
  // Predicated region
  $region2: #{net_forward.20} parent=0 // pred_check
    _
  $region3: #{net_forward.20} parent=0 // pred_check_branch
    %9 = sbr.rel (0) target = $region5
  $region4: #{net_forward.20} parent=0 // pred_region
    _
  $region5: #{net_forward.20} parent=0 // pred_fallthru
    _
  // Predicated region
  $region6: #{net_forward.20} parent=0 // pred_check
    _
  $region7: #{net_forward.20} parent=0 // pred_check_branch
    %11 = sbr.rel (0) target = $region9
  $region8: #{net_forward.20} parent=0 // pred_region
    _
  $region9: #{net_forward.20} parent=0 // pred_fallthru
    _
  // Predicated region
  $region10: #{net_forward.20} parent=0 // pred_check
    _
  $region11: #{net_forward.20} parent=0 // pred_check_branch
    %13 = sbr.rel (0) target = $region13
  $region12: #{net_forward.20} parent=0 // pred_region
    _
  $region13: #{net_forward.20} parent=0 // pred_fallthru
    _
  %v15 = vld [vmem:[%s0] sm:$0xff]
  %v16 = vld [vmem:[%s0 + $0x8] sm:$0xff]
  %v17 = vld [vmem:[%s0 + $0x10] sm:$0xff]
  %v18 = vld [vmem:[%s0 + $0x18] sm:$0xff]
  %v19 = vld [vmem:[%s1] sm:$0xf]
  %v20 = vld [vmem:[%s1 + $0x4] sm:$0xf]
  %v21 = vld [vmem:[%s1 + $0x8] sm:$0xf]
  %v22 = vld [vmem:[%s1 + $0xc] sm:$0xf]
  %v23 = vld [vmem:[%s1 + $0x10] sm:$0xf]
  %v24 = vld [vmem:[%s1 + $0x14] sm:$0xf]
  %v25 = vld [vmem:[%s1 + $0x18] sm:$0xf]
  %v26 = vld [vmem:[%s1 + $0x1c] sm:$0xf]
  %v27 = vld [vmem:[%s1 + $0x20] sm:$0xf]
  %v28 = vld [vmem:[%s1 + $0x24] sm:$0xf]
  %v29 = vld [vmem:[%s1 + $0x28] sm:$0xf]
  %v30 = vld [vmem:[%s1 + $0x2c] sm:$0xf]
  %v31 = vld [vmem:[%s1 + $0x30] sm:$0xf]
  %v32 = vld [vmem:[%s1 + $0x34] sm:$0xf]
  %v33 = vld [vmem:[%s1 + $0x38] sm:$0xf]
  %v34 = vld [vmem:[%s1 + $0x3c] sm:$0xf]
  %v35 = vld [vmem:[%s1 + $0x40] sm:$0xf]
  %v36 = vld [vmem:[%s1 + $0x44] sm:$0xf]
  %v37 = vld [vmem:[%s1 + $0x48] sm:$0xf]
  %v38 = vld [vmem:[%s1 + $0x4c] sm:$0xf]
  %v39 = vld [vmem:[%s1 + $0x50] sm:$0xf]
  %v40 = vld [vmem:[%s1 + $0x54] sm:$0xf]
  %v41 = vld [vmem:[%s1 + $0x58] sm:$0xf]
  %v42 = vld [vmem:[%s1 + $0x5c] sm:$0xf]
  %v43 = vld [vmem:[%s1 + $0x60] sm:$0xf]
  %v44 = vld [vmem:[%s1 + $0x64] sm:$0xf]
  %v45 = vld [vmem:[%s1 + $0x68] sm:$0xf]
  %v46 = vld [vmem:[%s2] sm:$0x1]
  %v48 = vlaneseq
  %v49 = vshrl.u32 %v48, 7
  %v50 = vsub.s32 0, %v49
  %v51 = vrot.slane %v46, %v50
  %v57 = vunpack.c.l.b16 %v15
  %v58 = vunpack.c.h.b16 %v15
  %v59 = vunpack.c.l.b16 %v16
  %v60 = vunpack.c.h.b16 %v16
  %v61 = vunpack.c.l.b16 %v17
  %v62 = vunpack.c.h.b16 %v17
  %v63 = vunpack.c.l.b16 %v18
  %v64 = vunpack.c.h.b16 %v18
  %v65 = vpack.c.b16 %v59, %v57
  %v66 = vpack.c.b16 %v60, %v58
  %v67 = vpack.c.b16 %v63, %v61
  %v68 = vpack.c.b16 %v64, %v62
  %v98 = vunpack.c.l.b16 %v19
  %v99 = vunpack.c.l.b16 %v20
  %v100 = vunpack.c.l.b16 %v21
  %v101 = vunpack.c.l.b16 %v22
  %v102 = vunpack.c.l.b16 %v23
  %v103 = vunpack.c.l.b16 %v24
  %v104 = vunpack.c.l.b16 %v25
  %v105 = vunpack.c.l.b16 %v26
  %v106 = vunpack.c.l.b16 %v27
  %v107 = vunpack.c.l.b16 %v28
  %v108 = vunpack.c.l.b16 %v29
  %v109 = vunpack.c.l.b16 %v30
  %v110 = vunpack.c.l.b16 %v31
  %v111 = vunpack.c.l.b16 %v32
  %v112 = vunpack.c.l.b16 %v33
  %v113 = vunpack.c.l.b16 %v34
  %v114 = vunpack.c.l.b16 %v35
  %v115 = vunpack.c.l.b16 %v36
  %v116 = vunpack.c.l.b16 %v37
  %v117 = vunpack.c.l.b16 %v38
  %v118 = vunpack.c.l.b16 %v39
  %v119 = vunpack.c.l.b16 %v40
  %v120 = vunpack.c.l.b16 %v41
  %v121 = vunpack.c.l.b16 %v42
  %v122 = vunpack.c.l.b16 %v43
  %v123 = vunpack.c.l.b16 %v44
  %v124 = vunpack.c.l.b16 %v45
  %v125 = vpack.c.b16 %v99, %v98
  %v126 = vpack.c.b16 %v101, %v100
  %v127 = vpack.c.b16 %v103, %v102
  %v128 = vpack.c.b16 %v105, %v104
  %v129 = vpack.c.b16 %v107, %v106
  %v130 = vpack.c.b16 %v109, %v108
  %v131 = vpack.c.b16 %v111, %v110
  %v132 = vpack.c.b16 %v113, %v112
  %v133 = vpack.c.b16 %v115, %v114
  %v134 = vpack.c.b16 %v117, %v116
  %v135 = vpack.c.b16 %v119, %v118
  %v136 = vpack.c.b16 %v121, %v120
  %v137 = vpack.c.b16 %v123, %v122
  %v138 = vpack.c.b16 %v124, %v124
  %vm152 = vcmask 719872
  %v154 = vsel %vm152, %v66, 0
  %v157 = vsel %vm152, %v68, 0
  %vm159 = vcmask 1043456
  %v161 = vsel %vm159, %v138, 0
  %163 = vmatprep.subr.bf16.mxu0 0
  %164 = vmatpush1.bf16.msra.mxu0 %v125
  %165 = vmatprep.subr.bf16.mxu0 0
  %166 = vmatpush1.bf16.msra.mxu0 %v126
  %167 = vmatprep.subr.bf16.mxu0 0
  %168 = vmatpush1.bf16.msra.mxu0 %v127
  %169 = vmatprep.subr.bf16.mxu0 0
  %170 = vmatpush1.bf16.msra.mxu0 %v128
  %171 = vmatprep.subr.bf16.mxu0 0
  %172 = vmatpush1.bf16.msra.mxu0 %v129
  %173 = vmatprep.subr.bf16.mxu0 0
  %174 = vmatpush1.bf16.msra.mxu0 %v130
  %175 = vmatprep.subr.bf16.mxu0 0
  %176 = vmatpush1.bf16.msra.mxu0 %v131
  %177 = vmatprep.subr.bf16.mxu0 0
  %178 = vmatpush1.bf16.msra.mxu0 %v132
  %179 = vmatprep.subr.bf16.mxu0 0
  %180 = vmatpush1.bf16.msra.mxu0 %v133
  %181 = vmatprep.subr.bf16.mxu0 0
  %182 = vmatpush1.bf16.msra.mxu0 %v134
  %183 = vmatprep.subr.bf16.mxu0 0
  %184 = vmatpush1.bf16.msra.mxu0 %v135
  %185 = vmatprep.subr.bf16.mxu0 0
  %186 = vmatpush1.bf16.msra.mxu0 %v136
  %187 = vmatprep.subr.bf16.mxu0 0
  %188 = vmatpush1.bf16.msra.mxu0 %v137
  %189 = vmatprep.subr.bf16.mxu0 0
  %190 = vmatpush1.bf16.msra.mxu0 %v161
  %191 = vmatprep.subr.bf16.mxu0 0
  %192 = vmatpush1.bf16.msra.mxu0 0
  %193 = vmatprep.subr.bf16.mxu0 0
  %194 = vmatpush1.bf16.msra.mxu0 0
  %195 = vmatprep.mubr.bf16.mxu0 %v154
  %196 = vmatmul.mubr.bf16.gmra.mrb[0].mxu0 %v65
  %v197 = vpop.f32.mrb[0].mxu0
  %v198 = vadd.f32 %v51, %v197
  %v199 = vpop.f32.mrb[0].mxu0
  %v200 = vpop.f32.mrb[0].mxu0
  %v201 = vadd.f32 %v51, %v200
  %v202 = vpop.f32.mrb[0].mxu0
  %203 = vmatprep.mubr.bf16.mxu0 %v157
  %204 = vmatmul.mubr.bf16.gmra.mrb[0].mxu0 %v67
  %v205 = vpop.f32.mrb[0].mxu0
  %v206 = vadd.f32 %v51, %v205
  %v207 = vpop.f32.mrb[0].mxu0
  %v208 = vpop.f32.mrb[0].mxu0
  %v209 = vadd.f32 %v51, %v208
  %v210 = vpop.f32.mrb[0].mxu0
  %211 = vdwg.mxu0
  %212 = vst [vmem:[%s3] sm:$0xff] %v198
  %213 = vst [vmem:[%s3 + $0x8] sm:$0xff] %v201
  %214 = vst [vmem:[%s3 + $0x10] sm:$0xff] %v206
  %215 = vst [vmem:[%s3 + $0x18] sm:$0xff] %v209
  // Predicated region
  $region14: #{net_forward.20} parent=0 // pred_check
    _
  $region15: #{net_forward.20} parent=0 // pred_check_branch
    %217 = sbr.rel (0) target = $region17
  $region16: #{net_forward.20} parent=0 // pred_region
    _
  $region17: #{net_forward.20} parent=0 // pred_fallthru
    _
  // Predicated region
  $region18: #{net_forward.20} parent=0 // pred_check
    _
  $region19: #{net_forward.20} parent=0 // pred_check_branch
    %219 = sbr.rel (0) target = $region21
  $region20: #{net_forward.20} parent=0 // pred_region
    _
  $region21: #{net_forward.20} parent=0 // pred_fallthru
    _

// kernel: net_forward.16
$region0: #{net_forward.16}
  #allocation0 [shape = 'u32[]', space=smem, size = 0x4, offset = 0x4, fixed_abs, tag = 'smem constant byte address 0x4 - core index']
  #allocation1 [shape = 'u32[144,128]{1,0:T(1,128)}', space=vmem, size = 0x12000, scoped, tag = 'internal scratch']
  %s0 = inlined_call_operand.vmem [shape: bf16[32,2200], index: 0, kind: input, shape index: {}]
  %s1 = inlined_call_operand.vmem [shape: bf16[32,2200], index: 1, kind: input, shape index: {}]
  %s2 = inlined_call_operand.vmem [shape: bf16[32,2200], index: 2, kind: input, shape index: {}]
  %s3 = inlined_call_operand.vmem [shape: bf16[32,2200], index: 3, kind: input, shape index: {}]
  %s4 = inlined_call_operand.vmem [shape: bf16[2200,128], index: 4, kind: input, shape index: {}]
  %s5 = inlined_call_operand.vmem [shape: f32[1,128], index: 5, kind: input, shape index: {}]
  %s6 = inlined_call_operand.vmem [shape: f32[32,128], index: 6, kind: output, shape index: {}]
  %s7 = sld [smem:[#allocation0]]
  $region34: #{net_forward.16} parent=0
    _
  %s9 = ssub.s32 1, %s7
  %s10 = scalar_select 0, %s9, %s7
  // Predicated region
  $region2: #{net_forward.16} parent=0 // pred_check
    _
  $region3: #{net_forward.16} parent=0 // pred_check_branch
    %12 = sbr.rel (0) target = $region5
  $region4: #{net_forward.16} parent=0 // pred_region
    _
  $region5: #{net_forward.16} parent=0 // pred_fallthru
    _
  // Predicated region
  $region6: #{net_forward.16} parent=0 // pred_check
    _
  $region7: #{net_forward.16} parent=0 // pred_check_branch
    %14 = sbr.rel (0) target = $region9
  $region8: #{net_forward.16} parent=0 // pred_region
    _
  $region9: #{net_forward.16} parent=0 // pred_fallthru
    _
  // Predicated region
  $region10: #{net_forward.16} parent=0 // pred_check
    _
  $region11: #{net_forward.16} parent=0 // pred_check_branch
    %16 = sbr.rel (0) target = $region13
  $region12: #{net_forward.16} parent=0 // pred_region
    _
  $region13: #{net_forward.16} parent=0 // pred_fallthru
    _
  // Predicated region
  $region14: #{net_forward.16} parent=0 // pred_check
    _
  $region15: #{net_forward.16} parent=0 // pred_check_branch
    %18 = sbr.rel (0) target = $region17
  $region16: #{net_forward.16} parent=0 // pred_region
    _
  $region17: #{net_forward.16} parent=0 // pred_fallthru
    _
  // Predicated region
  $region18: #{net_forward.16} parent=0 // pred_check
    _
  $region19: #{net_forward.16} parent=0 // pred_check_branch
    %20 = sbr.rel (0) target = $region21
  $region20: #{net_forward.16} parent=0 // pred_region
    _
  $region21: #{net_forward.16} parent=0 // pred_fallthru
    _
  // Predicated region
  $region22: #{net_forward.16} parent=0 // pred_check
    _
  $region23: #{net_forward.16} parent=0 // pred_check_branch
    %22 = sbr.rel (0) target = $region25
  $region24: #{net_forward.16} parent=0 // pred_region
    _
  $region25: #{net_forward.16} parent=0 // pred_fallthru
    _
  %v24 = vld [vmem:[%s4] sm:$0xf]
  %v25 = vld [vmem:[%s4 + $0x4] sm:$0xf]
  %v26 = vld [vmem:[%s4 + $0x8] sm:$0xf]
  %v27 = vld [vmem:[%s4 + $0xc] sm:$0xf]
  %v28 = vld [vmem:[%s4 + $0x10] sm:$0xf]
  %v29 = vld [vmem:[%s4 + $0x14] sm:$0xf]
  %v30 = vld [vmem:[%s4 + $0x18] sm:$0xf]
  %v31 = vld [vmem:[%s4 + $0x1c] sm:$0xf]
  %v32 = vld [vmem:[%s4 + $0x20] sm:$0xf]
  %v33 = vld [vmem:[%s4 + $0x24] sm:$0xf]
  %v34 = vld [vmem:[%s4 + $0x28] sm:$0xf]
  %v35 = vld [vmem:[%s4 + $0x2c] sm:$0xf]
  %v36 = vld [vmem:[%s4 + $0x30] sm:$0xf]
  %v37 = vld [vmem:[%s4 + $0x34] sm:$0xf]
  %v38 = vld [vmem:[%s4 + $0x38] sm:$0xf]
  %v39 = vld [vmem:[%s4 + $0x3c] sm:$0xf]
  %v40 = vld [vmem:[%s4 + $0x40] sm:$0xf]
  %v41 = vld [vmem:[%s4 + $0x44] sm:$0xf]
  %v42 = vld [vmem:[%s4 + $0x48] sm:$0xf]
  %v43 = vld [vmem:[%s4 + $0x4c] sm:$0xf]
  %v44 = vld [vmem:[%s4 + $0x50] sm:$0xf]
  %v45 = vld [vmem:[%s4 + $0x54] sm:$0xf]
  %v46 = vld [vmem:[%s4 + $0x58] sm:$0xf]
  %v47 = vld [vmem:[%s4 + $0x5c] sm:$0xf]
  %v48 = vld [vmem:[%s4 + $0x60] sm:$0xf]
  %v49 = vld [vmem:[%s4 + $0x64] sm:$0xf]
  %v50 = vld [vmem:[%s4 + $0x68] sm:$0xf]
  %v51 = vld [vmem:[%s4 + $0x6c] sm:$0xf]
  %v52 = vld [vmem:[%s4 + $0x70] sm:$0xf]
  %v53 = vld [vmem:[%s4 + $0x74] sm:$0xf]
  %v54 = vld [vmem:[%s4 + $0x78] sm:$0xf]
  %v55 = vld [vmem:[%s4 + $0x7c] sm:$0xf]
  %v56 = vld [vmem:[%s4 + $0x80] sm:$0xf]
  %v57 = vld [vmem:[%s4 + $0x84] sm:$0xf]
  %v58 = vld [vmem:[%s4 + $0x88] sm:$0xf]
  %v59 = vld [vmem:[%s4 + $0x8c] sm:$0xf]
  %v60 = vld [vmem:[%s4 + $0x90] sm:$0xf]
  %v61 = vld [vmem:[%s4 + $0x94] sm:$0xf]
  %v62 = vld [vmem:[%s4 + $0x98] sm:$0xf]
  %v63 = vld [vmem:[%s4 + $0x9c] sm:$0xf]
  %v64 = vld [vmem:[%s4 + $0xa0] sm:$0xf]
  %v65 = vld [vmem:[%s4 + $0xa4] sm:$0xf]
  %v66 = vld [vmem:[%s4 + $0xa8] sm:$0xf]
  %v67 = vld [vmem:[%s4 + $0xac] sm:$0xf]
  %v68 = vld [vmem:[%s4 + $0xb0] sm:$0xf]
  %v69 = vld [vmem:[%s4 + $0xb4] sm:$0xf]
  %v70 = vld [vmem:[%s4 + $0xb8] sm:$0xf]
  %v71 = vld [vmem:[%s4 + $0xbc] sm:$0xf]
  %v72 = vld [vmem:[%s4 + $0xc0] sm:$0xf]
  %v73 = vld [vmem:[%s4 + $0xc4] sm:$0xf]
  %v74 = vld [vmem:[%s4 + $0xc8] sm:$0xf]
  %v75 = vld [vmem:[%s4 + $0xcc] sm:$0xf]
  %v76 = vld [vmem:[%s4 + $0xd0] sm:$0xf]
  %v77 = vld [vmem:[%s4 + $0xd4] sm:$0xf]
  %v78 = vld [vmem:[%s4 + $0xd8] sm:$0xf]
  %v79 = vld [vmem:[%s4 + $0xdc] sm:$0xf]
  %v80 = vld [vmem:[%s4 + $0xe0] sm:$0xf]
  %v81 = vld [vmem:[%s4 + $0xe4] sm:$0xf]
  %v82 = vld [vmem:[%s4 + $0xe8] sm:$0xf]
  %v83 = vld [vmem:[%s4 + $0xec] sm:$0xf]
  %v84 = vld [vmem:[%s4 + $0xf0] sm:$0xf]
  %v85 = vld [vmem:[%s4 + $0xf4] sm:$0xf]
  %v86 = vld [vmem:[%s4 + $0xf8] sm:$0xf]
  %v87 = vld [vmem:[%s4 + $0xfc] sm:$0xf]
  %v88 = vld [vmem:[%s4 + $0x100] sm:$0xf]
  %v89 = vld [vmem:[%s4 + $0x104] sm:$0xf]
  %v90 = vld [vmem:[%s4 + $0x108] sm:$0xf]
  %v91 = vld [vmem:[%s4 + $0x10c] sm:$0xf]
  %v92 = vld [vmem:[%s4 + $0x110] sm:$0xf]
  %v93 = vld [vmem:[%s4 + $0x114] sm:$0xf]
  %v94 = vld [vmem:[%s4 + $0x118] sm:$0xf]
  %v95 = vld [vmem:[%s4 + $0x11c] sm:$0xf]
  %v96 = vld [vmem:[%s4 + $0x120] sm:$0xf]
  %v97 = vld [vmem:[%s4 + $0x124] sm:$0xf]
  %v98 = vld [vmem:[%s4 + $0x128] sm:$0xf]
  %v99 = vld [vmem:[%s4 + $0x12c] sm:$0xf]
  %v100 = vld [vmem:[%s4 + $0x130] sm:$0xf]
  %v101 = vld [vmem:[%s4 + $0x134] sm:$0xf]
  %v102 = vld [vmem:[%s4 + $0x138] sm:$0xf]
  %v103 = vld [vmem:[%s4 + $0x13c] sm:$0xf]
  %v104 = vld [vmem:[%s4 + $0x140] sm:$0xf]
  %v105 = vld [vmem:[%s4 + $0x144] sm:$0xf]
  %v106 = vld [vmem:[%s4 + $0x148] sm:$0xf]
  %v107 = vld [vmem:[%s4 + $0x14c] sm:$0xf]
  %v108 = vld [vmem:[%s4 + $0x150] sm:$0xf]
  %v109 = vld [vmem:[%s4 + $0x154] sm:$0xf]
  %v110 = vld [vmem:[%s4 + $0x158] sm:$0xf]
  %v111 = vld [vmem:[%s4 + $0x15c] sm:$0xf]
  %v112 = vld [vmem:[%s4 + $0x160] sm:$0xf]
  %v113 = vld [vmem:[%s4 + $0x164] sm:$0xf]
  %v114 = vld [vmem:[%s4 + $0x168] sm:$0xf]
  %v115 = vld [vmem:[%s4 + $0x16c] sm:$0xf]
  %v116 = vld [vmem:[%s4 + $0x170] sm:$0xf]
  %v117 = vld [vmem:[%s4 + $0x174] sm:$0xf]
  %v118 = vld [vmem:[%s4 + $0x178] sm:$0xf]
  %v119 = vld [vmem:[%s4 + $0x17c] sm:$0xf]
  %v120 = vld [vmem:[%s4 + $0x180] sm:$0xf]
  %v121 = vld [vmem:[%s4 + $0x184] sm:$0xf]
  %v122 = vld [vmem:[%s4 + $0x188] sm:$0xf]
  %v123 = vld [vmem:[%s4 + $0x18c] sm:$0xf]
  %v124 = vld [vmem:[%s4 + $0x190] sm:$0xf]
  %v125 = vld [vmem:[%s4 + $0x194] sm:$0xf]
  %v126 = vld [vmem:[%s4 + $0x198] sm:$0xf]
  %v127 = vld [vmem:[%s4 + $0x19c] sm:$0xf]
  %v128 = vld [vmem:[%s4 + $0x1a0] sm:$0xf]
  %v129 = vld [vmem:[%s4 + $0x1a4] sm:$0xf]
  %v130 = vld [vmem:[%s4 + $0x1a8] sm:$0xf]
  %v131 = vld [vmem:[%s4 + $0x1ac] sm:$0xf]
  %v132 = vld [vmem:[%s4 + $0x1b0] sm:$0xf]
  %v133 = vld [vmem:[%s4 + $0x1b4] sm:$0xf]
  %v134 = vld [vmem:[%s4 + $0x1b8] sm:$0xf]
  %v135 = vld [vmem:[%s4 + $0x1bc] sm:$0xf]
  %v136 = vld [vmem:[%s4 + $0x1c0] sm:$0xf]
  %v137 = vld [vmem:[%s4 + $0x1c4] sm:$0xf]
  %v138 = vld [vmem:[%s4 + $0x1c8] sm:$0xf]
  %v139 = vld [vmem:[%s4 + $0x1cc] sm:$0xf]
  %v140 = vld [vmem:[%s4 + $0x1d0] sm:$0xf]
  %v141 = vld [vmem:[%s4 + $0x1d4] sm:$0xf]
  %v142 = vld [vmem:[%s4 + $0x1d8] sm:$0xf]
  %v143 = vld [vmem:[%s4 + $0x1dc] sm:$0xf]
  %v144 = vld [vmem:[%s4 + $0x1e0] sm:$0xf]
  %v145 = vld [vmem:[%s4 + $0x1e4] sm:$0xf]
  %v146 = vld [vmem:[%s4 + $0x1e8] sm:$0xf]
  %v147 = vld [vmem:[%s4 + $0x1ec] sm:$0xf]
  %v148 = vld [vmem:[%s4 + $0x1f0] sm:$0xf]
  %v149 = vld [vmem:[%s4 + $0x1f4] sm:$0xf]
  %v150 = vld [vmem:[%s4 + $0x1f8] sm:$0xf]
  %v151 = vld [vmem:[%s4 + $0x1fc] sm:$0xf]
  %v152 = vld [vmem:[%s4 + $0x200] sm:$0xf]
  %v153 = vld [vmem:[%s4 + $0x204] sm:$0xf]
  %v154 = vld [vmem:[%s4 + $0x208] sm:$0xf]
  %v155 = vld [vmem:[%s4 + $0x20c] sm:$0xf]
  %v156 = vld [vmem:[%s4 + $0x210] sm:$0xf]
  %v157 = vld [vmem:[%s4 + $0x214] sm:$0xf]
  %v158 = vld [vmem:[%s4 + $0x218] sm:$0xf]
  %v159 = vld [vmem:[%s4 + $0x21c] sm:$0xf]
  %v160 = vld [vmem:[%s4 + $0x220] sm:$0xf]
  %v161 = vld [vmem:[%s4 + $0x224] sm:$0xf]
  %v162 = vld [vmem:[%s4 + $0x228] sm:$0xf]
  %v163 = vld [vmem:[%s4 + $0x22c] sm:$0xf]
  %v164 = vld [vmem:[%s4 + $0x230] sm:$0xf]
  %v165 = vld [vmem:[%s4 + $0x234] sm:$0xf]
  %v166 = vld [vmem:[%s4 + $0x238] sm:$0xf]
  %v167 = vld [vmem:[%s4 + $0x23c] sm:$0xf]
  %v168 = vld [vmem:[%s4 + $0x240] sm:$0xf]
  %v169 = vld [vmem:[%s4 + $0x244] sm:$0xf]
  %v170 = vld [vmem:[%s4 + $0x248] sm:$0xf]
  %v171 = vld [vmem:[%s4 + $0x24c] sm:$0xf]
  %v172 = vld [vmem:[%s4 + $0x250] sm:$0xf]
  %v173 = vld [vmem:[%s4 + $0x254] sm:$0xf]
  %v174 = vld [vmem:[%s4 + $0x258] sm:$0xf]
  %v175 = vld [vmem:[%s4 + $0x25c] sm:$0xf]
  %v176 = vld [vmem:[%s4 + $0x260] sm:$0xf]
  %v177 = vld [vmem:[%s4 + $0x264] sm:$0xf]
  %v178 = vld [vmem:[%s4 + $0x268] sm:$0xf]
  %v179 = vld [vmem:[%s4 + $0x26c] sm:$0xf]
  %v180 = vld [vmem:[%s4 + $0x270] sm:$0xf]
  %v181 = vld [vmem:[%s4 + $0x274] sm:$0xf]
  %v182 = vld [vmem:[%s4 + $0x278] sm:$0xf]
  %v183 = vld [vmem:[%s4 + $0x27c] sm:$0xf]
  %v184 = vld [vmem:[%s4 + $0x280] sm:$0xf]
  %v185 = vld [vmem:[%s4 + $0x284] sm:$0xf]
  %v186 = vld [vmem:[%s4 + $0x288] sm:$0xf]
  %v187 = vld [vmem:[%s4 + $0x28c] sm:$0xf]
  %v188 = vld [vmem:[%s4 + $0x290] sm:$0xf]
  %v189 = vld [vmem:[%s4 + $0x294] sm:$0xf]
  %v190 = vld [vmem:[%s4 + $0x298] sm:$0xf]
  %v191 = vld [vmem:[%s4 + $0x29c] sm:$0xf]
  %v192 = vld [vmem:[%s4 + $0x2a0] sm:$0xf]
  %v193 = vld [vmem:[%s4 + $0x2a4] sm:$0xf]
  %v194 = vld [vmem:[%s4 + $0x2a8] sm:$0xf]
  %v195 = vld [vmem:[%s4 + $0x2ac] sm:$0xf]
  %v196 = vld [vmem:[%s4 + $0x2b0] sm:$0xf]
  %v197 = vld [vmem:[%s4 + $0x2b4] sm:$0xf]
  %v198 = vld [vmem:[%s4 + $0x2b8] sm:$0xf]
  %v199 = vld [vmem:[%s4 + $0x2bc] sm:$0xf]
  %v200 = vld [vmem:[%s4 + $0x2c0] sm:$0xf]
  %v201 = vld [vmem:[%s4 + $0x2c4] sm:$0xf]
  %v202 = vld [vmem:[%s4 + $0x2c8] sm:$0xf]
  %v203 = vld [vmem:[%s4 + $0x2cc] sm:$0xf]
  %v204 = vld [vmem:[%s4 + $0x2d0] sm:$0xf]
  %v205 = vld [vmem:[%s4 + $0x2d4] sm:$0xf]
  %v206 = vld [vmem:[%s4 + $0x2d8] sm:$0xf]
  %v207 = vld [vmem:[%s4 + $0x2dc] sm:$0xf]
  %v208 = vld [vmem:[%s4 + $0x2e0] sm:$0xf]
  %v209 = vld [vmem:[%s4 + $0x2e4] sm:$0xf]
  %v210 = vld [vmem:[%s4 + $0x2e8] sm:$0xf]
  %v211 = vld [vmem:[%s4 + $0x2ec] sm:$0xf]
  %v212 = vld [vmem:[%s4 + $0x2f0] sm:$0xf]
  %v213 = vld [vmem:[%s4 + $0x2f4] sm:$0xf]
  %v214 = vld [vmem:[%s4 + $0x2f8] sm:$0xf]
  %v215 = vld [vmem:[%s4 + $0x2fc] sm:$0xf]
  %v216 = vld [vmem:[%s4 + $0x300] sm:$0xf]
  %v217 = vld [vmem:[%s4 + $0x304] sm:$0xf]
  %v218 = vld [vmem:[%s4 + $0x308] sm:$0xf]
  %v219 = vld [vmem:[%s4 + $0x30c] sm:$0xf]
  %v220 = vld [vmem:[%s4 + $0x310] sm:$0xf]
  %v221 = vld [vmem:[%s4 + $0x314] sm:$0xf]
  %v222 = vld [vmem:[%s4 + $0x318] sm:$0xf]
  %v223 = vld [vmem:[%s4 + $0x31c] sm:$0xf]
  %v224 = vld [vmem:[%s4 + $0x320] sm:$0xf]
  %v225 = vld [vmem:[%s4 + $0x324] sm:$0xf]
  %v226 = vld [vmem:[%s4 + $0x328] sm:$0xf]
  %v227 = vld [vmem:[%s4 + $0x32c] sm:$0xf]
  %v228 = vld [vmem:[%s4 + $0x330] sm:$0xf]
  %v229 = vld [vmem:[%s4 + $0x334] sm:$0xf]
  %v230 = vld [vmem:[%s4 + $0x338] sm:$0xf]
  %v231 = vld [vmem:[%s4 + $0x33c] sm:$0xf]
  %v232 = vld [vmem:[%s4 + $0x340] sm:$0xf]
  %v233 = vld [vmem:[%s4 + $0x344] sm:$0xf]
  %v234 = vld [vmem:[%s4 + $0x348] sm:$0xf]
  %v235 = vld [vmem:[%s4 + $0x34c] sm:$0xf]
  %v236 = vld [vmem:[%s4 + $0x350] sm:$0xf]
  %v237 = vld [vmem:[%s4 + $0x354] sm:$0xf]
  %v238 = vld [vmem:[%s4 + $0x358] sm:$0xf]
  %v239 = vld [vmem:[%s4 + $0x35c] sm:$0xf]
  %v240 = vld [vmem:[%s4 + $0x360] sm:$0xf]
  %v241 = vld [vmem:[%s4 + $0x364] sm:$0xf]
  %v242 = vld [vmem:[%s4 + $0x368] sm:$0xf]
  %v243 = vld [vmem:[%s4 + $0x36c] sm:$0xf]
  %v244 = vld [vmem:[%s4 + $0x370] sm:$0xf]
  %v245 = vld [vmem:[%s4 + $0x374] sm:$0xf]
  %v246 = vld [vmem:[%s4 + $0x378] sm:$0xf]
  %v247 = vld [vmem:[%s4 + $0x37c] sm:$0xf]
  %v248 = vld [vmem:[%s4 + $0x380] sm:$0xf]
  %v249 = vld [vmem:[%s4 + $0x384] sm:$0xf]
  %v250 = vld [vmem:[%s4 + $0x388] sm:$0xf]
  %v251 = vld [vmem:[%s4 + $0x38c] sm:$0xf]
  %v252 = vld [vmem:[%s4 + $0x390] sm:$0xf]
  %v253 = vld [vmem:[%s4 + $0x394] sm:$0xf]
  %v254 = vld [vmem:[%s4 + $0x398] sm:$0xf]
  %v255 = vld [vmem:[%s4 + $0x39c] sm:$0xf]
  %v256 = vld [vmem:[%s4 + $0x3a0] sm:$0xf]
  %v257 = vld [vmem:[%s4 + $0x3a4] sm:$0xf]
  %v258 = vld [vmem:[%s4 + $0x3a8] sm:$0xf]
  %v259 = vld [vmem:[%s4 + $0x3ac] sm:$0xf]
  %v260 = vld [vmem:[%s4 + $0x3b0] sm:$0xf]
  %v261 = vld [vmem:[%s4 + $0x3b4] sm:$0xf]
  %v262 = vld [vmem:[%s4 + $0x3b8] sm:$0xf]
  %v263 = vld [vmem:[%s4 + $0x3bc] sm:$0xf]
  %v264 = vld [vmem:[%s4 + $0x3c0] sm:$0xf]
  %v265 = vld [vmem:[%s4 + $0x3c4] sm:$0xf]
  %v266 = vld [vmem:[%s4 + $0x3c8] sm:$0xf]
  %v267 = vld [vmem:[%s4 + $0x3cc] sm:$0xf]
  %v268 = vld [vmem:[%s4 + $0x3d0] sm:$0xf]
  %v269 = vld [vmem:[%s4 + $0x3d4] sm:$0xf]
  %v270 = vld [vmem:[%s4 + $0x3d8] sm:$0xf]
  %v271 = vld [vmem:[%s4 + $0x3dc] sm:$0xf]
  %v272 = vld [vmem:[%s4 + $0x3e0] sm:$0xf]
  %v273 = vld [vmem:[%s4 + $0x3e4] sm:$0xf]
  %v274 = vld [vmem:[%s4 + $0x3e8] sm:$0xf]
  %v275 = vld [vmem:[%s4 + $0x3ec] sm:$0xf]
  %v276 = vld [vmem:[%s4 + $0x3f0] sm:$0xf]
  %v277 = vld [vmem:[%s4 + $0x3f4] sm:$0xf]
  %v278 = vld [vmem:[%s4 + $0x3f8] sm:$0xf]
  %v279 = vld [vmem:[%s4 + $0x3fc] sm:$0xf]
  %v280 = vld [vmem:[%s4 + $0x400] sm:$0xf]
  %v281 = vld [vmem:[%s4 + $0x404] sm:$0xf]
  %v282 = vld [vmem:[%s4 + $0x408] sm:$0xf]
  %v283 = vld [vmem:[%s4 + $0x40c] sm:$0xf]
  %v284 = vld [vmem:[%s4 + $0x410] sm:$0xf]
  %v285 = vld [vmem:[%s4 + $0x414] sm:$0xf]
  %v286 = vld [vmem:[%s4 + $0x418] sm:$0xf]
  %v287 = vld [vmem:[%s4 + $0x41c] sm:$0xf]
  %v288 = vld [vmem:[%s4 + $0x420] sm:$0xf]
  %v289 = vld [vmem:[%s4 + $0x424] sm:$0xf]
  %v290 = vld [vmem:[%s4 + $0x428] sm:$0xf]
  %v291 = vld [vmem:[%s4 + $0x42c] sm:$0xf]
  %v292 = vld [vmem:[%s4 + $0x430] sm:$0xf]
  %v293 = vld [vmem:[%s4 + $0x434] sm:$0xf]
  %v294 = vld [vmem:[%s4 + $0x438] sm:$0xf]
  %v295 = vld [vmem:[%s4 + $0x43c] sm:$0xf]
  %v296 = vld [vmem:[%s4 + $0x440] sm:$0xf]
  %v297 = vld [vmem:[%s4 + $0x444] sm:$0xf]
  %v298 = vld [vmem:[%s4 + $0x448] sm:$0xf]
  %v299 = vld [vmem:[%s0] sm:$0xff]
  %v300 = vld [vmem:[%s0 + $0x8] sm:$0xff]
  %v301 = vld [vmem:[%s0 + $0x10] sm:$0xff]
  %v302 = vld [vmem:[%s0 + $0x18] sm:$0xff]
  %v303 = vld [vmem:[%s0 + $0x20] sm:$0xff]
  %v304 = vld [vmem:[%s0 + $0x28] sm:$0xff]
  %v305 = vld [vmem:[%s0 + $0x30] sm:$0xff]
  %v306 = vld [vmem:[%s0 + $0x38] sm:$0xff]
  %v307 = vld [vmem:[%s0 + $0x40] sm:$0xff]
  %v308 = vld [vmem:[%s0 + $0x48] sm:$0xff]
  %v309 = vld [vmem:[%s0 + $0x50] sm:$0xff]
  %v310 = vld [vmem:[%s0 + $0x58] sm:$0xff]
  %v311 = vld [vmem:[%s0 + $0x60] sm:$0xff]
  %v312 = vld [vmem:[%s0 + $0x68] sm:$0xff]
  %v313 = vld [vmem:[%s0 + $0x70] sm:$0xff]
  %v314 = vld [vmem:[%s0 + $0x78] sm:$0xff]
  %v315 = vld [vmem:[%s0 + $0x80] sm:$0xff]
  %v316 = vld [vmem:[%s0 + $0x88] sm:$0xff]
  %v317 = vld [vmem:[%s0 + $0x90] sm:$0xff]
  %v318 = vld [vmem:[%s0 + $0x98] sm:$0xff]
  %v319 = vld [vmem:[%s0 + $0xa0] sm:$0xff]
  %v320 = vld [vmem:[%s0 + $0xa8] sm:$0xff]
  %v321 = vld [vmem:[%s0 + $0xb0] sm:$0xff]
  %v322 = vld [vmem:[%s0 + $0xb8] sm:$0xff]
  %v323 = vld [vmem:[%s0 + $0xc0] sm:$0xff]
  %v324 = vld [vmem:[%s0 + $0xc8] sm:$0xff]
  %v325 = vld [vmem:[%s0 + $0xd0] sm:$0xff]
  %v326 = vld [vmem:[%s0 + $0xd8] sm:$0xff]
  %v327 = vld [vmem:[%s0 + $0xe0] sm:$0xff]
  %v328 = vld [vmem:[%s0 + $0xe8] sm:$0xff]
  %v329 = vld [vmem:[%s0 + $0xf0] sm:$0xff]
  %v330 = vld [vmem:[%s0 + $0xf8] sm:$0xff]
  %v331 = vld [vmem:[%s0 + $0x100] sm:$0xff]
  %v332 = vld [vmem:[%s0 + $0x108] sm:$0xff]
  %v333 = vld [vmem:[%s0 + $0x110] sm:$0xff]
  %v334 = vld [vmem:[%s0 + $0x118] sm:$0xff]
  %v371 = vunpack.c.l.b16 %v299
  %v372 = vunpack.c.h.b16 %v299
  %v373 = vunpack.c.l.b16 %v300
  %v374 = vunpack.c.h.b16 %v300
  %v375 = vunpack.c.l.b16 %v301
  %v376 = vunpack.c.h.b16 %v301
  %v377 = vunpack.c.l.b16 %v302
  %v378 = vunpack.c.h.b16 %v302
  %v379 = vunpack.c.l.b16 %v303
  %v380 = vunpack.c.h.b16 %v303
  %v381 = vunpack.c.l.b16 %v304
  %v382 = vunpack.c.h.b16 %v304
  %v383 = vunpack.c.l.b16 %v305
  %v384 = vunpack.c.h.b16 %v305
  %v385 = vunpack.c.l.b16 %v306
  %v386 = vunpack.c.h.b16 %v306
  %v387 = vunpack.c.l.b16 %v307
  %v388 = vunpack.c.h.b16 %v307
  %v389 = vunpack.c.l.b16 %v308
  %v390 = vunpack.c.h.b16 %v308
  %v391 = vunpack.c.l.b16 %v309
  %v392 = vunpack.c.h.b16 %v309
  %v393 = vunpack.c.l.b16 %v310
  %v394 = vunpack.c.h.b16 %v310
  %v395 = vunpack.c.l.b16 %v311
  %v396 = vunpack.c.h.b16 %v311
  %v397 = vunpack.c.l.b16 %v312
  %v398 = vunpack.c.h.b16 %v312
  %v399 = vunpack.c.l.b16 %v313
  %v400 = vunpack.c.h.b16 %v313
  %v401 = vunpack.c.l.b16 %v314
  %v402 = vunpack.c.h.b16 %v314
  %v403 = vunpack.c.l.b16 %v315
  %v404 = vunpack.c.h.b16 %v315
  %v405 = vunpack.c.l.b16 %v316
  %v406 = vunpack.c.h.b16 %v316
  %v407 = vunpack.c.l.b16 %v317
  %v408 = vunpack.c.h.b16 %v317
  %v409 = vunpack.c.l.b16 %v318
  %v410 = vunpack.c.h.b16 %v318
  %v411 = vunpack.c.l.b16 %v319
  %v412 = vunpack.c.h.b16 %v319
  %v413 = vunpack.c.l.b16 %v320
  %v414 = vunpack.c.h.b16 %v320
  %v415 = vunpack.c.l.b16 %v321
  %v416 = vunpack.c.h.b16 %v321
  %v417 = vunpack.c.l.b16 %v322
  %v418 = vunpack.c.h.b16 %v322
  %v419 = vunpack.c.l.b16 %v323
  %v420 = vunpack.c.h.b16 %v323
  %v421 = vunpack.c.l.b16 %v324
  %v422 = vunpack.c.h.b16 %v324
  %v423 = vunpack.c.l.b16 %v325
  %v424 = vunpack.c.h.b16 %v325
  %v425 = vunpack.c.l.b16 %v326
  %v426 = vunpack.c.h.b16 %v326
  %v427 = vunpack.c.l.b16 %v327
  %v428 = vunpack.c.h.b16 %v327
  %v429 = vunpack.c.l.b16 %v328
  %v430 = vunpack.c.h.b16 %v328
  %v431 = vunpack.c.l.b16 %v329
  %v432 = vunpack.c.h.b16 %v329
  %v433 = vunpack.c.l.b16 %v330
  %v434 = vunpack.c.h.b16 %v330
  %v435 = vunpack.c.l.b16 %v331
  %v436 = vunpack.c.h.b16 %v331
  %v437 = vunpack.c.l.b16 %v332
  %v438 = vunpack.c.h.b16 %v332
  %v439 = vunpack.c.l.b16 %v333
  %v440 = vunpack.c.h.b16 %v333
  %v441 = vunpack.c.l.b16 %v334
  %v442 = vunpack.c.h.b16 %v334
  %v443 = vpack.c.b16 %v389, %v371
  %v444 = vpack.c.b16 %v390, %v372
  %v445 = vpack.c.b16 %v391, %v373
  %v446 = vpack.c.b16 %v392, %v374
  %v447 = vpack.c.b16 %v393, %v375
  %v448 = vpack.c.b16 %v394, %v376
  %v449 = vpack.c.b16 %v395, %v377
  %v450 = vpack.c.b16 %v396, %v378
  %v451 = vpack.c.b16 %v397, %v379
  %v452 = vpack.c.b16 %v398, %v380
  %v453 = vpack.c.b16 %v399, %v381
  %v454 = vpack.c.b16 %v400, %v382
  %v455 = vpack.c.b16 %v401, %v383
  %v456 = vpack.c.b16 %v402, %v384
  %v457 = vpack.c.b16 %v403, %v385
  %v458 = vpack.c.b16 %v404, %v386
  %v459 = vpack.c.b16 %v405, %v387
  %v460 = vpack.c.b16 %v406, %v388
  %v461 = vpack.c.b16 %v425, %v407
  %v462 = vpack.c.b16 %v426, %v408
  %v463 = vpack.c.b16 %v427, %v409
  %v464 = vpack.c.b16 %v428, %v410
  %v465 = vpack.c.b16 %v429, %v411
  %v466 = vpack.c.b16 %v430, %v412
  %v467 = vpack.c.b16 %v431, %v413
  %v468 = vpack.c.b16 %v432, %v414
  %v469 = vpack.c.b16 %v433, %v415
  %v470 = vpack.c.b16 %v434, %v416
  %v471 = vpack.c.b16 %v435, %v417
  %v472 = vpack.c.b16 %v436, %v418
  %v473 = vpack.c.b16 %v437, %v419
  %v474 = vpack.c.b16 %v438, %v420
  %v475 = vpack.c.b16 %v439, %v421
  %v476 = vpack.c.b16 %v440, %v422
  %v477 = vpack.c.b16 %v441, %v423
  %v478 = vpack.c.b16 %v442, %v424
  %v788 = vunpack.c.l.b16 %v24
  %v789 = vunpack.c.l.b16 %v25
  %v790 = vunpack.c.l.b16 %v26
  %v791 = vunpack.c.l.b16 %v27
  %v792 = vunpack.c.l.b16 %v28
  %v793 = vunpack.c.l.b16 %v29
  %v794 = vunpack.c.l.b16 %v30
  %v795 = vunpack.c.l.b16 %v31
  %v796 = vunpack.c.l.b16 %v32
  %v797 = vunpack.c.l.b16 %v33
  %v798 = vunpack.c.l.b16 %v34
  %v799 = vunpack.c.l.b16 %v35
  %v800 = vunpack.c.l.b16 %v36
  %v801 = vunpack.c.l.b16 %v37
  %v802 = vunpack.c.l.b16 %v38
  %v803 = vunpack.c.l.b16 %v39
  %v804 = vunpack.c.l.b16 %v40
  %v805 = vunpack.c.l.b16 %v41
  %v806 = vunpack.c.l.b16 %v42
  %v807 = vunpack.c.l.b16 %v43
  %v808 = vunpack.c.l.b16 %v44
  %v809 = vunpack.c.l.b16 %v45
  %v810 = vunpack.c.l.b16 %v46
  %v811 = vunpack.c.l.b16 %v47
  %v812 = vunpack.c.l.b16 %v48
  %v813 = vunpack.c.l.b16 %v49
  %v814 = vunpack.c.l.b16 %v50
  %v815 = vunpack.c.l.b16 %v51
  %v816 = vunpack.c.l.b16 %v52
  %v817 = vunpack.c.l.b16 %v53
  %v818 = vunpack.c.l.b16 %v54
  %v819 = vunpack.c.l.b16 %v55
  %v820 = vunpack.c.l.b16 %v56
  %v821 = vunpack.c.l.b16 %v57
  %v822 = vunpack.c.l.b16 %v58
  %v823 = vunpack.c.l.b16 %v59
  %v824 = vunpack.c.l.b16 %v60
  %v825 = vunpack.c.l.b16 %v61
  %v826 = vunpack.c.l.b16 %v62
  %v827 = vunpack.c.l.b16 %v63
  %v828 = vunpack.c.l.b16 %v64
  %v829 = vunpack.c.l.b16 %v65
  %v830 = vunpack.c.l.b16 %v66
  %v831 = vunpack.c.l.b16 %v67
  %v832 = vunpack.c.l.b16 %v68
  %v833 = vunpack.c.l.b16 %v69
  %v834 = vunpack.c.l.b16 %v70
  %v835 = vunpack.c.l.b16 %v71
  %v836 = vunpack.c.l.b16 %v72
  %v837 = vunpack.c.l.b16 %v73
  %v838 = vunpack.c.l.b16 %v74
  %v839 = vunpack.c.l.b16 %v75
  %v840 = vunpack.c.l.b16 %v76
  %v841 = vunpack.c.l.b16 %v77
  %v842 = vunpack.c.l.b16 %v78
  %v843 = vunpack.c.l.b16 %v79
  %v844 = vunpack.c.l.b16 %v80
  %v845 = vunpack.c.l.b16 %v81
  %v846 = vunpack.c.l.b16 %v82
  %v847 = vunpack.c.l.b16 %v83
  %v848 = vunpack.c.l.b16 %v84
  %v849 = vunpack.c.l.b16 %v85
  %v850 = vunpack.c.l.b16 %v86
  %v851 = vunpack.c.l.b16 %v87
  %v852 = vunpack.c.l.b16 %v88
  %v853 = vunpack.c.l.b16 %v89
  %v854 = vunpack.c.l.b16 %v90
  %v855 = vunpack.c.l.b16 %v91
  %v856 = vunpack.c.l.b16 %v92
  %v857 = vunpack.c.l.b16 %v93
  %v858 = vunpack.c.l.b16 %v94
  %v859 = vunpack.c.l.b16 %v95
  %v860 = vunpack.c.l.b16 %v96
  %v861 = vunpack.c.l.b16 %v97
  %v862 = vunpack.c.l.b16 %v98
  %v863 = vunpack.c.l.b16 %v99
  %v864 = vunpack.c.l.b16 %v100
  %v865 = vunpack.c.l.b16 %v101
  %v866 = vunpack.c.l.b16 %v102
  %v867 = vunpack.c.l.b16 %v103
  %v868 = vunpack.c.l.b16 %v104
  %v869 = vunpack.c.l.b16 %v105
  %v870 = vunpack.c.l.b16 %v106
  %v871 = vunpack.c.l.b16 %v107
  %v872 = vunpack.c.l.b16 %v108
  %v873 = vunpack.c.l.b16 %v109
  %v874 = vunpack.c.l.b16 %v110
  %v875 = vunpack.c.l.b16 %v111
  %v876 = vunpack.c.l.b16 %v112
  %v877 = vunpack.c.l.b16 %v113
  %v878 = vunpack.c.l.b16 %v114
  %v879 = vunpack.c.l.b16 %v115
  %v880 = vunpack.c.l.b16 %v116
  %v881 = vunpack.c.l.b16 %v117
  %v882 = vunpack.c.l.b16 %v118
  %v883 = vunpack.c.l.b16 %v119
  %v884 = vunpack.c.l.b16 %v120
  %v885 = vunpack.c.l.b16 %v121
  %v886 = vunpack.c.l.b16 %v122
  %v887 = vunpack.c.l.b16 %v123
  %v888 = vunpack.c.l.b16 %v124
  %v889 = vunpack.c.l.b16 %v125
  %v890 = vunpack.c.l.b16 %v126
  %v891 = vunpack.c.l.b16 %v127
  %v892 = vunpack.c.l.b16 %v128
  %v893 = vunpack.c.l.b16 %v129
  %v894 = vunpack.c.l.b16 %v130
  %v895 = vunpack.c.l.b16 %v131
  %v896 = vunpack.c.l.b16 %v132
  %v897 = vunpack.c.l.b16 %v133
  %v898 = vunpack.c.l.b16 %v134
  %v899 = vunpack.c.l.b16 %v135
  %v900 = vunpack.c.l.b16 %v136
  %v901 = vunpack.c.l.b16 %v137
  %v902 = vunpack.c.l.b16 %v138
  %v903 = vunpack.c.l.b16 %v139
  %v904 = vunpack.c.l.b16 %v140
  %v905 = vunpack.c.l.b16 %v141
  %v906 = vunpack.c.l.b16 %v142
  %v907 = vunpack.c.l.b16 %v143
  %v908 = vunpack.c.l.b16 %v144
  %v909 = vunpack.c.l.b16 %v145
  %v910 = vunpack.c.l.b16 %v146
  %v911 = vunpack.c.l.b16 %v147
  %v912 = vunpack.c.l.b16 %v148
  %v913 = vunpack.c.l.b16 %v149
  %v914 = vunpack.c.l.b16 %v150
  %v915 = vunpack.c.l.b16 %v151
  %v916 = vunpack.c.l.b16 %v152
  %v917 = vunpack.c.l.b16 %v153
  %v918 = vunpack.c.l.b16 %v154
  %v919 = vunpack.c.l.b16 %v155
  %v920 = vunpack.c.l.b16 %v156
  %v921 = vunpack.c.l.b16 %v157
  %v922 = vunpack.c.l.b16 %v158
  %v923 = vunpack.c.l.b16 %v159
  %v924 = vunpack.c.l.b16 %v160
  %v925 = vunpack.c.l.b16 %v161
  %v926 = vunpack.c.l.b16 %v162
  %v927 = vunpack.c.l.b16 %v163
  %v928 = vunpack.c.l.b16 %v164
  %v929 = vunpack.c.l.b16 %v165
  %v930 = vunpack.c.l.b16 %v166
  %v931 = vunpack.c.l.b16 %v167
  %v932 = vunpack.c.l.b16 %v168
  %v933 = vunpack.c.l.b16 %v169
  %v934 = vunpack.c.l.b16 %v170
  %v935 = vunpack.c.l.b16 %v171
  %v936 = vunpack.c.l.b16 %v172
  %v937 = vunpack.c.l.b16 %v173
  %v938 = vunpack.c.l.b16 %v174
  %v939 = vunpack.c.l.b16 %v175
  %v940 = vunpack.c.l.b16 %v176
  %v941 = vunpack.c.l.b16 %v177
  %v942 = vunpack.c.l.b16 %v178
  %v943 = vunpack.c.l.b16 %v179
  %v944 = vunpack.c.l.b16 %v180
  %v945 = vunpack.c.l.b16 %v181
  %v946 = vunpack.c.l.b16 %v182
  %v947 = vunpack.c.l.b16 %v183
  %v948 = vunpack.c.l.b16 %v184
  %v949 = vunpack.c.l.b16 %v185
  %v950 = vunpack.c.l.b16 %v186
  %v951 = vunpack.c.l.b16 %v187
  %v952 = vunpack.c.l.b16 %v188
  %v953 = vunpack.c.l.b16 %v189
  %v954 = vunpack.c.l.b16 %v190
  %v955 = vunpack.c.l.b16 %v191
  %v956 = vunpack.c.l.b16 %v192
  %v957 = vunpack.c.l.b16 %v193
  %v958 = vunpack.c.l.b16 %v194
  %v959 = vunpack.c.l.b16 %v195
  %v960 = vunpack.c.l.b16 %v196
  %v961 = vunpack.c.l.b16 %v197
  %v962 = vunpack.c.l.b16 %v198
  %v963 = vunpack.c.l.b16 %v199
  %v964 = vunpack.c.l.b16 %v200
  %v965 = vunpack.c.l.b16 %v201
  %v966 = vunpack.c.l.b16 %v202
  %v967 = vunpack.c.l.b16 %v203
  %v968 = vunpack.c.l.b16 %v204
  %v969 = vunpack.c.l.b16 %v205
  %v970 = vunpack.c.l.b16 %v206
  %v971 = vunpack.c.l.b16 %v207
  %v972 = vunpack.c.l.b16 %v208
  %v973 = vunpack.c.l.b16 %v209
  %v974 = vunpack.c.l.b16 %v210
  %v975 = vunpack.c.l.b16 %v211
  %v976 = vunpack.c.l.b16 %v212
  %v977 = vunpack.c.l.b16 %v213
  %v978 = vunpack.c.l.b16 %v214
  %v979 = vunpack.c.l.b16 %v215
  %v980 = vunpack.c.l.b16 %v216
  %v981 = vunpack.c.l.b16 %v217
  %v982 = vunpack.c.l.b16 %v218
  %v983 = vunpack.c.l.b16 %v219
  %v984 = vunpack.c.l.b16 %v220
  %v985 = vunpack.c.l.b16 %v221
  %v986 = vunpack.c.l.b16 %v222
  %v987 = vunpack.c.l.b16 %v223
  %v988 = vunpack.c.l.b16 %v224
  %v989 = vunpack.c.l.b16 %v225
  %v990 = vunpack.c.l.b16 %v226
  %v991 = vunpack.c.l.b16 %v227
  %v992 = vunpack.c.l.b16 %v228
  %v993 = vunpack.c.l.b16 %v229
  %v994 = vunpack.c.l.b16 %v230
  %v995 = vunpack.c.l.b16 %v231
  %v996 = vunpack.c.l.b16 %v232
  %v997 = vunpack.c.l.b16 %v233
  %v998 = vunpack.c.l.b16 %v234
  %v999 = vunpack.c.l.b16 %v235
  %v1000 = vunpack.c.l.b16 %v236
  %v1001 = vunpack.c.l.b16 %v237
  %v1002 = vunpack.c.l.b16 %v238
  %v1003 = vunpack.c.l.b16 %v239
  %v1004 = vunpack.c.l.b16 %v240
  %v1005 = vunpack.c.l.b16 %v241
  %v1006 = vunpack.c.l.b16 %v242
  %v1007 = vunpack.c.l.b16 %v243
  %v1008 = vunpack.c.l.b16 %v244
  %v1009 = vunpack.c.l.b16 %v245
  %v1010 = vunpack.c.l.b16 %v246
  %v1011 = vunpack.c.l.b16 %v247
  %v1012 = vunpack.c.l.b16 %v248
  %v1013 = vunpack.c.l.b16 %v249
  %v1014 = vunpack.c.l.b16 %v250
  %v1015 = vunpack.c.l.b16 %v251
  %v1016 = vunpack.c.l.b16 %v252
  %v1017 = vunpack.c.l.b16 %v253
  %v1018 = vunpack.c.l.b16 %v254
  %v1019 = vunpack.c.l.b16 %v255
  %v1020 = vunpack.c.l.b16 %v256
  %v1021 = vunpack.c.l.b16 %v257
  %v1022 = vunpack.c.l.b16 %v258
  %v1023 = vunpack.c.l.b16 %v259
  %v1024 = vunpack.c.l.b16 %v260
  %v1025 = vunpack.c.l.b16 %v261
  %v1026 = vunpack.c.l.b16 %v262
  %v1027 = vunpack.c.l.b16 %v263
  %v1028 = vunpack.c.l.b16 %v264
  %v1029 = vunpack.c.l.b16 %v265
  %v1030 = vunpack.c.l.b16 %v266
  %v1031 = vunpack.c.l.b16 %v267
  %v1032 = vunpack.c.l.b16 %v268
  %v1033 = vunpack.c.l.b16 %v269
  %v1034 = vunpack.c.l.b16 %v270
  %v1035 = vunpack.c.l.b16 %v271
  %v1036 = vunpack.c.l.b16 %v272
  %v1037 = vunpack.c.l.b16 %v273
  %v1038 = vunpack.c.l.b16 %v274
  %v1039 = vunpack.c.l.b16 %v275
  %v1040 = vunpack.c.l.b16 %v276
  %v1041 = vunpack.c.l.b16 %v277
  %v1042 = vunpack.c.l.b16 %v278
  %v1043 = vunpack.c.l.b16 %v279
  %v1044 = vunpack.c.l.b16 %v280
  %v1045 = vunpack.c.l.b16 %v281
  %v1046 = vunpack.c.l.b16 %v282
  %v1047 = vunpack.c.l.b16 %v283
  %v1048 = vunpack.c.l.b16 %v284
  %v1049 = vunpack.c.l.b16 %v285
  %v1050 = vunpack.c.l.b16 %v286
  %v1051 = vunpack.c.l.b16 %v287
  %v1052 = vunpack.c.l.b16 %v288
  %v1053 = vunpack.c.l.b16 %v289
  %v1054 = vunpack.c.l.b16 %v290
  %v1055 = vunpack.c.l.b16 %v291
  %v1056 = vunpack.c.l.b16 %v292
  %v1057 = vunpack.c.l.b16 %v293
  %v1058 = vunpack.c.l.b16 %v294
  %v1059 = vunpack.c.l.b16 %v295
  %v1060 = vunpack.c.l.b16 %v296
  %v1061 = vunpack.c.l.b16 %v297
  %v1062 = vunpack.c.l.b16 %v298
  %v1063 = vpack.c.b16 %v789, %v788
  %v1064 = vpack.c.b16 %v791, %v790
  %v1065 = vpack.c.b16 %v793, %v792
  %v1066 = vpack.c.b16 %v795, %v794
  %v1067 = vpack.c.b16 %v797, %v796
  %v1068 = vpack.c.b16 %v799, %v798
  %v1069 = vpack.c.b16 %v801, %v800
  %v1070 = vpack.c.b16 %v803, %v802
  %v1071 = vpack.c.b16 %v805, %v804
  %v1072 = vpack.c.b16 %v807, %v806
  %v1073 = vpack.c.b16 %v809, %v808
  %v1074 = vpack.c.b16 %v811, %v810
  %v1075 = vpack.c.b16 %v813, %v812
  %v1076 = vpack.c.b16 %v815, %v814
  %v1077 = vpack.c.b16 %v817, %v816
  %v1078 = vpack.c.b16 %v819, %v818
  %v1079 = vpack.c.b16 %v821, %v820
  %v1080 = vpack.c.b16 %v823, %v822
  %v1081 = vpack.c.b16 %v825, %v824
  %v1082 = vpack.c.b16 %v827, %v826
  %v1083 = vpack.c.b16 %v829, %v828
  %v1084 = vpack.c.b16 %v831, %v830
  %v1085 = vpack.c.b16 %v833, %v832
  %v1086 = vpack.c.b16 %v835, %v834
  %v1087 = vpack.c.b16 %v837, %v836
  %v1088 = vpack.c.b16 %v839, %v838
  %v1089 = vpack.c.b16 %v841, %v840
  %v1090 = vpack.c.b16 %v843, %v842
  %v1091 = vpack.c.b16 %v845, %v844
  %v1092 = vpack.c.b16 %v847, %v846
  %v1093 = vpack.c.b16 %v849, %v848
  %v1094 = vpack.c.b16 %v851, %v850
  %v1095 = vpack.c.b16 %v853, %v852
  %v1096 = vpack.c.b16 %v855, %v854
  %v1097 = vpack.c.b16 %v857, %v856
  %v1098 = vpack.c.b16 %v859, %v858
  %v1099 = vpack.c.b16 %v861, %v860
  %v1100 = vpack.c.b16 %v863, %v862
  %v1101 = vpack.c.b16 %v865, %v864
  %v1102 = vpack.c.b16 %v867, %v866
  %v1103 = vpack.c.b16 %v869, %v868
  %v1104 = vpack.c.b16 %v871, %v870
  %v1105 = vpack.c.b16 %v873, %v872
  %v1106 = vpack.c.b16 %v875, %v874
  %v1107 = vpack.c.b16 %v877, %v876
  %v1108 = vpack.c.b16 %v879, %v878
  %v1109 = vpack.c.b16 %v881, %v880
  %v1110 = vpack.c.b16 %v883, %v882
  %v1111 = vpack.c.b16 %v885, %v884
  %v1112 = vpack.c.b16 %v887, %v886
  %v1113 = vpack.c.b16 %v889, %v888
  %v1114 = vpack.c.b16 %v891, %v890
  %v1115 = vpack.c.b16 %v893, %v892
  %v1116 = vpack.c.b16 %v895, %v894
  %v1117 = vpack.c.b16 %v897, %v896
  %v1118 = vpack.c.b16 %v899, %v898
  %v1119 = vpack.c.b16 %v901, %v900
  %v1120 = vpack.c.b16 %v903, %v902
  %v1121 = vpack.c.b16 %v905, %v904
  %v1122 = vpack.c.b16 %v907, %v906
  %v1123 = vpack.c.b16 %v909, %v908
  %v1124 = vpack.c.b16 %v911, %v910
  %v1125 = vpack.c.b16 %v913, %v912
  %v1126 = vpack.c.b16 %v915, %v914
  %v1127 = vpack.c.b16 %v917, %v916
  %v1128 = vpack.c.b16 %v919, %v918
  %v1129 = vpack.c.b16 %v921, %v920
  %v1130 = vpack.c.b16 %v923, %v922
  %v1131 = vpack.c.b16 %v925, %v924
  %v1132 = vpack.c.b16 %v927, %v926
  %v1133 = vpack.c.b16 %v929, %v928
  %v1134 = vpack.c.b16 %v931, %v930
  %v1135 = vpack.c.b16 %v933, %v932
  %v1136 = vpack.c.b16 %v935, %v934
  %v1137 = vpack.c.b16 %v937, %v936
  %v1138 = vpack.c.b16 %v939, %v938
  %v1139 = vpack.c.b16 %v941, %v940
  %v1140 = vpack.c.b16 %v943, %v942
  %v1141 = vpack.c.b16 %v945, %v944
  %v1142 = vpack.c.b16 %v947, %v946
  %v1143 = vpack.c.b16 %v949, %v948
  %v1144 = vpack.c.b16 %v951, %v950
  %v1145 = vpack.c.b16 %v953, %v952
  %v1146 = vpack.c.b16 %v955, %v954
  %v1147 = vpack.c.b16 %v957, %v956
  %v1148 = vpack.c.b16 %v959, %v958
  %v1149 = vpack.c.b16 %v961, %v960
  %v1150 = vpack.c.b16 %v963, %v962
  %v1151 = vpack.c.b16 %v965, %v964
  %v1152 = vpack.c.b16 %v967, %v966
  %v1153 = vpack.c.b16 %v969, %v968
  %v1154 = vpack.c.b16 %v971, %v970
  %v1155 = vpack.c.b16 %v973, %v972
  %v1156 = vpack.c.b16 %v975, %v974
  %v1157 = vpack.c.b16 %v977, %v976
  %v1158 = vpack.c.b16 %v979, %v978
  %v1159 = vpack.c.b16 %v981, %v980
  %v1160 = vpack.c.b16 %v983, %v982
  %v1161 = vpack.c.b16 %v985, %v984
  %v1162 = vpack.c.b16 %v987, %v986
  %v1163 = vpack.c.b16 %v989, %v988
  %v1164 = vpack.c.b16 %v991, %v990
  %v1165 = vpack.c.b16 %v993, %v992
  %v1166 = vpack.c.b16 %v995, %v994
  %v1167 = vpack.c.b16 %v997, %v996
  %v1168 = vpack.c.b16 %v999, %v998
  %v1169 = vpack.c.b16 %v1001, %v1000
  %v1170 = vpack.c.b16 %v1003, %v1002
  %v1171 = vpack.c.b16 %v1005, %v1004
  %v1172 = vpack.c.b16 %v1007, %v1006
  %v1173 = vpack.c.b16 %v1009, %v1008
  %v1174 = vpack.c.b16 %v1011, %v1010
  %v1175 = vpack.c.b16 %v1013, %v1012
  %v1176 = vpack.c.b16 %v1015, %v1014
  %v1177 = vpack.c.b16 %v1017, %v1016
  %v1178 = vpack.c.b16 %v1019, %v1018
  %v1179 = vpack.c.b16 %v1021, %v1020
  %v1180 = vpack.c.b16 %v1023, %v1022
  %v1181 = vpack.c.b16 %v1025, %v1024
  %v1182 = vpack.c.b16 %v1027, %v1026
  %v1183 = vpack.c.b16 %v1029, %v1028
  %v1184 = vpack.c.b16 %v1031, %v1030
  %v1185 = vpack.c.b16 %v1033, %v1032
  %v1186 = vpack.c.b16 %v1035, %v1034
  %v1187 = vpack.c.b16 %v1037, %v1036
  %v1188 = vpack.c.b16 %v1039, %v1038
  %v1189 = vpack.c.b16 %v1041, %v1040
  %v1190 = vpack.c.b16 %v1043, %v1042
  %v1191 = vpack.c.b16 %v1045, %v1044
  %v1192 = vpack.c.b16 %v1047, %v1046
  %v1193 = vpack.c.b16 %v1049, %v1048
  %v1194 = vpack.c.b16 %v1051, %v1050
  %v1195 = vpack.c.b16 %v1053, %v1052
  %v1196 = vpack.c.b16 %v1055, %v1054
  %v1197 = vpack.c.b16 %v1057, %v1056
  %v1198 = vpack.c.b16 %v1059, %v1058
  %v1199 = vpack.c.b16 %v1061, %v1060
  %v1200 = vpack.c.b16 %v1062, %v1062
  %vm1338 = vcmask 195584
  %v1340 = vsel %vm1338, %v460, 0
  %v1343 = vsel %vm1338, %v478, 0
  %vm1345 = vcmask 1043456
  %v1347 = vsel %vm1345, %v1200, 0
  %1349 = vmatprep.subr.bf16.mxu0 0
  %1350 = vmatpush1.bf16.msra.mxu0 %v1063
  %1351 = vmatprep.subr.bf16.mxu0 0
  %1352 = vmatpush1.bf16.msra.mxu0 %v1064
  %1353 = vmatprep.subr.bf16.mxu0 0
  %1354 = vmatpush1.bf16.msra.mxu0 %v1065
  %1355 = vmatprep.subr.bf16.mxu0 0
  %1356 = vmatpush1.bf16.msra.mxu0 %v1066
  %1357 = vmatprep.subr.bf16.mxu0 0
  %1358 = vmatpush1.bf16.msra.mxu0 %v1067
  %1359 = vmatprep.subr.bf16.mxu0 0
  %1360 = vmatpush1.bf16.msra.mxu0 %v1068
  %1361 = vmatprep.subr.bf16.mxu0 0
  %1362 = vmatpush1.bf16.msra.mxu0 %v1069
  %1363 = vmatprep.subr.bf16.mxu0 0
  %1364 = vmatpush1.bf16.msra.mxu0 %v1070
  %1365 = vmatprep.subr.bf16.mxu0 0
  %1366 = vmatpush1.bf16.msra.mxu0 %v1071
  %1367 = vmatprep.subr.bf16.mxu0 0
  %1368 = vmatpush1.bf16.msra.mxu0 %v1072
  %1369 = vmatprep.subr.bf16.mxu0 0
  %1370 = vmatpush1.bf16.msra.mxu0 %v1073
  %1371 = vmatprep.subr.bf16.mxu0 0
  %1372 = vmatpush1.bf16.msra.mxu0 %v1074
  %1373 = vmatprep.subr.bf16.mxu0 0
  %1374 = vmatpush1.bf16.msra.mxu0 %v1075
  %1375 = vmatprep.subr.bf16.mxu0 0
  %1376 = vmatpush1.bf16.msra.mxu0 %v1076
  %1377 = vmatprep.subr.bf16.mxu0 0
  %1378 = vmatpush1.bf16.msra.mxu0 %v1077
  %1379 = vmatprep.subr.bf16.mxu0 0
  %1380 = vmatpush1.bf16.msra.mxu0 %v1078
  %1381 = vmatprep.mubr.bf16.mxu0 %v444
  %1382 = vmatmul.mubr.bf16.gmra.mrb[0].mxu0 %v443
  %v1383 = vpop.f32.mrb[0].mxu0
  %v1384 = vadd.f32 0.0, %v1383
  %v1385 = vpop.f32.mrb[0].mxu0
  %v1386 = vpop.f32.mrb[0].mxu0
  %v1387 = vadd.f32 0.0, %v1386
  %v1388 = vpop.f32.mrb[0].mxu0
  %1389 = vmatprep.mubr.bf16.mxu0 %v462
  %1390 = vmatmul.mubr.bf16.gmra.mrb[0].mxu0 %v461
  %v1391 = vpop.f32.mrb[0].mxu0
  %v1392 = vadd.f32 0.0, %v1391
  %v1393 = vpop.f32.mrb[0].mxu0
  %v1394 = vpop.f32.mrb[0].mxu0
  %v1395 = vadd.f32 0.0, %v1394
  %v1396 = vpop.f32.mrb[0].mxu0
  %1397 = vdwg.mxu0
  %1398 = vmatprep.subr.bf16.mxu0 0
  %1399 = vmatpush1.bf16.msra.mxu0 %v1079
  %1400 = vmatprep.subr.bf16.mxu0 0
  %1401 = vmatpush1.bf16.msra.mxu0 %v1080
  %1402 = vmatprep.subr.bf16.mxu0 0
  %1403 = vmatpush1.bf16.msra.mxu0 %v1081
  %1404 = vmatprep.subr.bf16.mxu0 0
  %1405 = vmatpush1.bf16.msra.mxu0 %v1082
  %1406 = vmatprep.subr.bf16.mxu0 0
  %1407 = vmatpush1.bf16.msra.mxu0 %v1083
  %1408 = vmatprep.subr.bf16.mxu0 0
  %1409 = vmatpush1.bf16.msra.mxu0 %v1084
  %1410 = vmatprep.subr.bf16.mxu0 0
  %1411 = vmatpush1.bf16.msra.mxu0 %v1085
  %1412 = vmatprep.subr.bf16.mxu0 0
  %1413 = vmatpush1.bf16.msra.mxu0 %v1086
  %1414 = vmatprep.subr.bf16.mxu0 0
  %1415 = vmatpush1.bf16.msra.mxu0 %v1087
  %1416 = vmatprep.subr.bf16.mxu0 0
  %1417 = vmatpush1.bf16.msra.mxu0 %v1088
  %1418 = vmatprep.subr.bf16.mxu0 0
  %1419 = vmatpush1.bf16.msra.mxu0 %v1089
  %1420 = vmatprep.subr.bf16.mxu0 0
  %1421 = vmatpush1.bf16.msra.mxu0 %v1090
  %1422 = vmatprep.subr.bf16.mxu0 0
  %1423 = vmatpush1.bf16.msra.mxu0 %v1091
  %1424 = vmatprep.subr.bf16.mxu0 0
  %1425 = vmatpush1.bf16.msra.mxu0 %v1092
  %1426 = vmatprep.subr.bf16.mxu0 0
  %1427 = vmatpush1.bf16.msra.mxu0 %v1093
  %1428 = vmatprep.subr.bf16.mxu0 0
  %1429 = vmatpush1.bf16.msra.mxu0 %v1094
  %1430 = vmatprep.mubr.bf16.mxu0 %v446
  %1431 = vmatmul.mubr.bf16.gmra.mrb[0].mxu0 %v445
  %v1432 = vpop.f32.mrb[0].mxu0
  %v1433 = vadd.f32 %v1384, %v1432
  %v1434 = vpop.f32.mrb[0].mxu0
  %v1435 = vpop.f32.mrb[0].mxu0
  %v1436 = vadd.f32 %v1387, %v1435
  %v1437 = vpop.f32.mrb[0].mxu0
  %1438 = vmatprep.mubr.bf16.mxu0 %v464
  %1439 = vmatmul.mubr.bf16.gmra.mrb[0].mxu0 %v463
  %v1440 = vpop.f32.mrb[0].mxu0
  %v1441 = vadd.f32 %v1392, %v1440
  %v1442 = vpop.f32.mrb[0].mxu0
  %v1443 = vpop.f32.mrb[0].mxu0
  %v1444 = vadd.f32 %v1395, %v1443
  %v1445 = vpop.f32.mrb[0].mxu0
  %1446 = vdwg.mxu0
  %1447 = vmatprep.subr.bf16.mxu0 0
  %1448 = vmatpush1.bf16.msra.mxu0 %v1095
  %1449 = vmatprep.subr.bf16.mxu0 0
  %1450 = vmatpush1.bf16.msra.mxu0 %v1096
  %1451 = vmatprep.subr.bf16.mxu0 0
  %1452 = vmatpush1.bf16.msra.mxu0 %v1097
  %1453 = vmatprep.subr.bf16.mxu0 0
  %1454 = vmatpush1.bf16.msra.mxu0 %v1098
  %1455 = vmatprep.subr.bf16.mxu0 0
  %1456 = vmatpush1.bf16.msra.mxu0 %v1099
  %1457 = vmatprep.subr.bf16.mxu0 0
  %1458 = vmatpush1.bf16.msra.mxu0 %v1100
  %1459 = vmatprep.subr.bf16.mxu0 0
  %1460 = vmatpush1.bf16.msra.mxu0 %v1101
  %1461 = vmatprep.subr.bf16.mxu0 0
  %1462 = vmatpush1.bf16.msra.mxu0 %v1102
  %1463 = vmatprep.subr.bf16.mxu0 0
  %1464 = vmatpush1.bf16.msra.mxu0 %v1103
  %1465 = vmatprep.subr.bf16.mxu0 0
  %1466 = vmatpush1.bf16.msra.mxu0 %v1104
  %1467 = vmatprep.subr.bf16.mxu0 0
  %1468 = vmatpush1.bf16.msra.mxu0 %v1105
  %1469 = vmatprep.subr.bf16.mxu0 0
  %1470 = vmatpush1.bf16.msra.mxu0 %v1106
  %1471 = vmatprep.subr.bf16.mxu0 0
  %1472 = vmatpush1.bf16.msra.mxu0 %v1107
  %1473 = vmatprep.subr.bf16.mxu0 0
  %1474 = vmatpush1.bf16.msra.mxu0 %v1108
  %1475 = vmatprep.subr.bf16.mxu0 0
  %1476 = vmatpush1.bf16.msra.mxu0 %v1109
  %1477 = vmatprep.subr.bf16.mxu0 0
  %1478 = vmatpush1.bf16.msra.mxu0 %v1110
  %1479 = vmatprep.mubr.bf16.mxu0 %v448
  %1480 = vmatmul.mubr.bf16.gmra.mrb[0].mxu0 %v447
  %v1481 = vpop.f32.mrb[0].mxu0
  %v1482 = vadd.f32 %v1433, %v1481
  %v1483 = vpop.f32.mrb[0].mxu0
  %v1484 = vpop.f32.mrb[0].mxu0
  %v1485 = vadd.f32 %v1436, %v1484
  %v1486 = vpop.f32.mrb[0].mxu0
  %1487 = vmatprep.mubr.bf16.mxu0 %v466
  %1488 = vmatmul.mubr.bf16.gmra.mrb[0].mxu0 %v465
  %v1489 = vpop.f32.mrb[0].mxu0
  %v1490 = vadd.f32 %v1441, %v1489
  %v1491 = vpop.f32.mrb[0].mxu0
  %v1492 = vpop.f32.mrb[0].mxu0
  %v1493 = vadd.f32 %v1444, %v1492
  %v1494 = vpop.f32.mrb[0].mxu0
  %1495 = vdwg.mxu0
  %1496 = vmatprep.subr.bf16.mxu0 0
  %1497 = vmatpush1.bf16.msra.mxu0 %v1111
  %1498 = vmatprep.subr.bf16.mxu0 0
  %1499 = vmatpush1.bf16.msra.mxu0 %v1112
  %1500 = vmatprep.subr.bf16.mxu0 0
  %1501 = vmatpush1.bf16.msra.mxu0 %v1113
  %1502 = vmatprep.subr.bf16.mxu0 0
  %1503 = vmatpush1.bf16.msra.mxu0 %v1114
  %1504 = vmatprep.subr.bf16.mxu0 0
  %1505 = vmatpush1.bf16.msra.mxu0 %v1115
  %1506 = vmatprep.subr.bf16.mxu0 0
  %1507 = vmatpush1.bf16.msra.mxu0 %v1116
  %1508 = vmatprep.subr.bf16.mxu0 0
  %1509 = vmatpush1.bf16.msra.mxu0 %v1117
  %1510 = vmatprep.subr.bf16.mxu0 0
  %1511 = vmatpush1.bf16.msra.mxu0 %v1118
  %1512 = vmatprep.subr.bf16.mxu0 0
  %1513 = vmatpush1.bf16.msra.mxu0 %v1119
  %1514 = vmatprep.subr.bf16.mxu0 0
  %1515 = vmatpush1.bf16.msra.mxu0 %v1120
  %1516 = vmatprep.subr.bf16.mxu0 0
  %1517 = vmatpush1.bf16.msra.mxu0 %v1121
  %1518 = vmatprep.subr.bf16.mxu0 0
  %1519 = vmatpush1.bf16.msra.mxu0 %v1122
  %1520 = vmatprep.subr.bf16.mxu0 0
  %1521 = vmatpush1.bf16.msra.mxu0 %v1123
  %1522 = vmatprep.subr.bf16.mxu0 0
  %1523 = vmatpush1.bf16.msra.mxu0 %v1124
  %1524 = vmatprep.subr.bf16.mxu0 0
  %1525 = vmatpush1.bf16.msra.mxu0 %v1125
  %1526 = vmatprep.subr.bf16.mxu0 0
  %1527 = vmatpush1.bf16.msra.mxu0 %v1126
  %1528 = vmatprep.mubr.bf16.mxu0 %v450
  %1529 = vmatmul.mubr.bf16.gmra.mrb[0].mxu0 %v449
  %v1530 = vpop.f32.mrb[0].mxu0
  %v1531 = vadd.f32 %v1482, %v1530
  %v1532 = vpop.f32.mrb[0].mxu0
  %v1533 = vpop.f32.mrb[0].mxu0
  %v1534 = vadd.f32 %v1485, %v1533
  %v1535 = vpop.f32.mrb[0].mxu0
  %1536 = vmatprep.mubr.bf16.mxu0 %v468
  %1537 = vmatmul.mubr.bf16.gmra.mrb[0].mxu0 %v467
  %v1538 = vpop.f32.mrb[0].mxu0
  %v1539 = vadd.f32 %v1490, %v1538
  %v1540 = vpop.f32.mrb[0].mxu0
  %v1541 = vpop.f32.mrb[0].mxu0
  %v1542 = vadd.f32 %v1493, %v1541
  %v1543 = vpop.f32.mrb[0].mxu0
  %1544 = vdwg.mxu0
  %1545 = vmatprep.subr.bf16.mxu0 0
  %1546 = vmatpush1.bf16.msra.mxu0 %v1127
  %1547 = vmatprep.subr.bf16.mxu0 0
  %1548 = vmatpush1.bf16.msra.mxu0 %v1128
  %1549 = vmatprep.subr.bf16.mxu0 0
  %1550 = vmatpush1.bf16.msra.mxu0 %v1129
  %1551 = vmatprep.subr.bf16.mxu0 0
  %1552 = vmatpush1.bf16.msra.mxu0 %v1130
  %1553 = vmatprep.subr.bf16.mxu0 0
  %1554 = vmatpush1.bf16.msra.mxu0 %v1131
  %1555 = vmatprep.subr.bf16.mxu0 0
  %1556 = vmatpush1.bf16.msra.mxu0 %v1132
  %1557 = vmatprep.subr.bf16.mxu0 0
  %1558 = vmatpush1.bf16.msra.mxu0 %v1133
  %1559 = vmatprep.subr.bf16.mxu0 0
  %1560 = vmatpush1.bf16.msra.mxu0 %v1134
  %1561 = vmatprep.subr.bf16.mxu0 0
  %1562 = vmatpush1.bf16.msra.mxu0 %v1135
  %1563 = vmatprep.subr.bf16.mxu0 0
  %1564 = vmatpush1.bf16.msra.mxu0 %v1136
  %1565 = vmatprep.subr.bf16.mxu0 0
  %1566 = vmatpush1.bf16.msra.mxu0 %v1137
  %1567 = vmatprep.subr.bf16.mxu0 0
  %1568 = vmatpush1.bf16.msra.mxu0 %v1138
  %1569 = vmatprep.subr.bf16.mxu0 0
  %1570 = vmatpush1.bf16.msra.mxu0 %v1139
  %1571 = vmatprep.subr.bf16.mxu0 0
  %1572 = vmatpush1.bf16.msra.mxu0 %v1140
  %1573 = vmatprep.subr.bf16.mxu0 0
  %1574 = vmatpush1.bf16.msra.mxu0 %v1141
  %1575 = vmatprep.subr.bf16.mxu0 0
  %1576 = vmatpush1.bf16.msra.mxu0 %v1142
  %1577 = vmatprep.mubr.bf16.mxu0 %v452
  %1578 = vmatmul.mubr.bf16.gmra.mrb[0].mxu0 %v451
  %v1579 = vpop.f32.mrb[0].mxu0
  %v1580 = vadd.f32 %v1531, %v1579
  %v1581 = vpop.f32.mrb[0].mxu0
  %v1582 = vpop.f32.mrb[0].mxu0
  %v1583 = vadd.f32 %v1534, %v1582
  %v1584 = vpop.f32.mrb[0].mxu0
  %1585 = vmatprep.mubr.bf16.mxu0 %v470
  %1586 = vmatmul.mubr.bf16.gmra.mrb[0].mxu0 %v469
  %v1587 = vpop.f32.mrb[0].mxu0
  %v1588 = vadd.f32 %v1539, %v1587
  %v1589 = vpop.f32.mrb[0].mxu0
  %v1590 = vpop.f32.mrb[0].mxu0
  %v1591 = vadd.f32 %v1542, %v1590
  %v1592 = vpop.f32.mrb[0].mxu0
  %1593 = vdwg.mxu0
  %1594 = vmatprep.subr.bf16.mxu0 0
  %1595 = vmatpush1.bf16.msra.mxu0 %v1143
  %1596 = vmatprep.subr.bf16.mxu0 0
  %1597 = vmatpush1.bf16.msra.mxu0 %v1144
  %1598 = vmatprep.subr.bf16.mxu0 0
  %1599 = vmatpush1.bf16.msra.mxu0 %v1145
  %1600 = vmatprep.subr.bf16.mxu0 0
  %1601 = vmatpush1.bf16.msra.mxu0 %v1146
  %1602 = vmatprep.subr.bf16.mxu0 0
  %1603 = vmatpush1.bf16.msra.mxu0 %v1147
  %1604 = vmatprep.subr.bf16.mxu0 0
  %1605 = vmatpush1.bf16.msra.mxu0 %v1148
  %1606 = vmatprep.subr.bf16.mxu0 0
  %1607 = vmatpush1.bf16.msra.mxu0 %v1149
  %1608 = vmatprep.subr.bf16.mxu0 0
  %1609 = vmatpush1.bf16.msra.mxu0 %v1150
  %1610 = vmatprep.subr.bf16.mxu0 0
  %1611 = vmatpush1.bf16.msra.mxu0 %v1151
  %1612 = vmatprep.subr.bf16.mxu0 0
  %1613 = vmatpush1.bf16.msra.mxu0 %v1152
  %1614 = vmatprep.subr.bf16.mxu0 0
  %1615 = vmatpush1.bf16.msra.mxu0 %v1153
  %1616 = vmatprep.subr.bf16.mxu0 0
  %1617 = vmatpush1.bf16.msra.mxu0 %v1154
  %1618 = vmatprep.subr.bf16.mxu0 0
  %1619 = vmatpush1.bf16.msra.mxu0 %v1155
  %1620 = vmatprep.subr.bf16.mxu0 0
  %1621 = vmatpush1.bf16.msra.mxu0 %v1156
  %1622 = vmatprep.subr.bf16.mxu0 0
  %1623 = vmatpush1.bf16.msra.mxu0 %v1157
  %1624 = vmatprep.subr.bf16.mxu0 0
  %1625 = vmatpush1.bf16.msra.mxu0 %v1158
  %1626 = vmatprep.mubr.bf16.mxu0 %v454
  %1627 = vmatmul.mubr.bf16.gmra.mrb[0].mxu0 %v453
  %v1628 = vpop.f32.mrb[0].mxu0
  %v1629 = vadd.f32 %v1580, %v1628
  %v1630 = vpop.f32.mrb[0].mxu0
  %v1631 = vpop.f32.mrb[0].mxu0
  %v1632 = vadd.f32 %v1583, %v1631
  %v1633 = vpop.f32.mrb[0].mxu0
  %1634 = vmatprep.mubr.bf16.mxu0 %v472
  %1635 = vmatmul.mubr.bf16.gmra.mrb[0].mxu0 %v471
  %v1636 = vpop.f32.mrb[0].mxu0
  %v1637 = vadd.f32 %v1588, %v1636
  %v1638 = vpop.f32.mrb[0].mxu0
  %v1639 = vpop.f32.mrb[0].mxu0
  %v1640 = vadd.f32 %v1591, %v1639
  %v1641 = vpop.f32.mrb[0].mxu0
  %1642 = vdwg.mxu0
  %1643 = vmatprep.subr.bf16.mxu0 0
  %1644 = vmatpush1.bf16.msra.mxu0 %v1159
  %1645 = vmatprep.subr.bf16.mxu0 0
  %1646 = vmatpush1.bf16.msra.mxu0 %v1160
  %1647 = vmatprep.subr.bf16.mxu0 0
  %1648 = vmatpush1.bf16.msra.mxu0 %v1161
  %1649 = vmatprep.subr.bf16.mxu0 0
  %1650 = vmatpush1.bf16.msra.mxu0 %v1162
  %1651 = vmatprep.subr.bf16.mxu0 0
  %1652 = vmatpush1.bf16.msra.mxu0 %v1163
  %1653 = vmatprep.subr.bf16.mxu0 0
  %1654 = vmatpush1.bf16.msra.mxu0 %v1164
  %1655 = vmatprep.subr.bf16.mxu0 0
  %1656 = vmatpush1.bf16.msra.mxu0 %v1165
  %1657 = vmatprep.subr.bf16.mxu0 0
  %1658 = vmatpush1.bf16.msra.mxu0 %v1166
  %1659 = vmatprep.subr.bf16.mxu0 0
  %1660 = vmatpush1.bf16.msra.mxu0 %v1167
  %1661 = vmatprep.subr.bf16.mxu0 0
  %1662 = vmatpush1.bf16.msra.mxu0 %v1168
  %1663 = vmatprep.subr.bf16.mxu0 0
  %1664 = vmatpush1.bf16.msra.mxu0 %v1169
  %1665 = vmatprep.subr.bf16.mxu0 0
  %1666 = vmatpush1.bf16.msra.mxu0 %v1170
  %1667 = vmatprep.subr.bf16.mxu0 0
  %1668 = vmatpush1.bf16.msra.mxu0 %v1171
  %1669 = vmatprep.subr.bf16.mxu0 0
  %1670 = vmatpush1.bf16.msra.mxu0 %v1172
  %1671 = vmatprep.subr.bf16.mxu0 0
  %1672 = vmatpush1.bf16.msra.mxu0 %v1173
  %1673 = vmatprep.subr.bf16.mxu0 0
  %1674 = vmatpush1.bf16.msra.mxu0 %v1174
  %1675 = vmatprep.mubr.bf16.mxu0 %v456
  %1676 = vmatmul.mubr.bf16.gmra.mrb[0].mxu0 %v455
  %v1677 = vpop.f32.mrb[0].mxu0
  %v1678 = vadd.f32 %v1629, %v1677
  %v1679 = vpop.f32.mrb[0].mxu0
  %v1680 = vpop.f32.mrb[0].mxu0
  %v1681 = vadd.f32 %v1632, %v1680
  %v1682 = vpop.f32.mrb[0].mxu0
  %1683 = vmatprep.mubr.bf16.mxu0 %v474
  %1684 = vmatmul.mubr.bf16.gmra.mrb[0].mxu0 %v473
  %v1685 = vpop.f32.mrb[0].mxu0
  %v1686 = vadd.f32 %v1637, %v1685
  %v1687 = vpop.f32.mrb[0].mxu0
  %v1688 = vpop.f32.mrb[0].mxu0
  %v1689 = vadd.f32 %v1640, %v1688
  %v1690 = vpop.f32.mrb[0].mxu0
  %1691 = vdwg.mxu0
  %1692 = vmatprep.subr.bf16.mxu0 0
  %1693 = vmatpush1.bf16.msra.mxu0 %v1175
  %1694 = vmatprep.subr.bf16.mxu0 0
  %1695 = vmatpush1.bf16.msra.mxu0 %v1176
  %1696 = vmatprep.subr.bf16.mxu0 0
  %1697 = vmatpush1.bf16.msra.mxu0 %v1177
  %1698 = vmatprep.subr.bf16.mxu0 0
  %1699 = vmatpush1.bf16.msra.mxu0 %v1178
  %1700 = vmatprep.subr.bf16.mxu0 0
  %1701 = vmatpush1.bf16.msra.mxu0 %v1179
  %1702 = vmatprep.subr.bf16.mxu0 0
  %1703 = vmatpush1.bf16.msra.mxu0 %v1180
  %1704 = vmatprep.subr.bf16.mxu0 0
  %1705 = vmatpush1.bf16.msra.mxu0 %v1181
  %1706 = vmatprep.subr.bf16.mxu0 0
  %1707 = vmatpush1.bf16.msra.mxu0 %v1182
  %1708 = vmatprep.subr.bf16.mxu0 0
  %1709 = vmatpush1.bf16.msra.mxu0 %v1183
  %1710 = vmatprep.subr.bf16.mxu0 0
  %1711 = vmatpush1.bf16.msra.mxu0 %v1184
  %1712 = vmatprep.subr.bf16.mxu0 0
  %1713 = vmatpush1.bf16.msra.mxu0 %v1185
  %1714 = vmatprep.subr.bf16.mxu0 0
  %1715 = vmatpush1.bf16.msra.mxu0 %v1186
  %1716 = vmatprep.subr.bf16.mxu0 0
  %1717 = vmatpush1.bf16.msra.mxu0 %v1187
  %1718 = vmatprep.subr.bf16.mxu0 0
  %1719 = vmatpush1.bf16.msra.mxu0 %v1188
  %1720 = vmatprep.subr.bf16.mxu0 0
  %1721 = vmatpush1.bf16.msra.mxu0 %v1189
  %1722 = vmatprep.subr.bf16.mxu0 0
  %1723 = vmatpush1.bf16.msra.mxu0 %v1190
  %1724 = vmatprep.mubr.bf16.mxu0 %v458
  %1725 = vmatmul.mubr.bf16.gmra.mrb[0].mxu0 %v457
  %v1726 = vpop.f32.mrb[0].mxu0
  %v1727 = vadd.f32 %v1678, %v1726
  %v1728 = vpop.f32.mrb[0].mxu0
  %v1729 = vpop.f32.mrb[0].mxu0
  %v1730 = vadd.f32 %v1681, %v1729
  %v1731 = vpop.f32.mrb[0].mxu0
  %1732 = vmatprep.mubr.bf16.mxu0 %v476
  %1733 = vmatmul.mubr.bf16.gmra.mrb[0].mxu0 %v475
  %v1734 = vpop.f32.mrb[0].mxu0
  %v1735 = vadd.f32 %v1686, %v1734
  %v1736 = vpop.f32.mrb[0].mxu0
  %v1737 = vpop.f32.mrb[0].mxu0
  %v1738 = vadd.f32 %v1689, %v1737
  %v1739 = vpop.f32.mrb[0].mxu0
  %1740 = vdwg.mxu0
  %1741 = vmatprep.subr.bf16.mxu0 0
  %1742 = vmatpush1.bf16.msra.mxu0 %v1191
  %1743 = vmatprep.subr.bf16.mxu0 0
  %1744 = vmatpush1.bf16.msra.mxu0 %v1192
  %1745 = vmatprep.subr.bf16.mxu0 0
  %1746 = vmatpush1.bf16.msra.mxu0 %v1193
  %1747 = vmatprep.subr.bf16.mxu0 0
  %1748 = vmatpush1.bf16.msra.mxu0 %v1194
  %1749 = vmatprep.subr.bf16.mxu0 0
  %1750 = vmatpush1.bf16.msra.mxu0 %v1195
  %1751 = vmatprep.subr.bf16.mxu0 0
  %1752 = vmatpush1.bf16.msra.mxu0 %v1196
  %1753 = vmatprep.subr.bf16.mxu0 0
  %1754 = vmatpush1.bf16.msra.mxu0 %v1197
  %1755 = vmatprep.subr.bf16.mxu0 0
  %1756 = vmatpush1.bf16.msra.mxu0 %v1198
  %1757 = vmatprep.subr.bf16.mxu0 0
  %1758 = vmatpush1.bf16.msra.mxu0 %v1199
  %1759 = vmatprep.subr.bf16.mxu0 0
  %1760 = vmatpush1.bf16.msra.mxu0 %v1347
  %1761 = vmatprep.subr.bf16.mxu0 0
  %1762 = vmatpush1.bf16.msra.mxu0 0
  %1763 = vmatprep.subr.bf16.mxu0 0
  %1764 = vmatpush1.bf16.msra.mxu0 0
  %1765 = vmatprep.subr.bf16.mxu0 0
  %1766 = vmatpush1.bf16.msra.mxu0 0
  %1767 = vmatprep.subr.bf16.mxu0 0
  %1768 = vmatpush1.bf16.msra.mxu0 0
  %1769 = vmatprep.subr.bf16.mxu0 0
  %1770 = vmatpush1.bf16.msra.mxu0 0
  %1771 = vmatprep.subr.bf16.mxu0 0
  %1772 = vmatpush1.bf16.msra.mxu0 0
  %1773 = vmatprep.mubr.bf16.mxu0 %v1340
  %1774 = vmatmul.mubr.bf16.gmra.mrb[0].mxu0 %v459
  %v1775 = vpop.f32.mrb[0].mxu0
  %v1776 = vadd.f32 %v1727, %v1775
  %v1777 = vpop.f32.mrb[0].mxu0
  %v1778 = vpop.f32.mrb[0].mxu0
  %v1779 = vadd.f32 %v1730, %v1778
  %v1780 = vpop.f32.mrb[0].mxu0
  %1781 = vmatprep.mubr.bf16.mxu0 %v1343
  %1782 = vmatmul.mubr.bf16.gmra.mrb[0].mxu0 %v477
  %v1783 = vpop.f32.mrb[0].mxu0
  %v1784 = vadd.f32 %v1735, %v1783
  %v1785 = vpop.f32.mrb[0].mxu0
  %v1786 = vpop.f32.mrb[0].mxu0
  %v1787 = vadd.f32 %v1738, %v1786
  %v1788 = vpop.f32.mrb[0].mxu0
  %1789 = vdwg.mxu0
  %v1790 = vld [vmem:[%s1] sm:$0xff]
  %v1791 = vld [vmem:[%s1 + $0x8] sm:$0xff]
  %v1792 = vld [vmem:[%s1 + $0x10] sm:$0xff]
  %v1793 = vld [vmem:[%s1 + $0x18] sm:$0xff]
  %v1794 = vld [vmem:[%s1 + $0x20] sm:$0xff]
  %v1795 = vld [vmem:[%s1 + $0x28] sm:$0xff]
  %v1796 = vld [vmem:[%s1 + $0x30] sm:$0xff]
  %v1797 = vld [vmem:[%s1 + $0x38] sm:$0xff]
  %v1798 = vld [vmem:[%s1 + $0x40] sm:$0xff]
  %v1799 = vld [vmem:[%s1 + $0x48] sm:$0xff]
  %v1800 = vld [vmem:[%s1 + $0x50] sm:$0xff]
  %v1801 = vld [vmem:[%s1 + $0x58] sm:$0xff]
  %v1802 = vld [vmem:[%s1 + $0x60] sm:$0xff]
  %v1803 = vld [vmem:[%s1 + $0x68] sm:$0xff]
  %v1804 = vld [vmem:[%s1 + $0x70] sm:$0xff]
  %v1805 = vld [vmem:[%s1 + $0x78] sm:$0xff]
  %v1806 = vld [vmem:[%s1 + $0x80] sm:$0xff]
  %v1807 = vld [vmem:[%s1 + $0x88] sm:$0xff]
  %v1808 = vld [vmem:[%s1 + $0x90] sm:$0xff]
  %v1809 = vld [vmem:[%s1 + $0x98] sm:$0xff]
  %v1810 = vld [vmem:[%s1 + $0xa0] sm:$0xff]
  %v1811 = vld [vmem:[%s1 + $0xa8] sm:$0xff]
  %v1812 = vld [vmem:[%s1 + $0xb0] sm:$0xff]
  %v1813 = vld [vmem:[%s1 + $0xb8] sm:$0xff]
  %v1814 = vld [vmem:[%s1 + $0xc0] sm:$0xff]
  %v1815 = vld [vmem:[%s1 + $0xc8] sm:$0xff]
  %v1816 = vld [vmem:[%s1 + $0xd0] sm:$0xff]
  %v1817 = vld [vmem:[%s1 + $0xd8] sm:$0xff]
  %v1818 = vld [vmem:[%s1 + $0xe0] sm:$0xff]
  %v1819 = vld [vmem:[%s1 + $0xe8] sm:$0xff]
  %v1820 = vld [vmem:[%s1 + $0xf0] sm:$0xff]
  %v1821 = vld [vmem:[%s1 + $0xf8] sm:$0xff]
  %v1822 = vld [vmem:[%s1 + $0x100] sm:$0xff]
  %v1823 = vld [vmem:[%s1 + $0x108] sm:$0xff]
  %v1824 = vld [vmem:[%s1 + $0x110] sm:$0xff]
  %v1825 = vld [vmem:[%s1 + $0x118] sm:$0xff]
  %v1862 = vunpack.c.l.b16 %v1790
  %v1863 = vunpack.c.h.b16 %v1790
  %v1864 = vunpack.c.l.b16 %v1791
  %v1865 = vunpack.c.h.b16 %v1791
  %v1866 = vunpack.c.l.b16 %v1792
  %v1867 = vunpack.c.h.b16 %v1792
  %v1868 = vunpack.c.l.b16 %v1793
  %v1869 = vunpack.c.h.b16 %v1793
  %v1870 = vunpack.c.l.b16 %v1794
  %v1871 = vunpack.c.h.b16 %v1794
  %v1872 = vunpack.c.l.b16 %v1795
  %v1873 = vunpack.c.h.b16 %v1795
  %v1874 = vunpack.c.l.b16 %v1796
  %v1875 = vunpack.c.h.b16 %v1796
  %v1876 = vunpack.c.l.b16 %v1797
  %v1877 = vunpack.c.h.b16 %v1797
  %v1878 = vunpack.c.l.b16 %v1798
  %v1879 = vunpack.c.h.b16 %v1798
  %v1880 = vunpack.c.l.b16 %v1799
  %v1881 = vunpack.c.h.b16 %v1799
  %v1882 = vunpack.c.l.b16 %v1800
  %v1883 = vunpack.c.h.b16 %v1800
  %v1884 = vunpack.c.l.b16 %v1801
  %v1885 = vunpack.c.h.b16 %v1801
  %v1886 = vunpack.c.l.b16 %v1802
  %v1887 = vunpack.c.h.b16 %v1802
  %v1888 = vunpack.c.l.b16 %v1803
  %v1889 = vunpack.c.h.b16 %v1803
  %v1890 = vunpack.c.l.b16 %v1804
  %v1891 = vunpack.c.h.b16 %v1804
  %v1892 = vunpack.c.l.b16 %v1805
  %v1893 = vunpack.c.h.b16 %v1805
  %v1894 = vunpack.c.l.b16 %v1806
  %v1895 = vunpack.c.h.b16 %v1806
  %v1896 = vunpack.c.l.b16 %v1807
  %v1897 = vunpack.c.h.b16 %v1807
  %v1898 = vunpack.c.l.b16 %v1808
  %v1899 = vunpack.c.h.b16 %v1808
  %v1900 = vunpack.c.l.b16 %v1809
  %v1901 = vunpack.c.h.b16 %v1809
  %v1902 = vunpack.c.l.b16 %v1810
  %v1903 = vunpack.c.h.b16 %v1810
  %v1904 = vunpack.c.l.b16 %v1811
  %v1905 = vunpack.c.h.b16 %v1811
  %v1906 = vunpack.c.l.b16 %v1812
  %v1907 = vunpack.c.h.b16 %v1812
  %v1908 = vunpack.c.l.b16 %v1813
  %v1909 = vunpack.c.h.b16 %v1813
  %v1910 = vunpack.c.l.b16 %v1814
  %v1911 = vunpack.c.h.b16 %v1814
  %v1912 = vunpack.c.l.b16 %v1815
  %v1913 = vunpack.c.h.b16 %v1815
  %v1914 = vunpack.c.l.b16 %v1816
  %v1915 = vunpack.c.h.b16 %v1816
  %v1916 = vunpack.c.l.b16 %v1817
  %v1917 = vunpack.c.h.b16 %v1817
  %v1918 = vunpack.c.l.b16 %v1818
  %v1919 = vunpack.c.h.b16 %v1818
  %v1920 = vunpack.c.l.b16 %v1819
  %v1921 = vunpack.c.h.b16 %v1819
  %v1922 = vunpack.c.l.b16 %v1820
  %v1923 = vunpack.c.h.b16 %v1820
  %v1924 = vunpack.c.l.b16 %v1821
  %v1925 = vunpack.c.h.b16 %v1821
  %v1926 = vunpack.c.l.b16 %v1822
  %v1927 = vunpack.c.h.b16 %v1822
  %v1928 = vunpack.c.l.b16 %v1823
  %v1929 = vunpack.c.h.b16 %v1823
  %v1930 = vunpack.c.l.b16 %v1824
  %v1931 = vunpack.c.h.b16 %v1824
  %v1932 = vunpack.c.l.b16 %v1825
  %v1933 = vunpack.c.h.b16 %v1825
  %v1934 = vpack.c.b16 %v1880, %v1862
  %v1935 = vpack.c.b16 %v1881, %v1863
  %v1936 = vpack.c.b16 %v1882, %v1864
  %v1937 = vpack.c.b16 %v1883, %v1865
  %v1938 = vpack.c.b16 %v1884, %v1866
  %v1939 = vpack.c.b16 %v1885, %v1867
  %v1940 = vpack.c.b16 %v1886, %v1868
  %v1941 = vpack.c.b16 %v1887, %v1869
  %v1942 = vpack.c.b16 %v1888, %v1870
  %v1943 = vpack.c.b16 %v1889, %v1871
  %v1944 = vpack.c.b16 %v1890, %v1872
  %v1945 = vpack.c.b16 %v1891, %v1873
  %v1946 = vpack.c.b16 %v1892, %v1874
  %v1947 = vpack.c.b16 %v1893, %v1875
  %v1948 = vpack.c.b16 %v1894, %v1876
  %v1949 = vpack.c.b16 %v1895, %v1877
  %v1950 = vpack.c.b16 %v1896, %v1878
  %v1951 = vpack.c.b16 %v1897, %v1879
  %v1952 = vpack.c.b16 %v1916, %v1898
  %v1953 = vpack.c.b16 %v1917, %v1899
  %v1954 = vpack.c.b16 %v1918, %v1900
  %v1955 = vpack.c.b16 %v1919, %v1901
  %v1956 = vpack.c.b16 %v1920, %v1902
  %v1957 = vpack.c.b16 %v1921, %v1903
  %v1958 = vpack.c.b16 %v1922, %v1904
  %v1959 = vpack.c.b16 %v1923, %v1905
  %v1960 = vpack.c.b16 %v1924, %v1906
  %v1961 = vpack.c.b16 %v1925, %v1907
  %v1962 = vpack.c.b16 %v1926, %v1908
  %v1963 = vpack.c.b16 %v1927, %v1909
  %v1964 = vpack.c.b16 %v1928, %v1910
  %v1965 = vpack.c.b16 %v1929, %v1911
  %v1966 = vpack.c.b16 %v1930, %v1912
  %v1967 = vpack.c.b16 %v1931, %v1913
  %v1968 = vpack.c.b16 %v1932, %v1914
  %v1969 = vpack.c.b16 %v1933, %v1915
  %v2005 = vsel %vm1338, %v1951, 0
  %v2008 = vsel %vm1338, %v1969, 0
  %2010 = vmatprep.subr.bf16.mxu0 0
  %2011 = vmatpush1.bf16.msra.mxu0 %v1063
  %2012 = vmatprep.subr.bf16.mxu0 0
  %2013 = vmatpush1.bf16.msra.mxu0 %v1064
  %2014 = vmatprep.subr.bf16.mxu0 0
  %2015 = vmatpush1.bf16.msra.mxu0 %v1065
  %2016 = vmatprep.subr.bf16.mxu0 0
  %2017 = vmatpush1.bf16.msra.mxu0 %v1066
  %2018 = vmatprep.subr.bf16.mxu0 0
  %2019 = vmatpush1.bf16.msra.mxu0 %v1067
  %2020 = vmatprep.subr.bf16.mxu0 0
  %2021 = vmatpush1.bf16.msra.mxu0 %v1068
  %2022 = vmatprep.subr.bf16.mxu0 0
  %2023 = vmatpush1.bf16.msra.mxu0 %v1069
  %2024 = vmatprep.subr.bf16.mxu0 0
  %2025 = vmatpush1.bf16.msra.mxu0 %v1070
  %2026 = vmatprep.subr.bf16.mxu0 0
  %2027 = vmatpush1.bf16.msra.mxu0 %v1071
  %2028 = vmatprep.subr.bf16.mxu0 0
  %2029 = vmatpush1.bf16.msra.mxu0 %v1072
  %2030 = vmatprep.subr.bf16.mxu0 0
  %2031 = vmatpush1.bf16.msra.mxu0 %v1073
  %2032 = vmatprep.subr.bf16.mxu0 0
  %2033 = vmatpush1.bf16.msra.mxu0 %v1074
  %2034 = vmatprep.subr.bf16.mxu0 0
  %2035 = vmatpush1.bf16.msra.mxu0 %v1075
  %2036 = vmatprep.subr.bf16.mxu0 0
  %2037 = vmatpush1.bf16.msra.mxu0 %v1076
  %2038 = vmatprep.subr.bf16.mxu0 0
  %2039 = vmatpush1.bf16.msra.mxu0 %v1077
  %2040 = vmatprep.subr.bf16.mxu0 0
  %2041 = vmatpush1.bf16.msra.mxu0 %v1078
  %2042 = vmatprep.mubr.bf16.mxu0 %v1935
  %2043 = vmatmul.mubr.bf16.gmra.mrb[0].mxu0 %v1934
  %v2044 = vpop.f32.mrb[0].mxu0
  %v2045 = vadd.f32 0.0, %v2044
  %v2046 = vpop.f32.mrb[0].mxu0
  %v2047 = vpop.f32.mrb[0].mxu0
  %v2048 = vadd.f32 0.0, %v2047
  %v2049 = vpop.f32.mrb[0].mxu0
  %2050 = vmatprep.mubr.bf16.mxu0 %v1953
  %2051 = vmatmul.mubr.bf16.gmra.mrb[0].mxu0 %v1952
  %v2052 = vpop.f32.mrb[0].mxu0
  %v2053 = vadd.f32 0.0, %v2052
  %v2054 = vpop.f32.mrb[0].mxu0
  %v2055 = vpop.f32.mrb[0].mxu0
  %v2056 = vadd.f32 0.0, %v2055
  %v2057 = vpop.f32.mrb[0].mxu0
  %2058 = vdwg.mxu0
  %2059 = vmatprep.subr.bf16.mxu0 0
  %2060 = vmatpush1.bf16.msra.mxu0 %v1079
  %2061 = vmatprep.subr.bf16.mxu0 0
  %2062 = vmatpush1.bf16.msra.mxu0 %v1080
  %2063 = vmatprep.subr.bf16.mxu0 0
  %2064 = vmatpush1.bf16.msra.mxu0 %v1081
  %2065 = vmatprep.subr.bf16.mxu0 0
  %2066 = vmatpush1.bf16.msra.mxu0 %v1082
  %2067 = vmatprep.subr.bf16.mxu0 0
  %2068 = vmatpush1.bf16.msra.mxu0 %v1083
  %2069 = vmatprep.subr.bf16.mxu0 0
  %2070 = vmatpush1.bf16.msra.mxu0 %v1084
  %2071 = vmatprep.subr.bf16.mxu0 0
  %2072 = vmatpush1.bf16.msra.mxu0 %v1085
  %2073 = vmatprep.subr.bf16.mxu0 0
  %2074 = vmatpush1.bf16.msra.mxu0 %v1086
  %2075 = vmatprep.subr.bf16.mxu0 0
  %2076 = vmatpush1.bf16.msra.mxu0 %v1087
  %2077 = vmatprep.subr.bf16.mxu0 0
  %2078 = vmatpush1.bf16.msra.mxu0 %v1088
  %2079 = vmatprep.subr.bf16.mxu0 0
  %2080 = vmatpush1.bf16.msra.mxu0 %v1089
  %2081 = vmatprep.subr.bf16.mxu0 0
  %2082 = vmatpush1.bf16.msra.mxu0 %v1090
  %2083 = vmatprep.subr.bf16.mxu0 0
  %2084 = vmatpush1.bf16.msra.mxu0 %v1091
  %2085 = vmatprep.subr.bf16.mxu0 0
  %2086 = vmatpush1.bf16.msra.mxu0 %v1092
  %2087 = vmatprep.subr.bf16.mxu0 0
  %2088 = vmatpush1.bf16.msra.mxu0 %v1093
  %2089 = vmatprep.subr.bf16.mxu0 0
  %2090 = vmatpush1.bf16.msra.mxu0 %v1094
  %2091 = vmatprep.mubr.bf16.mxu0 %v1937
  %2092 = vmatmul.mubr.bf16.gmra.mrb[0].mxu0 %v1936
  %v2093 = vpop.f32.mrb[0].mxu0
  %v2094 = vadd.f32 %v2045, %v2093
  %v2095 = vpop.f32.mrb[0].mxu0
  %v2096 = vpop.f32.mrb[0].mxu0
  %v2097 = vadd.f32 %v2048, %v2096
  %v2098 = vpop.f32.mrb[0].mxu0
  %2099 = vmatprep.mubr.bf16.mxu0 %v1955
  %2100 = vmatmul.mubr.bf16.gmra.mrb[0].mxu0 %v1954
  %v2101 = vpop.f32.mrb[0].mxu0
  %v2102 = vadd.f32 %v2053, %v2101
  %v2103 = vpop.f32.mrb[0].mxu0
  %v2104 = vpop.f32.mrb[0].mxu0
  %v2105 = vadd.f32 %v2056, %v2104
  %v2106 = vpop.f32.mrb[0].mxu0
  %2107 = vdwg.mxu0
  %2108 = vmatprep.subr.bf16.mxu0 0
  %2109 = vmatpush1.bf16.msra.mxu0 %v1095
  %2110 = vmatprep.subr.bf16.mxu0 0
  %2111 = vmatpush1.bf16.msra.mxu0 %v1096
  %2112 = vmatprep.subr.bf16.mxu0 0
  %2113 = vmatpush1.bf16.msra.mxu0 %v1097
  %2114 = vmatprep.subr.bf16.mxu0 0
  %2115 = vmatpush1.bf16.msra.mxu0 %v1098
  %2116 = vmatprep.subr.bf16.mxu0 0
  %2117 = vmatpush1.bf16.msra.mxu0 %v1099
  %2118 = vmatprep.subr.bf16.mxu0 0
  %2119 = vmatpush1.bf16.msra.mxu0 %v1100
  %2120 = vmatprep.subr.bf16.mxu0 0
  %2121 = vmatpush1.bf16.msra.mxu0 %v1101
  %2122 = vmatprep.subr.bf16.mxu0 0
  %2123 = vmatpush1.bf16.msra.mxu0 %v1102
  %2124 = vmatprep.subr.bf16.mxu0 0
  %2125 = vmatpush1.bf16.msra.mxu0 %v1103
  %2126 = vmatprep.subr.bf16.mxu0 0
  %2127 = vmatpush1.bf16.msra.mxu0 %v1104
  %2128 = vmatprep.subr.bf16.mxu0 0
  %2129 = vmatpush1.bf16.msra.mxu0 %v1105
  %2130 = vmatprep.subr.bf16.mxu0 0
  %2131 = vmatpush1.bf16.msra.mxu0 %v1106
  %2132 = vmatprep.subr.bf16.mxu0 0
  %2133 = vmatpush1.bf16.msra.mxu0 %v1107
  %2134 = vmatprep.subr.bf16.mxu0 0
  %2135 = vmatpush1.bf16.msra.mxu0 %v1108
  %2136 = vmatprep.subr.bf16.mxu0 0
  %2137 = vmatpush1.bf16.msra.mxu0 %v1109
  %2138 = vmatprep.subr.bf16.mxu0 0
  %2139 = vmatpush1.bf16.msra.mxu0 %v1110
  %2140 = vmatprep.mubr.bf16.mxu0 %v1939
  %2141 = vmatmul.mubr.bf16.gmra.mrb[0].mxu0 %v1938
  %v2142 = vpop.f32.mrb[0].mxu0
  %v2143 = vadd.f32 %v2094, %v2142
  %v2144 = vpop.f32.mrb[0].mxu0
  %v2145 = vpop.f32.mrb[0].mxu0
  %v2146 = vadd.f32 %v2097, %v2145
  %v2147 = vpop.f32.mrb[0].mxu0
  %2148 = vmatprep.mubr.bf16.mxu0 %v1957
  %2149 = vmatmul.mubr.bf16.gmra.mrb[0].mxu0 %v1956
  %v2150 = vpop.f32.mrb[0].mxu0
  %v2151 = vadd.f32 %v2102, %v2150
  %v2152 = vpop.f32.mrb[0].mxu0
  %v2153 = vpop.f32.mrb[0].mxu0
  %v2154 = vadd.f32 %v2105, %v2153
  %v2155 = vpop.f32.mrb[0].mxu0
  %2156 = vdwg.mxu0
  %2157 = vmatprep.subr.bf16.mxu0 0
  %2158 = vmatpush1.bf16.msra.mxu0 %v1111
  %2159 = vmatprep.subr.bf16.mxu0 0
  %2160 = vmatpush1.bf16.msra.mxu0 %v1112
  %2161 = vmatprep.subr.bf16.mxu0 0
  %2162 = vmatpush1.bf16.msra.mxu0 %v1113
  %2163 = vmatprep.subr.bf16.mxu0 0
  %2164 = vmatpush1.bf16.msra.mxu0 %v1114
  %2165 = vmatprep.subr.bf16.mxu0 0
  %2166 = vmatpush1.bf16.msra.mxu0 %v1115
  %2167 = vmatprep.subr.bf16.mxu0 0
  %2168 = vmatpush1.bf16.msra.mxu0 %v1116
  %2169 = vmatprep.subr.bf16.mxu0 0
  %2170 = vmatpush1.bf16.msra.mxu0 %v1117
  %2171 = vmatprep.subr.bf16.mxu0 0
  %2172 = vmatpush1.bf16.msra.mxu0 %v1118
  %2173 = vmatprep.subr.bf16.mxu0 0
  %2174 = vmatpush1.bf16.msra.mxu0 %v1119
  %2175 = vmatprep.subr.bf16.mxu0 0
  %2176 = vmatpush1.bf16.msra.mxu0 %v1120
  %2177 = vmatprep.subr.bf16.mxu0 0
  %2178 = vmatpush1.bf16.msra.mxu0 %v1121
  %2179 = vmatprep.subr.bf16.mxu0 0
  %2180 = vmatpush1.bf16.msra.mxu0 %v1122
  %2181 = vmatprep.subr.bf16.mxu0 0
  %2182 = vmatpush1.bf16.msra.mxu0 %v1123
  %2183 = vmatprep.subr.bf16.mxu0 0
  %2184 = vmatpush1.bf16.msra.mxu0 %v1124
  %2185 = vmatprep.subr.bf16.mxu0 0
  %2186 = vmatpush1.bf16.msra.mxu0 %v1125
  %2187 = vmatprep.subr.bf16.mxu0 0
  %2188 = vmatpush1.bf16.msra.mxu0 %v1126
  %2189 = vmatprep.mubr.bf16.mxu0 %v1941
  %2190 = vmatmul.mubr.bf16.gmra.mrb[0].mxu0 %v1940
  %v2191 = vpop.f32.mrb[0].mxu0
  %v2192 = vadd.f32 %v2143, %v2191
  %v2193 = vpop.f32.mrb[0].mxu0
  %v2194 = vpop.f32.mrb[0].mxu0
  %v2195 = vadd.f32 %v2146, %v2194
  %v2196 = vpop.f32.mrb[0].mxu0
  %2197 = vmatprep.mubr.bf16.mxu0 %v1959
  %2198 = vmatmul.mubr.bf16.gmra.mrb[0].mxu0 %v1958
  %v2199 = vpop.f32.mrb[0].mxu0
  %v2200 = vadd.f32 %v2151, %v2199
  %v2201 = vpop.f32.mrb[0].mxu0
  %v2202 = vpop.f32.mrb[0].mxu0
  %v2203 = vadd.f32 %v2154, %v2202
  %v2204 = vpop.f32.mrb[0].mxu0
  %2205 = vdwg.mxu0
  %2206 = vmatprep.subr.bf16.mxu0 0
  %2207 = vmatpush1.bf16.msra.mxu0 %v1127
  %2208 = vmatprep.subr.bf16.mxu0 0
  %2209 = vmatpush1.bf16.msra.mxu0 %v1128
  %2210 = vmatprep.subr.bf16.mxu0 0
  %2211 = vmatpush1.bf16.msra.mxu0 %v1129
  %2212 = vmatprep.subr.bf16.mxu0 0
  %2213 = vmatpush1.bf16.msra.mxu0 %v1130
  %2214 = vmatprep.subr.bf16.mxu0 0
  %2215 = vmatpush1.bf16.msra.mxu0 %v1131
  %2216 = vmatprep.subr.bf16.mxu0 0
  %2217 = vmatpush1.bf16.msra.mxu0 %v1132
  %2218 = vmatprep.subr.bf16.mxu0 0
  %2219 = vmatpush1.bf16.msra.mxu0 %v1133
  %2220 = vmatprep.subr.bf16.mxu0 0
  %2221 = vmatpush1.bf16.msra.mxu0 %v1134
  %2222 = vmatprep.subr.bf16.mxu0 0
  %2223 = vmatpush1.bf16.msra.mxu0 %v1135
  %2224 = vmatprep.subr.bf16.mxu0 0
  %2225 = vmatpush1.bf16.msra.mxu0 %v1136
  %2226 = vmatprep.subr.bf16.mxu0 0
  %2227 = vmatpush1.bf16.msra.mxu0 %v1137
  %2228 = vmatprep.subr.bf16.mxu0 0
  %2229 = vmatpush1.bf16.msra.mxu0 %v1138
  %2230 = vmatprep.subr.bf16.mxu0 0
  %2231 = vmatpush1.bf16.msra.mxu0 %v1139
  %2232 = vmatprep.subr.bf16.mxu0 0
  %2233 = vmatpush1.bf16.msra.mxu0 %v1140
  %2234 = vmatprep.subr.bf16.mxu0 0
  %2235 = vmatpush1.bf16.msra.mxu0 %v1141
  %2236 = vmatprep.subr.bf16.mxu0 0
  %2237 = vmatpush1.bf16.msra.mxu0 %v1142
  %2238 = vmatprep.mubr.bf16.mxu0 %v1943
  %2239 = vmatmul.mubr.bf16.gmra.mrb[0].mxu0 %v1942
  %v2240 = vpop.f32.mrb[0].mxu0
  %v2241 = vadd.f32 %v2192, %v2240
  %v2242 = vpop.f32.mrb[0].mxu0
  %v2243 = vpop.f32.mrb[0].mxu0
  %v2244 = vadd.f32 %v2195, %v2243
  %v2245 = vpop.f32.mrb[0].mxu0
  %2246 = vmatprep.mubr.bf16.mxu0 %v1961
  %2247 = vmatmul.mubr.bf16.gmra.mrb[0].mxu0 %v1960
  %v2248 = vpop.f32.mrb[0].mxu0
  %v2249 = vadd.f32 %v2200, %v2248
  %v2250 = vpop.f32.mrb[0].mxu0
  %v2251 = vpop.f32.mrb[0].mxu0
  %v2252 = vadd.f32 %v2203, %v2251
  %v2253 = vpop.f32.mrb[0].mxu0
  %2254 = vdwg.mxu0
  %2255 = vmatprep.subr.bf16.mxu0 0
  %2256 = vmatpush1.bf16.msra.mxu0 %v1143
  %2257 = vmatprep.subr.bf16.mxu0 0
  %2258 = vmatpush1.bf16.msra.mxu0 %v1144
  %2259 = vmatprep.subr.bf16.mxu0 0
  %2260 = vmatpush1.bf16.msra.mxu0 %v1145
  %2261 = vmatprep.subr.bf16.mxu0 0
  %2262 = vmatpush1.bf16.msra.mxu0 %v1146
  %2263 = vmatprep.subr.bf16.mxu0 0
  %2264 = vmatpush1.bf16.msra.mxu0 %v1147
  %2265 = vmatprep.subr.bf16.mxu0 0
  %2266 = vmatpush1.bf16.msra.mxu0 %v1148
  %2267 = vmatprep.subr.bf16.mxu0 0
  %2268 = vmatpush1.bf16.msra.mxu0 %v1149
  %2269 = vmatprep.subr.bf16.mxu0 0
  %2270 = vmatpush1.bf16.msra.mxu0 %v1150
  %2271 = vmatprep.subr.bf16.mxu0 0
  %2272 = vmatpush1.bf16.msra.mxu0 %v1151
  %2273 = vmatprep.subr.bf16.mxu0 0
  %2274 = vmatpush1.bf16.msra.mxu0 %v1152
  %2275 = vmatprep.subr.bf16.mxu0 0
  %2276 = vmatpush1.bf16.msra.mxu0 %v1153
  %2277 = vmatprep.subr.bf16.mxu0 0
  %2278 = vmatpush1.bf16.msra.mxu0 %v1154
  %2279 = vmatprep.subr.bf16.mxu0 0
  %2280 = vmatpush1.bf16.msra.mxu0 %v1155
  %2281 = vmatprep.subr.bf16.mxu0 0
  %2282 = vmatpush1.bf16.msra.mxu0 %v1156
  %2283 = vmatprep.subr.bf16.mxu0 0
  %2284 = vmatpush1.bf16.msra.mxu0 %v1157
  %2285 = vmatprep.subr.bf16.mxu0 0
  %2286 = vmatpush1.bf16.msra.mxu0 %v1158
  %2287 = vmatprep.mubr.bf16.mxu0 %v1945
  %2288 = vmatmul.mubr.bf16.gmra.mrb[0].mxu0 %v1944
  %v2289 = vpop.f32.mrb[0].mxu0
  %v2290 = vadd.f32 %v2241, %v2289
  %v2291 = vpop.f32.mrb[0].mxu0
  %v2292 = vpop.f32.mrb[0].mxu0
  %v2293 = vadd.f32 %v2244, %v2292
  %v2294 = vpop.f32.mrb[0].mxu0
  %2295 = vmatprep.mubr.bf16.mxu0 %v1963
  %2296 = vmatmul.mubr.bf16.gmra.mrb[0].mxu0 %v1962
  %v2297 = vpop.f32.mrb[0].mxu0
  %v2298 = vadd.f32 %v2249, %v2297
  %v2299 = vpop.f32.mrb[0].mxu0
  %v2300 = vpop.f32.mrb[0].mxu0
  %v2301 = vadd.f32 %v2252, %v2300
  %v2302 = vpop.f32.mrb[0].mxu0
  %2303 = vdwg.mxu0
  %2304 = vmatprep.subr.bf16.mxu0 0
  %2305 = vmatpush1.bf16.msra.mxu0 %v1159
  %2306 = vmatprep.subr.bf16.mxu0 0
  %2307 = vmatpush1.bf16.msra.mxu0 %v1160
  %2308 = vmatprep.subr.bf16.mxu0 0
  %2309 = vmatpush1.bf16.msra.mxu0 %v1161
  %2310 = vmatprep.subr.bf16.mxu0 0
  %2311 = vmatpush1.bf16.msra.mxu0 %v1162
  %2312 = vmatprep.subr.bf16.mxu0 0
  %2313 = vmatpush1.bf16.msra.mxu0 %v1163
  %2314 = vmatprep.subr.bf16.mxu0 0
  %2315 = vmatpush1.bf16.msra.mxu0 %v1164
  %2316 = vmatprep.subr.bf16.mxu0 0
  %2317 = vmatpush1.bf16.msra.mxu0 %v1165
  %2318 = vmatprep.subr.bf16.mxu0 0
  %2319 = vmatpush1.bf16.msra.mxu0 %v1166
  %2320 = vmatprep.subr.bf16.mxu0 0
  %2321 = vmatpush1.bf16.msra.mxu0 %v1167
  %2322 = vmatprep.subr.bf16.mxu0 0
  %2323 = vmatpush1.bf16.msra.mxu0 %v1168
  %2324 = vmatprep.subr.bf16.mxu0 0
  %2325 = vmatpush1.bf16.msra.mxu0 %v1169
  %2326 = vmatprep.subr.bf16.mxu0 0
  %2327 = vmatpush1.bf16.msra.mxu0 %v1170
  %2328 = vmatprep.subr.bf16.mxu0 0
  %2329 = vmatpush1.bf16.msra.mxu0 %v1171
  %2330 = vmatprep.subr.bf16.mxu0 0
  %2331 = vmatpush1.bf16.msra.mxu0 %v1172
  %2332 = vmatprep.subr.bf16.mxu0 0
  %2333 = vmatpush1.bf16.msra.mxu0 %v1173
  %2334 = vmatprep.subr.bf16.mxu0 0
  %2335 = vmatpush1.bf16.msra.mxu0 %v1174
  %2336 = vmatprep.mubr.bf16.mxu0 %v1947
  %2337 = vmatmul.mubr.bf16.gmra.mrb[0].mxu0 %v1946
  %v2338 = vpop.f32.mrb[0].mxu0
  %v2339 = vadd.f32 %v2290, %v2338
  %v2340 = vpop.f32.mrb[0].mxu0
  %v2341 = vpop.f32.mrb[0].mxu0
  %v2342 = vadd.f32 %v2293, %v2341
  %v2343 = vpop.f32.mrb[0].mxu0
  %2344 = vmatprep.mubr.bf16.mxu0 %v1965
  %2345 = vmatmul.mubr.bf16.gmra.mrb[0].mxu0 %v1964
  %v2346 = vpop.f32.mrb[0].mxu0
  %v2347 = vadd.f32 %v2298, %v2346
  %v2348 = vpop.f32.mrb[0].mxu0
  %v2349 = vpop.f32.mrb[0].mxu0
  %v2350 = vadd.f32 %v2301, %v2349
  %v2351 = vpop.f32.mrb[0].mxu0
  %2352 = vdwg.mxu0
  %2353 = vmatprep.subr.bf16.mxu0 0
  %2354 = vmatpush1.bf16.msra.mxu0 %v1175
  %2355 = vmatprep.subr.bf16.mxu0 0
  %2356 = vmatpush1.bf16.msra.mxu0 %v1176
  %2357 = vmatprep.subr.bf16.mxu0 0
  %2358 = vmatpush1.bf16.msra.mxu0 %v1177
  %2359 = vmatprep.subr.bf16.mxu0 0
  %2360 = vmatpush1.bf16.msra.mxu0 %v1178
  %2361 = vmatprep.subr.bf16.mxu0 0
  %2362 = vmatpush1.bf16.msra.mxu0 %v1179
  %2363 = vmatprep.subr.bf16.mxu0 0
  %2364 = vmatpush1.bf16.msra.mxu0 %v1180
  %2365 = vmatprep.subr.bf16.mxu0 0
  %2366 = vmatpush1.bf16.msra.mxu0 %v1181
  %2367 = vmatprep.subr.bf16.mxu0 0
  %2368 = vmatpush1.bf16.msra.mxu0 %v1182
  %2369 = vmatprep.subr.bf16.mxu0 0
  %2370 = vmatpush1.bf16.msra.mxu0 %v1183
  %2371 = vmatprep.subr.bf16.mxu0 0
  %2372 = vmatpush1.bf16.msra.mxu0 %v1184
  %2373 = vmatprep.subr.bf16.mxu0 0
  %2374 = vmatpush1.bf16.msra.mxu0 %v1185
  %2375 = vmatprep.subr.bf16.mxu0 0
  %2376 = vmatpush1.bf16.msra.mxu0 %v1186
  %2377 = vmatprep.subr.bf16.mxu0 0
  %2378 = vmatpush1.bf16.msra.mxu0 %v1187
  %2379 = vmatprep.subr.bf16.mxu0 0
  %2380 = vmatpush1.bf16.msra.mxu0 %v1188
  %2381 = vmatprep.subr.bf16.mxu0 0
  %2382 = vmatpush1.bf16.msra.mxu0 %v1189
  %2383 = vmatprep.subr.bf16.mxu0 0
  %2384 = vmatpush1.bf16.msra.mxu0 %v1190
  %2385 = vmatprep.mubr.bf16.mxu0 %v1949
  %2386 = vmatmul.mubr.bf16.gmra.mrb[0].mxu0 %v1948
  %v2387 = vpop.f32.mrb[0].mxu0
  %v2388 = vadd.f32 %v2339, %v2387
  %v2389 = vpop.f32.mrb[0].mxu0
  %v2390 = vpop.f32.mrb[0].mxu0
  %v2391 = vadd.f32 %v2342, %v2390
  %v2392 = vpop.f32.mrb[0].mxu0
  %2393 = vmatprep.mubr.bf16.mxu0 %v1967
  %2394 = vmatmul.mubr.bf16.gmra.mrb[0].mxu0 %v1966
  %v2395 = vpop.f32.mrb[0].mxu0
  %v2396 = vadd.f32 %v2347, %v2395
  %v2397 = vpop.f32.mrb[0].mxu0
  %v2398 = vpop.f32.mrb[0].mxu0
  %v2399 = vadd.f32 %v2350, %v2398
  %v2400 = vpop.f32.mrb[0].mxu0
  %2401 = vdwg.mxu0
  %2402 = vmatprep.subr.bf16.mxu0 0
  %2403 = vmatpush1.bf16.msra.mxu0 %v1191
  %2404 = vmatprep.subr.bf16.mxu0 0
  %2405 = vmatpush1.bf16.msra.mxu0 %v1192
  %2406 = vmatprep.subr.bf16.mxu0 0
  %2407 = vmatpush1.bf16.msra.mxu0 %v1193
  %2408 = vmatprep.subr.bf16.mxu0 0
  %2409 = vmatpush1.bf16.msra.mxu0 %v1194
  %2410 = vmatprep.subr.bf16.mxu0 0
  %2411 = vmatpush1.bf16.msra.mxu0 %v1195
  %2412 = vmatprep.subr.bf16.mxu0 0
  %2413 = vmatpush1.bf16.msra.mxu0 %v1196
  %2414 = vmatprep.subr.bf16.mxu0 0
  %2415 = vmatpush1.bf16.msra.mxu0 %v1197
  %2416 = vmatprep.subr.bf16.mxu0 0
  %2417 = vmatpush1.bf16.msra.mxu0 %v1198
  %2418 = vmatprep.subr.bf16.mxu0 0
  %2419 = vmatpush1.bf16.msra.mxu0 %v1199
  %2420 = vmatprep.subr.bf16.mxu0 0
  %2421 = vmatpush1.bf16.msra.mxu0 %v1347
  %2422 = vmatprep.subr.bf16.mxu0 0
  %2423 = vmatpush1.bf16.msra.mxu0 0
  %2424 = vmatprep.subr.bf16.mxu0 0
  %2425 = vmatpush1.bf16.msra.mxu0 0
  %2426 = vmatprep.subr.bf16.mxu0 0
  %2427 = vmatpush1.bf16.msra.mxu0 0
  %2428 = vmatprep.subr.bf16.mxu0 0
  %2429 = vmatpush1.bf16.msra.mxu0 0
  %2430 = vmatprep.subr.bf16.mxu0 0
  %2431 = vmatpush1.bf16.msra.mxu0 0
  %2432 = vmatprep.subr.bf16.mxu0 0
  %2433 = vmatpush1.bf16.msra.mxu0 0
  %2434 = vmatprep.mubr.bf16.mxu0 %v2005
  %2435 = vmatmul.mubr.bf16.gmra.mrb[0].mxu0 %v1950
  %v2436 = vpop.f32.mrb[0].mxu0
  %v2437 = vadd.f32 %v2388, %v2436
  %v2438 = vpop.f32.mrb[0].mxu0
  %v2439 = vpop.f32.mrb[0].mxu0
  %v2440 = vadd.f32 %v2391, %v2439
  %v2441 = vpop.f32.mrb[0].mxu0
  %2442 = vmatprep.mubr.bf16.mxu0 %v2008
  %2443 = vmatmul.mubr.bf16.gmra.mrb[0].mxu0 %v1968
  %v2444 = vpop.f32.mrb[0].mxu0
  %v2445 = vadd.f32 %v2396, %v2444
  %v2446 = vpop.f32.mrb[0].mxu0
  %v2447 = vpop.f32.mrb[0].mxu0
  %v2448 = vadd.f32 %v2399, %v2447
  %v2449 = vpop.f32.mrb[0].mxu0
  %2450 = vdwg.mxu0
  %v2451 = vld [vmem:[%s2] sm:$0xff]
  %v2452 = vld [vmem:[%s2 + $0x8] sm:$0xff]
  %v2453 = vld [vmem:[%s2 + $0x10] sm:$0xff]
  %v2454 = vld [vmem:[%s2 + $0x18] sm:$0xff]
  %v2455 = vld [vmem:[%s2 + $0x20] sm:$0xff]
  %v2456 = vld [vmem:[%s2 + $0x28] sm:$0xff]
  %v2457 = vld [vmem:[%s2 + $0x30] sm:$0xff]
  %v2458 = vld [vmem:[%s2 + $0x38] sm:$0xff]
  %v2459 = vld [vmem:[%s2 + $0x40] sm:$0xff]
  %v2460 = vld [vmem:[%s2 + $0x48] sm:$0xff]
  %v2461 = vld [vmem:[%s2 + $0x50] sm:$0xff]
  %v2462 = vld [vmem:[%s2 + $0x58] sm:$0xff]
  %v2463 = vld [vmem:[%s2 + $0x60] sm:$0xff]
  %v2464 = vld [vmem:[%s2 + $0x68] sm:$0xff]
  %v2465 = vld [vmem:[%s2 + $0x70] sm:$0xff]
  %v2466 = vld [vmem:[%s2 + $0x78] sm:$0xff]
  %v2467 = vld [vmem:[%s2 + $0x80] sm:$0xff]
  %v2468 = vld [vmem:[%s2 + $0x88] sm:$0xff]
  %v2469 = vld [vmem:[%s2 + $0x90] sm:$0xff]
  %v2470 = vld [vmem:[%s2 + $0x98] sm:$0xff]
  %v2471 = vld [vmem:[%s2 + $0xa0] sm:$0xff]
  %v2472 = vld [vmem:[%s2 + $0xa8] sm:$0xff]
  %v2473 = vld [vmem:[%s2 + $0xb0] sm:$0xff]
  %v2474 = vld [vmem:[%s2 + $0xb8] sm:$0xff]
  %v2475 = vld [vmem:[%s2 + $0xc0] sm:$0xff]
  %v2476 = vld [vmem:[%s2 + $0xc8] sm:$0xff]
  %v2477 = vld [vmem:[%s2 + $0xd0] sm:$0xff]
  %v2478 = vld [vmem:[%s2 + $0xd8] sm:$0xff]
  %v2479 = vld [vmem:[%s2 + $0xe0] sm:$0xff]
  %v2480 = vld [vmem:[%s2 + $0xe8] sm:$0xff]
  %v2481 = vld [vmem:[%s2 + $0xf0] sm:$0xff]
  %v2482 = vld [vmem:[%s2 + $0xf8] sm:$0xff]
  %v2483 = vld [vmem:[%s2 + $0x100] sm:$0xff]
  %v2484 = vld [vmem:[%s2 + $0x108] sm:$0xff]
  %v2485 = vld [vmem:[%s2 + $0x110] sm:$0xff]
  %v2486 = vld [vmem:[%s2 + $0x118] sm:$0xff]
  %v2523 = vunpack.c.l.b16 %v2451
  %v2524 = vunpack.c.h.b16 %v2451
  %v2525 = vunpack.c.l.b16 %v2452
  %v2526 = vunpack.c.h.b16 %v2452
  %v2527 = vunpack.c.l.b16 %v2453
  %v2528 = vunpack.c.h.b16 %v2453
  %v2529 = vunpack.c.l.b16 %v2454
  %v2530 = vunpack.c.h.b16 %v2454
  %v2531 = vunpack.c.l.b16 %v2455
  %v2532 = vunpack.c.h.b16 %v2455
  %v2533 = vunpack.c.l.b16 %v2456
  %v2534 = vunpack.c.h.b16 %v2456
  %v2535 = vunpack.c.l.b16 %v2457
  %v2536 = vunpack.c.h.b16 %v2457
  %v2537 = vunpack.c.l.b16 %v2458
  %v2538 = vunpack.c.h.b16 %v2458
  %v2539 = vunpack.c.l.b16 %v2459
  %v2540 = vunpack.c.h.b16 %v2459
  %v2541 = vunpack.c.l.b16 %v2460
  %v2542 = vunpack.c.h.b16 %v2460
  %v2543 = vunpack.c.l.b16 %v2461
  %v2544 = vunpack.c.h.b16 %v2461
  %v2545 = vunpack.c.l.b16 %v2462
  %v2546 = vunpack.c.h.b16 %v2462
  %v2547 = vunpack.c.l.b16 %v2463
  %v2548 = vunpack.c.h.b16 %v2463
  %v2549 = vunpack.c.l.b16 %v2464
  %v2550 = vunpack.c.h.b16 %v2464
  %v2551 = vunpack.c.l.b16 %v2465
  %v2552 = vunpack.c.h.b16 %v2465
  %v2553 = vunpack.c.l.b16 %v2466
  %v2554 = vunpack.c.h.b16 %v2466
  %v2555 = vunpack.c.l.b16 %v2467
  %v2556 = vunpack.c.h.b16 %v2467
  %v2557 = vunpack.c.l.b16 %v2468
  %v2558 = vunpack.c.h.b16 %v2468
  %v2559 = vunpack.c.l.b16 %v2469
  %v2560 = vunpack.c.h.b16 %v2469
  %v2561 = vunpack.c.l.b16 %v2470
  %v2562 = vunpack.c.h.b16 %v2470
  %v2563 = vunpack.c.l.b16 %v2471
  %v2564 = vunpack.c.h.b16 %v2471
  %v2565 = vunpack.c.l.b16 %v2472
  %v2566 = vunpack.c.h.b16 %v2472
  %v2567 = vunpack.c.l.b16 %v2473
  %v2568 = vunpack.c.h.b16 %v2473
  %v2569 = vunpack.c.l.b16 %v2474
  %v2570 = vunpack.c.h.b16 %v2474
  %v2571 = vunpack.c.l.b16 %v2475
  %v2572 = vunpack.c.h.b16 %v2475
  %v2573 = vunpack.c.l.b16 %v2476
  %v2574 = vunpack.c.h.b16 %v2476
  %v2575 = vunpack.c.l.b16 %v2477
  %v2576 = vunpack.c.h.b16 %v2477
  %v2577 = vunpack.c.l.b16 %v2478
  %v2578 = vunpack.c.h.b16 %v2478
  %v2579 = vunpack.c.l.b16 %v2479
  %v2580 = vunpack.c.h.b16 %v2479
  %v2581 = vunpack.c.l.b16 %v2480
  %v2582 = vunpack.c.h.b16 %v2480
  %v2583 = vunpack.c.l.b16 %v2481
  %v2584 = vunpack.c.h.b16 %v2481
  %v2585 = vunpack.c.l.b16 %v2482
  %v2586 = vunpack.c.h.b16 %v2482
  %v2587 = vunpack.c.l.b16 %v2483
  %v2588 = vunpack.c.h.b16 %v2483
  %v2589 = vunpack.c.l.b16 %v2484
  %v2590 = vunpack.c.h.b16 %v2484
  %v2591 = vunpack.c.l.b16 %v2485
  %v2592 = vunpack.c.h.b16 %v2485
  %v2593 = vunpack.c.l.b16 %v2486
  %v2594 = vunpack.c.h.b16 %v2486
  %v2595 = vpack.c.b16 %v2541, %v2523
  %v2596 = vpack.c.b16 %v2542, %v2524
  %v2597 = vpack.c.b16 %v2543, %v2525
  %v2598 = vpack.c.b16 %v2544, %v2526
  %v2599 = vpack.c.b16 %v2545, %v2527
  %v2600 = vpack.c.b16 %v2546, %v2528
  %v2601 = vpack.c.b16 %v2547, %v2529
  %v2602 = vpack.c.b16 %v2548, %v2530
  %v2603 = vpack.c.b16 %v2549, %v2531
  %v2604 = vpack.c.b16 %v2550, %v2532
  %v2605 = vpack.c.b16 %v2551, %v2533
  %v2606 = vpack.c.b16 %v2552, %v2534
  %v2607 = vpack.c.b16 %v2553, %v2535
  %v2608 = vpack.c.b16 %v2554, %v2536
  %v2609 = vpack.c.b16 %v2555, %v2537
  %v2610 = vpack.c.b16 %v2556, %v2538
  %v2611 = vpack.c.b16 %v2557, %v2539
  %v2612 = vpack.c.b16 %v2558, %v2540
  %v2613 = vpack.c.b16 %v2577, %v2559
  %v2614 = vpack.c.b16 %v2578, %v2560
  %v2615 = vpack.c.b16 %v2579, %v2561
  %v2616 = vpack.c.b16 %v2580, %v2562
  %v2617 = vpack.c.b16 %v2581, %v2563
  %v2618 = vpack.c.b16 %v2582, %v2564
  %v2619 = vpack.c.b16 %v2583, %v2565
  %v2620 = vpack.c.b16 %v2584, %v2566
  %v2621 = vpack.c.b16 %v2585, %v2567
  %v2622 = vpack.c.b16 %v2586, %v2568
  %v2623 = vpack.c.b16 %v2587, %v2569
  %v2624 = vpack.c.b16 %v2588, %v2570
  %v2625 = vpack.c.b16 %v2589, %v2571
  %v2626 = vpack.c.b16 %v2590, %v2572
  %v2627 = vpack.c.b16 %v2591, %v2573
  %v2628 = vpack.c.b16 %v2592, %v2574
  %v2629 = vpack.c.b16 %v2593, %v2575
  %v2630 = vpack.c.b16 %v2594, %v2576
  %v2666 = vsel %vm1338, %v2612, 0
  %v2669 = vsel %vm1338, %v2630, 0
  %2671 = vmatprep.subr.bf16.mxu0 0
  %2672 = vmatpush1.bf16.msra.mxu0 %v1063
  %2673 = vmatprep.subr.bf16.mxu0 0
  %2674 = vmatpush1.bf16.msra.mxu0 %v1064
  %2675 = vmatprep.subr.bf16.mxu0 0
  %2676 = vmatpush1.bf16.msra.mxu0 %v1065
  %2677 = vmatprep.subr.bf16.mxu0 0
  %2678 = vmatpush1.bf16.msra.mxu0 %v1066
  %2679 = vmatprep.subr.bf16.mxu0 0
  %2680 = vmatpush1.bf16.msra.mxu0 %v1067
  %2681 = vmatprep.subr.bf16.mxu0 0
  %2682 = vmatpush1.bf16.msra.mxu0 %v1068
  %2683 = vmatprep.subr.bf16.mxu0 0
  %2684 = vmatpush1.bf16.msra.mxu0 %v1069
  %2685 = vmatprep.subr.bf16.mxu0 0
  %2686 = vmatpush1.bf16.msra.mxu0 %v1070
  %2687 = vmatprep.subr.bf16.mxu0 0
  %2688 = vmatpush1.bf16.msra.mxu0 %v1071
  %2689 = vmatprep.subr.bf16.mxu0 0
  %2690 = vmatpush1.bf16.msra.mxu0 %v1072
  %2691 = vmatprep.subr.bf16.mxu0 0
  %2692 = vmatpush1.bf16.msra.mxu0 %v1073
  %2693 = vmatprep.subr.bf16.mxu0 0
  %2694 = vmatpush1.bf16.msra.mxu0 %v1074
  %2695 = vmatprep.subr.bf16.mxu0 0
  %2696 = vmatpush1.bf16.msra.mxu0 %v1075
  %2697 = vmatprep.subr.bf16.mxu0 0
  %2698 = vmatpush1.bf16.msra.mxu0 %v1076
  %2699 = vmatprep.subr.bf16.mxu0 0
  %2700 = vmatpush1.bf16.msra.mxu0 %v1077
  %2701 = vmatprep.subr.bf16.mxu0 0
  %2702 = vmatpush1.bf16.msra.mxu0 %v1078
  %2703 = vmatprep.mubr.bf16.mxu0 %v2596
  %2704 = vmatmul.mubr.bf16.gmra.mrb[0].mxu0 %v2595
  %v2705 = vpop.f32.mrb[0].mxu0
  %v2706 = vadd.f32 0.0, %v2705
  %v2707 = vpop.f32.mrb[0].mxu0
  %v2708 = vpop.f32.mrb[0].mxu0
  %v2709 = vadd.f32 0.0, %v2708
  %v2710 = vpop.f32.mrb[0].mxu0
  %2711 = vmatprep.mubr.bf16.mxu0 %v2614
  %2712 = vmatmul.mubr.bf16.gmra.mrb[0].mxu0 %v2613
  %v2713 = vpop.f32.mrb[0].mxu0
  %v2714 = vadd.f32 0.0, %v2713
  %v2715 = vpop.f32.mrb[0].mxu0
  %v2716 = vpop.f32.mrb[0].mxu0
  %v2717 = vadd.f32 0.0, %v2716
  %v2718 = vpop.f32.mrb[0].mxu0
  %2719 = vdwg.mxu0
  %2720 = vmatprep.subr.bf16.mxu0 0
  %2721 = vmatpush1.bf16.msra.mxu0 %v1079
  %2722 = vmatprep.subr.bf16.mxu0 0
  %2723 = vmatpush1.bf16.msra.mxu0 %v1080
  %2724 = vmatprep.subr.bf16.mxu0 0
  %2725 = vmatpush1.bf16.msra.mxu0 %v1081
  %2726 = vmatprep.subr.bf16.mxu0 0
  %2727 = vmatpush1.bf16.msra.mxu0 %v1082
  %2728 = vmatprep.subr.bf16.mxu0 0
  %2729 = vmatpush1.bf16.msra.mxu0 %v1083
  %2730 = vmatprep.subr.bf16.mxu0 0
  %2731 = vmatpush1.bf16.msra.mxu0 %v1084
  %2732 = vmatprep.subr.bf16.mxu0 0
  %2733 = vmatpush1.bf16.msra.mxu0 %v1085
  %2734 = vmatprep.subr.bf16.mxu0 0
  %2735 = vmatpush1.bf16.msra.mxu0 %v1086
  %2736 = vmatprep.subr.bf16.mxu0 0
  %2737 = vmatpush1.bf16.msra.mxu0 %v1087
  %2738 = vmatprep.subr.bf16.mxu0 0
  %2739 = vmatpush1.bf16.msra.mxu0 %v1088
  %2740 = vmatprep.subr.bf16.mxu0 0
  %2741 = vmatpush1.bf16.msra.mxu0 %v1089
  %2742 = vmatprep.subr.bf16.mxu0 0
  %2743 = vmatpush1.bf16.msra.mxu0 %v1090
  %2744 = vmatprep.subr.bf16.mxu0 0
  %2745 = vmatpush1.bf16.msra.mxu0 %v1091
  %2746 = vmatprep.subr.bf16.mxu0 0
  %2747 = vmatpush1.bf16.msra.mxu0 %v1092
  %2748 = vmatprep.subr.bf16.mxu0 0
  %2749 = vmatpush1.bf16.msra.mxu0 %v1093
  %2750 = vmatprep.subr.bf16.mxu0 0
  %2751 = vmatpush1.bf16.msra.mxu0 %v1094
  %2752 = vmatprep.mubr.bf16.mxu0 %v2598
  %2753 = vmatmul.mubr.bf16.gmra.mrb[0].mxu0 %v2597
  %v2754 = vpop.f32.mrb[0].mxu0
  %v2755 = vadd.f32 %v2706, %v2754
  %v2756 = vpop.f32.mrb[0].mxu0
  %v2757 = vpop.f32.mrb[0].mxu0
  %v2758 = vadd.f32 %v2709, %v2757
  %v2759 = vpop.f32.mrb[0].mxu0
  %2760 = vmatprep.mubr.bf16.mxu0 %v2616
  %2761 = vmatmul.mubr.bf16.gmra.mrb[0].mxu0 %v2615
  %v2762 = vpop.f32.mrb[0].mxu0
  %v2763 = vadd.f32 %v2714, %v2762
  %v2764 = vpop.f32.mrb[0].mxu0
  %v2765 = vpop.f32.mrb[0].mxu0
  %v2766 = vadd.f32 %v2717, %v2765
  %v2767 = vpop.f32.mrb[0].mxu0
  %2768 = vdwg.mxu0
  %2769 = vmatprep.subr.bf16.mxu0 0
  %2770 = vmatpush1.bf16.msra.mxu0 %v1095
  %2771 = vmatprep.subr.bf16.mxu0 0
  %2772 = vmatpush1.bf16.msra.mxu0 %v1096
  %2773 = vmatprep.subr.bf16.mxu0 0
  %2774 = vmatpush1.bf16.msra.mxu0 %v1097
  %2775 = vmatprep.subr.bf16.mxu0 0
  %2776 = vmatpush1.bf16.msra.mxu0 %v1098
  %2777 = vmatprep.subr.bf16.mxu0 0
  %2778 = vmatpush1.bf16.msra.mxu0 %v1099
  %2779 = vmatprep.subr.bf16.mxu0 0
  %2780 = vmatpush1.bf16.msra.mxu0 %v1100
  %2781 = vmatprep.subr.bf16.mxu0 0
  %2782 = vmatpush1.bf16.msra.mxu0 %v1101
  %2783 = vmatprep.subr.bf16.mxu0 0
  %2784 = vmatpush1.bf16.msra.mxu0 %v1102
  %2785 = vmatprep.subr.bf16.mxu0 0
  %2786 = vmatpush1.bf16.msra.mxu0 %v1103
  %2787 = vmatprep.subr.bf16.mxu0 0
  %2788 = vmatpush1.bf16.msra.mxu0 %v1104
  %2789 = vmatprep.subr.bf16.mxu0 0
  %2790 = vmatpush1.bf16.msra.mxu0 %v1105
  %2791 = vmatprep.subr.bf16.mxu0 0
  %2792 = vmatpush1.bf16.msra.mxu0 %v1106
  %2793 = vmatprep.subr.bf16.mxu0 0
  %2794 = vmatpush1.bf16.msra.mxu0 %v1107
  %2795 = vmatprep.subr.bf16.mxu0 0
  %2796 = vmatpush1.bf16.msra.mxu0 %v1108
  %2797 = vmatprep.subr.bf16.mxu0 0
  %2798 = vmatpush1.bf16.msra.mxu0 %v1109
  %2799 = vmatprep.subr.bf16.mxu0 0
  %2800 = vmatpush1.bf16.msra.mxu0 %v1110
  %2801 = vmatprep.mubr.bf16.mxu0 %v2600
  %2802 = vmatmul.mubr.bf16.gmra.mrb[0].mxu0 %v2599
  %v2803 = vpop.f32.mrb[0].mxu0
  %v2804 = vadd.f32 %v2755, %v2803
  %v2805 = vpop.f32.mrb[0].mxu0
  %v2806 = vpop.f32.mrb[0].mxu0
  %v2807 = vadd.f32 %v2758, %v2806
  %v2808 = vpop.f32.mrb[0].mxu0
  %2809 = vmatprep.mubr.bf16.mxu0 %v2618
  %2810 = vmatmul.mubr.bf16.gmra.mrb[0].mxu0 %v2617
  %v2811 = vpop.f32.mrb[0].mxu0
  %v2812 = vadd.f32 %v2763, %v2811
  %v2813 = vpop.f32.mrb[0].mxu0
  %v2814 = vpop.f32.mrb[0].mxu0
  %v2815 = vadd.f32 %v2766, %v2814
  %v2816 = vpop.f32.mrb[0].mxu0
  %2817 = vdwg.mxu0
  %2818 = vmatprep.subr.bf16.mxu0 0
  %2819 = vmatpush1.bf16.msra.mxu0 %v1111
  %2820 = vmatprep.subr.bf16.mxu0 0
  %2821 = vmatpush1.bf16.msra.mxu0 %v1112
  %2822 = vmatprep.subr.bf16.mxu0 0
  %2823 = vmatpush1.bf16.msra.mxu0 %v1113
  %2824 = vmatprep.subr.bf16.mxu0 0
  %2825 = vmatpush1.bf16.msra.mxu0 %v1114
  %2826 = vmatprep.subr.bf16.mxu0 0
  %2827 = vmatpush1.bf16.msra.mxu0 %v1115
  %2828 = vmatprep.subr.bf16.mxu0 0
  %2829 = vmatpush1.bf16.msra.mxu0 %v1116
  %2830 = vmatprep.subr.bf16.mxu0 0
  %2831 = vmatpush1.bf16.msra.mxu0 %v1117
  %2832 = vmatprep.subr.bf16.mxu0 0
  %2833 = vmatpush1.bf16.msra.mxu0 %v1118
  %2834 = vmatprep.subr.bf16.mxu0 0
  %2835 = vmatpush1.bf16.msra.mxu0 %v1119
  %2836 = vmatprep.subr.bf16.mxu0 0
  %2837 = vmatpush1.bf16.msra.mxu0 %v1120
  %2838 = vmatprep.subr.bf16.mxu0 0
  %2839 = vmatpush1.bf16.msra.mxu0 %v1121
  %2840 = vmatprep.subr.bf16.mxu0 0
  %2841 = vmatpush1.bf16.msra.mxu0 %v1122
  %2842 = vmatprep.subr.bf16.mxu0 0
  %2843 = vmatpush1.bf16.msra.mxu0 %v1123
  %2844 = vmatprep.subr.bf16.mxu0 0
  %2845 = vmatpush1.bf16.msra.mxu0 %v1124
  %2846 = vmatprep.subr.bf16.mxu0 0
  %2847 = vmatpush1.bf16.msra.mxu0 %v1125
  %2848 = vmatprep.subr.bf16.mxu0 0
  %2849 = vmatpush1.bf16.msra.mxu0 %v1126
  %2850 = vmatprep.mubr.bf16.mxu0 %v2602
  %2851 = vmatmul.mubr.bf16.gmra.mrb[0].mxu0 %v2601
  %v2852 = vpop.f32.mrb[0].mxu0
  %v2853 = vadd.f32 %v2804, %v2852
  %v2854 = vpop.f32.mrb[0].mxu0
  %v2855 = vpop.f32.mrb[0].mxu0
  %v2856 = vadd.f32 %v2807, %v2855
  %v2857 = vpop.f32.mrb[0].mxu0
  %2858 = vmatprep.mubr.bf16.mxu0 %v2620
  %2859 = vmatmul.mubr.bf16.gmra.mrb[0].mxu0 %v2619
  %v2860 = vpop.f32.mrb[0].mxu0
  %v2861 = vadd.f32 %v2812, %v2860
  %v2862 = vpop.f32.mrb[0].mxu0
  %v2863 = vpop.f32.mrb[0].mxu0
  %v2864 = vadd.f32 %v2815, %v2863
  %v2865 = vpop.f32.mrb[0].mxu0
  %2866 = vdwg.mxu0
  %2867 = vmatprep.subr.bf16.mxu0 0
  %2868 = vmatpush1.bf16.msra.mxu0 %v1127
  %2869 = vmatprep.subr.bf16.mxu0 0
  %2870 = vmatpush1.bf16.msra.mxu0 %v1128
  %2871 = vmatprep.subr.bf16.mxu0 0
  %2872 = vmatpush1.bf16.msra.mxu0 %v1129
  %2873 = vmatprep.subr.bf16.mxu0 0
  %2874 = vmatpush1.bf16.msra.mxu0 %v1130
  %2875 = vmatprep.subr.bf16.mxu0 0
  %2876 = vmatpush1.bf16.msra.mxu0 %v1131
  %2877 = vmatprep.subr.bf16.mxu0 0
  %2878 = vmatpush1.bf16.msra.mxu0 %v1132
  %2879 = vmatprep.subr.bf16.mxu0 0
  %2880 = vmatpush1.bf16.msra.mxu0 %v1133
  %2881 = vmatprep.subr.bf16.mxu0 0
  %2882 = vmatpush1.bf16.msra.mxu0 %v1134
  %2883 = vmatprep.subr.bf16.mxu0 0
  %2884 = vmatpush1.bf16.msra.mxu0 %v1135
  %2885 = vmatprep.subr.bf16.mxu0 0
  %2886 = vmatpush1.bf16.msra.mxu0 %v1136
  %2887 = vmatprep.subr.bf16.mxu0 0
  %2888 = vmatpush1.bf16.msra.mxu0 %v1137
  %2889 = vmatprep.subr.bf16.mxu0 0
  %2890 = vmatpush1.bf16.msra.mxu0 %v1138
  %2891 = vmatprep.subr.bf16.mxu0 0
  %2892 = vmatpush1.bf16.msra.mxu0 %v1139
  %2893 = vmatprep.subr.bf16.mxu0 0
  %2894 = vmatpush1.bf16.msra.mxu0 %v1140
  %2895 = vmatprep.subr.bf16.mxu0 0
  %2896 = vmatpush1.bf16.msra.mxu0 %v1141
  %2897 = vmatprep.subr.bf16.mxu0 0
  %2898 = vmatpush1.bf16.msra.mxu0 %v1142
  %2899 = vmatprep.mubr.bf16.mxu0 %v2604
  %2900 = vmatmul.mubr.bf16.gmra.mrb[0].mxu0 %v2603
  %v2901 = vpop.f32.mrb[0].mxu0
  %v2902 = vadd.f32 %v2853, %v2901
  %v2903 = vpop.f32.mrb[0].mxu0
  %v2904 = vpop.f32.mrb[0].mxu0
  %v2905 = vadd.f32 %v2856, %v2904
  %v2906 = vpop.f32.mrb[0].mxu0
  %2907 = vmatprep.mubr.bf16.mxu0 %v2622
  %2908 = vmatmul.mubr.bf16.gmra.mrb[0].mxu0 %v2621
  %v2909 = vpop.f32.mrb[0].mxu0
  %v2910 = vadd.f32 %v2861, %v2909
  %v2911 = vpop.f32.mrb[0].mxu0
  %v2912 = vpop.f32.mrb[0].mxu0
  %v2913 = vadd.f32 %v2864, %v2912
  %v2914 = vpop.f32.mrb[0].mxu0
  %2915 = vdwg.mxu0
  %2916 = vmatprep.subr.bf16.mxu0 0
  %2917 = vmatpush1.bf16.msra.mxu0 %v1143
  %2918 = vmatprep.subr.bf16.mxu0 0
  %2919 = vmatpush1.bf16.msra.mxu0 %v1144
  %2920 = vmatprep.subr.bf16.mxu0 0
  %2921 = vmatpush1.bf16.msra.mxu0 %v1145
  %2922 = vmatprep.subr.bf16.mxu0 0
  %2923 = vmatpush1.bf16.msra.mxu0 %v1146
  %2924 = vmatprep.subr.bf16.mxu0 0
  %2925 = vmatpush1.bf16.msra.mxu0 %v1147
  %2926 = vmatprep.subr.bf16.mxu0 0
  %2927 = vmatpush1.bf16.msra.mxu0 %v1148
  %2928 = vmatprep.subr.bf16.mxu0 0
  %2929 = vmatpush1.bf16.msra.mxu0 %v1149
  %2930 = vmatprep.subr.bf16.mxu0 0
  %2931 = vmatpush1.bf16.msra.mxu0 %v1150
  %2932 = vmatprep.subr.bf16.mxu0 0
  %2933 = vmatpush1.bf16.msra.mxu0 %v1151
  %2934 = vmatprep.subr.bf16.mxu0 0
  %2935 = vmatpush1.bf16.msra.mxu0 %v1152
  %2936 = vmatprep.subr.bf16.mxu0 0
  %2937 = vmatpush1.bf16.msra.mxu0 %v1153
  %2938 = vmatprep.subr.bf16.mxu0 0
  %2939 = vmatpush1.bf16.msra.mxu0 %v1154
  %2940 = vmatprep.subr.bf16.mxu0 0
  %2941 = vmatpush1.bf16.msra.mxu0 %v1155
  %2942 = vmatprep.subr.bf16.mxu0 0
  %2943 = vmatpush1.bf16.msra.mxu0 %v1156
  %2944 = vmatprep.subr.bf16.mxu0 0
  %2945 = vmatpush1.bf16.msra.mxu0 %v1157
  %2946 = vmatprep.subr.bf16.mxu0 0
  %2947 = vmatpush1.bf16.msra.mxu0 %v1158
  %2948 = vmatprep.mubr.bf16.mxu0 %v2606
  %2949 = vmatmul.mubr.bf16.gmra.mrb[0].mxu0 %v2605
  %v2950 = vpop.f32.mrb[0].mxu0
  %v2951 = vadd.f32 %v2902, %v2950
  %v2952 = vpop.f32.mrb[0].mxu0
  %v2953 = vpop.f32.mrb[0].mxu0
  %v2954 = vadd.f32 %v2905, %v2953
  %v2955 = vpop.f32.mrb[0].mxu0
  %2956 = vmatprep.mubr.bf16.mxu0 %v2624
  %2957 = vmatmul.mubr.bf16.gmra.mrb[0].mxu0 %v2623
  %v2958 = vpop.f32.mrb[0].mxu0
  %v2959 = vadd.f32 %v2910, %v2958
  %v2960 = vpop.f32.mrb[0].mxu0
  %v2961 = vpop.f32.mrb[0].mxu0
  %v2962 = vadd.f32 %v2913, %v2961
  %v2963 = vpop.f32.mrb[0].mxu0
  %2964 = vdwg.mxu0
  %2965 = vmatprep.subr.bf16.mxu0 0
  %2966 = vmatpush1.bf16.msra.mxu0 %v1159
  %2967 = vmatprep.subr.bf16.mxu0 0
  %2968 = vmatpush1.bf16.msra.mxu0 %v1160
  %2969 = vmatprep.subr.bf16.mxu0 0
  %2970 = vmatpush1.bf16.msra.mxu0 %v1161
  %2971 = vmatprep.subr.bf16.mxu0 0
  %2972 = vmatpush1.bf16.msra.mxu0 %v1162
  %2973 = vmatprep.subr.bf16.mxu0 0
  %2974 = vmatpush1.bf16.msra.mxu0 %v1163
  %2975 = vmatprep.subr.bf16.mxu0 0
  %2976 = vmatpush1.bf16.msra.mxu0 %v1164
  %2977 = vmatprep.subr.bf16.mxu0 0
  %2978 = vmatpush1.bf16.msra.mxu0 %v1165
  %2979 = vmatprep.subr.bf16.mxu0 0
  %2980 = vmatpush1.bf16.msra.mxu0 %v1166
  %2981 = vmatprep.subr.bf16.mxu0 0
  %2982 = vmatpush1.bf16.msra.mxu0 %v1167
  %2983 = vmatprep.subr.bf16.mxu0 0
  %2984 = vmatpush1.bf16.msra.mxu0 %v1168
  %2985 = vmatprep.subr.bf16.mxu0 0
  %2986 = vmatpush1.bf16.msra.mxu0 %v1169
  %2987 = vmatprep.subr.bf16.mxu0 0
  %2988 = vmatpush1.bf16.msra.mxu0 %v1170
  %2989 = vmatprep.subr.bf16.mxu0 0
  %2990 = vmatpush1.bf16.msra.mxu0 %v1171
  %2991 = vmatprep.subr.bf16.mxu0 0
  %2992 = vmatpush1.bf16.msra.mxu0 %v1172
  %2993 = vmatprep.subr.bf16.mxu0 0
  %2994 = vmatpush1.bf16.msra.mxu0 %v1173
  %2995 = vmatprep.subr.bf16.mxu0 0
  %2996 = vmatpush1.bf16.msra.mxu0 %v1174
  %2997 = vmatprep.mubr.bf16.mxu0 %v2608
  %2998 = vmatmul.mubr.bf16.gmra.mrb[0].mxu0 %v2607
  %v2999 = vpop.f32.mrb[0].mxu0
  %v3000 = vadd.f32 %v2951, %v2999
  %v3001 = vpop.f32.mrb[0].mxu0
  %v3002 = vpop.f32.mrb[0].mxu0
  %v3003 = vadd.f32 %v2954, %v3002
  %v3004 = vpop.f32.mrb[0].mxu0
  %3005 = vmatprep.mubr.bf16.mxu0 %v2626
  %3006 = vmatmul.mubr.bf16.gmra.mrb[0].mxu0 %v2625
  %v3007 = vpop.f32.mrb[0].mxu0
  %v3008 = vadd.f32 %v2959, %v3007
  %v3009 = vpop.f32.mrb[0].mxu0
  %v3010 = vpop.f32.mrb[0].mxu0
  %v3011 = vadd.f32 %v2962, %v3010
  %v3012 = vpop.f32.mrb[0].mxu0
  %3013 = vdwg.mxu0
  %3014 = vmatprep.subr.bf16.mxu0 0
  %3015 = vmatpush1.bf16.msra.mxu0 %v1175
  %3016 = vmatprep.subr.bf16.mxu0 0
  %3017 = vmatpush1.bf16.msra.mxu0 %v1176
  %3018 = vmatprep.subr.bf16.mxu0 0
  %3019 = vmatpush1.bf16.msra.mxu0 %v1177
  %3020 = vmatprep.subr.bf16.mxu0 0
  %3021 = vmatpush1.bf16.msra.mxu0 %v1178
  %3022 = vmatprep.subr.bf16.mxu0 0
  %3023 = vmatpush1.bf16.msra.mxu0 %v1179
  %3024 = vmatprep.subr.bf16.mxu0 0
  %3025 = vmatpush1.bf16.msra.mxu0 %v1180
  %3026 = vmatprep.subr.bf16.mxu0 0
  %3027 = vmatpush1.bf16.msra.mxu0 %v1181
  %3028 = vmatprep.subr.bf16.mxu0 0
  %3029 = vmatpush1.bf16.msra.mxu0 %v1182
  %3030 = vmatprep.subr.bf16.mxu0 0
  %3031 = vmatpush1.bf16.msra.mxu0 %v1183
  %3032 = vmatprep.subr.bf16.mxu0 0
  %3033 = vmatpush1.bf16.msra.mxu0 %v1184
  %3034 = vmatprep.subr.bf16.mxu0 0
  %3035 = vmatpush1.bf16.msra.mxu0 %v1185
  %3036 = vmatprep.subr.bf16.mxu0 0
  %3037 = vmatpush1.bf16.msra.mxu0 %v1186
  %3038 = vmatprep.subr.bf16.mxu0 0
  %3039 = vmatpush1.bf16.msra.mxu0 %v1187
  %3040 = vmatprep.subr.bf16.mxu0 0
  %3041 = vmatpush1.bf16.msra.mxu0 %v1188
  %3042 = vmatprep.subr.bf16.mxu0 0
  %3043 = vmatpush1.bf16.msra.mxu0 %v1189
  %3044 = vmatprep.subr.bf16.mxu0 0
  %3045 = vmatpush1.bf16.msra.mxu0 %v1190
  %3046 = vmatprep.mubr.bf16.mxu0 %v2610
  %3047 = vmatmul.mubr.bf16.gmra.mrb[0].mxu0 %v2609
  %v3048 = vpop.f32.mrb[0].mxu0
  %v3049 = vadd.f32 %v3000, %v3048
  %v3050 = vpop.f32.mrb[0].mxu0
  %v3051 = vpop.f32.mrb[0].mxu0
  %v3052 = vadd.f32 %v3003, %v3051
  %v3053 = vpop.f32.mrb[0].mxu0
  %3054 = vmatprep.mubr.bf16.mxu0 %v2628
  %3055 = vmatmul.mubr.bf16.gmra.mrb[0].mxu0 %v2627
  %v3056 = vpop.f32.mrb[0].mxu0
  %v3057 = vadd.f32 %v3008, %v3056
  %v3058 = vpop.f32.mrb[0].mxu0
  %v3059 = vpop.f32.mrb[0].mxu0
  %v3060 = vadd.f32 %v3011, %v3059
  %v3061 = vpop.f32.mrb[0].mxu0
  %3062 = vdwg.mxu0
  %3063 = vmatprep.subr.bf16.mxu0 0
  %3064 = vmatpush1.bf16.msra.mxu0 %v1191
  %3065 = vmatprep.subr.bf16.mxu0 0
  %3066 = vmatpush1.bf16.msra.mxu0 %v1192
  %3067 = vmatprep.subr.bf16.mxu0 0
  %3068 = vmatpush1.bf16.msra.mxu0 %v1193
  %3069 = vmatprep.subr.bf16.mxu0 0
  %3070 = vmatpush1.bf16.msra.mxu0 %v1194
  %3071 = vmatprep.subr.bf16.mxu0 0
  %3072 = vmatpush1.bf16.msra.mxu0 %v1195
  %3073 = vmatprep.subr.bf16.mxu0 0
  %3074 = vmatpush1.bf16.msra.mxu0 %v1196
  %3075 = vmatprep.subr.bf16.mxu0 0
  %3076 = vmatpush1.bf16.msra.mxu0 %v1197
  %3077 = vmatprep.subr.bf16.mxu0 0
  %3078 = vmatpush1.bf16.msra.mxu0 %v1198
  %3079 = vmatprep.subr.bf16.mxu0 0
  %3080 = vmatpush1.bf16.msra.mxu0 %v1199
  %3081 = vmatprep.subr.bf16.mxu0 0
  %3082 = vmatpush1.bf16.msra.mxu0 %v1347
  %3083 = vmatprep.subr.bf16.mxu0 0
  %3084 = vmatpush1.bf16.msra.mxu0 0
  %3085 = vmatprep.subr.bf16.mxu0 0
  %3086 = vmatpush1.bf16.msra.mxu0 0
  %3087 = vmatprep.subr.bf16.mxu0 0
  %3088 = vmatpush1.bf16.msra.mxu0 0
  %3089 = vmatprep.subr.bf16.mxu0 0
  %3090 = vmatpush1.bf16.msra.mxu0 0
  %3091 = vmatprep.subr.bf16.mxu0 0
  %3092 = vmatpush1.bf16.msra.mxu0 0
  %3093 = vmatprep.subr.bf16.mxu0 0
  %3094 = vmatpush1.bf16.msra.mxu0 0
  %3095 = vmatprep.mubr.bf16.mxu0 %v2666
  %3096 = vmatmul.mubr.bf16.gmra.mrb[0].mxu0 %v2611
  %v3097 = vpop.f32.mrb[0].mxu0
  %v3098 = vadd.f32 %v3049, %v3097
  %v3099 = vpop.f32.mrb[0].mxu0
  %v3100 = vpop.f32.mrb[0].mxu0
  %v3101 = vadd.f32 %v3052, %v3100
  %v3102 = vpop.f32.mrb[0].mxu0
  %3103 = vmatprep.mubr.bf16.mxu0 %v2669
  %3104 = vmatmul.mubr.bf16.gmra.mrb[0].mxu0 %v2629
  %v3105 = vpop.f32.mrb[0].mxu0
  %v3106 = vadd.f32 %v3057, %v3105
  %v3107 = vpop.f32.mrb[0].mxu0
  %v3108 = vpop.f32.mrb[0].mxu0
  %v3109 = vadd.f32 %v3060, %v3108
  %v3110 = vpop.f32.mrb[0].mxu0
  %3111 = vdwg.mxu0
  %v3112 = vld [vmem:[%s3] sm:$0xff]
  %v3113 = vld [vmem:[%s3 + $0x8] sm:$0xff]
  %v3114 = vld [vmem:[%s3 + $0x10] sm:$0xff]
  %v3115 = vld [vmem:[%s3 + $0x18] sm:$0xff]
  %v3116 = vld [vmem:[%s3 + $0x20] sm:$0xff]
  %v3117 = vld [vmem:[%s3 + $0x28] sm:$0xff]
  %v3118 = vld [vmem:[%s3 + $0x30] sm:$0xff]
  %v3119 = vld [vmem:[%s3 + $0x38] sm:$0xff]
  %v3120 = vld [vmem:[%s3 + $0x40] sm:$0xff]
  %v3121 = vld [vmem:[%s3 + $0x48] sm:$0xff]
  %v3122 = vld [vmem:[%s3 + $0x50] sm:$0xff]
  %v3123 = vld [vmem:[%s3 + $0x58] sm:$0xff]
  %v3124 = vld [vmem:[%s3 + $0x60] sm:$0xff]
  %v3125 = vld [vmem:[%s3 + $0x68] sm:$0xff]
  %v3126 = vld [vmem:[%s3 + $0x70] sm:$0xff]
  %v3127 = vld [vmem:[%s3 + $0x78] sm:$0xff]
  %v3128 = vld [vmem:[%s3 + $0x80] sm:$0xff]
  %v3129 = vld [vmem:[%s3 + $0x88] sm:$0xff]
  %v3130 = vld [vmem:[%s3 + $0x90] sm:$0xff]
  %v3131 = vld [vmem:[%s3 + $0x98] sm:$0xff]
  %v3132 = vld [vmem:[%s3 + $0xa0] sm:$0xff]
  %v3133 = vld [vmem:[%s3 + $0xa8] sm:$0xff]
  %v3134 = vld [vmem:[%s3 + $0xb0] sm:$0xff]
  %v3135 = vld [vmem:[%s3 + $0xb8] sm:$0xff]
  %v3136 = vld [vmem:[%s3 + $0xc0] sm:$0xff]
  %v3137 = vld [vmem:[%s3 + $0xc8] sm:$0xff]
  %v3138 = vld [vmem:[%s3 + $0xd0] sm:$0xff]
  %v3139 = vld [vmem:[%s3 + $0xd8] sm:$0xff]
  %v3140 = vld [vmem:[%s3 + $0xe0] sm:$0xff]
  %v3141 = vld [vmem:[%s3 + $0xe8] sm:$0xff]
  %v3142 = vld [vmem:[%s3 + $0xf0] sm:$0xff]
  %v3143 = vld [vmem:[%s3 + $0xf8] sm:$0xff]
  %v3144 = vld [vmem:[%s3 + $0x100] sm:$0xff]
  %v3145 = vld [vmem:[%s3 + $0x108] sm:$0xff]
  %v3146 = vld [vmem:[%s3 + $0x110] sm:$0xff]
  %v3147 = vld [vmem:[%s3 + $0x118] sm:$0xff]
  %v3184 = vunpack.c.l.b16 %v3112
  %v3185 = vunpack.c.h.b16 %v3112
  %v3186 = vunpack.c.l.b16 %v3113
  %v3187 = vunpack.c.h.b16 %v3113
  %v3188 = vunpack.c.l.b16 %v3114
  %v3189 = vunpack.c.h.b16 %v3114
  %v3190 = vunpack.c.l.b16 %v3115
  %v3191 = vunpack.c.h.b16 %v3115
  %v3192 = vunpack.c.l.b16 %v3116
  %v3193 = vunpack.c.h.b16 %v3116
  %v3194 = vunpack.c.l.b16 %v3117
  %v3195 = vunpack.c.h.b16 %v3117
  %v3196 = vunpack.c.l.b16 %v3118
  %v3197 = vunpack.c.h.b16 %v3118
  %v3198 = vunpack.c.l.b16 %v3119
  %v3199 = vunpack.c.h.b16 %v3119
  %v3200 = vunpack.c.l.b16 %v3120
  %v3201 = vunpack.c.h.b16 %v3120
  %v3202 = vunpack.c.l.b16 %v3121
  %v3203 = vunpack.c.h.b16 %v3121
  %v3204 = vunpack.c.l.b16 %v3122
  %v3205 = vunpack.c.h.b16 %v3122
  %v3206 = vunpack.c.l.b16 %v3123
  %v3207 = vunpack.c.h.b16 %v3123
  %v3208 = vunpack.c.l.b16 %v3124
  %v3209 = vunpack.c.h.b16 %v3124
  %v3210 = vunpack.c.l.b16 %v3125
  %v3211 = vunpack.c.h.b16 %v3125
  %v3212 = vunpack.c.l.b16 %v3126
  %v3213 = vunpack.c.h.b16 %v3126
  %v3214 = vunpack.c.l.b16 %v3127
  %v3215 = vunpack.c.h.b16 %v3127
  %v3216 = vunpack.c.l.b16 %v3128
  %v3217 = vunpack.c.h.b16 %v3128
  %v3218 = vunpack.c.l.b16 %v3129
  %v3219 = vunpack.c.h.b16 %v3129
  %v3220 = vunpack.c.l.b16 %v3130
  %v3221 = vunpack.c.h.b16 %v3130
  %v3222 = vunpack.c.l.b16 %v3131
  %v3223 = vunpack.c.h.b16 %v3131
  %v3224 = vunpack.c.l.b16 %v3132
  %v3225 = vunpack.c.h.b16 %v3132
  %v3226 = vunpack.c.l.b16 %v3133
  %v3227 = vunpack.c.h.b16 %v3133
  %v3228 = vunpack.c.l.b16 %v3134
  %v3229 = vunpack.c.h.b16 %v3134
  %v3230 = vunpack.c.l.b16 %v3135
  %v3231 = vunpack.c.h.b16 %v3135
  %v3232 = vunpack.c.l.b16 %v3136
  %v3233 = vunpack.c.h.b16 %v3136
  %v3234 = vunpack.c.l.b16 %v3137
  %v3235 = vunpack.c.h.b16 %v3137
  %v3236 = vunpack.c.l.b16 %v3138
  %v3237 = vunpack.c.h.b16 %v3138
  %v3238 = vunpack.c.l.b16 %v3139
  %v3239 = vunpack.c.h.b16 %v3139
  %v3240 = vunpack.c.l.b16 %v3140
  %v3241 = vunpack.c.h.b16 %v3140
  %v3242 = vunpack.c.l.b16 %v3141
  %v3243 = vunpack.c.h.b16 %v3141
  %v3244 = vunpack.c.l.b16 %v3142
  %v3245 = vunpack.c.h.b16 %v3142
  %v3246 = vunpack.c.l.b16 %v3143
  %v3247 = vunpack.c.h.b16 %v3143
  %v3248 = vunpack.c.l.b16 %v3144
  %v3249 = vunpack.c.h.b16 %v3144
  %v3250 = vunpack.c.l.b16 %v3145
  %v3251 = vunpack.c.h.b16 %v3145
  %v3252 = vunpack.c.l.b16 %v3146
  %v3253 = vunpack.c.h.b16 %v3146
  %v3254 = vunpack.c.l.b16 %v3147
  %v3255 = vunpack.c.h.b16 %v3147
  %v3256 = vpack.c.b16 %v3202, %v3184
  %v3257 = vpack.c.b16 %v3203, %v3185
  %v3258 = vpack.c.b16 %v3204, %v3186
  %v3259 = vpack.c.b16 %v3205, %v3187
  %v3260 = vpack.c.b16 %v3206, %v3188
  %v3261 = vpack.c.b16 %v3207, %v3189
  %v3262 = vpack.c.b16 %v3208, %v3190
  %v3263 = vpack.c.b16 %v3209, %v3191
  %v3264 = vpack.c.b16 %v3210, %v3192
  %v3265 = vpack.c.b16 %v3211, %v3193
  %v3266 = vpack.c.b16 %v3212, %v3194
  %v3267 = vpack.c.b16 %v3213, %v3195
  %v3268 = vpack.c.b16 %v3214, %v3196
  %v3269 = vpack.c.b16 %v3215, %v3197
  %v3270 = vpack.c.b16 %v3216, %v3198
  %v3271 = vpack.c.b16 %v3217, %v3199
  %v3272 = vpack.c.b16 %v3218, %v3200
  %v3273 = vpack.c.b16 %v3219, %v3201
  %v3274 = vpack.c.b16 %v3238, %v3220
  %v3275 = vpack.c.b16 %v3239, %v3221
  %v3276 = vpack.c.b16 %v3240, %v3222
  %v3277 = vpack.c.b16 %v3241, %v3223
  %v3278 = vpack.c.b16 %v3242, %v3224
  %v3279 = vpack.c.b16 %v3243, %v3225
  %v3280 = vpack.c.b16 %v3244, %v3226
  %v3281 = vpack.c.b16 %v3245, %v3227
  %v3282 = vpack.c.b16 %v3246, %v3228
  %v3283 = vpack.c.b16 %v3247, %v3229
  %v3284 = vpack.c.b16 %v3248, %v3230
  %v3285 = vpack.c.b16 %v3249, %v3231
  %v3286 = vpack.c.b16 %v3250, %v3232
  %v3287 = vpack.c.b16 %v3251, %v3233
  %v3288 = vpack.c.b16 %v3252, %v3234
  %v3289 = vpack.c.b16 %v3253, %v3235
  %v3290 = vpack.c.b16 %v3254, %v3236
  %v3291 = vpack.c.b16 %v3255, %v3237
  %v3327 = vsel %vm1338, %v3273, 0
  %v3330 = vsel %vm1338, %v3291, 0
  %3332 = vmatprep.subr.bf16.mxu0 0
  %3333 = vmatpush1.bf16.msra.mxu0 %v1063
  %3334 = vmatprep.subr.bf16.mxu0 0
  %3335 = vmatpush1.bf16.msra.mxu0 %v1064
  %3336 = vmatprep.subr.bf16.mxu0 0
  %3337 = vmatpush1.bf16.msra.mxu0 %v1065
  %3338 = vmatprep.subr.bf16.mxu0 0
  %3339 = vmatpush1.bf16.msra.mxu0 %v1066
  %3340 = vmatprep.subr.bf16.mxu0 0
  %3341 = vmatpush1.bf16.msra.mxu0 %v1067
  %3342 = vmatprep.subr.bf16.mxu0 0
  %3343 = vmatpush1.bf16.msra.mxu0 %v1068
  %3344 = vmatprep.subr.bf16.mxu0 0
  %3345 = vmatpush1.bf16.msra.mxu0 %v1069
  %3346 = vmatprep.subr.bf16.mxu0 0
  %3347 = vmatpush1.bf16.msra.mxu0 %v1070
  %3348 = vmatprep.subr.bf16.mxu0 0
  %3349 = vmatpush1.bf16.msra.mxu0 %v1071
  %3350 = vmatprep.subr.bf16.mxu0 0
  %3351 = vmatpush1.bf16.msra.mxu0 %v1072
  %3352 = vmatprep.subr.bf16.mxu0 0
  %3353 = vmatpush1.bf16.msra.mxu0 %v1073
  %3354 = vmatprep.subr.bf16.mxu0 0
  %3355 = vmatpush1.bf16.msra.mxu0 %v1074
  %3356 = vmatprep.subr.bf16.mxu0 0
  %3357 = vmatpush1.bf16.msra.mxu0 %v1075
  %3358 = vmatprep.subr.bf16.mxu0 0
  %3359 = vmatpush1.bf16.msra.mxu0 %v1076
  %3360 = vmatprep.subr.bf16.mxu0 0
  %3361 = vmatpush1.bf16.msra.mxu0 %v1077
  %3362 = vmatprep.subr.bf16.mxu0 0
  %3363 = vmatpush1.bf16.msra.mxu0 %v1078
  %3364 = vmatprep.mubr.bf16.mxu0 %v3257
  %3365 = vmatmul.mubr.bf16.gmra.mrb[0].mxu0 %v3256
  %v3366 = vpop.f32.mrb[0].mxu0
  %v3367 = vadd.f32 0.0, %v3366
  %v3368 = vpop.f32.mrb[0].mxu0
  %v3369 = vpop.f32.mrb[0].mxu0
  %v3370 = vadd.f32 0.0, %v3369
  %v3371 = vpop.f32.mrb[0].mxu0
  %3372 = vmatprep.mubr.bf16.mxu0 %v3275
  %3373 = vmatmul.mubr.bf16.gmra.mrb[0].mxu0 %v3274
  %v3374 = vpop.f32.mrb[0].mxu0
  %v3375 = vadd.f32 0.0, %v3374
  %v3376 = vpop.f32.mrb[0].mxu0
  %v3377 = vpop.f32.mrb[0].mxu0
  %v3378 = vadd.f32 0.0, %v3377
  %v3379 = vpop.f32.mrb[0].mxu0
  %3380 = vdwg.mxu0
  %3381 = vmatprep.subr.bf16.mxu0 0
  %3382 = vmatpush1.bf16.msra.mxu0 %v1079
  %3383 = vmatprep.subr.bf16.mxu0 0
  %3384 = vmatpush1.bf16.msra.mxu0 %v1080
  %3385 = vmatprep.subr.bf16.mxu0 0
  %3386 = vmatpush1.bf16.msra.mxu0 %v1081
  %3387 = vmatprep.subr.bf16.mxu0 0
  %3388 = vmatpush1.bf16.msra.mxu0 %v1082
  %3389 = vmatprep.subr.bf16.mxu0 0
  %3390 = vmatpush1.bf16.msra.mxu0 %v1083
  %3391 = vmatprep.subr.bf16.mxu0 0
  %3392 = vmatpush1.bf16.msra.mxu0 %v1084
  %3393 = vmatprep.subr.bf16.mxu0 0
  %3394 = vmatpush1.bf16.msra.mxu0 %v1085
  %3395 = vmatprep.subr.bf16.mxu0 0
  %3396 = vmatpush1.bf16.msra.mxu0 %v1086
  %3397 = vmatprep.subr.bf16.mxu0 0
  %3398 = vmatpush1.bf16.msra.mxu0 %v1087
  %3399 = vmatprep.subr.bf16.mxu0 0
  %3400 = vmatpush1.bf16.msra.mxu0 %v1088
  %3401 = vmatprep.subr.bf16.mxu0 0
  %3402 = vmatpush1.bf16.msra.mxu0 %v1089
  %3403 = vmatprep.subr.bf16.mxu0 0
  %3404 = vmatpush1.bf16.msra.mxu0 %v1090
  %3405 = vmatprep.subr.bf16.mxu0 0
  %3406 = vmatpush1.bf16.msra.mxu0 %v1091
  %3407 = vmatprep.subr.bf16.mxu0 0
  %3408 = vmatpush1.bf16.msra.mxu0 %v1092
  %3409 = vmatprep.subr.bf16.mxu0 0
  %3410 = vmatpush1.bf16.msra.mxu0 %v1093
  %3411 = vmatprep.subr.bf16.mxu0 0
  %3412 = vmatpush1.bf16.msra.mxu0 %v1094
  %3413 = vmatprep.mubr.bf16.mxu0 %v3259
  %3414 = vmatmul.mubr.bf16.gmra.mrb[0].mxu0 %v3258
  %v3415 = vpop.f32.mrb[0].mxu0
  %v3416 = vadd.f32 %v3367, %v3415
  %v3417 = vpop.f32.mrb[0].mxu0
  %v3418 = vpop.f32.mrb[0].mxu0
  %v3419 = vadd.f32 %v3370, %v3418
  %v3420 = vpop.f32.mrb[0].mxu0
  %3421 = vmatprep.mubr.bf16.mxu0 %v3277
  %3422 = vmatmul.mubr.bf16.gmra.mrb[0].mxu0 %v3276
  %v3423 = vpop.f32.mrb[0].mxu0
  %v3424 = vadd.f32 %v3375, %v3423
  %v3425 = vpop.f32.mrb[0].mxu0
  %v3426 = vpop.f32.mrb[0].mxu0
  %v3427 = vadd.f32 %v3378, %v3426
  %v3428 = vpop.f32.mrb[0].mxu0
  %3429 = vdwg.mxu0
  %3430 = vmatprep.subr.bf16.mxu0 0
  %3431 = vmatpush1.bf16.msra.mxu0 %v1095
  %3432 = vmatprep.subr.bf16.mxu0 0
  %3433 = vmatpush1.bf16.msra.mxu0 %v1096
  %3434 = vmatprep.subr.bf16.mxu0 0
  %3435 = vmatpush1.bf16.msra.mxu0 %v1097
  %3436 = vmatprep.subr.bf16.mxu0 0
  %3437 = vmatpush1.bf16.msra.mxu0 %v1098
  %3438 = vmatprep.subr.bf16.mxu0 0
  %3439 = vmatpush1.bf16.msra.mxu0 %v1099
  %3440 = vmatprep.subr.bf16.mxu0 0
  %3441 = vmatpush1.bf16.msra.mxu0 %v1100
  %3442 = vmatprep.subr.bf16.mxu0 0
  %3443 = vmatpush1.bf16.msra.mxu0 %v1101
  %3444 = vmatprep.subr.bf16.mxu0 0
  %3445 = vmatpush1.bf16.msra.mxu0 %v1102
  %3446 = vmatprep.subr.bf16.mxu0 0
  %3447 = vmatpush1.bf16.msra.mxu0 %v1103
  %3448 = vmatprep.subr.bf16.mxu0 0
  %3449 = vmatpush1.bf16.msra.mxu0 %v1104
  %3450 = vmatprep.subr.bf16.mxu0 0
  %3451 = vmatpush1.bf16.msra.mxu0 %v1105
  %3452 = vmatprep.subr.bf16.mxu0 0
  %3453 = vmatpush1.bf16.msra.mxu0 %v1106
  %3454 = vmatprep.subr.bf16.mxu0 0
  %3455 = vmatpush1.bf16.msra.mxu0 %v1107
  %3456 = vmatprep.subr.bf16.mxu0 0
  %3457 = vmatpush1.bf16.msra.mxu0 %v1108
  %3458 = vmatprep.subr.bf16.mxu0 0
  %3459 = vmatpush1.bf16.msra.mxu0 %v1109
  %3460 = vmatprep.subr.bf16.mxu0 0
  %3461 = vmatpush1.bf16.msra.mxu0 %v1110
  %3462 = vmatprep.mubr.bf16.mxu0 %v3261
  %3463 = vmatmul.mubr.bf16.gmra.mrb[0].mxu0 %v3260
  %v3464 = vpop.f32.mrb[0].mxu0
  %v3465 = vadd.f32 %v3416, %v3464
  %v3466 = vpop.f32.mrb[0].mxu0
  %v3467 = vpop.f32.mrb[0].mxu0
  %v3468 = vadd.f32 %v3419, %v3467
  %v3469 = vpop.f32.mrb[0].mxu0
  %3470 = vmatprep.mubr.bf16.mxu0 %v3279
  %3471 = vmatmul.mubr.bf16.gmra.mrb[0].mxu0 %v3278
  %v3472 = vpop.f32.mrb[0].mxu0
  %v3473 = vadd.f32 %v3424, %v3472
  %v3474 = vpop.f32.mrb[0].mxu0
  %v3475 = vpop.f32.mrb[0].mxu0
  %v3476 = vadd.f32 %v3427, %v3475
  %v3477 = vpop.f32.mrb[0].mxu0
  %3478 = vdwg.mxu0
  %3479 = vmatprep.subr.bf16.mxu0 0
  %3480 = vmatpush1.bf16.msra.mxu0 %v1111
  %3481 = vmatprep.subr.bf16.mxu0 0
  %3482 = vmatpush1.bf16.msra.mxu0 %v1112
  %3483 = vmatprep.subr.bf16.mxu0 0
  %3484 = vmatpush1.bf16.msra.mxu0 %v1113
  %3485 = vmatprep.subr.bf16.mxu0 0
  %3486 = vmatpush1.bf16.msra.mxu0 %v1114
  %3487 = vmatprep.subr.bf16.mxu0 0
  %3488 = vmatpush1.bf16.msra.mxu0 %v1115
  %3489 = vmatprep.subr.bf16.mxu0 0
  %3490 = vmatpush1.bf16.msra.mxu0 %v1116
  %3491 = vmatprep.subr.bf16.mxu0 0
  %3492 = vmatpush1.bf16.msra.mxu0 %v1117
  %3493 = vmatprep.subr.bf16.mxu0 0
  %3494 = vmatpush1.bf16.msra.mxu0 %v1118
  %3495 = vmatprep.subr.bf16.mxu0 0
  %3496 = vmatpush1.bf16.msra.mxu0 %v1119
  %3497 = vmatprep.subr.bf16.mxu0 0
  %3498 = vmatpush1.bf16.msra.mxu0 %v1120
  %3499 = vmatprep.subr.bf16.mxu0 0
  %3500 = vmatpush1.bf16.msra.mxu0 %v1121
  %3501 = vmatprep.subr.bf16.mxu0 0
  %3502 = vmatpush1.bf16.msra.mxu0 %v1122
  %3503 = vmatprep.subr.bf16.mxu0 0
  %3504 = vmatpush1.bf16.msra.mxu0 %v1123
  %3505 = vmatprep.subr.bf16.mxu0 0
  %3506 = vmatpush1.bf16.msra.mxu0 %v1124
  %3507 = vmatprep.subr.bf16.mxu0 0
  %3508 = vmatpush1.bf16.msra.mxu0 %v1125
  %3509 = vmatprep.subr.bf16.mxu0 0
  %3510 = vmatpush1.bf16.msra.mxu0 %v1126
  %3511 = vmatprep.mubr.bf16.mxu0 %v3263
  %3512 = vmatmul.mubr.bf16.gmra.mrb[0].mxu0 %v3262
  %v3513 = vpop.f32.mrb[0].mxu0
  %v3514 = vadd.f32 %v3465, %v3513
  %v3515 = vpop.f32.mrb[0].mxu0
  %v3516 = vpop.f32.mrb[0].mxu0
  %v3517 = vadd.f32 %v3468, %v3516
  %v3518 = vpop.f32.mrb[0].mxu0
  %3519 = vmatprep.mubr.bf16.mxu0 %v3281
  %3520 = vmatmul.mubr.bf16.gmra.mrb[0].mxu0 %v3280
  %v3521 = vpop.f32.mrb[0].mxu0
  %v3522 = vadd.f32 %v3473, %v3521
  %v3523 = vpop.f32.mrb[0].mxu0
  %v3524 = vpop.f32.mrb[0].mxu0
  %v3525 = vadd.f32 %v3476, %v3524
  %v3526 = vpop.f32.mrb[0].mxu0
  %3527 = vdwg.mxu0
  %3528 = vmatprep.subr.bf16.mxu0 0
  %3529 = vmatpush1.bf16.msra.mxu0 %v1127
  %3530 = vmatprep.subr.bf16.mxu0 0
  %3531 = vmatpush1.bf16.msra.mxu0 %v1128
  %3532 = vmatprep.subr.bf16.mxu0 0
  %3533 = vmatpush1.bf16.msra.mxu0 %v1129
  %3534 = vmatprep.subr.bf16.mxu0 0
  %3535 = vmatpush1.bf16.msra.mxu0 %v1130
  %3536 = vmatprep.subr.bf16.mxu0 0
  %3537 = vmatpush1.bf16.msra.mxu0 %v1131
  %3538 = vmatprep.subr.bf16.mxu0 0
  %3539 = vmatpush1.bf16.msra.mxu0 %v1132
  %3540 = vmatprep.subr.bf16.mxu0 0
  %3541 = vmatpush1.bf16.msra.mxu0 %v1133
  %3542 = vmatprep.subr.bf16.mxu0 0
  %3543 = vmatpush1.bf16.msra.mxu0 %v1134
  %3544 = vmatprep.subr.bf16.mxu0 0
  %3545 = vmatpush1.bf16.msra.mxu0 %v1135
  %3546 = vmatprep.subr.bf16.mxu0 0
  %3547 = vmatpush1.bf16.msra.mxu0 %v1136
  %3548 = vmatprep.subr.bf16.mxu0 0
  %3549 = vmatpush1.bf16.msra.mxu0 %v1137
  %3550 = vmatprep.subr.bf16.mxu0 0
  %3551 = vmatpush1.bf16.msra.mxu0 %v1138
  %3552 = vmatprep.subr.bf16.mxu0 0
  %3553 = vmatpush1.bf16.msra.mxu0 %v1139
  %3554 = vmatprep.subr.bf16.mxu0 0
  %3555 = vmatpush1.bf16.msra.mxu0 %v1140
  %3556 = vmatprep.subr.bf16.mxu0 0
  %3557 = vmatpush1.bf16.msra.mxu0 %v1141
  %3558 = vmatprep.subr.bf16.mxu0 0
  %3559 = vmatpush1.bf16.msra.mxu0 %v1142
  %3560 = vmatprep.mubr.bf16.mxu0 %v3265
  %3561 = vmatmul.mubr.bf16.gmra.mrb[0].mxu0 %v3264
  %v3562 = vpop.f32.mrb[0].mxu0
  %v3563 = vadd.f32 %v3514, %v3562
  %v3564 = vpop.f32.mrb[0].mxu0
  %v3565 = vpop.f32.mrb[0].mxu0
  %v3566 = vadd.f32 %v3517, %v3565
  %v3567 = vpop.f32.mrb[0].mxu0
  %3568 = vmatprep.mubr.bf16.mxu0 %v3283
  %3569 = vmatmul.mubr.bf16.gmra.mrb[0].mxu0 %v3282
  %v3570 = vpop.f32.mrb[0].mxu0
  %v3571 = vadd.f32 %v3522, %v3570
  %v3572 = vpop.f32.mrb[0].mxu0
  %v3573 = vpop.f32.mrb[0].mxu0
  %v3574 = vadd.f32 %v3525, %v3573
  %v3575 = vpop.f32.mrb[0].mxu0
  %3576 = vdwg.mxu0
  %3577 = vmatprep.subr.bf16.mxu0 0
  %3578 = vmatpush1.bf16.msra.mxu0 %v1143
  %3579 = vmatprep.subr.bf16.mxu0 0
  %3580 = vmatpush1.bf16.msra.mxu0 %v1144
  %3581 = vmatprep.subr.bf16.mxu0 0
  %3582 = vmatpush1.bf16.msra.mxu0 %v1145
  %3583 = vmatprep.subr.bf16.mxu0 0
  %3584 = vmatpush1.bf16.msra.mxu0 %v1146
  %3585 = vmatprep.subr.bf16.mxu0 0
  %3586 = vmatpush1.bf16.msra.mxu0 %v1147
  %3587 = vmatprep.subr.bf16.mxu0 0
  %3588 = vmatpush1.bf16.msra.mxu0 %v1148
  %3589 = vmatprep.subr.bf16.mxu0 0
  %3590 = vmatpush1.bf16.msra.mxu0 %v1149
  %3591 = vmatprep.subr.bf16.mxu0 0
  %3592 = vmatpush1.bf16.msra.mxu0 %v1150
  %3593 = vmatprep.subr.bf16.mxu0 0
  %3594 = vmatpush1.bf16.msra.mxu0 %v1151
  %3595 = vmatprep.subr.bf16.mxu0 0
  %3596 = vmatpush1.bf16.msra.mxu0 %v1152
  %3597 = vmatprep.subr.bf16.mxu0 0
  %3598 = vmatpush1.bf16.msra.mxu0 %v1153
  %3599 = vmatprep.subr.bf16.mxu0 0
  %3600 = vmatpush1.bf16.msra.mxu0 %v1154
  %3601 = vmatprep.subr.bf16.mxu0 0
  %3602 = vmatpush1.bf16.msra.mxu0 %v1155
  %3603 = vmatprep.subr.bf16.mxu0 0
  %3604 = vmatpush1.bf16.msra.mxu0 %v1156
  %3605 = vmatprep.subr.bf16.mxu0 0
  %3606 = vmatpush1.bf16.msra.mxu0 %v1157
  %3607 = vmatprep.subr.bf16.mxu0 0
  %3608 = vmatpush1.bf16.msra.mxu0 %v1158
  %3609 = vmatprep.mubr.bf16.mxu0 %v3267
  %3610 = vmatmul.mubr.bf16.gmra.mrb[0].mxu0 %v3266
  %v3611 = vpop.f32.mrb[0].mxu0
  %v3612 = vadd.f32 %v3563, %v3611
  %v3613 = vpop.f32.mrb[0].mxu0
  %v3614 = vpop.f32.mrb[0].mxu0
  %v3615 = vadd.f32 %v3566, %v3614
  %v3616 = vpop.f32.mrb[0].mxu0
  %3617 = vmatprep.mubr.bf16.mxu0 %v3285
  %3618 = vmatmul.mubr.bf16.gmra.mrb[0].mxu0 %v3284
  %v3619 = vpop.f32.mrb[0].mxu0
  %v3620 = vadd.f32 %v3571, %v3619
  %v3621 = vpop.f32.mrb[0].mxu0
  %v3622 = vpop.f32.mrb[0].mxu0
  %v3623 = vadd.f32 %v3574, %v3622
  %v3624 = vpop.f32.mrb[0].mxu0
  %3625 = vdwg.mxu0
  %3626 = vmatprep.subr.bf16.mxu0 0
  %3627 = vmatpush1.bf16.msra.mxu0 %v1159
  %3628 = vmatprep.subr.bf16.mxu0 0
  %3629 = vmatpush1.bf16.msra.mxu0 %v1160
  %3630 = vmatprep.subr.bf16.mxu0 0
  %3631 = vmatpush1.bf16.msra.mxu0 %v1161
  %3632 = vmatprep.subr.bf16.mxu0 0
  %3633 = vmatpush1.bf16.msra.mxu0 %v1162
  %3634 = vmatprep.subr.bf16.mxu0 0
  %3635 = vmatpush1.bf16.msra.mxu0 %v1163
  %3636 = vmatprep.subr.bf16.mxu0 0
  %3637 = vmatpush1.bf16.msra.mxu0 %v1164
  %3638 = vmatprep.subr.bf16.mxu0 0
  %3639 = vmatpush1.bf16.msra.mxu0 %v1165
  %3640 = vmatprep.subr.bf16.mxu0 0
  %3641 = vmatpush1.bf16.msra.mxu0 %v1166
  %3642 = vmatprep.subr.bf16.mxu0 0
  %3643 = vmatpush1.bf16.msra.mxu0 %v1167
  %3644 = vmatprep.subr.bf16.mxu0 0
  %3645 = vmatpush1.bf16.msra.mxu0 %v1168
  %3646 = vmatprep.subr.bf16.mxu0 0
  %3647 = vmatpush1.bf16.msra.mxu0 %v1169
  %3648 = vmatprep.subr.bf16.mxu0 0
  %3649 = vmatpush1.bf16.msra.mxu0 %v1170
  %3650 = vmatprep.subr.bf16.mxu0 0
  %3651 = vmatpush1.bf16.msra.mxu0 %v1171
  %3652 = vmatprep.subr.bf16.mxu0 0
  %3653 = vmatpush1.bf16.msra.mxu0 %v1172
  %3654 = vmatprep.subr.bf16.mxu0 0
  %3655 = vmatpush1.bf16.msra.mxu0 %v1173
  %3656 = vmatprep.subr.bf16.mxu0 0
  %3657 = vmatpush1.bf16.msra.mxu0 %v1174
  %3658 = vmatprep.mubr.bf16.mxu0 %v3269
  %3659 = vmatmul.mubr.bf16.gmra.mrb[0].mxu0 %v3268
  %v3660 = vpop.f32.mrb[0].mxu0
  %v3661 = vadd.f32 %v3612, %v3660
  %v3662 = vpop.f32.mrb[0].mxu0
  %v3663 = vpop.f32.mrb[0].mxu0
  %v3664 = vadd.f32 %v3615, %v3663
  %v3665 = vpop.f32.mrb[0].mxu0
  %3666 = vmatprep.mubr.bf16.mxu0 %v3287
  %3667 = vmatmul.mubr.bf16.gmra.mrb[0].mxu0 %v3286
  %v3668 = vpop.f32.mrb[0].mxu0
  %v3669 = vadd.f32 %v3620, %v3668
  %v3670 = vpop.f32.mrb[0].mxu0
  %v3671 = vpop.f32.mrb[0].mxu0
  %v3672 = vadd.f32 %v3623, %v3671
  %v3673 = vpop.f32.mrb[0].mxu0
  %3674 = vdwg.mxu0
  %3675 = vmatprep.subr.bf16.mxu0 0
  %3676 = vmatpush1.bf16.msra.mxu0 %v1175
  %3677 = vmatprep.subr.bf16.mxu0 0
  %3678 = vmatpush1.bf16.msra.mxu0 %v1176
  %3679 = vmatprep.subr.bf16.mxu0 0
  %3680 = vmatpush1.bf16.msra.mxu0 %v1177
  %3681 = vmatprep.subr.bf16.mxu0 0
  %3682 = vmatpush1.bf16.msra.mxu0 %v1178
  %3683 = vmatprep.subr.bf16.mxu0 0
  %3684 = vmatpush1.bf16.msra.mxu0 %v1179
  %3685 = vmatprep.subr.bf16.mxu0 0
  %3686 = vmatpush1.bf16.msra.mxu0 %v1180
  %3687 = vmatprep.subr.bf16.mxu0 0
  %3688 = vmatpush1.bf16.msra.mxu0 %v1181
  %3689 = vmatprep.subr.bf16.mxu0 0
  %3690 = vmatpush1.bf16.msra.mxu0 %v1182
  %3691 = vmatprep.subr.bf16.mxu0 0
  %3692 = vmatpush1.bf16.msra.mxu0 %v1183
  %3693 = vmatprep.subr.bf16.mxu0 0
  %3694 = vmatpush1.bf16.msra.mxu0 %v1184
  %3695 = vmatprep.subr.bf16.mxu0 0
  %3696 = vmatpush1.bf16.msra.mxu0 %v1185
  %3697 = vmatprep.subr.bf16.mxu0 0
  %3698 = vmatpush1.bf16.msra.mxu0 %v1186
  %3699 = vmatprep.subr.bf16.mxu0 0
  %3700 = vmatpush1.bf16.msra.mxu0 %v1187
  %3701 = vmatprep.subr.bf16.mxu0 0
  %3702 = vmatpush1.bf16.msra.mxu0 %v1188
  %3703 = vmatprep.subr.bf16.mxu0 0
  %3704 = vmatpush1.bf16.msra.mxu0 %v1189
  %3705 = vmatprep.subr.bf16.mxu0 0
  %3706 = vmatpush1.bf16.msra.mxu0 %v1190
  %3707 = vmatprep.mubr.bf16.mxu0 %v3271
  %3708 = vmatmul.mubr.bf16.gmra.mrb[0].mxu0 %v3270
  %v3709 = vpop.f32.mrb[0].mxu0
  %v3710 = vadd.f32 %v3661, %v3709
  %v3711 = vpop.f32.mrb[0].mxu0
  %v3712 = vpop.f32.mrb[0].mxu0
  %v3713 = vadd.f32 %v3664, %v3712
  %v3714 = vpop.f32.mrb[0].mxu0
  %3715 = vmatprep.mubr.bf16.mxu0 %v3289
  %3716 = vmatmul.mubr.bf16.gmra.mrb[0].mxu0 %v3288
  %v3717 = vpop.f32.mrb[0].mxu0
  %v3718 = vadd.f32 %v3669, %v3717
  %v3719 = vpop.f32.mrb[0].mxu0
  %v3720 = vpop.f32.mrb[0].mxu0
  %v3721 = vadd.f32 %v3672, %v3720
  %v3722 = vpop.f32.mrb[0].mxu0
  %3723 = vdwg.mxu0
  %3724 = vmatprep.subr.bf16.mxu0 0
  %3725 = vmatpush1.bf16.msra.mxu0 %v1191
  %3726 = vmatprep.subr.bf16.mxu0 0
  %3727 = vmatpush1.bf16.msra.mxu0 %v1192
  %3728 = vmatprep.subr.bf16.mxu0 0
  %3729 = vmatpush1.bf16.msra.mxu0 %v1193
  %3730 = vmatprep.subr.bf16.mxu0 0
  %3731 = vmatpush1.bf16.msra.mxu0 %v1194
  %3732 = vmatprep.subr.bf16.mxu0 0
  %3733 = vmatpush1.bf16.msra.mxu0 %v1195
  %3734 = vmatprep.subr.bf16.mxu0 0
  %3735 = vmatpush1.bf16.msra.mxu0 %v1196
  %3736 = vmatprep.subr.bf16.mxu0 0
  %3737 = vmatpush1.bf16.msra.mxu0 %v1197
  %3738 = vmatprep.subr.bf16.mxu0 0
  %3739 = vmatpush1.bf16.msra.mxu0 %v1198
  %3740 = vmatprep.subr.bf16.mxu0 0
  %3741 = vmatpush1.bf16.msra.mxu0 %v1199
  %3742 = vmatprep.subr.bf16.mxu0 0
  %3743 = vmatpush1.bf16.msra.mxu0 %v1347
  %3744 = vmatprep.subr.bf16.mxu0 0
  %3745 = vmatpush1.bf16.msra.mxu0 0
  %3746 = vmatprep.subr.bf16.mxu0 0
  %3747 = vmatpush1.bf16.msra.mxu0 0
  %3748 = vmatprep.subr.bf16.mxu0 0
  %3749 = vmatpush1.bf16.msra.mxu0 0
  %3750 = vmatprep.subr.bf16.mxu0 0
  %3751 = vmatpush1.bf16.msra.mxu0 0
  %3752 = vmatprep.subr.bf16.mxu0 0
  %3753 = vmatpush1.bf16.msra.mxu0 0
  %3754 = vmatprep.subr.bf16.mxu0 0
  %3755 = vmatpush1.bf16.msra.mxu0 0
  %3756 = vmatprep.mubr.bf16.mxu0 %v3327
  %3757 = vmatmul.mubr.bf16.gmra.mrb[0].mxu0 %v3272
  %v3758 = vpop.f32.mrb[0].mxu0
  %v3759 = vadd.f32 %v3710, %v3758
  %v3760 = vpop.f32.mrb[0].mxu0
  %v3761 = vpop.f32.mrb[0].mxu0
  %v3762 = vadd.f32 %v3713, %v3761
  %v3763 = vpop.f32.mrb[0].mxu0
  %3764 = vmatprep.mubr.bf16.mxu0 %v3330
  %3765 = vmatmul.mubr.bf16.gmra.mrb[0].mxu0 %v3290
  %v3766 = vpop.f32.mrb[0].mxu0
  %v3767 = vadd.f32 %v3718, %v3766
  %v3768 = vpop.f32.mrb[0].mxu0
  %v3769 = vpop.f32.mrb[0].mxu0
  %v3770 = vadd.f32 %v3721, %v3769
  %v3771 = vpop.f32.mrb[0].mxu0
  %3772 = vdwg.mxu0
  %v3773 = vmax.f32 %v1776, %v2437
  %v3774 = vmax.f32 %v1779, %v2440
  %v3775 = vmax.f32 %v1784, %v2445
  %v3776 = vmax.f32 %v1787, %v2448
  %v3777 = vmax.f32 %v3098, %v3759
  %v3778 = vmax.f32 %v3101, %v3762
  %v3779 = vmax.f32 %v3106, %v3767
  %v3780 = vmax.f32 %v3109, %v3770
  %v3781 = vmax.f32 %v3773, %v3777
  %v3782 = vmax.f32 %v3774, %v3778
  %v3783 = vmax.f32 %v3775, %v3779
  %v3784 = vmax.f32 %v3776, %v3780
  %v3785 = vld [vmem:[%s5] sm:$0x1]
  %v3787 = vlaneseq
  %v3788 = vshrl.u32 %v3787, 7
  %v3789 = vsub.s32 0, %v3788
  %v3790 = vrot.slane %v3785, %v3789
  %v3792 = vadd.f32 %v3781, %v3790
  %v3793 = vadd.f32 %v3782, %v3790
  %v3794 = vadd.f32 %v3783, %v3790
  %v3795 = vadd.f32 %v3784, %v3790
  %v3796 = vmax.f32 %v3792, 0.0
  %v3797 = vmax.f32 %v3793, 0.0
  %v3798 = vmax.f32 %v3794, 0.0
  %v3799 = vmax.f32 %v3795, 0.0
  %3800 = vst [vmem:[%s6] sm:$0xff] %v3796
  %3801 = vst [vmem:[%s6 + $0x8] sm:$0xff] %v3797
  %3802 = vst [vmem:[%s6 + $0x10] sm:$0xff] %v3798
  %3803 = vst [vmem:[%s6 + $0x18] sm:$0xff] %v3799
  // Predicated region
  $region26: #{net_forward.16} parent=0 // pred_check
    _
  $region27: #{net_forward.16} parent=0 // pred_check_branch
    %3805 = sbr.rel (0) target = $region29
  $region28: #{net_forward.16} parent=0 // pred_region
    _
  $region29: #{net_forward.16} parent=0 // pred_fallthru
    _
  // Predicated region
  $region30: #{net_forward.16} parent=0 // pred_check
    _
  $region31: #{net_forward.16} parent=0 // pred_check_branch
    %3807 = sbr.rel (0) target = $region33
  $region32: #{net_forward.16} parent=0 // pred_region
    _
  $region33: #{net_forward.16} parent=0 // pred_fallthru
    _

// kernel: net_forward.18
$region0: #{net_forward.18}
  #allocation0 [shape = 'u32[]', space=smem, size = 0x4, offset = 0x4, fixed_abs, tag = 'smem constant byte address 0x4 - core index']
  #allocation1 [shape = 'u32[144,128]{1,0:T(1,128)}', space=vmem, size = 0x12000, scoped, tag = 'internal scratch']
  %s0 = inlined_call_operand.vmem [shape: bf16[32,400], index: 0, kind: input, shape index: {}]
  %s1 = inlined_call_operand.vmem [shape: bf16[400,128], index: 1, kind: input, shape index: {}]
  %s2 = inlined_call_operand.vmem [shape: f32[1,128], index: 2, kind: input, shape index: {}]
  %s3 = inlined_call_operand.vmem [shape: f32[32,128], index: 3, kind: output, shape index: {}]
  %s4 = sld [smem:[#allocation0]]
  $region22: #{net_forward.18} parent=0
    _
  %s6 = ssub.s32 1, %s4
  %s7 = scalar_select 0, %s6, %s4
  // Predicated region
  $region2: #{net_forward.18} parent=0 // pred_check
    _
  $region3: #{net_forward.18} parent=0 // pred_check_branch
    %9 = sbr.rel (0) target = $region5
  $region4: #{net_forward.18} parent=0 // pred_region
    _
  $region5: #{net_forward.18} parent=0 // pred_fallthru
    _
  // Predicated region
  $region6: #{net_forward.18} parent=0 // pred_check
    _
  $region7: #{net_forward.18} parent=0 // pred_check_branch
    %11 = sbr.rel (0) target = $region9
  $region8: #{net_forward.18} parent=0 // pred_region
    _
  $region9: #{net_forward.18} parent=0 // pred_fallthru
    _
  // Predicated region
  $region10: #{net_forward.18} parent=0 // pred_check
    _
  $region11: #{net_forward.18} parent=0 // pred_check_branch
    %13 = sbr.rel (0) target = $region13
  $region12: #{net_forward.18} parent=0 // pred_region
    _
  $region13: #{net_forward.18} parent=0 // pred_fallthru
    _
  %v15 = vld [vmem:[%s0] sm:$0xff]
  %v16 = vld [vmem:[%s0 + $0x8] sm:$0xff]
  %v17 = vld [vmem:[%s0 + $0x10] sm:$0xff]
  %v18 = vld [vmem:[%s0 + $0x18] sm:$0xff]
  %v19 = vld [vmem:[%s0 + $0x20] sm:$0xff]
  %v20 = vld [vmem:[%s0 + $0x28] sm:$0xff]
  %v21 = vld [vmem:[%s0 + $0x30] sm:$0xff]
  %v22 = vld [vmem:[%s0 + $0x38] sm:$0xff]
  %v23 = vld [vmem:[%s1] sm:$0xf]
  %v24 = vld [vmem:[%s1 + $0x4] sm:$0xf]
  %v25 = vld [vmem:[%s1 + $0x8] sm:$0xf]
  %v26 = vld [vmem:[%s1 + $0xc] sm:$0xf]
  %v27 = vld [vmem:[%s1 + $0x10] sm:$0xf]
  %v28 = vld [vmem:[%s1 + $0x14] sm:$0xf]
  %v29 = vld [vmem:[%s1 + $0x18] sm:$0xf]
  %v30 = vld [vmem:[%s1 + $0x1c] sm:$0xf]
  %v31 = vld [vmem:[%s1 + $0x20] sm:$0xf]
  %v32 = vld [vmem:[%s1 + $0x24] sm:$0xf]
  %v33 = vld [vmem:[%s1 + $0x28] sm:$0xf]
  %v34 = vld [vmem:[%s1 + $0x2c] sm:$0xf]
  %v35 = vld [vmem:[%s1 + $0x30] sm:$0xf]
  %v36 = vld [vmem:[%s1 + $0x34] sm:$0xf]
  %v37 = vld [vmem:[%s1 + $0x38] sm:$0xf]
  %v38 = vld [vmem:[%s1 + $0x3c] sm:$0xf]
  %v39 = vld [vmem:[%s1 + $0x40] sm:$0xf]
  %v40 = vld [vmem:[%s1 + $0x44] sm:$0xf]
  %v41 = vld [vmem:[%s1 + $0x48] sm:$0xf]
  %v42 = vld [vmem:[%s1 + $0x4c] sm:$0xf]
  %v43 = vld [vmem:[%s1 + $0x50] sm:$0xf]
  %v44 = vld [vmem:[%s1 + $0x54] sm:$0xf]
  %v45 = vld [vmem:[%s1 + $0x58] sm:$0xf]
  %v46 = vld [vmem:[%s1 + $0x5c] sm:$0xf]
  %v47 = vld [vmem:[%s1 + $0x60] sm:$0xf]
  %v48 = vld [vmem:[%s1 + $0x64] sm:$0xf]
  %v49 = vld [vmem:[%s1 + $0x68] sm:$0xf]
  %v50 = vld [vmem:[%s1 + $0x6c] sm:$0xf]
  %v51 = vld [vmem:[%s1 + $0x70] sm:$0xf]
  %v52 = vld [vmem:[%s1 + $0x74] sm:$0xf]
  %v53 = vld [vmem:[%s1 + $0x78] sm:$0xf]
  %v54 = vld [vmem:[%s1 + $0x7c] sm:$0xf]
  %v55 = vld [vmem:[%s1 + $0x80] sm:$0xf]
  %v56 = vld [vmem:[%s1 + $0x84] sm:$0xf]
  %v57 = vld [vmem:[%s1 + $0x88] sm:$0xf]
  %v58 = vld [vmem:[%s1 + $0x8c] sm:$0xf]
  %v59 = vld [vmem:[%s1 + $0x90] sm:$0xf]
  %v60 = vld [vmem:[%s1 + $0x94] sm:$0xf]
  %v61 = vld [vmem:[%s1 + $0x98] sm:$0xf]
  %v62 = vld [vmem:[%s1 + $0x9c] sm:$0xf]
  %v63 = vld [vmem:[%s1 + $0xa0] sm:$0xf]
  %v64 = vld [vmem:[%s1 + $0xa4] sm:$0xf]
  %v65 = vld [vmem:[%s1 + $0xa8] sm:$0xf]
  %v66 = vld [vmem:[%s1 + $0xac] sm:$0xf]
  %v67 = vld [vmem:[%s1 + $0xb0] sm:$0xf]
  %v68 = vld [vmem:[%s1 + $0xb4] sm:$0xf]
  %v69 = vld [vmem:[%s1 + $0xb8] sm:$0xf]
  %v70 = vld [vmem:[%s1 + $0xbc] sm:$0xf]
  %v71 = vld [vmem:[%s1 + $0xc0] sm:$0xf]
  %v72 = vld [vmem:[%s1 + $0xc4] sm:$0xf]
  %v73 = vld [vmem:[%s2] sm:$0x1]
  %v75 = vlaneseq
  %v76 = vshrl.u32 %v75, 7
  %v77 = vsub.s32 0, %v76
  %v78 = vrot.slane %v73, %v77
  %v88 = vunpack.c.l.b16 %v15
  %v89 = vunpack.c.h.b16 %v15
  %v90 = vunpack.c.l.b16 %v16
  %v91 = vunpack.c.h.b16 %v16
  %v92 = vunpack.c.l.b16 %v17
  %v93 = vunpack.c.h.b16 %v17
  %v94 = vunpack.c.l.b16 %v18
  %v95 = vunpack.c.h.b16 %v18
  %v96 = vunpack.c.l.b16 %v19
  %v97 = vunpack.c.h.b16 %v19
  %v98 = vunpack.c.l.b16 %v20
  %v99 = vunpack.c.h.b16 %v20
  %v100 = vunpack.c.l.b16 %v21
  %v101 = vunpack.c.h.b16 %v21
  %v102 = vunpack.c.l.b16 %v22
  %v103 = vunpack.c.h.b16 %v22
  %v104 = vpack.c.b16 %v92, %v88
  %v105 = vpack.c.b16 %v93, %v89
  %v106 = vpack.c.b16 %v94, %v90
  %v107 = vpack.c.b16 %v95, %v91
  %v108 = vpack.c.b16 %v100, %v96
  %v109 = vpack.c.b16 %v101, %v97
  %v110 = vpack.c.b16 %v102, %v98
  %v111 = vpack.c.b16 %v103, %v99
  %v168 = vunpack.c.l.b16 %v23
  %v169 = vunpack.c.l.b16 %v24
  %v170 = vunpack.c.l.b16 %v25
  %v171 = vunpack.c.l.b16 %v26
  %v172 = vunpack.c.l.b16 %v27
  %v173 = vunpack.c.l.b16 %v28
  %v174 = vunpack.c.l.b16 %v29
  %v175 = vunpack.c.l.b16 %v30
  %v176 = vunpack.c.l.b16 %v31
  %v177 = vunpack.c.l.b16 %v32
  %v178 = vunpack.c.l.b16 %v33
  %v179 = vunpack.c.l.b16 %v34
  %v180 = vunpack.c.l.b16 %v35
  %v181 = vunpack.c.l.b16 %v36
  %v182 = vunpack.c.l.b16 %v37
  %v183 = vunpack.c.l.b16 %v38
  %v184 = vunpack.c.l.b16 %v39
  %v185 = vunpack.c.l.b16 %v40
  %v186 = vunpack.c.l.b16 %v41
  %v187 = vunpack.c.l.b16 %v42
  %v188 = vunpack.c.l.b16 %v43
  %v189 = vunpack.c.l.b16 %v44
  %v190 = vunpack.c.l.b16 %v45
  %v191 = vunpack.c.l.b16 %v46
  %v192 = vunpack.c.l.b16 %v47
  %v193 = vunpack.c.l.b16 %v48
  %v194 = vunpack.c.l.b16 %v49
  %v195 = vunpack.c.l.b16 %v50
  %v196 = vunpack.c.l.b16 %v51
  %v197 = vunpack.c.l.b16 %v52
  %v198 = vunpack.c.l.b16 %v53
  %v199 = vunpack.c.l.b16 %v54
  %v200 = vunpack.c.l.b16 %v55
  %v201 = vunpack.c.l.b16 %v56
  %v202 = vunpack.c.l.b16 %v57
  %v203 = vunpack.c.l.b16 %v58
  %v204 = vunpack.c.l.b16 %v59
  %v205 = vunpack.c.l.b16 %v60
  %v206 = vunpack.c.l.b16 %v61
  %v207 = vunpack.c.l.b16 %v62
  %v208 = vunpack.c.l.b16 %v63
  %v209 = vunpack.c.l.b16 %v64
  %v210 = vunpack.c.l.b16 %v65
  %v211 = vunpack.c.l.b16 %v66
  %v212 = vunpack.c.l.b16 %v67
  %v213 = vunpack.c.l.b16 %v68
  %v214 = vunpack.c.l.b16 %v69
  %v215 = vunpack.c.l.b16 %v70
  %v216 = vunpack.c.l.b16 %v71
  %v217 = vunpack.c.l.b16 %v72
  %v218 = vpack.c.b16 %v169, %v168
  %v219 = vpack.c.b16 %v171, %v170
  %v220 = vpack.c.b16 %v173, %v172
  %v221 = vpack.c.b16 %v175, %v174
  %v222 = vpack.c.b16 %v177, %v176
  %v223 = vpack.c.b16 %v179, %v178
  %v224 = vpack.c.b16 %v181, %v180
  %v225 = vpack.c.b16 %v183, %v182
  %v226 = vpack.c.b16 %v185, %v184
  %v227 = vpack.c.b16 %v187, %v186
  %v228 = vpack.c.b16 %v189, %v188
  %v229 = vpack.c.b16 %v191, %v190
  %v230 = vpack.c.b16 %v193, %v192
  %v231 = vpack.c.b16 %v195, %v194
  %v232 = vpack.c.b16 %v197, %v196
  %v233 = vpack.c.b16 %v199, %v198
  %v234 = vpack.c.b16 %v201, %v200
  %v235 = vpack.c.b16 %v203, %v202
  %v236 = vpack.c.b16 %v205, %v204
  %v237 = vpack.c.b16 %v207, %v206
  %v238 = vpack.c.b16 %v209, %v208
  %v239 = vpack.c.b16 %v211, %v210
  %v240 = vpack.c.b16 %v213, %v212
  %v241 = vpack.c.b16 %v215, %v214
  %v242 = vpack.c.b16 %v217, %v216
  %vm268 = vcmask 130048
  %v270 = vsel %vm268, %v107, 0
  %v273 = vsel %vm268, %v111, 0
  %275 = vmatprep.subr.bf16.mxu0 0
  %276 = vmatpush1.bf16.msra.mxu0 %v218
  %277 = vmatprep.subr.bf16.mxu0 0
  %278 = vmatpush1.bf16.msra.mxu0 %v219
  %279 = vmatprep.subr.bf16.mxu0 0
  %280 = vmatpush1.bf16.msra.mxu0 %v220
  %281 = vmatprep.subr.bf16.mxu0 0
  %282 = vmatpush1.bf16.msra.mxu0 %v221
  %283 = vmatprep.subr.bf16.mxu0 0
  %284 = vmatpush1.bf16.msra.mxu0 %v222
  %285 = vmatprep.subr.bf16.mxu0 0
  %286 = vmatpush1.bf16.msra.mxu0 %v223
  %287 = vmatprep.subr.bf16.mxu0 0
  %288 = vmatpush1.bf16.msra.mxu0 %v224
  %289 = vmatprep.subr.bf16.mxu0 0
  %290 = vmatpush1.bf16.msra.mxu0 %v225
  %291 = vmatprep.subr.bf16.mxu0 0
  %292 = vmatpush1.bf16.msra.mxu0 %v226
  %293 = vmatprep.subr.bf16.mxu0 0
  %294 = vmatpush1.bf16.msra.mxu0 %v227
  %295 = vmatprep.subr.bf16.mxu0 0
  %296 = vmatpush1.bf16.msra.mxu0 %v228
  %297 = vmatprep.subr.bf16.mxu0 0
  %298 = vmatpush1.bf16.msra.mxu0 %v229
  %299 = vmatprep.subr.bf16.mxu0 0
  %300 = vmatpush1.bf16.msra.mxu0 %v230
  %301 = vmatprep.subr.bf16.mxu0 0
  %302 = vmatpush1.bf16.msra.mxu0 %v231
  %303 = vmatprep.subr.bf16.mxu0 0
  %304 = vmatpush1.bf16.msra.mxu0 %v232
  %305 = vmatprep.subr.bf16.mxu0 0
  %306 = vmatpush1.bf16.msra.mxu0 %v233
  %307 = vmatprep.mubr.bf16.mxu0 %v105
  %308 = vmatmul.mubr.bf16.gmra.mrb[0].mxu0 %v104
  %v309 = vpop.f32.mrb[0].mxu0
  %v310 = vadd.f32 %v78, %v309
  %v311 = vpop.f32.mrb[0].mxu0
  %v312 = vpop.f32.mrb[0].mxu0
  %v313 = vadd.f32 %v78, %v312
  %v314 = vpop.f32.mrb[0].mxu0
  %315 = vmatprep.mubr.bf16.mxu0 %v109
  %316 = vmatmul.mubr.bf16.gmra.mrb[0].mxu0 %v108
  %v317 = vpop.f32.mrb[0].mxu0
  %v318 = vadd.f32 %v78, %v317
  %v319 = vpop.f32.mrb[0].mxu0
  %v320 = vpop.f32.mrb[0].mxu0
  %v321 = vadd.f32 %v78, %v320
  %v322 = vpop.f32.mrb[0].mxu0
  %323 = vdwg.mxu0
  %324 = vmatprep.subr.bf16.mxu0 0
  %325 = vmatpush1.bf16.msra.mxu0 %v234
  %326 = vmatprep.subr.bf16.mxu0 0
  %327 = vmatpush1.bf16.msra.mxu0 %v235
  %328 = vmatprep.subr.bf16.mxu0 0
  %329 = vmatpush1.bf16.msra.mxu0 %v236
  %330 = vmatprep.subr.bf16.mxu0 0
  %331 = vmatpush1.bf16.msra.mxu0 %v237
  %332 = vmatprep.subr.bf16.mxu0 0
  %333 = vmatpush1.bf16.msra.mxu0 %v238
  %334 = vmatprep.subr.bf16.mxu0 0
  %335 = vmatpush1.bf16.msra.mxu0 %v239
  %336 = vmatprep.subr.bf16.mxu0 0
  %337 = vmatpush1.bf16.msra.mxu0 %v240
  %338 = vmatprep.subr.bf16.mxu0 0
  %339 = vmatpush1.bf16.msra.mxu0 %v241
  %340 = vmatprep.subr.bf16.mxu0 0
  %341 = vmatpush1.bf16.msra.mxu0 %v242
  %342 = vmatprep.subr.bf16.mxu0 0
  %343 = vmatpush1.bf16.msra.mxu0 0
  %344 = vmatprep.subr.bf16.mxu0 0
  %345 = vmatpush1.bf16.msra.mxu0 0
  %346 = vmatprep.subr.bf16.mxu0 0
  %347 = vmatpush1.bf16.msra.mxu0 0
  %348 = vmatprep.subr.bf16.mxu0 0
  %349 = vmatpush1.bf16.msra.mxu0 0
  %350 = vmatprep.subr.bf16.mxu0 0
  %351 = vmatpush1.bf16.msra.mxu0 0
  %352 = vmatprep.subr.bf16.mxu0 0
  %353 = vmatpush1.bf16.msra.mxu0 0
  %354 = vmatprep.subr.bf16.mxu0 0
  %355 = vmatpush1.bf16.msra.mxu0 0
  %356 = vmatprep.mubr.bf16.mxu0 %v270
  %357 = vmatmul.mubr.bf16.gmra.mrb[0].mxu0 %v106
  %v358 = vpop.f32.mrb[0].mxu0
  %v359 = vadd.f32 %v310, %v358
  %v360 = vpop.f32.mrb[0].mxu0
  %v361 = vpop.f32.mrb[0].mxu0
  %v362 = vadd.f32 %v313, %v361
  %v363 = vpop.f32.mrb[0].mxu0
  %364 = vmatprep.mubr.bf16.mxu0 %v273
  %365 = vmatmul.mubr.bf16.gmra.mrb[0].mxu0 %v110
  %v366 = vpop.f32.mrb[0].mxu0
  %v367 = vadd.f32 %v318, %v366
  %v368 = vpop.f32.mrb[0].mxu0
  %v369 = vpop.f32.mrb[0].mxu0
  %v370 = vadd.f32 %v321, %v369
  %v371 = vpop.f32.mrb[0].mxu0
  %372 = vdwg.mxu0
  %373 = vst [vmem:[%s3] sm:$0xff] %v359
  %374 = vst [vmem:[%s3 + $0x8] sm:$0xff] %v362
  %375 = vst [vmem:[%s3 + $0x10] sm:$0xff] %v367
  %376 = vst [vmem:[%s3 + $0x18] sm:$0xff] %v370
  // Predicated region
  $region14: #{net_forward.18} parent=0 // pred_check
    _
  $region15: #{net_forward.18} parent=0 // pred_check_branch
    %378 = sbr.rel (0) target = $region17
  $region16: #{net_forward.18} parent=0 // pred_region
    _
  $region17: #{net_forward.18} parent=0 // pred_fallthru
    _
  // Predicated region
  $region18: #{net_forward.18} parent=0 // pred_check
    _
  $region19: #{net_forward.18} parent=0 // pred_check_branch
    %380 = sbr.rel (0) target = $region21
  $region20: #{net_forward.18} parent=0 // pred_region
    _
  $region21: #{net_forward.18} parent=0 // pred_fallthru
    _

// kernel: net_forward.21
$region0: #{net_forward.21}
  #allocation0 [shape = 'u32[]', space=smem, size = 0x4, offset = 0x4, fixed_abs, tag = 'smem constant byte address 0x4 - core index']
  #allocation1 [shape = 'u32[144,128]{1,0:T(1,128)}', space=vmem, size = 0x12000, scoped, tag = 'internal scratch']
  %s0 = inlined_call_operand.vmem [shape: bf16[2,1408], index: 0, kind: input, shape index: {}]
  %s1 = inlined_call_operand.vmem [shape: bf16[1408,128], index: 1, kind: input, shape index: {}]
  %s2 = inlined_call_operand.vmem [shape: f32[1,128], index: 2, kind: input, shape index: {}]
  %s3 = inlined_call_operand.hbm [shape: f32[2,128], index: 3, kind: output, shape index: {}]
  %s4 = sld [smem:[#allocation0]]
  $region22: #{net_forward.21} parent=0
    _
  %s6 = ssub.s32 1, %s4
  %s7 = scalar_select 0, %s6, %s4
  $region1: #{net_forward.21} parent=0
    #allocation2 [shape = 'u8[1024]{0}', space=vmem, size = 0x400, scoped, tag = 'output window, operand 0, single buffered']
    #allocation3 [shape = 's32[1]{0}', space=sflag, size = 0x4, scoped, tag = 'scoped memory for net_forward.21']
    %8 = vsyncpa [#allocation3], 0
    // Predicated region
    $region2: #{net_forward.21} parent=1 // pred_check
      _
    $region3: #{net_forward.21} parent=1 // pred_check_branch
      %10 = sbr.rel (0) target = $region5
    $region4: #{net_forward.21} parent=1 // pred_region
      _
    $region5: #{net_forward.21} parent=1 // pred_fallthru
      _
    // Predicated region
    $region6: #{net_forward.21} parent=1 // pred_check
      _
    $region7: #{net_forward.21} parent=1 // pred_check_branch
      %12 = sbr.rel (0) target = $region9
    $region8: #{net_forward.21} parent=1 // pred_region
      _
    $region9: #{net_forward.21} parent=1 // pred_fallthru
      _
    // Predicated region
    $region10: #{net_forward.21} parent=1 // pred_check
      _
    $region11: #{net_forward.21} parent=1 // pred_check_branch
      %14 = sbr.rel (0) target = $region13
    $region12: #{net_forward.21} parent=1 // pred_region
      _
    $region13: #{net_forward.21} parent=1 // pred_fallthru
      _
    %v16 = vld [vmem:[%s0] sm:$0xff]
    %v17 = vld [vmem:[%s0 + $0x8] sm:$0x7]
    %v18 = vld [vmem:[%s1] sm:$0xf]
    %v19 = vld [vmem:[%s1 + $0x4] sm:$0xf]
    %v20 = vld [vmem:[%s1 + $0x8] sm:$0xf]
    %v21 = vld [vmem:[%s1 + $0xc] sm:$0xf]
    %v22 = vld [vmem:[%s1 + $0x10] sm:$0xf]
    %v23 = vld [vmem:[%s1 + $0x14] sm:$0xf]
    %v24 = vld [vmem:[%s1 + $0x18] sm:$0xf]
    %v25 = vld [vmem:[%s1 + $0x1c] sm:$0xf]
    %v26 = vld [vmem:[%s1 + $0x20] sm:$0xf]
    %v27 = vld [vmem:[%s1 + $0x24] sm:$0xf]
    %v28 = vld [vmem:[%s1 + $0x28] sm:$0xf]
    %v29 = vld [vmem:[%s1 + $0x2c] sm:$0xf]
    %v30 = vld [vmem:[%s1 + $0x30] sm:$0xf]
    %v31 = vld [vmem:[%s1 + $0x34] sm:$0xf]
    %v32 = vld [vmem:[%s1 + $0x38] sm:$0xf]
    %v33 = vld [vmem:[%s1 + $0x3c] sm:$0xf]
    %v34 = vld [vmem:[%s1 + $0x40] sm:$0xf]
    %v35 = vld [vmem:[%s1 + $0x44] sm:$0xf]
    %v36 = vld [vmem:[%s1 + $0x48] sm:$0xf]
    %v37 = vld [vmem:[%s1 + $0x4c] sm:$0xf]
    %v38 = vld [vmem:[%s1 + $0x50] sm:$0xf]
    %v39 = vld [vmem:[%s1 + $0x54] sm:$0xf]
    %v40 = vld [vmem:[%s1 + $0x58] sm:$0xf]
    %v41 = vld [vmem:[%s1 + $0x5c] sm:$0xf]
    %v42 = vld [vmem:[%s1 + $0x60] sm:$0xf]
    %v43 = vld [vmem:[%s1 + $0x64] sm:$0xf]
    %v44 = vld [vmem:[%s1 + $0x68] sm:$0xf]
    %v45 = vld [vmem:[%s1 + $0x6c] sm:$0xf]
    %v46 = vld [vmem:[%s1 + $0x70] sm:$0xf]
    %v47 = vld [vmem:[%s1 + $0x74] sm:$0xf]
    %v48 = vld [vmem:[%s1 + $0x78] sm:$0xf]
    %v49 = vld [vmem:[%s1 + $0x7c] sm:$0xf]
    %v50 = vld [vmem:[%s1 + $0x80] sm:$0xf]
    %v51 = vld [vmem:[%s1 + $0x84] sm:$0xf]
    %v52 = vld [vmem:[%s1 + $0x88] sm:$0xf]
    %v53 = vld [vmem:[%s1 + $0x8c] sm:$0xf]
    %v54 = vld [vmem:[%s1 + $0x90] sm:$0xf]
    %v55 = vld [vmem:[%s1 + $0x94] sm:$0xf]
    %v56 = vld [vmem:[%s1 + $0x98] sm:$0xf]
    %v57 = vld [vmem:[%s1 + $0x9c] sm:$0xf]
    %v58 = vld [vmem:[%s1 + $0xa0] sm:$0xf]
    %v59 = vld [vmem:[%s1 + $0xa4] sm:$0xf]
    %v60 = vld [vmem:[%s1 + $0xa8] sm:$0xf]
    %v61 = vld [vmem:[%s1 + $0xac] sm:$0xf]
    %v62 = vld [vmem:[%s1 + $0xb0] sm:$0xf]
    %v63 = vld [vmem:[%s1 + $0xb4] sm:$0xf]
    %v64 = vld [vmem:[%s1 + $0xb8] sm:$0xf]
    %v65 = vld [vmem:[%s1 + $0xbc] sm:$0xf]
    %v66 = vld [vmem:[%s1 + $0xc0] sm:$0xf]
    %v67 = vld [vmem:[%s1 + $0xc4] sm:$0xf]
    %v68 = vld [vmem:[%s1 + $0xc8] sm:$0xf]
    %v69 = vld [vmem:[%s1 + $0xcc] sm:$0xf]
    %v70 = vld [vmem:[%s1 + $0xd0] sm:$0xf]
    %v71 = vld [vmem:[%s1 + $0xd4] sm:$0xf]
    %v72 = vld [vmem:[%s1 + $0xd8] sm:$0xf]
    %v73 = vld [vmem:[%s1 + $0xdc] sm:$0xf]
    %v74 = vld [vmem:[%s1 + $0xe0] sm:$0xf]
    %v75 = vld [vmem:[%s1 + $0xe4] sm:$0xf]
    %v76 = vld [vmem:[%s1 + $0xe8] sm:$0xf]
    %v77 = vld [vmem:[%s1 + $0xec] sm:$0xf]
    %v78 = vld [vmem:[%s1 + $0xf0] sm:$0xf]
    %v79 = vld [vmem:[%s1 + $0xf4] sm:$0xf]
    %v80 = vld [vmem:[%s1 + $0xf8] sm:$0xf]
    %v81 = vld [vmem:[%s1 + $0xfc] sm:$0xf]
    %v82 = vld [vmem:[%s1 + $0x100] sm:$0xf]
    %v83 = vld [vmem:[%s1 + $0x104] sm:$0xf]
    %v84 = vld [vmem:[%s1 + $0x108] sm:$0xf]
    %v85 = vld [vmem:[%s1 + $0x10c] sm:$0xf]
    %v86 = vld [vmem:[%s1 + $0x110] sm:$0xf]
    %v87 = vld [vmem:[%s1 + $0x114] sm:$0xf]
    %v88 = vld [vmem:[%s1 + $0x118] sm:$0xf]
    %v89 = vld [vmem:[%s1 + $0x11c] sm:$0xf]
    %v90 = vld [vmem:[%s1 + $0x120] sm:$0xf]
    %v91 = vld [vmem:[%s1 + $0x124] sm:$0xf]
    %v92 = vld [vmem:[%s1 + $0x128] sm:$0xf]
    %v93 = vld [vmem:[%s1 + $0x12c] sm:$0xf]
    %v94 = vld [vmem:[%s1 + $0x130] sm:$0xf]
    %v95 = vld [vmem:[%s1 + $0x134] sm:$0xf]
    %v96 = vld [vmem:[%s1 + $0x138] sm:$0xf]
    %v97 = vld [vmem:[%s1 + $0x13c] sm:$0xf]
    %v98 = vld [vmem:[%s1 + $0x140] sm:$0xf]
    %v99 = vld [vmem:[%s1 + $0x144] sm:$0xf]
    %v100 = vld [vmem:[%s1 + $0x148] sm:$0xf]
    %v101 = vld [vmem:[%s1 + $0x14c] sm:$0xf]
    %v102 = vld [vmem:[%s1 + $0x150] sm:$0xf]
    %v103 = vld [vmem:[%s1 + $0x154] sm:$0xf]
    %v104 = vld [vmem:[%s1 + $0x158] sm:$0xf]
    %v105 = vld [vmem:[%s1 + $0x15c] sm:$0xf]
    %v106 = vld [vmem:[%s1 + $0x160] sm:$0xf]
    %v107 = vld [vmem:[%s1 + $0x164] sm:$0xf]
    %v108 = vld [vmem:[%s1 + $0x168] sm:$0xf]
    %v109 = vld [vmem:[%s1 + $0x16c] sm:$0xf]
    %v110 = vld [vmem:[%s1 + $0x170] sm:$0xf]
    %v111 = vld [vmem:[%s1 + $0x174] sm:$0xf]
    %v112 = vld [vmem:[%s1 + $0x178] sm:$0xf]
    %v113 = vld [vmem:[%s1 + $0x17c] sm:$0xf]
    %v114 = vld [vmem:[%s1 + $0x180] sm:$0xf]
    %v115 = vld [vmem:[%s1 + $0x184] sm:$0xf]
    %v116 = vld [vmem:[%s1 + $0x188] sm:$0xf]
    %v117 = vld [vmem:[%s1 + $0x18c] sm:$0xf]
    %v118 = vld [vmem:[%s1 + $0x190] sm:$0xf]
    %v119 = vld [vmem:[%s1 + $0x194] sm:$0xf]
    %v120 = vld [vmem:[%s1 + $0x198] sm:$0xf]
    %v121 = vld [vmem:[%s1 + $0x19c] sm:$0xf]
    %v122 = vld [vmem:[%s1 + $0x1a0] sm:$0xf]
    %v123 = vld [vmem:[%s1 + $0x1a4] sm:$0xf]
    %v124 = vld [vmem:[%s1 + $0x1a8] sm:$0xf]
    %v125 = vld [vmem:[%s1 + $0x1ac] sm:$0xf]
    %v126 = vld [vmem:[%s1 + $0x1b0] sm:$0xf]
    %v127 = vld [vmem:[%s1 + $0x1b4] sm:$0xf]
    %v128 = vld [vmem:[%s1 + $0x1b8] sm:$0xf]
    %v129 = vld [vmem:[%s1 + $0x1bc] sm:$0xf]
    %v130 = vld [vmem:[%s1 + $0x1c0] sm:$0xf]
    %v131 = vld [vmem:[%s1 + $0x1c4] sm:$0xf]
    %v132 = vld [vmem:[%s1 + $0x1c8] sm:$0xf]
    %v133 = vld [vmem:[%s1 + $0x1cc] sm:$0xf]
    %v134 = vld [vmem:[%s1 + $0x1d0] sm:$0xf]
    %v135 = vld [vmem:[%s1 + $0x1d4] sm:$0xf]
    %v136 = vld [vmem:[%s1 + $0x1d8] sm:$0xf]
    %v137 = vld [vmem:[%s1 + $0x1dc] sm:$0xf]
    %v138 = vld [vmem:[%s1 + $0x1e0] sm:$0xf]
    %v139 = vld [vmem:[%s1 + $0x1e4] sm:$0xf]
    %v140 = vld [vmem:[%s1 + $0x1e8] sm:$0xf]
    %v141 = vld [vmem:[%s1 + $0x1ec] sm:$0xf]
    %v142 = vld [vmem:[%s1 + $0x1f0] sm:$0xf]
    %v143 = vld [vmem:[%s1 + $0x1f4] sm:$0xf]
    %v144 = vld [vmem:[%s1 + $0x1f8] sm:$0xf]
    %v145 = vld [vmem:[%s1 + $0x1fc] sm:$0xf]
    %v146 = vld [vmem:[%s1 + $0x200] sm:$0xf]
    %v147 = vld [vmem:[%s1 + $0x204] sm:$0xf]
    %v148 = vld [vmem:[%s1 + $0x208] sm:$0xf]
    %v149 = vld [vmem:[%s1 + $0x20c] sm:$0xf]
    %v150 = vld [vmem:[%s1 + $0x210] sm:$0xf]
    %v151 = vld [vmem:[%s1 + $0x214] sm:$0xf]
    %v152 = vld [vmem:[%s1 + $0x218] sm:$0xf]
    %v153 = vld [vmem:[%s1 + $0x21c] sm:$0xf]
    %v154 = vld [vmem:[%s1 + $0x220] sm:$0xf]
    %v155 = vld [vmem:[%s1 + $0x224] sm:$0xf]
    %v156 = vld [vmem:[%s1 + $0x228] sm:$0xf]
    %v157 = vld [vmem:[%s1 + $0x22c] sm:$0xf]
    %v158 = vld [vmem:[%s1 + $0x230] sm:$0xf]
    %v159 = vld [vmem:[%s1 + $0x234] sm:$0xf]
    %v160 = vld [vmem:[%s1 + $0x238] sm:$0xf]
    %v161 = vld [vmem:[%s1 + $0x23c] sm:$0xf]
    %v162 = vld [vmem:[%s1 + $0x240] sm:$0xf]
    %v163 = vld [vmem:[%s1 + $0x244] sm:$0xf]
    %v164 = vld [vmem:[%s1 + $0x248] sm:$0xf]
    %v165 = vld [vmem:[%s1 + $0x24c] sm:$0xf]
    %v166 = vld [vmem:[%s1 + $0x250] sm:$0xf]
    %v167 = vld [vmem:[%s1 + $0x254] sm:$0xf]
    %v168 = vld [vmem:[%s1 + $0x258] sm:$0xf]
    %v169 = vld [vmem:[%s1 + $0x25c] sm:$0xf]
    %v170 = vld [vmem:[%s1 + $0x260] sm:$0xf]
    %v171 = vld [vmem:[%s1 + $0x264] sm:$0xf]
    %v172 = vld [vmem:[%s1 + $0x268] sm:$0xf]
    %v173 = vld [vmem:[%s1 + $0x26c] sm:$0xf]
    %v174 = vld [vmem:[%s1 + $0x270] sm:$0xf]
    %v175 = vld [vmem:[%s1 + $0x274] sm:$0xf]
    %v176 = vld [vmem:[%s1 + $0x278] sm:$0xf]
    %v177 = vld [vmem:[%s1 + $0x27c] sm:$0xf]
    %v178 = vld [vmem:[%s1 + $0x280] sm:$0xf]
    %v179 = vld [vmem:[%s1 + $0x284] sm:$0xf]
    %v180 = vld [vmem:[%s1 + $0x288] sm:$0xf]
    %v181 = vld [vmem:[%s1 + $0x28c] sm:$0xf]
    %v182 = vld [vmem:[%s1 + $0x290] sm:$0xf]
    %v183 = vld [vmem:[%s1 + $0x294] sm:$0xf]
    %v184 = vld [vmem:[%s1 + $0x298] sm:$0xf]
    %v185 = vld [vmem:[%s1 + $0x29c] sm:$0xf]
    %v186 = vld [vmem:[%s1 + $0x2a0] sm:$0xf]
    %v187 = vld [vmem:[%s1 + $0x2a4] sm:$0xf]
    %v188 = vld [vmem:[%s1 + $0x2a8] sm:$0xf]
    %v189 = vld [vmem:[%s1 + $0x2ac] sm:$0xf]
    %v190 = vld [vmem:[%s1 + $0x2b0] sm:$0xf]
    %v191 = vld [vmem:[%s1 + $0x2b4] sm:$0xf]
    %v192 = vld [vmem:[%s1 + $0x2b8] sm:$0xf]
    %v193 = vld [vmem:[%s1 + $0x2bc] sm:$0xf]
    %v194 = vld [vmem:[%s2] sm:$0x1]
    %v196 = vlaneseq
    %v197 = vshrl.u32 %v196, 7
    %v198 = vsub.s32 0, %v197
    %v199 = vrot.slane %v194, %v198
    %v203 = vcombine.high %v16, %v16
    %v205 = vunpack.c.l.s4 1966171168
    %v206 = vunpack.c.0.s8 %v205
    %v207 = vlaneseq
    %v208 = vshrl.u32 %v207, 7
    %v209 = vsub.s32 %v206, %v208
    %v210 = vrot.slane %v16, %v209
    %v212 = vunpack.c.l.s4 1966171168
    %v213 = vunpack.c.0.s8 %v212
    %v214 = vlaneseq
    %v215 = vshrl.u32 %v214, 7
    %v216 = vsub.s32 %v213, %v215
    %v217 = vrot.slane %v203, %v216
    %v218 = vcombine.high %v210, %v210
    %v219 = vcombine.high %v217, %v217
    %v221 = vunpack.c.l.s4 1966171168
    %v222 = vunpack.c.0.s8 %v221
    %v223 = vlaneseq
    %v224 = vshrl.u32 %v223, 7
    %v225 = vsub.s32 %v222, %v224
    %v226 = vrot.slane %v210, %v225
    %v228 = vunpack.c.l.s4 1966171168
    %v229 = vunpack.c.0.s8 %v228
    %v230 = vlaneseq
    %v231 = vshrl.u32 %v230, 7
    %v232 = vsub.s32 %v229, %v231
    %v233 = vrot.slane %v217, %v232
    %v235 = vunpack.c.l.s4 1966171168
    %v236 = vunpack.c.0.s8 %v235
    %v237 = vlaneseq
    %v238 = vshrl.u32 %v237, 7
    %v239 = vsub.s32 %v236, %v238
    %v240 = vrot.slane %v218, %v239
    %v242 = vunpack.c.l.s4 1966171168
    %v243 = vunpack.c.0.s8 %v242
    %v244 = vlaneseq
    %v245 = vshrl.u32 %v244, 7
    %v246 = vsub.s32 %v243, %v245
    %v247 = vrot.slane %v219, %v246
    %v248 = vcombine.high %v226, %v226
    %v249 = vcombine.high %v233, %v233
    %v250 = vcombine.high %v240, %v240
    %v251 = vcombine.high %v247, %v247
    %v253 = vunpack.c.l.s4 1966171168
    %v254 = vunpack.c.0.s8 %v253
    %v255 = vlaneseq
    %v256 = vshrl.u32 %v255, 7
    %v257 = vsub.s32 %v254, %v256
    %v258 = vrot.slane %v17, %v257
    %v259 = vcombine.high %v258, %v258
    %v261 = vunpack.c.l.s4 1966171168
    %v262 = vunpack.c.0.s8 %v261
    %v263 = vlaneseq
    %v264 = vshrl.u32 %v263, 7
    %v265 = vsub.s32 %v262, %v264
    %v266 = vrot.slane %v258, %v265
    %v268 = vunpack.c.l.s4 1966171168
    %v269 = vunpack.c.0.s8 %v268
    %v270 = vlaneseq
    %v271 = vshrl.u32 %v270, 7
    %v272 = vsub.s32 %v269, %v271
    %v273 = vrot.slane %v259, %v272
    %v274 = vcombine.high %v266, %v266
    %v462 = vunpack.c.l.b16 %v18
    %v463 = vunpack.c.l.b16 %v19
    %v464 = vunpack.c.l.b16 %v20
    %v465 = vunpack.c.l.b16 %v21
    %v466 = vunpack.c.l.b16 %v22
    %v467 = vunpack.c.l.b16 %v23
    %v468 = vunpack.c.l.b16 %v24
    %v469 = vunpack.c.l.b16 %v25
    %v470 = vunpack.c.l.b16 %v26
    %v471 = vunpack.c.l.b16 %v27
    %v472 = vunpack.c.l.b16 %v28
    %v473 = vunpack.c.l.b16 %v29
    %v474 = vunpack.c.l.b16 %v30
    %v475 = vunpack.c.l.b16 %v31
    %v476 = vunpack.c.l.b16 %v32
    %v477 = vunpack.c.l.b16 %v33
    %v478 = vunpack.c.l.b16 %v34
    %v479 = vunpack.c.l.b16 %v35
    %v480 = vunpack.c.l.b16 %v36
    %v481 = vunpack.c.l.b16 %v37
    %v482 = vunpack.c.l.b16 %v38
    %v483 = vunpack.c.l.b16 %v39
    %v484 = vunpack.c.l.b16 %v40
    %v485 = vunpack.c.l.b16 %v41
    %v486 = vunpack.c.l.b16 %v42
    %v487 = vunpack.c.l.b16 %v43
    %v488 = vunpack.c.l.b16 %v44
    %v489 = vunpack.c.l.b16 %v45
    %v490 = vunpack.c.l.b16 %v46
    %v491 = vunpack.c.l.b16 %v47
    %v492 = vunpack.c.l.b16 %v48
    %v493 = vunpack.c.l.b16 %v49
    %v494 = vunpack.c.l.b16 %v50
    %v495 = vunpack.c.l.b16 %v51
    %v496 = vunpack.c.l.b16 %v52
    %v497 = vunpack.c.l.b16 %v53
    %v498 = vunpack.c.l.b16 %v54
    %v499 = vunpack.c.l.b16 %v55
    %v500 = vunpack.c.l.b16 %v56
    %v501 = vunpack.c.l.b16 %v57
    %v502 = vunpack.c.l.b16 %v58
    %v503 = vunpack.c.l.b16 %v59
    %v504 = vunpack.c.l.b16 %v60
    %v505 = vunpack.c.l.b16 %v61
    %v506 = vunpack.c.l.b16 %v62
    %v507 = vunpack.c.l.b16 %v63
    %v508 = vunpack.c.l.b16 %v64
    %v509 = vunpack.c.l.b16 %v65
    %v510 = vunpack.c.l.b16 %v66
    %v511 = vunpack.c.l.b16 %v67
    %v512 = vunpack.c.l.b16 %v68
    %v513 = vunpack.c.l.b16 %v69
    %v514 = vunpack.c.l.b16 %v70
    %v515 = vunpack.c.l.b16 %v71
    %v516 = vunpack.c.l.b16 %v72
    %v517 = vunpack.c.l.b16 %v73
    %v518 = vunpack.c.l.b16 %v74
    %v519 = vunpack.c.l.b16 %v75
    %v520 = vunpack.c.l.b16 %v76
    %v521 = vunpack.c.l.b16 %v77
    %v522 = vunpack.c.l.b16 %v78
    %v523 = vunpack.c.l.b16 %v79
    %v524 = vunpack.c.l.b16 %v80
    %v525 = vunpack.c.l.b16 %v81
    %v526 = vunpack.c.l.b16 %v82
    %v527 = vunpack.c.l.b16 %v83
    %v528 = vunpack.c.l.b16 %v84
    %v529 = vunpack.c.l.b16 %v85
    %v530 = vunpack.c.l.b16 %v86
    %v531 = vunpack.c.l.b16 %v87
    %v532 = vunpack.c.l.b16 %v88
    %v533 = vunpack.c.l.b16 %v89
    %v534 = vunpack.c.l.b16 %v90
    %v535 = vunpack.c.l.b16 %v91
    %v536 = vunpack.c.l.b16 %v92
    %v537 = vunpack.c.l.b16 %v93
    %v538 = vunpack.c.l.b16 %v94
    %v539 = vunpack.c.l.b16 %v95
    %v540 = vunpack.c.l.b16 %v96
    %v541 = vunpack.c.l.b16 %v97
    %v542 = vunpack.c.l.b16 %v98
    %v543 = vunpack.c.l.b16 %v99
    %v544 = vunpack.c.l.b16 %v100
    %v545 = vunpack.c.l.b16 %v101
    %v546 = vunpack.c.l.b16 %v102
    %v547 = vunpack.c.l.b16 %v103
    %v548 = vunpack.c.l.b16 %v104
    %v549 = vunpack.c.l.b16 %v105
    %v550 = vunpack.c.l.b16 %v106
    %v551 = vunpack.c.l.b16 %v107
    %v552 = vunpack.c.l.b16 %v108
    %v553 = vunpack.c.l.b16 %v109
    %v554 = vunpack.c.l.b16 %v110
    %v555 = vunpack.c.l.b16 %v111
    %v556 = vunpack.c.l.b16 %v112
    %v557 = vunpack.c.l.b16 %v113
    %v558 = vunpack.c.l.b16 %v114
    %v559 = vunpack.c.l.b16 %v115
    %v560 = vunpack.c.l.b16 %v116
    %v561 = vunpack.c.l.b16 %v117
    %v562 = vunpack.c.l.b16 %v118
    %v563 = vunpack.c.l.b16 %v119
    %v564 = vunpack.c.l.b16 %v120
    %v565 = vunpack.c.l.b16 %v121
    %v566 = vunpack.c.l.b16 %v122
    %v567 = vunpack.c.l.b16 %v123
    %v568 = vunpack.c.l.b16 %v124
    %v569 = vunpack.c.l.b16 %v125
    %v570 = vunpack.c.l.b16 %v126
    %v571 = vunpack.c.l.b16 %v127
    %v572 = vunpack.c.l.b16 %v128
    %v573 = vunpack.c.l.b16 %v129
    %v574 = vunpack.c.l.b16 %v130
    %v575 = vunpack.c.l.b16 %v131
    %v576 = vunpack.c.l.b16 %v132
    %v577 = vunpack.c.l.b16 %v133
    %v578 = vunpack.c.l.b16 %v134
    %v579 = vunpack.c.l.b16 %v135
    %v580 = vunpack.c.l.b16 %v136
    %v581 = vunpack.c.l.b16 %v137
    %v582 = vunpack.c.l.b16 %v138
    %v583 = vunpack.c.l.b16 %v139
    %v584 = vunpack.c.l.b16 %v140
    %v585 = vunpack.c.l.b16 %v141
    %v586 = vunpack.c.l.b16 %v142
    %v587 = vunpack.c.l.b16 %v143
    %v588 = vunpack.c.l.b16 %v144
    %v589 = vunpack.c.l.b16 %v145
    %v590 = vunpack.c.l.b16 %v146
    %v591 = vunpack.c.l.b16 %v147
    %v592 = vunpack.c.l.b16 %v148
    %v593 = vunpack.c.l.b16 %v149
    %v594 = vunpack.c.l.b16 %v150
    %v595 = vunpack.c.l.b16 %v151
    %v596 = vunpack.c.l.b16 %v152
    %v597 = vunpack.c.l.b16 %v153
    %v598 = vunpack.c.l.b16 %v154
    %v599 = vunpack.c.l.b16 %v155
    %v600 = vunpack.c.l.b16 %v156
    %v601 = vunpack.c.l.b16 %v157
    %v602 = vunpack.c.l.b16 %v158
    %v603 = vunpack.c.l.b16 %v159
    %v604 = vunpack.c.l.b16 %v160
    %v605 = vunpack.c.l.b16 %v161
    %v606 = vunpack.c.l.b16 %v162
    %v607 = vunpack.c.l.b16 %v163
    %v608 = vunpack.c.l.b16 %v164
    %v609 = vunpack.c.l.b16 %v165
    %v610 = vunpack.c.l.b16 %v166
    %v611 = vunpack.c.l.b16 %v167
    %v612 = vunpack.c.l.b16 %v168
    %v613 = vunpack.c.l.b16 %v169
    %v614 = vunpack.c.l.b16 %v170
    %v615 = vunpack.c.l.b16 %v171
    %v616 = vunpack.c.l.b16 %v172
    %v617 = vunpack.c.l.b16 %v173
    %v618 = vunpack.c.l.b16 %v174
    %v619 = vunpack.c.l.b16 %v175
    %v620 = vunpack.c.l.b16 %v176
    %v621 = vunpack.c.l.b16 %v177
    %v622 = vunpack.c.l.b16 %v178
    %v623 = vunpack.c.l.b16 %v179
    %v624 = vunpack.c.l.b16 %v180
    %v625 = vunpack.c.l.b16 %v181
    %v626 = vunpack.c.l.b16 %v182
    %v627 = vunpack.c.l.b16 %v183
    %v628 = vunpack.c.l.b16 %v184
    %v629 = vunpack.c.l.b16 %v185
    %v630 = vunpack.c.l.b16 %v186
    %v631 = vunpack.c.l.b16 %v187
    %v632 = vunpack.c.l.b16 %v188
    %v633 = vunpack.c.l.b16 %v189
    %v634 = vunpack.c.l.b16 %v190
    %v635 = vunpack.c.l.b16 %v191
    %v636 = vunpack.c.l.b16 %v192
    %v637 = vunpack.c.l.b16 %v193
    %v638 = vpack.c.b16 %v463, %v462
    %v639 = vpack.c.b16 %v465, %v464
    %v640 = vpack.c.b16 %v467, %v466
    %v641 = vpack.c.b16 %v469, %v468
    %v642 = vpack.c.b16 %v471, %v470
    %v643 = vpack.c.b16 %v473, %v472
    %v644 = vpack.c.b16 %v475, %v474
    %v645 = vpack.c.b16 %v477, %v476
    %v646 = vpack.c.b16 %v479, %v478
    %v647 = vpack.c.b16 %v481, %v480
    %v648 = vpack.c.b16 %v483, %v482
    %v649 = vpack.c.b16 %v485, %v484
    %v650 = vpack.c.b16 %v487, %v486
    %v651 = vpack.c.b16 %v489, %v488
    %v652 = vpack.c.b16 %v491, %v490
    %v653 = vpack.c.b16 %v493, %v492
    %v654 = vpack.c.b16 %v495, %v494
    %v655 = vpack.c.b16 %v497, %v496
    %v656 = vpack.c.b16 %v499, %v498
    %v657 = vpack.c.b16 %v501, %v500
    %v658 = vpack.c.b16 %v503, %v502
    %v659 = vpack.c.b16 %v505, %v504
    %v660 = vpack.c.b16 %v507, %v506
    %v661 = vpack.c.b16 %v509, %v508
    %v662 = vpack.c.b16 %v511, %v510
    %v663 = vpack.c.b16 %v513, %v512
    %v664 = vpack.c.b16 %v515, %v514
    %v665 = vpack.c.b16 %v517, %v516
    %v666 = vpack.c.b16 %v519, %v518
    %v667 = vpack.c.b16 %v521, %v520
    %v668 = vpack.c.b16 %v523, %v522
    %v669 = vpack.c.b16 %v525, %v524
    %v670 = vpack.c.b16 %v527, %v526
    %v671 = vpack.c.b16 %v529, %v528
    %v672 = vpack.c.b16 %v531, %v530
    %v673 = vpack.c.b16 %v533, %v532
    %v674 = vpack.c.b16 %v535, %v534
    %v675 = vpack.c.b16 %v537, %v536
    %v676 = vpack.c.b16 %v539, %v538
    %v677 = vpack.c.b16 %v541, %v540
    %v678 = vpack.c.b16 %v543, %v542
    %v679 = vpack.c.b16 %v545, %v544
    %v680 = vpack.c.b16 %v547, %v546
    %v681 = vpack.c.b16 %v549, %v548
    %v682 = vpack.c.b16 %v551, %v550
    %v683 = vpack.c.b16 %v553, %v552
    %v684 = vpack.c.b16 %v555, %v554
    %v685 = vpack.c.b16 %v557, %v556
    %v686 = vpack.c.b16 %v559, %v558
    %v687 = vpack.c.b16 %v561, %v560
    %v688 = vpack.c.b16 %v563, %v562
    %v689 = vpack.c.b16 %v565, %v564
    %v690 = vpack.c.b16 %v567, %v566
    %v691 = vpack.c.b16 %v569, %v568
    %v692 = vpack.c.b16 %v571, %v570
    %v693 = vpack.c.b16 %v573, %v572
    %v694 = vpack.c.b16 %v575, %v574
    %v695 = vpack.c.b16 %v577, %v576
    %v696 = vpack.c.b16 %v579, %v578
    %v697 = vpack.c.b16 %v581, %v580
    %v698 = vpack.c.b16 %v583, %v582
    %v699 = vpack.c.b16 %v585, %v584
    %v700 = vpack.c.b16 %v587, %v586
    %v701 = vpack.c.b16 %v589, %v588
    %v702 = vpack.c.b16 %v591, %v590
    %v703 = vpack.c.b16 %v593, %v592
    %v704 = vpack.c.b16 %v595, %v594
    %v705 = vpack.c.b16 %v597, %v596
    %v706 = vpack.c.b16 %v599, %v598
    %v707 = vpack.c.b16 %v601, %v600
    %v708 = vpack.c.b16 %v603, %v602
    %v709 = vpack.c.b16 %v605, %v604
    %v710 = vpack.c.b16 %v607, %v606
    %v711 = vpack.c.b16 %v609, %v608
    %v712 = vpack.c.b16 %v611, %v610
    %v713 = vpack.c.b16 %v613, %v612
    %v714 = vpack.c.b16 %v615, %v614
    %v715 = vpack.c.b16 %v617, %v616
    %v716 = vpack.c.b16 %v619, %v618
    %v717 = vpack.c.b16 %v621, %v620
    %v718 = vpack.c.b16 %v623, %v622
    %v719 = vpack.c.b16 %v625, %v624
    %v720 = vpack.c.b16 %v627, %v626
    %v721 = vpack.c.b16 %v629, %v628
    %v722 = vpack.c.b16 %v631, %v630
    %v723 = vpack.c.b16 %v633, %v632
    %v724 = vpack.c.b16 %v635, %v634
    %v725 = vpack.c.b16 %v637, %v636
    %814 = vmatprep.subr.bf16.mxu0 0
    %815 = vmatpush1.bf16.msra.mxu0 %v638
    %816 = vmatprep.subr.bf16.mxu0 0
    %817 = vmatpush1.bf16.msra.mxu0 %v639
    %818 = vmatprep.subr.bf16.mxu0 0
    %819 = vmatpush1.bf16.msra.mxu0 %v640
    %820 = vmatprep.subr.bf16.mxu0 0
    %821 = vmatpush1.bf16.msra.mxu0 %v641
    %822 = vmatprep.subr.bf16.mxu0 0
    %823 = vmatpush1.bf16.msra.mxu0 %v642
    %824 = vmatprep.subr.bf16.mxu0 0
    %825 = vmatpush1.bf16.msra.mxu0 %v643
    %826 = vmatprep.subr.bf16.mxu0 0
    %827 = vmatpush1.bf16.msra.mxu0 %v644
    %828 = vmatprep.subr.bf16.mxu0 0
    %829 = vmatpush1.bf16.msra.mxu0 %v645
    %830 = vmatprep.subr.bf16.mxu0 0
    %831 = vmatpush1.bf16.msra.mxu0 %v646
    %832 = vmatprep.subr.bf16.mxu0 0
    %833 = vmatpush1.bf16.msra.mxu0 %v647
    %834 = vmatprep.subr.bf16.mxu0 0
    %835 = vmatpush1.bf16.msra.mxu0 %v648
    %836 = vmatprep.subr.bf16.mxu0 0
    %837 = vmatpush1.bf16.msra.mxu0 %v649
    %838 = vmatprep.subr.bf16.mxu0 0
    %839 = vmatpush1.bf16.msra.mxu0 %v650
    %840 = vmatprep.subr.bf16.mxu0 0
    %841 = vmatpush1.bf16.msra.mxu0 %v651
    %842 = vmatprep.subr.bf16.mxu0 0
    %843 = vmatpush1.bf16.msra.mxu0 %v652
    %844 = vmatprep.subr.bf16.mxu0 0
    %845 = vmatpush1.bf16.msra.mxu0 %v653
    %846 = vmatprep.mubr.bf16.mxu0 %v240
    %847 = vmatmul.mubr.bf16.gmra.mrb[0].mxu0 %v226
    %v848 = vpop.f32.mrb[0].mxu0
    %v849 = vadd.f32 %v199, %v848
    %v850 = vpop.f32.mrb[0].mxu0
    %v851 = vpop.f32.mrb[0].mxu0
    %v852 = vpop.f32.mrb[0].mxu0
    %853 = vdwg.mxu0
    %854 = vmatprep.subr.bf16.mxu0 0
    %855 = vmatpush1.bf16.msra.mxu0 %v654
    %856 = vmatprep.subr.bf16.mxu0 0
    %857 = vmatpush1.bf16.msra.mxu0 %v655
    %858 = vmatprep.subr.bf16.mxu0 0
    %859 = vmatpush1.bf16.msra.mxu0 %v656
    %860 = vmatprep.subr.bf16.mxu0 0
    %861 = vmatpush1.bf16.msra.mxu0 %v657
    %862 = vmatprep.subr.bf16.mxu0 0
    %863 = vmatpush1.bf16.msra.mxu0 %v658
    %864 = vmatprep.subr.bf16.mxu0 0
    %865 = vmatpush1.bf16.msra.mxu0 %v659
    %866 = vmatprep.subr.bf16.mxu0 0
    %867 = vmatpush1.bf16.msra.mxu0 %v660
    %868 = vmatprep.subr.bf16.mxu0 0
    %869 = vmatpush1.bf16.msra.mxu0 %v661
    %870 = vmatprep.subr.bf16.mxu0 0
    %871 = vmatpush1.bf16.msra.mxu0 %v662
    %872 = vmatprep.subr.bf16.mxu0 0
    %873 = vmatpush1.bf16.msra.mxu0 %v663
    %874 = vmatprep.subr.bf16.mxu0 0
    %875 = vmatpush1.bf16.msra.mxu0 %v664
    %876 = vmatprep.subr.bf16.mxu0 0
    %877 = vmatpush1.bf16.msra.mxu0 %v665
    %878 = vmatprep.subr.bf16.mxu0 0
    %879 = vmatpush1.bf16.msra.mxu0 %v666
    %880 = vmatprep.subr.bf16.mxu0 0
    %881 = vmatpush1.bf16.msra.mxu0 %v667
    %882 = vmatprep.subr.bf16.mxu0 0
    %883 = vmatpush1.bf16.msra.mxu0 %v668
    %884 = vmatprep.subr.bf16.mxu0 0
    %885 = vmatpush1.bf16.msra.mxu0 %v669
    %886 = vmatprep.mubr.bf16.mxu0 %v250
    %887 = vmatmul.mubr.bf16.gmra.mrb[0].mxu0 %v248
    %v888 = vpop.f32.mrb[0].mxu0
    %v889 = vadd.f32 %v849, %v888
    %v890 = vpop.f32.mrb[0].mxu0
    %v891 = vpop.f32.mrb[0].mxu0
    %v892 = vpop.f32.mrb[0].mxu0
    %893 = vdwg.mxu0
    %894 = vmatprep.subr.bf16.mxu0 0
    %895 = vmatpush1.bf16.msra.mxu0 %v670
    %896 = vmatprep.subr.bf16.mxu0 0
    %897 = vmatpush1.bf16.msra.mxu0 %v671
    %898 = vmatprep.subr.bf16.mxu0 0
    %899 = vmatpush1.bf16.msra.mxu0 %v672
    %900 = vmatprep.subr.bf16.mxu0 0
    %901 = vmatpush1.bf16.msra.mxu0 %v673
    %902 = vmatprep.subr.bf16.mxu0 0
    %903 = vmatpush1.bf16.msra.mxu0 %v674
    %904 = vmatprep.subr.bf16.mxu0 0
    %905 = vmatpush1.bf16.msra.mxu0 %v675
    %906 = vmatprep.subr.bf16.mxu0 0
    %907 = vmatpush1.bf16.msra.mxu0 %v676
    %908 = vmatprep.subr.bf16.mxu0 0
    %909 = vmatpush1.bf16.msra.mxu0 %v677
    %910 = vmatprep.subr.bf16.mxu0 0
    %911 = vmatpush1.bf16.msra.mxu0 %v678
    %912 = vmatprep.subr.bf16.mxu0 0
    %913 = vmatpush1.bf16.msra.mxu0 %v679
    %914 = vmatprep.subr.bf16.mxu0 0
    %915 = vmatpush1.bf16.msra.mxu0 %v680
    %916 = vmatprep.subr.bf16.mxu0 0
    %917 = vmatpush1.bf16.msra.mxu0 %v681
    %918 = vmatprep.subr.bf16.mxu0 0
    %919 = vmatpush1.bf16.msra.mxu0 %v682
    %920 = vmatprep.subr.bf16.mxu0 0
    %921 = vmatpush1.bf16.msra.mxu0 %v683
    %922 = vmatprep.subr.bf16.mxu0 0
    %923 = vmatpush1.bf16.msra.mxu0 %v684
    %924 = vmatprep.subr.bf16.mxu0 0
    %925 = vmatpush1.bf16.msra.mxu0 %v685
    %926 = vmatprep.mubr.bf16.mxu0 %v247
    %927 = vmatmul.mubr.bf16.gmra.mrb[0].mxu0 %v233
    %v928 = vpop.f32.mrb[0].mxu0
    %v929 = vadd.f32 %v889, %v928
    %v930 = vpop.f32.mrb[0].mxu0
    %v931 = vpop.f32.mrb[0].mxu0
    %v932 = vpop.f32.mrb[0].mxu0
    %933 = vdwg.mxu0
    %934 = vmatprep.subr.bf16.mxu0 0
    %935 = vmatpush1.bf16.msra.mxu0 %v686
    %936 = vmatprep.subr.bf16.mxu0 0
    %937 = vmatpush1.bf16.msra.mxu0 %v687
    %938 = vmatprep.subr.bf16.mxu0 0
    %939 = vmatpush1.bf16.msra.mxu0 %v688
    %940 = vmatprep.subr.bf16.mxu0 0
    %941 = vmatpush1.bf16.msra.mxu0 %v689
    %942 = vmatprep.subr.bf16.mxu0 0
    %943 = vmatpush1.bf16.msra.mxu0 %v690
    %944 = vmatprep.subr.bf16.mxu0 0
    %945 = vmatpush1.bf16.msra.mxu0 %v691
    %946 = vmatprep.subr.bf16.mxu0 0
    %947 = vmatpush1.bf16.msra.mxu0 %v692
    %948 = vmatprep.subr.bf16.mxu0 0
    %949 = vmatpush1.bf16.msra.mxu0 %v693
    %950 = vmatprep.subr.bf16.mxu0 0
    %951 = vmatpush1.bf16.msra.mxu0 %v694
    %952 = vmatprep.subr.bf16.mxu0 0
    %953 = vmatpush1.bf16.msra.mxu0 %v695
    %954 = vmatprep.subr.bf16.mxu0 0
    %955 = vmatpush1.bf16.msra.mxu0 %v696
    %956 = vmatprep.subr.bf16.mxu0 0
    %957 = vmatpush1.bf16.msra.mxu0 %v697
    %958 = vmatprep.subr.bf16.mxu0 0
    %959 = vmatpush1.bf16.msra.mxu0 %v698
    %960 = vmatprep.subr.bf16.mxu0 0
    %961 = vmatpush1.bf16.msra.mxu0 %v699
    %962 = vmatprep.subr.bf16.mxu0 0
    %963 = vmatpush1.bf16.msra.mxu0 %v700
    %964 = vmatprep.subr.bf16.mxu0 0
    %965 = vmatpush1.bf16.msra.mxu0 %v701
    %966 = vmatprep.mubr.bf16.mxu0 %v251
    %967 = vmatmul.mubr.bf16.gmra.mrb[0].mxu0 %v249
    %v968 = vpop.f32.mrb[0].mxu0
    %v969 = vadd.f32 %v929, %v968
    %v970 = vpop.f32.mrb[0].mxu0
    %v971 = vpop.f32.mrb[0].mxu0
    %v972 = vpop.f32.mrb[0].mxu0
    %973 = vdwg.mxu0
    %974 = vmatprep.subr.bf16.mxu0 0
    %975 = vmatpush1.bf16.msra.mxu0 %v702
    %976 = vmatprep.subr.bf16.mxu0 0
    %977 = vmatpush1.bf16.msra.mxu0 %v703
    %978 = vmatprep.subr.bf16.mxu0 0
    %979 = vmatpush1.bf16.msra.mxu0 %v704
    %980 = vmatprep.subr.bf16.mxu0 0
    %981 = vmatpush1.bf16.msra.mxu0 %v705
    %982 = vmatprep.subr.bf16.mxu0 0
    %983 = vmatpush1.bf16.msra.mxu0 %v706
    %984 = vmatprep.subr.bf16.mxu0 0
    %985 = vmatpush1.bf16.msra.mxu0 %v707
    %986 = vmatprep.subr.bf16.mxu0 0
    %987 = vmatpush1.bf16.msra.mxu0 %v708
    %988 = vmatprep.subr.bf16.mxu0 0
    %989 = vmatpush1.bf16.msra.mxu0 %v709
    %990 = vmatprep.subr.bf16.mxu0 0
    %991 = vmatpush1.bf16.msra.mxu0 %v710
    %992 = vmatprep.subr.bf16.mxu0 0
    %993 = vmatpush1.bf16.msra.mxu0 %v711
    %994 = vmatprep.subr.bf16.mxu0 0
    %995 = vmatpush1.bf16.msra.mxu0 %v712
    %996 = vmatprep.subr.bf16.mxu0 0
    %997 = vmatpush1.bf16.msra.mxu0 %v713
    %998 = vmatprep.subr.bf16.mxu0 0
    %999 = vmatpush1.bf16.msra.mxu0 %v714
    %1000 = vmatprep.subr.bf16.mxu0 0
    %1001 = vmatpush1.bf16.msra.mxu0 %v715
    %1002 = vmatprep.subr.bf16.mxu0 0
    %1003 = vmatpush1.bf16.msra.mxu0 %v716
    %1004 = vmatprep.subr.bf16.mxu0 0
    %1005 = vmatpush1.bf16.msra.mxu0 %v717
    %1006 = vmatprep.mubr.bf16.mxu0 %v273
    %1007 = vmatmul.mubr.bf16.gmra.mrb[0].mxu0 %v266
    %v1008 = vpop.f32.mrb[0].mxu0
    %v1009 = vadd.f32 %v969, %v1008
    %v1010 = vpop.f32.mrb[0].mxu0
    %v1011 = vpop.f32.mrb[0].mxu0
    %v1012 = vpop.f32.mrb[0].mxu0
    %1013 = vdwg.mxu0
    %1014 = vmatprep.subr.bf16.mxu0 0
    %1015 = vmatpush1.bf16.msra.mxu0 %v718
    %1016 = vmatprep.subr.bf16.mxu0 0
    %1017 = vmatpush1.bf16.msra.mxu0 %v719
    %1018 = vmatprep.subr.bf16.mxu0 0
    %1019 = vmatpush1.bf16.msra.mxu0 %v720
    %1020 = vmatprep.subr.bf16.mxu0 0
    %1021 = vmatpush1.bf16.msra.mxu0 %v721
    %1022 = vmatprep.subr.bf16.mxu0 0
    %1023 = vmatpush1.bf16.msra.mxu0 %v722
    %1024 = vmatprep.subr.bf16.mxu0 0
    %1025 = vmatpush1.bf16.msra.mxu0 %v723
    %1026 = vmatprep.subr.bf16.mxu0 0
    %1027 = vmatpush1.bf16.msra.mxu0 %v724
    %1028 = vmatprep.subr.bf16.mxu0 0
    %1029 = vmatpush1.bf16.msra.mxu0 %v725
    %1030 = vmatprep.subr.bf16.mxu0 0
    %1031 = vmatpush1.bf16.msra.mxu0 0
    %1032 = vmatprep.subr.bf16.mxu0 0
    %1033 = vmatpush1.bf16.msra.mxu0 0
    %1034 = vmatprep.subr.bf16.mxu0 0
    %1035 = vmatpush1.bf16.msra.mxu0 0
    %1036 = vmatprep.subr.bf16.mxu0 0
    %1037 = vmatpush1.bf16.msra.mxu0 0
    %1038 = vmatprep.subr.bf16.mxu0 0
    %1039 = vmatpush1.bf16.msra.mxu0 0
    %1040 = vmatprep.subr.bf16.mxu0 0
    %1041 = vmatpush1.bf16.msra.mxu0 0
    %1042 = vmatprep.subr.bf16.mxu0 0
    %1043 = vmatpush1.bf16.msra.mxu0 0
    %1044 = vmatprep.subr.bf16.mxu0 0
    %1045 = vmatpush1.bf16.msra.mxu0 0
    %1046 = vmatprep.mubr.bf16.mxu0 0
    %1047 = vmatmul.mubr.bf16.gmra.mrb[0].mxu0 %v274
    %v1048 = vpop.f32.mrb[0].mxu0
    %v1049 = vadd.f32 %v1009, %v1048
    %v1050 = vpop.f32.mrb[0].mxu0
    %v1051 = vpop.f32.mrb[0].mxu0
    %v1052 = vpop.f32.mrb[0].mxu0
    %1053 = vdwg.mxu0
    %1054 = vst [vmem:[#allocation2] sm:$0x3] %v1049
    // Predicated region
    $region14: #{net_forward.21} parent=1 // pred_check
      _
    $region15: #{net_forward.21} parent=1 // pred_check_branch
      %1056 = sbr.rel (0) target = $region17
    $region16: #{net_forward.21} parent=1 // pred_region
      %s1058 = ssub.s32 32, 32
      %1059 = vsyncadd [#allocation3], %s1058
      %s1061 = sshll.u32 [#allocation2], 4
      %s1062 = int_to_ptr.vmem [resolvable:$true] %s1061
      %1064 = dma.vmem_to_hbm [thread:$0]  %s1062, 32, %s3, [#allocation3]
    $region17: #{net_forward.21} parent=1 // pred_fallthru
      _
    // Predicated region
    $region18: #{net_forward.21} parent=1 // pred_check
      _
    $region19: #{net_forward.21} parent=1 // pred_check_branch
      %1066 = sbr.rel (0) target = $region21
    $region20: #{net_forward.21} parent=1 // pred_region
      %1067 = dma.done [#allocation3], 32
    $region21: #{net_forward.21} parent=1 // pred_fallthru
      _
    %1068 = vsyncpa [#allocation3], 1

</llo_original>
